<compile_context>
chip_gen: v6e
topology: v6e:2x2x1
jax: 0.10.0
libtpu: 0.0.40
codegen_flags: <defaults>
</compile_context>

<pallas_src>
import functools

import jax
import jax.numpy as jnp
from jax.experimental import pallas as pl
from jax.experimental.pallas import tpu as pltpu


def _round_up(x, m):
    return -(-x // m) * m


# ----------------------------------------------------------------------------
# Fused conv/deconv kernel:
#   acc[tile, Nout] = bias + sum_d  x_flat[start + base_d : +tile, :Cx] @ W_d
# ----------------------------------------------------------------------------
def _fused_conv_kernel(x_ref, w_ref, b_ref, o_ref, *scratch,
                       bases, cx, relu, single_tile):
    """x_ref: [1, R, Cx] bf16  (flat padded / phase-merged input, per image)
       w_ref: [len(bases)*Cx, Nout] bf16  (one [Cx, Nout] slab per displacement)
       b_ref: [1, Nout] f32
       o_ref: [1, tile_rows, Nout]
       scratch (optional): [tile_rows, len(bases)*Cx] bf16 im2col slab."""
    tile = o_ref.shape[1]
    nout = o_ref.shape[2]
    start = 0 if single_tile else pl.program_id(1) * tile
    # Bias folded into the accumulator init (single broadcast per tile).
    acc = jnp.broadcast_to(b_ref[...], (tile, nout)).astype(jnp.float32)
    if scratch:
        # Small-K path: pack all displacements into one VMEM im2col slab and
        # issue a single MXU pass with K = len(bases) * Cx.
        im_ref, = scratch
        for d, base in enumerate(bases):
            im_ref[:, d * cx:(d + 1) * cx] = x_ref[0, pl.ds(start + base, tile), :]
        acc = acc + jnp.dot(im_ref[...], w_ref[...],
                            preferred_element_type=jnp.float32)
    else:
        # Large-K path: one chained dot per displacement (K = Cx = 128).
        for d, base in enumerate(bases):
            xb = x_ref[0, pl.ds(start + base, tile), :]            # [tile, Cx]
            wt = w_ref[d * cx:(d + 1) * cx, :]                     # [Cx, Nout]
            acc = acc + jnp.dot(xb, wt, preferred_element_type=jnp.float32)
    if relu:
        acc = jnp.maximum(acc, 0.0)
    o_ref[0, :, :] = acc.astype(o_ref.dtype)


def _fused_conv_call(x_flat, wk, bias, bases, tile_rows, n_tiles, out_dtype,
                     relu, packed):
    B, R, Cx = x_flat.shape
    _, Nout = wk.shape
    n_disp = len(bases)
    kernel = functools.partial(_fused_conv_kernel, bases=tuple(bases), cx=Cx,
                               relu=relu, single_tile=(n_tiles == 1))
    scratch_shapes = (
        [pltpu.VMEM((tile_rows, n_disp * Cx), jnp.bfloat16)] if packed else [])

    out_bytes = jnp.dtype(out_dtype).itemsize
    blocks_bytes = (R * Cx * 2 + wk.size * 2 + Nout * 4
                    + tile_rows * Nout * out_bytes
                    + (tile_rows * n_disp * Cx * 2 if packed else 0)
                    + tile_rows * Nout * 4)                  # f32 accumulator
    vmem_limit = int(min(max(2 * blocks_bytes + (4 << 20), 16 << 20), 64 << 20))

    return pl.pallas_call(
        kernel,
        out_shape=jax.ShapeDtypeStruct((B, n_tiles * tile_rows, Nout), out_dtype),
        grid=(B, n_tiles),
        in_specs=[
            # block index constant in the row-tile axis -> stays VMEM-resident
            pl.BlockSpec((1, R, Cx), lambda b, t: (b, 0, 0)),
            pl.BlockSpec((n_disp * Cx, Nout), lambda b, t: (0, 0)),
            pl.BlockSpec((1, Nout), lambda b, t: (0, 0)),
        ],
        out_specs=pl.BlockSpec((1, tile_rows, Nout), lambda b, t: (b, t, 0)),
        scratch_shapes=scratch_shapes,
        compiler_params=pltpu.CompilerParams(
            dimension_semantics=("parallel", "parallel"),
            vmem_limit_bytes=vmem_limit),
    )(x_flat, wk, bias)


# ----------------------------------------------------------------------------
# Conv2d (stride s) on NHWC bf16 activations, K-merged (phase -> channel)
# ----------------------------------------------------------------------------
def conv2d_act(x, w, b, stride, pad, relu, max_tile_rows=512):
    """w: [Cout, Cin, k, k] (PyTorch OIHW)."""
    B, H, W, Cin = x.shape
    Cout, _, k, _ = w.shape
    s = stride
    Ho = (H + 2 * pad - k) // s + 1
    Wo = (W + 2 * pad - k) // s + 1
    nq = -(-k // s)                       # quotient taps per axis
    qmax = nq - 1

    wq = max(Wo + qmax, -(-(W + pad) // s))
    band = Ho * wq
    tile_rows = min(max_tile_rows, _round_up(band, 8))
    n_tiles = -(-band // tile_rows)
    padded_band = n_tiles * tile_rows
    base_max = qmax * wq + qmax
    hq = max(-(-(padded_band + base_max) // wq), -(-(H + pad) // s))
    R = hq * wq

    # Exact in-bounds / no-row-wrap guarantees (review correctness items).
    assert padded_band + base_max <= R
    assert Wo - 1 + qmax <= wq - 1          # kept columns never wrap a row
    assert s * hq - H - pad >= 0 and s * wq - W - pad >= 0

    # phase-merge: [B,H,W,C] -> [B, hq*wq, s*s*Cin]
    xp = jnp.pad(x, ((0, 0), (pad, s * hq - H - pad),
                     (pad, s * wq - W - pad), (0, 0)))
    xp = xp.reshape(B, hq, s, wq, s, Cin).transpose(0, 1, 3, 2, 4, 5)
    x_flat = xp.reshape(B, hq * wq, s * s * Cin)

    # weights -> per-displacement [s*s*Cin, Cout] slabs (zero-padded taps >= k)
    wp = jnp.pad(w, ((0, 0), (0, 0), (0, nq * s - k), (0, nq * s - k)))
    wp = wp.reshape(Cout, Cin, nq, s, nq, s).transpose(2, 4, 3, 5, 1, 0)
    wk = wp.reshape(nq * nq * s * s * Cin, Cout).astype(jnp.bfloat16)
    b2 = b.reshape(1, Cout).astype(jnp.float32)

    bases = tuple(qi * wq + qj for qi in range(nq) for qj in range(nq))
    packed = len(bases) * (s * s * Cin) <= 512
    out = _fused_conv_call(x_flat, wk, b2, bases, tile_rows, n_tiles,
                           jnp.bfloat16, relu, packed)
    out = out[:, :band, :].reshape(B, Ho, wq, Cout)
    return out[:, :, :Wo, :]


# ----------------------------------------------------------------------------
# ConvTranspose2d (stride s) on NHWC bf16, N-merged (output phases -> channels)
# ----------------------------------------------------------------------------
def conv_transpose2d_act(x, w, b, stride, pad, out_pad, relu,
                         max_tile_rows=512):
    """w: [Cin, Cout, k, k] (PyTorch). Sub-pixel decomposition; the dilated-zero
       input is never built and stores are lane-dense [tile, s*s*Cout]."""
    B, H, W, Cin = x.shape
    _, Cout, k, _ = w.shape
    s = stride
    pt = k - 1 - pad
    Ho = (H - 1) * s - 2 * pad + k + out_pad
    Wo = (W - 1) * s - 2 * pad + k + out_pad
    hq_out = -(-Ho // s)
    wq_out = -(-Wo // s)

    d_all = sorted({(ro + ki - pt) // s
                    for ro in range(s) for ki in range(k)
                    if (ro + ki - pt) % s == 0})
    d_min, d_max = d_all[0], d_all[-1]
    T = max(0, -d_min)
    L = T
    wq_in = max(L + W, L + wq_out + d_max)
    band = hq_out * wq_in
    tile_rows = min(max_tile_rows, _round_up(band, 8))
    n_tiles = -(-band // tile_rows)
    padded_band = n_tiles * tile_rows
    base_max = (T + d_max) * wq_in + (L + d_max)
    hq_in = max(-(-(padded_band + base_max) // wq_in), T + H)
    R = hq_in * wq_in

    assert padded_band + base_max <= R
    assert L + wq_out - 1 + d_max <= wq_in - 1   # kept columns never wrap
    assert hq_in - T - H >= 0 and wq_in - L - W >= 0

    xq = jnp.pad(x, ((0, 0), (T, hq_in - T - H), (L, wq_in - L - W), (0, 0)))
    x_flat = xq.reshape(B, hq_in * wq_in, Cin)

    # weights: per (dr,dc) base an [Cin, s*s*Cout] slab (zero where no tap)
    nd = d_max - d_min + 1
    wk = jnp.zeros((nd * nd, Cin, s * s * Cout), jnp.float32)
    for di, dr in enumerate(range(d_min, d_max + 1)):
        for ro in range(s):
            kfi = pad + ro - dr * s
            if not 0 <= kfi < k:
                continue
            for dj, dc in enumerate(range(d_min, d_max + 1)):
                for co in range(s):
                    kfj = pad + co - dc * s
                    if not 0 <= kfj < k:
                        continue
                    p = ro * s + co
                    wk = wk.at[di * nd + dj, :,
                               p * Cout:(p + 1) * Cout].set(w[:, :, kfi, kfj])
    wk = wk.reshape(nd * nd * Cin, s * s * Cout).astype(jnp.bfloat16)
    b2 = jnp.tile(b, s * s).reshape(1, s * s * Cout).astype(jnp.float32)

    bases = tuple((T + dr) * wq_in + (L + dc)
                  for dr in range(d_min, d_max + 1)
                  for dc in range(d_min, d_max + 1))
    packed = len(bases) * Cin <= 512
    out = _fused_conv_call(x_flat, wk, b2, bases, tile_rows, n_tiles,
                           jnp.bfloat16, relu, packed)
    out = out[:, :band, :].reshape(B, hq_out, wq_in, s, s, Cout)
    out = out[:, :, :wq_out].transpose(0, 1, 3, 2, 4, 5)
    out = out.reshape(B, hq_out * s, wq_out * s, Cout)
    return out[:, :Ho, :Wo, :]


# ----------------------------------------------------------------------------
# Final ConvTranspose2d (k=3, stride=1): transposed product, C-major f32 output
# ----------------------------------------------------------------------------
def _final_convT_kernel(xt_ref, w_ref, b_ref, o_ref, *, bases, cout):
    """xt_ref: [1, Cin, R] bf16; w_ref: [len(bases)*Cout, Cin] bf16;
       b_ref: [Cout, 1] f32;   o_ref: [1, Cout, band] f32 (lane-dense, C-major)."""
    band = o_ref.shape[2]
    acc = jnp.broadcast_to(b_ref[...], (cout, band)).astype(jnp.float32)
    for d, base in enumerate(bases):
        wt = w_ref[d * cout:(d + 1) * cout, :]               # [Cout, Cin]
        xb = xt_ref[0, :, base:base + band]                  # [Cin, band]
        acc = acc + jnp.dot(wt, xb, preferred_element_type=jnp.float32)
    o_ref[0, :, :] = acc


def conv_transpose2d_final_cmajor(x, w, b, pad):
    """Final ConvTranspose2d (stride 1, out_pad 0) producing NCHW f32 directly
       (no exit relayout).  x: [B,H,W,Cin] bf16, w: [Cin, Cout, k, k]."""
    B, H, W, Cin = x.shape
    _, Cout, k, _ = w.shape
    pt = k - 1 - pad
    Ho = H - 2 * pad + k - 1
    Wo = W - 2 * pad + k - 1
    d_min, d_max = -pt, pad                  # ki = dr + pt in [0, k)
    T = max(0, -d_min)
    L = T
    wq_in = max(L + W, L + Wo + d_max)
    band = Ho * wq_in
    base_max = (T + d_max) * wq_in + (L + d_max)
    hq_in = max(-(-(band + base_max) // wq_in), T + H)
    R = hq_in * wq_in

    assert band + base_max <= R
    assert L + Wo - 1 + d_max <= wq_in - 1
    assert hq_in - T - H >= 0 and wq_in - L - W >= 0

    xp = jnp.pad(x, ((0, 0), (T, hq_in - T - H), (L, wq_in - L - W), (0, 0)))
    xt = xp.reshape(B, R, Cin).transpose(0, 2, 1)            # [B, Cin, R] bf16

    bases = tuple((T + dr) * wq_in + (L + dc)
                  for dr in range(d_min, d_max + 1)
                  for dc in range(d_min, d_max + 1))
    blocks = [w[:, :, pad - dr, pad - dc].T
              for dr in range(d_min, d_max + 1)
              for dc in range(d_min, d_max + 1)]
    wk = jnp.concatenate(blocks, axis=0).astype(jnp.bfloat16)  # [n_disp*Cout, Cin]
    b2 = b.reshape(Cout, 1).astype(jnp.float32)

    kernel = functools.partial(_final_convT_kernel, bases=bases, cout=Cout)
    out = pl.pallas_call(
        kernel,
        out_shape=jax.ShapeDtypeStruct((B, Cout, band), jnp.float32),
        grid=(B,),
        in_specs=[
            pl.BlockSpec((1, Cin, R), lambda bb: (bb, 0, 0)),
            pl.BlockSpec((len(bases) * Cout, Cin), lambda bb: (0, 0)),
            pl.BlockSpec((Cout, 1), lambda bb: (0, 0)),
        ],
        out_specs=pl.BlockSpec((1, Cout, band), lambda bb: (bb, 0, 0)),
        compiler_params=pltpu.CompilerParams(
            dimension_semantics=("parallel",),
            vmem_limit_bytes=32 * 1024 * 1024),
    )(xt, wk, b2)
    return out.reshape(B, Cout, Ho, wq_in)[:, :, :, :Wo]      # NCHW f32


# ----------------------------------------------------------------------------
# ConvAutoEncoder: parameters + forward
# ----------------------------------------------------------------------------
def init_params(key, in_channels, enc_channels=(32, 32, 32),
                dec_channels=(32, 32, 32), kernel_size=5):
    keys = iter(jax.random.split(key, 32))
    params = {"encoder": [], "decoder": []}
    enc = [in_channels] + list(enc_channels)
    for i in range(len(enc) - 1):
        fan_in = enc[i] * kernel_size * kernel_size
        sc = 1.0 / jnp.sqrt(fan_in)
        w = jax.random.uniform(next(keys),
                               (enc[i + 1], enc[i], kernel_size, kernel_size),
                               minval=-sc, maxval=sc, dtype=jnp.float32)
        b = jax.random.uniform(next(keys), (enc[i + 1],), minval=-sc, maxval=sc,
                               dtype=jnp.float32)
        params["encoder"].append((w, b))
    dec = [enc[-1]] + list(dec_channels)
    for i in range(len(dec) - 1):
        fan_in = dec[i + 1] * kernel_size * kernel_size
        sc = 1.0 / jnp.sqrt(fan_in)
        w = jax.random.uniform(next(keys),
                               (dec[i], dec[i + 1], kernel_size, kernel_size),
                               minval=-sc, maxval=sc, dtype=jnp.float32)
        b = jax.random.uniform(next(keys), (dec[i + 1],), minval=-sc, maxval=sc,
                               dtype=jnp.float32)
        params["decoder"].append((w, b))
    sc = 1.0 / jnp.sqrt(in_channels * 9)
    wf = jax.random.uniform(next(keys), (dec[-1], in_channels, 3, 3),
                            minval=-sc, maxval=sc, dtype=jnp.float32)
    bf = jax.random.uniform(next(keys), (in_channels,), minval=-sc, maxval=sc,
                            dtype=jnp.float32)
    params["final"] = (wf, bf)
    return params


def conv_autoencoder_forward(params, x, kernel_size=5, strides=(2, 2, 2),
                             num_slots=4, use_softmax=False):
    """x: [B, C, H, W] f32 -> prediction [B, C, H, W] f32."""
    pad = kernel_size // 2
    B, C, H, W = x.shape
    h = x.transpose(0, 2, 3, 1).astype(jnp.bfloat16)        # NCHW -> NHWC once
    # TODO(synk): fuse the <=8x8 latent layers into a single pallas_call and
    # carry the phase-major layout between decoder layers (relayout saving).
    for (w, b), s in zip(params["encoder"], strides):
        h = conv2d_act(h, w, b, stride=s, pad=pad, relu=True)
    for (w, b), s in zip(params["decoder"], strides[::-1]):
        out_pad = int(s + 2 * pad - kernel_size)
        h = conv_transpose2d_act(h, w, b, stride=s, pad=pad, out_pad=out_pad,
                                 relu=True)
    wf, bf = params["final"]
    out = conv_transpose2d_final_cmajor(h, wf, bf, pad=1)    # NCHW f32 directly
    if use_softmax:
        # TODO(synk): use_softmax branch (requires batch % num_slots == 0) is
        # plain-JAX glue and not exercised here (module default is False).
        out = jax.nn.softmax(out.reshape(-1, num_slots, C, H, W), axis=1)
        out = out.reshape(-1, C, H, W)
    return out


# ----------------------------------------------------------------------------
# Pure-JAX reference (lax conv) with the same bf16 storage / f32 accum policy
# ----------------------------------------------------------------------------
def _bf16_round(x):
    return x.astype(jnp.bfloat16).astype(jnp.float32)


def _conv_ref(x, w, b, stride, pad):
    out = jax.lax.conv_general_dilated(
        x, w, (stride, stride), ((pad, pad), (pad, pad)),
        dimension_numbers=("NCHW", "OIHW", "NCHW"),
        precision=jax.lax.Precision.HIGHEST)
    return out + b[None, :, None, None]


def _deconv_ref(x, w, b, stride, pad, out_pad):
    k = w.shape[2]
    w_conv = jnp.flip(w, axis=(2, 3)).transpose(1, 0, 2, 3)
    pt = k - 1 - pad
    out = jax.lax.conv_general_dilated(
        x, w_conv, (1, 1), ((pt, pt + out_pad), (pt, pt + out_pad)),
        lhs_dilation=(stride, stride),
        dimension_numbers=("NCHW", "OIHW", "NCHW"),
        precision=jax.lax.Precision.HIGHEST)
    return out + b[None, :, None, None]


def forward_ref(params, x, kernel_size=5, strides=(2, 2, 2)):
    pad = kernel_size // 2
    h = _bf16_round(x)
    for (w, b), s in zip(params["encoder"], strides):
        h = _bf16_round(jnp.maximum(_conv_ref(h, _bf16_round(w), b, s, pad), 0.0))
    for (w, b), s in zip(params["decoder"], strides[::-1]):
        op = int(s + 2 * pad - kernel_size)
        h = _bf16_round(jnp.maximum(_deconv_ref(h, _bf16_round(w), b, s, pad, op), 0.0))
    wf, bf = params["final"]
    return _deconv_ref(h, _bf16_round(wf), bf, 1, 1, 0)


# ----------------------------------------------------------------------------
if __name__ == "__main__":
    key = jax.random.PRNGKey(0)
    kx, kp = jax.random.split(key)

    B, C, H, W = 2, 4, 16, 16          # strides (2,2,2) -> 2x2 latent
    x = jax.random.normal(kx, (B, C, H, W), dtype=jnp.float32)
    params = init_params(kp, in_channels=C)

    fwd = jax.jit(conv_autoencoder_forward)
    y = jax.block_until_ready(fwd(params, x))
    assert y.shape == (B, C, H, W), y.shape

    y_ref = jax.block_until_ready(jax.jit(forward_ref)(params, x))
    max_err = float(jnp.max(jnp.abs(y - y_ref)))
    assert jnp.allclose(y, y_ref, atol=2e-2, rtol=2e-2), max_err

    print("KERNEL_OK")
</pallas_src>

<mosaic_0001>
module attributes {stable_mosaic.version = 11 : i64} {
  func.func @_fused_conv_kernel(%arg0: i32, %arg1: i32, %arg2: memref<1x110x16xbf16, #tpu.memory_space<vmem>>, %arg3: memref<144x32xbf16, #tpu.memory_space<vmem>>, %arg4: memref<1x32xf32, #tpu.memory_space<vmem>>, %arg5: memref<1x80x32xbf16, #tpu.memory_space<vmem>>, %arg6: memref<80x144xbf16, #tpu.memory_space<vmem>>) attributes {dimension_semantics = [#tpu.dimension_semantics<parallel>, #tpu.dimension_semantics<parallel>], iteration_bounds = array<i64: 2, 1>, scalar_prefetch = 0 : i64, scratch_operands = 1 : i64, tpu.core_type = #tpu.core_type<tc>, window_params = [{transform_indices = @transform_0, window_bounds = array<i64: 1, 110, 16>}, {pipeline_mode = #tpu.pipeline_mode<synchronous>, transform_indices = @transform_1, window_bounds = array<i64: 144, 32>}, {pipeline_mode = #tpu.pipeline_mode<synchronous>, transform_indices = @transform_2, window_bounds = array<i64: 1, 32>}, {transform_indices = @transform_3, window_bounds = array<i64: 1, 80, 32>}]} {
    %c0 = arith.constant 0 : index
    %c0_0 = arith.constant 0 : index
    %0 = vector.load %arg4[%c0, %c0_0] : memref<1x32xf32, #tpu.memory_space<vmem>>, vector<1x32xf32>
    %1 = vector.shape_cast %0 : vector<1x32xf32> to vector<1x32xf32>
    %2 = vector.broadcast %1 : vector<1x32xf32> to vector<80x32xf32>
    %c0_1 = arith.constant 0 : index
    %c0_2 = arith.constant 0 : index
    %c0_3 = arith.constant 0 : index
    %3 = vector.load %arg2[%c0_1, %c0_2, %c0_3] : memref<1x110x16xbf16, #tpu.memory_space<vmem>>, vector<1x80x16xbf16>
    %4 = vector.shape_cast %3 : vector<1x80x16xbf16> to vector<80x16xbf16>
    %c0_4 = arith.constant 0 : index
    %c0_5 = arith.constant 0 : index
    %5 = vector.load %arg6[%c0_4, %c0_5] : memref<80x144xbf16, #tpu.memory_space<vmem>>, vector<80x16xbf16>
    tpu.vector_store %arg6[%c0_4, %c0_5], %4 {strides = array<i32>} : memref<80x144xbf16, #tpu.memory_space<vmem>>, vector<80x16xbf16>,
    %c0_6 = arith.constant 0 : index
    %c1 = arith.constant 1 : index
    %c0_7 = arith.constant 0 : index
    %6 = vector.load %arg2[%c0_6, %c1, %c0_7] : memref<1x110x16xbf16, #tpu.memory_space<vmem>>, vector<1x80x16xbf16>
    %7 = vector.shape_cast %6 : vector<1x80x16xbf16> to vector<80x16xbf16>
    %c0_8 = arith.constant 0 : index
    %c16 = arith.constant 16 : index
    %8 = vector.load %arg6[%c0_8, %c16] : memref<80x144xbf16, #tpu.memory_space<vmem>>, vector<80x16xbf16>
    tpu.vector_store %arg6[%c0_8, %c16], %7 {strides = array<i32>} : memref<80x144xbf16, #tpu.memory_space<vmem>>, vector<80x16xbf16>,
    %c0_9 = arith.constant 0 : index
    %c2 = arith.constant 2 : index
    %c0_10 = arith.constant 0 : index
    %9 = vector.load %arg2[%c0_9, %c2, %c0_10] : memref<1x110x16xbf16, #tpu.memory_space<vmem>>, vector<1x80x16xbf16>
    %10 = vector.shape_cast %9 : vector<1x80x16xbf16> to vector<80x16xbf16>
    %c0_11 = arith.constant 0 : index
    %c32 = arith.constant 32 : index
    %11 = vector.load %arg6[%c0_11, %c32] : memref<80x144xbf16, #tpu.memory_space<vmem>>, vector<80x16xbf16>
    tpu.vector_store %arg6[%c0_11, %c32], %10 {strides = array<i32>} : memref<80x144xbf16, #tpu.memory_space<vmem>>, vector<80x16xbf16>,
    %c0_12 = arith.constant 0 : index
    %c10 = arith.constant 10 : index
    %c0_13 = arith.constant 0 : index
    %12 = vector.load %arg2[%c0_12, %c10, %c0_13] : memref<1x110x16xbf16, #tpu.memory_space<vmem>>, vector<1x80x16xbf16>
    %13 = vector.shape_cast %12 : vector<1x80x16xbf16> to vector<80x16xbf16>
    %c0_14 = arith.constant 0 : index
    %c48 = arith.constant 48 : index
    %14 = vector.load %arg6[%c0_14, %c48] : memref<80x144xbf16, #tpu.memory_space<vmem>>, vector<80x16xbf16>
    tpu.vector_store %arg6[%c0_14, %c48], %13 {strides = array<i32>} : memref<80x144xbf16, #tpu.memory_space<vmem>>, vector<80x16xbf16>,
    %c0_15 = arith.constant 0 : index
    %c11 = arith.constant 11 : index
    %c0_16 = arith.constant 0 : index
    %15 = vector.load %arg2[%c0_15, %c11, %c0_16] : memref<1x110x16xbf16, #tpu.memory_space<vmem>>, vector<1x80x16xbf16>
    %16 = vector.shape_cast %15 : vector<1x80x16xbf16> to vector<80x16xbf16>
    %c0_17 = arith.constant 0 : index
    %c64 = arith.constant 64 : index
    %17 = vector.load %arg6[%c0_17, %c64] : memref<80x144xbf16, #tpu.memory_space<vmem>>, vector<80x16xbf16>
    tpu.vector_store %arg6[%c0_17, %c64], %16 {strides = array<i32>} : memref<80x144xbf16, #tpu.memory_space<vmem>>, vector<80x16xbf16>,
    %c0_18 = arith.constant 0 : index
    %c12 = arith.constant 12 : index
    %c0_19 = arith.constant 0 : index
    %18 = vector.load %arg2[%c0_18, %c12, %c0_19] : memref<1x110x16xbf16, #tpu.memory_space<vmem>>, vector<1x80x16xbf16>
    %19 = vector.shape_cast %18 : vector<1x80x16xbf16> to vector<80x16xbf16>
    %c0_20 = arith.constant 0 : index
    %c80 = arith.constant 80 : index
    %20 = vector.load %arg6[%c0_20, %c80] : memref<80x144xbf16, #tpu.memory_space<vmem>>, vector<80x16xbf16>
    tpu.vector_store %arg6[%c0_20, %c80], %19 {strides = array<i32>} : memref<80x144xbf16, #tpu.memory_space<vmem>>, vector<80x16xbf16>,
    %c0_21 = arith.constant 0 : index
    %c20 = arith.constant 20 : index
    %c0_22 = arith.constant 0 : index
    %21 = vector.load %arg2[%c0_21, %c20, %c0_22] : memref<1x110x16xbf16, #tpu.memory_space<vmem>>, vector<1x80x16xbf16>
    %22 = vector.shape_cast %21 : vector<1x80x16xbf16> to vector<80x16xbf16>
    %c0_23 = arith.constant 0 : index
    %c96 = arith.constant 96 : index
    %23 = vector.load %arg6[%c0_23, %c96] : memref<80x144xbf16, #tpu.memory_space<vmem>>, vector<80x16xbf16>
    tpu.vector_store %arg6[%c0_23, %c96], %22 {strides = array<i32>} : memref<80x144xbf16, #tpu.memory_space<vmem>>, vector<80x16xbf16>,
    %c0_24 = arith.constant 0 : index
    %c21 = arith.constant 21 : index
    %c0_25 = arith.constant 0 : index
    %24 = vector.load %arg2[%c0_24, %c21, %c0_25] : memref<1x110x16xbf16, #tpu.memory_space<vmem>>, vector<1x80x16xbf16>
    %25 = vector.shape_cast %24 : vector<1x80x16xbf16> to vector<80x16xbf16>
    %c0_26 = arith.constant 0 : index
    %c112 = arith.constant 112 : index
    %26 = vector.load %arg6[%c0_26, %c112] : memref<80x144xbf16, #tpu.memory_space<vmem>>, vector<80x16xbf16>
    tpu.vector_store %arg6[%c0_26, %c112], %25 {strides = array<i32>} : memref<80x144xbf16, #tpu.memory_space<vmem>>, vector<80x16xbf16>,
    %c0_27 = arith.constant 0 : index
    %c22 = arith.constant 22 : index
    %c0_28 = arith.constant 0 : index
    %27 = vector.load %arg2[%c0_27, %c22, %c0_28] : memref<1x110x16xbf16, #tpu.memory_space<vmem>>, vector<1x80x16xbf16>
    %28 = vector.shape_cast %27 : vector<1x80x16xbf16> to vector<80x16xbf16>
    %c0_29 = arith.constant 0 : index
    %c128 = arith.constant 128 : index
    %29 = vector.load %arg6[%c0_29, %c128] : memref<80x144xbf16, #tpu.memory_space<vmem>>, vector<80x16xbf16>
    tpu.vector_store %arg6[%c0_29, %c128], %28 {strides = array<i32>} : memref<80x144xbf16, #tpu.memory_space<vmem>>, vector<80x16xbf16>,
    %c0_30 = arith.constant 0 : index
    %c0_31 = arith.constant 0 : index
    %30 = vector.load %arg6[%c0_30, %c0_31] : memref<80x144xbf16, #tpu.memory_space<vmem>>, vector<80x144xbf16>
    %c0_32 = arith.constant 0 : index
    %c0_33 = arith.constant 0 : index
    %31 = vector.load %arg3[%c0_32, %c0_33] : memref<144x32xbf16, #tpu.memory_space<vmem>>, vector<144x32xbf16>
    %cst = arith.constant dense<0.000000e+00> : vector<80x32xf32>
    %32 = tpu.matmul %30, %31, %cst {dimension_numbers = #tpu.dot_dimension_numbers<[1], [0], [0], [1], [0, 0, 1, 1], [], []>} : vector<80x144xbf16>, vector<144x32xbf16>, vector<80x32xf32> -> vector<80x32xf32>
    %33 = arith.addf %2, %32 : vector<80x32xf32>
    %cst_34 = arith.constant 0.000000e+00 : f32
    %34 = vector.broadcast %cst_34 : f32 to vector<80x32xf32>
    %35 = arith.maximumf %33, %34 : vector<80x32xf32>
    %36 = arith.truncf %35 : vector<80x32xf32> to vector<80x32xbf16>
    %c0_35 = arith.constant 0 : index
    %c0_36 = arith.constant 0 : index
    %c0_37 = arith.constant 0 : index
    %37 = vector.load %arg5[%c0_35, %c0_36, %c0_37] : memref<1x80x32xbf16, #tpu.memory_space<vmem>>, vector<1x80x32xbf16>
    %38 = vector.shape_cast %37 : vector<1x80x32xbf16> to vector<80x32xbf16>
    %39 = vector.shape_cast %36 : vector<80x32xbf16> to vector<1x80x32xbf16>
    tpu.vector_store %arg5[%c0_35, %c0_36, %c0_37], %39 {strides = array<i32>} : memref<1x80x32xbf16, #tpu.memory_space<vmem>>, vector<1x80x32xbf16>,
    return
  }
  func.func @transform_0(%arg0: i32, %arg1: i32) -> (i32, i32, i32) {
    %c0_i32 = arith.constant 0 : i32
    %c0_i32_0 = arith.constant 0 : i32
    %c0_i32_1 = arith.constant 0 : i32
    return %arg0, %c0_i32, %c0_i32_0 : i32, i32, i32
  }
  func.func @transform_1(%arg0: i32, %arg1: i32) -> (i32, i32) {
    %c0_i32 = arith.constant 0 : i32
    %c0_i32_0 = arith.constant 0 : i32
    %c0_i32_1 = arith.constant 0 : i32
    return %c0_i32, %c0_i32_0 : i32, i32
  }
  func.func @transform_2(%arg0: i32, %arg1: i32) -> (i32, i32) {
    %c0_i32 = arith.constant 0 : i32
    %c0_i32_0 = arith.constant 0 : i32
    %c0_i32_1 = arith.constant 0 : i32
    return %c0_i32, %c0_i32_0 : i32, i32
  }
  func.func @transform_3(%arg0: i32, %arg1: i32) -> (i32, i32, i32) {
    %c0_i32 = arith.constant 0 : i32
    %c0_i32_0 = arith.constant 0 : i32
    return %arg0, %arg1, %c0_i32 : i32, i32, i32
  }
}

module attributes {stable_mosaic.version = 11 : i64} {
  func.func @_fused_conv_kernel(%arg0: i32, %arg1: i32, %arg2: memref<1x42x128xbf16, #tpu.memory_space<vmem>>, %arg3: memref<1152x32xbf16, #tpu.memory_space<vmem>>, %arg4: memref<1x32xf32, #tpu.memory_space<vmem>>, %arg5: memref<1x24x32xbf16, #tpu.memory_space<vmem>>) attributes {dimension_semantics = [#tpu.dimension_semantics<parallel>, #tpu.dimension_semantics<parallel>], iteration_bounds = array<i64: 2, 1>, scalar_prefetch = 0 : i64, scratch_operands = 0 : i64, tpu.core_type = #tpu.core_type<tc>, window_params = [{transform_indices = @transform_0, window_bounds = array<i64: 1, 42, 128>}, {pipeline_mode = #tpu.pipeline_mode<synchronous>, transform_indices = @transform_1, window_bounds = array<i64: 1152, 32>}, {pipeline_mode = #tpu.pipeline_mode<synchronous>, transform_indices = @transform_2, window_bounds = array<i64: 1, 32>}, {transform_indices = @transform_3, window_bounds = array<i64: 1, 24, 32>}]} {
    %c0 = arith.constant 0 : index
    %c0_0 = arith.constant 0 : index
    %0 = vector.load %arg4[%c0, %c0_0] : memref<1x32xf32, #tpu.memory_space<vmem>>, vector<1x32xf32>
    %1 = vector.shape_cast %0 : vector<1x32xf32> to vector<1x32xf32>
    %2 = vector.broadcast %1 : vector<1x32xf32> to vector<24x32xf32>
    %c0_1 = arith.constant 0 : index
    %c0_2 = arith.constant 0 : index
    %c0_3 = arith.constant 0 : index
    %3 = vector.load %arg2[%c0_1, %c0_2, %c0_3] : memref<1x42x128xbf16, #tpu.memory_space<vmem>>, vector<1x24x128xbf16>
    %4 = vector.shape_cast %3 : vector<1x24x128xbf16> to vector<24x128xbf16>
    %c0_4 = arith.constant 0 : index
    %c0_5 = arith.constant 0 : index
    %5 = vector.load %arg3[%c0_4, %c0_5] : memref<1152x32xbf16, #tpu.memory_space<vmem>>, vector<128x32xbf16>
    %cst = arith.constant dense<0.000000e+00> : vector<24x32xf32>
    %6 = tpu.matmul %4, %5, %cst {dimension_numbers = #tpu.dot_dimension_numbers<[1], [0], [0], [1], [0, 0, 1, 1], [], []>} : vector<24x128xbf16>, vector<128x32xbf16>, vector<24x32xf32> -> vector<24x32xf32>
    %7 = arith.addf %2, %6 : vector<24x32xf32>
    %c0_6 = arith.constant 0 : index
    %c1 = arith.constant 1 : index
    %c0_7 = arith.constant 0 : index
    %8 = vector.load %arg2[%c0_6, %c1, %c0_7] : memref<1x42x128xbf16, #tpu.memory_space<vmem>>, vector<1x24x128xbf16>
    %9 = vector.shape_cast %8 : vector<1x24x128xbf16> to vector<24x128xbf16>
    %c128 = arith.constant 128 : index
    %c0_8 = arith.constant 0 : index
    %10 = vector.load %arg3[%c128, %c0_8] : memref<1152x32xbf16, #tpu.memory_space<vmem>>, vector<128x32xbf16>
    %cst_9 = arith.constant dense<0.000000e+00> : vector<24x32xf32>
    %11 = tpu.matmul %9, %10, %cst_9 {dimension_numbers = #tpu.dot_dimension_numbers<[1], [0], [0], [1], [0, 0, 1, 1], [], []>} : vector<24x128xbf16>, vector<128x32xbf16>, vector<24x32xf32> -> vector<24x32xf32>
    %12 = arith.addf %7, %11 : vector<24x32xf32>
    %c0_10 = arith.constant 0 : index
    %c2 = arith.constant 2 : index
    %c0_11 = arith.constant 0 : index
    %13 = vector.load %arg2[%c0_10, %c2, %c0_11] : memref<1x42x128xbf16, #tpu.memory_space<vmem>>, vector<1x24x128xbf16>
    %14 = vector.shape_cast %13 : vector<1x24x128xbf16> to vector<24x128xbf16>
    %c256 = arith.constant 256 : index
    %c0_12 = arith.constant 0 : index
    %15 = vector.load %arg3[%c256, %c0_12] : memref<1152x32xbf16, #tpu.memory_space<vmem>>, vector<128x32xbf16>
    %cst_13 = arith.constant dense<0.000000e+00> : vector<24x32xf32>
    %16 = tpu.matmul %14, %15, %cst_13 {dimension_numbers = #tpu.dot_dimension_numbers<[1], [0], [0], [1], [0, 0, 1, 1], [], []>} : vector<24x128xbf16>, vector<128x32xbf16>, vector<24x32xf32> -> vector<24x32xf32>
    %17 = arith.addf %12, %16 : vector<24x32xf32>
    %c0_14 = arith.constant 0 : index
    %c6 = arith.constant 6 : index
    %c0_15 = arith.constant 0 : index
    %18 = vector.load %arg2[%c0_14, %c6, %c0_15] : memref<1x42x128xbf16, #tpu.memory_space<vmem>>, vector<1x24x128xbf16>
    %19 = vector.shape_cast %18 : vector<1x24x128xbf16> to vector<24x128xbf16>
    %c384 = arith.constant 384 : index
    %c0_16 = arith.constant 0 : index
    %20 = vector.load %arg3[%c384, %c0_16] : memref<1152x32xbf16, #tpu.memory_space<vmem>>, vector<128x32xbf16>
    %cst_17 = arith.constant dense<0.000000e+00> : vector<24x32xf32>
    %21 = tpu.matmul %19, %20, %cst_17 {dimension_numbers = #tpu.dot_dimension_numbers<[1], [0], [0], [1], [0, 0, 1, 1], [], []>} : vector<24x128xbf16>, vector<128x32xbf16>, vector<24x32xf32> -> vector<24x32xf32>
    %22 = arith.addf %17, %21 : vector<24x32xf32>
    %c0_18 = arith.constant 0 : index
    %c7 = arith.constant 7 : index
    %c0_19 = arith.constant 0 : index
    %23 = vector.load %arg2[%c0_18, %c7, %c0_19] : memref<1x42x128xbf16, #tpu.memory_space<vmem>>, vector<1x24x128xbf16>
    %24 = vector.shape_cast %23 : vector<1x24x128xbf16> to vector<24x128xbf16>
    %c512 = arith.constant 512 : index
    %c0_20 = arith.constant 0 : index
    %25 = vector.load %arg3[%c512, %c0_20] : memref<1152x32xbf16, #tpu.memory_space<vmem>>, vector<128x32xbf16>
    %cst_21 = arith.constant dense<0.000000e+00> : vector<24x32xf32>
    %26 = tpu.matmul %24, %25, %cst_21 {dimension_numbers = #tpu.dot_dimension_numbers<[1], [0], [0], [1], [0, 0, 1, 1], [], []>} : vector<24x128xbf16>, vector<128x32xbf16>, vector<24x32xf32> -> vector<24x32xf32>
    %27 = arith.addf %22, %26 : vector<24x32xf32>
    %c0_22 = arith.constant 0 : index
    %c8 = arith.constant 8 : index
    %c0_23 = arith.constant 0 : index
    %28 = vector.load %arg2[%c0_22, %c8, %c0_23] : memref<1x42x128xbf16, #tpu.memory_space<vmem>>, vector<1x24x128xbf16>
    %29 = vector.shape_cast %28 : vector<1x24x128xbf16> to vector<24x128xbf16>
    %c640 = arith.constant 640 : index
    %c0_24 = arith.constant 0 : index
    %30 = vector.load %arg3[%c640, %c0_24] : memref<1152x32xbf16, #tpu.memory_space<vmem>>, vector<128x32xbf16>
    %cst_25 = arith.constant dense<0.000000e+00> : vector<24x32xf32>
    %31 = tpu.matmul %29, %30, %cst_25 {dimension_numbers = #tpu.dot_dimension_numbers<[1], [0], [0], [1], [0, 0, 1, 1], [], []>} : vector<24x128xbf16>, vector<128x32xbf16>, vector<24x32xf32> -> vector<24x32xf32>
    %32 = arith.addf %27, %31 : vector<24x32xf32>
    %c0_26 = arith.constant 0 : index
    %c12 = arith.constant 12 : index
    %c0_27 = arith.constant 0 : index
    %33 = vector.load %arg2[%c0_26, %c12, %c0_27] : memref<1x42x128xbf16, #tpu.memory_space<vmem>>, vector<1x24x128xbf16>
    %34 = vector.shape_cast %33 : vector<1x24x128xbf16> to vector<24x128xbf16>
    %c768 = arith.constant 768 : index
    %c0_28 = arith.constant 0 : index
    %35 = vector.load %arg3[%c768, %c0_28] : memref<1152x32xbf16, #tpu.memory_space<vmem>>, vector<128x32xbf16>
    %cst_29 = arith.constant dense<0.000000e+00> : vector<24x32xf32>
    %36 = tpu.matmul %34, %35, %cst_29 {dimension_numbers = #tpu.dot_dimension_numbers<[1], [0], [0], [1], [0, 0, 1, 1], [], []>} : vector<24x128xbf16>, vector<128x32xbf16>, vector<24x32xf32> -> vector<24x32xf32>
    %37 = arith.addf %32, %36 : vector<24x32xf32>
    %c0_30 = arith.constant 0 : index
    %c13 = arith.constant 13 : index
    %c0_31 = arith.constant 0 : index
    %38 = vector.load %arg2[%c0_30, %c13, %c0_31] : memref<1x42x128xbf16, #tpu.memory_space<vmem>>, vector<1x24x128xbf16>
    %39 = vector.shape_cast %38 : vector<1x24x128xbf16> to vector<24x128xbf16>
    %c896 = arith.constant 896 : index
    %c0_32 = arith.constant 0 : index
    %40 = vector.load %arg3[%c896, %c0_32] : memref<1152x32xbf16, #tpu.memory_space<vmem>>, vector<128x32xbf16>
    %cst_33 = arith.constant dense<0.000000e+00> : vector<24x32xf32>
    %41 = tpu.matmul %39, %40, %cst_33 {dimension_numbers = #tpu.dot_dimension_numbers<[1], [0], [0], [1], [0, 0, 1, 1], [], []>} : vector<24x128xbf16>, vector<128x32xbf16>, vector<24x32xf32> -> vector<24x32xf32>
    %42 = arith.addf %37, %41 : vector<24x32xf32>
    %c0_34 = arith.constant 0 : index
    %c14 = arith.constant 14 : index
    %c0_35 = arith.constant 0 : index
    %43 = vector.load %arg2[%c0_34, %c14, %c0_35] : memref<1x42x128xbf16, #tpu.memory_space<vmem>>, vector<1x24x128xbf16>
    %44 = vector.shape_cast %43 : vector<1x24x128xbf16> to vector<24x128xbf16>
    %c1024 = arith.constant 1024 : index
    %c0_36 = arith.constant 0 : index
    %45 = vector.load %arg3[%c1024, %c0_36] : memref<1152x32xbf16, #tpu.memory_space<vmem>>, vector<128x32xbf16>
    %cst_37 = arith.constant dense<0.000000e+00> : vector<24x32xf32>
    %46 = tpu.matmul %44, %45, %cst_37 {dimension_numbers = #tpu.dot_dimension_numbers<[1], [0], [0], [1], [0, 0, 1, 1], [], []>} : vector<24x128xbf16>, vector<128x32xbf16>, vector<24x32xf32> -> vector<24x32xf32>
    %47 = arith.addf %42, %46 : vector<24x32xf32>
    %cst_38 = arith.constant 0.000000e+00 : f32
    %48 = vector.broadcast %cst_38 : f32 to vector<24x32xf32>
    %49 = arith.maximumf %47, %48 : vector<24x32xf32>
    %50 = arith.truncf %49 : vector<24x32xf32> to vector<24x32xbf16>
    %c0_39 = arith.constant 0 : index
    %c0_40 = arith.constant 0 : index
    %c0_41 = arith.constant 0 : index
    %51 = vector.load %arg5[%c0_39, %c0_40, %c0_41] : memref<1x24x32xbf16, #tpu.memory_space<vmem>>, vector<1x24x32xbf16>
    %52 = vector.shape_cast %51 : vector<1x24x32xbf16> to vector<24x32xbf16>
    %53 = vector.shape_cast %50 : vector<24x32xbf16> to vector<1x24x32xbf16>
    tpu.vector_store %arg5[%c0_39, %c0_40, %c0_41], %53 {strides = array<i32>} : memref<1x24x32xbf16, #tpu.memory_space<vmem>>, vector<1x24x32xbf16>,
    return
  }
  func.func @transform_0(%arg0: i32, %arg1: i32) -> (i32, i32, i32) {
    %c0_i32 = arith.constant 0 : i32
    %c0_i32_0 = arith.constant 0 : i32
    %c0_i32_1 = arith.constant 0 : i32
    return %arg0, %c0_i32, %c0_i32_0 : i32, i32, i32
  }
  func.func @transform_1(%arg0: i32, %arg1: i32) -> (i32, i32) {
    %c0_i32 = arith.constant 0 : i32
    %c0_i32_0 = arith.constant 0 : i32
    %c0_i32_1 = arith.constant 0 : i32
    return %c0_i32, %c0_i32_0 : i32, i32
  }
  func.func @transform_2(%arg0: i32, %arg1: i32) -> (i32, i32) {
    %c0_i32 = arith.constant 0 : i32
    %c0_i32_0 = arith.constant 0 : i32
    %c0_i32_1 = arith.constant 0 : i32
    return %c0_i32, %c0_i32_0 : i32, i32
  }
  func.func @transform_3(%arg0: i32, %arg1: i32) -> (i32, i32, i32) {
    %c0_i32 = arith.constant 0 : i32
    %c0_i32_0 = arith.constant 0 : i32
    return %arg0, %arg1, %c0_i32 : i32, i32, i32
  }
}

module attributes {stable_mosaic.version = 11 : i64} {
  func.func @_fused_conv_kernel(%arg0: i32, %arg1: i32, %arg2: memref<1x20x128xbf16, #tpu.memory_space<vmem>>, %arg3: memref<1152x32xbf16, #tpu.memory_space<vmem>>, %arg4: memref<1x32xf32, #tpu.memory_space<vmem>>, %arg5: memref<1x8x32xbf16, #tpu.memory_space<vmem>>) attributes {dimension_semantics = [#tpu.dimension_semantics<parallel>, #tpu.dimension_semantics<parallel>], iteration_bounds = array<i64: 2, 1>, scalar_prefetch = 0 : i64, scratch_operands = 0 : i64, tpu.core_type = #tpu.core_type<tc>, window_params = [{transform_indices = @transform_0, window_bounds = array<i64: 1, 20, 128>}, {pipeline_mode = #tpu.pipeline_mode<synchronous>, transform_indices = @transform_1, window_bounds = array<i64: 1152, 32>}, {pipeline_mode = #tpu.pipeline_mode<synchronous>, transform_indices = @transform_2, window_bounds = array<i64: 1, 32>}, {transform_indices = @transform_3, window_bounds = array<i64: 1, 8, 32>}]} {
    %c0 = arith.constant 0 : index
    %c0_0 = arith.constant 0 : index
    %0 = vector.load %arg4[%c0, %c0_0] : memref<1x32xf32, #tpu.memory_space<vmem>>, vector<1x32xf32>
    %1 = vector.shape_cast %0 : vector<1x32xf32> to vector<1x32xf32>
    %2 = vector.broadcast %1 : vector<1x32xf32> to vector<8x32xf32>
    %c0_1 = arith.constant 0 : index
    %c0_2 = arith.constant 0 : index
    %c0_3 = arith.constant 0 : index
    %3 = vector.load %arg2[%c0_1, %c0_2, %c0_3] : memref<1x20x128xbf16, #tpu.memory_space<vmem>>, vector<1x8x128xbf16>
    %4 = vector.shape_cast %3 : vector<1x8x128xbf16> to vector<8x128xbf16>
    %c0_4 = arith.constant 0 : index
    %c0_5 = arith.constant 0 : index
    %5 = vector.load %arg3[%c0_4, %c0_5] : memref<1152x32xbf16, #tpu.memory_space<vmem>>, vector<128x32xbf16>
    %cst = arith.constant dense<0.000000e+00> : vector<8x32xf32>
    %6 = tpu.matmul %4, %5, %cst {dimension_numbers = #tpu.dot_dimension_numbers<[1], [0], [0], [1], [0, 0, 1, 1], [], []>} : vector<8x128xbf16>, vector<128x32xbf16>, vector<8x32xf32> -> vector<8x32xf32>
    %7 = arith.addf %2, %6 : vector<8x32xf32>
    %c0_6 = arith.constant 0 : index
    %c1 = arith.constant 1 : index
    %c0_7 = arith.constant 0 : index
    %8 = vector.load %arg2[%c0_6, %c1, %c0_7] : memref<1x20x128xbf16, #tpu.memory_space<vmem>>, vector<1x8x128xbf16>
    %9 = vector.shape_cast %8 : vector<1x8x128xbf16> to vector<8x128xbf16>
    %c128 = arith.constant 128 : index
    %c0_8 = arith.constant 0 : index
    %10 = vector.load %arg3[%c128, %c0_8] : memref<1152x32xbf16, #tpu.memory_space<vmem>>, vector<128x32xbf16>
    %cst_9 = arith.constant dense<0.000000e+00> : vector<8x32xf32>
    %11 = tpu.matmul %9, %10, %cst_9 {dimension_numbers = #tpu.dot_dimension_numbers<[1], [0], [0], [1], [0, 0, 1, 1], [], []>} : vector<8x128xbf16>, vector<128x32xbf16>, vector<8x32xf32> -> vector<8x32xf32>
    %12 = arith.addf %7, %11 : vector<8x32xf32>
    %c0_10 = arith.constant 0 : index
    %c2 = arith.constant 2 : index
    %c0_11 = arith.constant 0 : index
    %13 = vector.load %arg2[%c0_10, %c2, %c0_11] : memref<1x20x128xbf16, #tpu.memory_space<vmem>>, vector<1x8x128xbf16>
    %14 = vector.shape_cast %13 : vector<1x8x128xbf16> to vector<8x128xbf16>
    %c256 = arith.constant 256 : index
    %c0_12 = arith.constant 0 : index
    %15 = vector.load %arg3[%c256, %c0_12] : memref<1152x32xbf16, #tpu.memory_space<vmem>>, vector<128x32xbf16>
    %cst_13 = arith.constant dense<0.000000e+00> : vector<8x32xf32>
    %16 = tpu.matmul %14, %15, %cst_13 {dimension_numbers = #tpu.dot_dimension_numbers<[1], [0], [0], [1], [0, 0, 1, 1], [], []>} : vector<8x128xbf16>, vector<128x32xbf16>, vector<8x32xf32> -> vector<8x32xf32>
    %17 = arith.addf %12, %16 : vector<8x32xf32>
    %c0_14 = arith.constant 0 : index
    %c4 = arith.constant 4 : index
    %c0_15 = arith.constant 0 : index
    %18 = vector.load %arg2[%c0_14, %c4, %c0_15] : memref<1x20x128xbf16, #tpu.memory_space<vmem>>, vector<1x8x128xbf16>
    %19 = vector.shape_cast %18 : vector<1x8x128xbf16> to vector<8x128xbf16>
    %c384 = arith.constant 384 : index
    %c0_16 = arith.constant 0 : index
    %20 = vector.load %arg3[%c384, %c0_16] : memref<1152x32xbf16, #tpu.memory_space<vmem>>, vector<128x32xbf16>
    %cst_17 = arith.constant dense<0.000000e+00> : vector<8x32xf32>
    %21 = tpu.matmul %19, %20, %cst_17 {dimension_numbers = #tpu.dot_dimension_numbers<[1], [0], [0], [1], [0, 0, 1, 1], [], []>} : vector<8x128xbf16>, vector<128x32xbf16>, vector<8x32xf32> -> vector<8x32xf32>
    %22 = arith.addf %17, %21 : vector<8x32xf32>
    %c0_18 = arith.constant 0 : index
    %c5 = arith.constant 5 : index
    %c0_19 = arith.constant 0 : index
    %23 = vector.load %arg2[%c0_18, %c5, %c0_19] : memref<1x20x128xbf16, #tpu.memory_space<vmem>>, vector<1x8x128xbf16>
    %24 = vector.shape_cast %23 : vector<1x8x128xbf16> to vector<8x128xbf16>
    %c512 = arith.constant 512 : index
    %c0_20 = arith.constant 0 : index
    %25 = vector.load %arg3[%c512, %c0_20] : memref<1152x32xbf16, #tpu.memory_space<vmem>>, vector<128x32xbf16>
    %cst_21 = arith.constant dense<0.000000e+00> : vector<8x32xf32>
    %26 = tpu.matmul %24, %25, %cst_21 {dimension_numbers = #tpu.dot_dimension_numbers<[1], [0], [0], [1], [0, 0, 1, 1], [], []>} : vector<8x128xbf16>, vector<128x32xbf16>, vector<8x32xf32> -> vector<8x32xf32>
    %27 = arith.addf %22, %26 : vector<8x32xf32>
    %c0_22 = arith.constant 0 : index
    %c6 = arith.constant 6 : index
    %c0_23 = arith.constant 0 : index
    %28 = vector.load %arg2[%c0_22, %c6, %c0_23] : memref<1x20x128xbf16, #tpu.memory_space<vmem>>, vector<1x8x128xbf16>
    %29 = vector.shape_cast %28 : vector<1x8x128xbf16> to vector<8x128xbf16>
    %c640 = arith.constant 640 : index
    %c0_24 = arith.constant 0 : index
    %30 = vector.load %arg3[%c640, %c0_24] : memref<1152x32xbf16, #tpu.memory_space<vmem>>, vector<128x32xbf16>
    %cst_25 = arith.constant dense<0.000000e+00> : vector<8x32xf32>
    %31 = tpu.matmul %29, %30, %cst_25 {dimension_numbers = #tpu.dot_dimension_numbers<[1], [0], [0], [1], [0, 0, 1, 1], [], []>} : vector<8x128xbf16>, vector<128x32xbf16>, vector<8x32xf32> -> vector<8x32xf32>
    %32 = arith.addf %27, %31 : vector<8x32xf32>
    %c0_26 = arith.constant 0 : index
    %c8 = arith.constant 8 : index
    %c0_27 = arith.constant 0 : index
    %33 = vector.load %arg2[%c0_26, %c8, %c0_27] : memref<1x20x128xbf16, #tpu.memory_space<vmem>>, vector<1x8x128xbf16>
    %34 = vector.shape_cast %33 : vector<1x8x128xbf16> to vector<8x128xbf16>
    %c768 = arith.constant 768 : index
    %c0_28 = arith.constant 0 : index
    %35 = vector.load %arg3[%c768, %c0_28] : memref<1152x32xbf16, #tpu.memory_space<vmem>>, vector<128x32xbf16>
    %cst_29 = arith.constant dense<0.000000e+00> : vector<8x32xf32>
    %36 = tpu.matmul %34, %35, %cst_29 {dimension_numbers = #tpu.dot_dimension_numbers<[1], [0], [0], [1], [0, 0, 1, 1], [], []>} : vector<8x128xbf16>, vector<128x32xbf16>, vector<8x32xf32> -> vector<8x32xf32>
    %37 = arith.addf %32, %36 : vector<8x32xf32>
    %c0_30 = arith.constant 0 : index
    %c9 = arith.constant 9 : index
    %c0_31 = arith.constant 0 : index
    %38 = vector.load %arg2[%c0_30, %c9, %c0_31] : memref<1x20x128xbf16, #tpu.memory_space<vmem>>, vector<1x8x128xbf16>
    %39 = vector.shape_cast %38 : vector<1x8x128xbf16> to vector<8x128xbf16>
    %c896 = arith.constant 896 : index
    %c0_32 = arith.constant 0 : index
    %40 = vector.load %arg3[%c896, %c0_32] : memref<1152x32xbf16, #tpu.memory_space<vmem>>, vector<128x32xbf16>
    %cst_33 = arith.constant dense<0.000000e+00> : vector<8x32xf32>
    %41 = tpu.matmul %39, %40, %cst_33 {dimension_numbers = #tpu.dot_dimension_numbers<[1], [0], [0], [1], [0, 0, 1, 1], [], []>} : vector<8x128xbf16>, vector<128x32xbf16>, vector<8x32xf32> -> vector<8x32xf32>
    %42 = arith.addf %37, %41 : vector<8x32xf32>
    %c0_34 = arith.constant 0 : index
    %c10 = arith.constant 10 : index
    %c0_35 = arith.constant 0 : index
    %43 = vector.load %arg2[%c0_34, %c10, %c0_35] : memref<1x20x128xbf16, #tpu.memory_space<vmem>>, vector<1x8x128xbf16>
    %44 = vector.shape_cast %43 : vector<1x8x128xbf16> to vector<8x128xbf16>
    %c1024 = arith.constant 1024 : index
    %c0_36 = arith.constant 0 : index
    %45 = vector.load %arg3[%c1024, %c0_36] : memref<1152x32xbf16, #tpu.memory_space<vmem>>, vector<128x32xbf16>
    %cst_37 = arith.constant dense<0.000000e+00> : vector<8x32xf32>
    %46 = tpu.matmul %44, %45, %cst_37 {dimension_numbers = #tpu.dot_dimension_numbers<[1], [0], [0], [1], [0, 0, 1, 1], [], []>} : vector<8x128xbf16>, vector<128x32xbf16>, vector<8x32xf32> -> vector<8x32xf32>
    %47 = arith.addf %42, %46 : vector<8x32xf32>
    %cst_38 = arith.constant 0.000000e+00 : f32
    %48 = vector.broadcast %cst_38 : f32 to vector<8x32xf32>
    %49 = arith.maximumf %47, %48 : vector<8x32xf32>
    %50 = arith.truncf %49 : vector<8x32xf32> to vector<8x32xbf16>
    %c0_39 = arith.constant 0 : index
    %c0_40 = arith.constant 0 : index
    %c0_41 = arith.constant 0 : index
    %51 = vector.load %arg5[%c0_39, %c0_40, %c0_41] : memref<1x8x32xbf16, #tpu.memory_space<vmem>>, vector<1x8x32xbf16>
    %52 = vector.shape_cast %51 : vector<1x8x32xbf16> to vector<8x32xbf16>
    %53 = vector.shape_cast %50 : vector<8x32xbf16> to vector<1x8x32xbf16>
    tpu.vector_store %arg5[%c0_39, %c0_40, %c0_41], %53 {strides = array<i32>} : memref<1x8x32xbf16, #tpu.memory_space<vmem>>, vector<1x8x32xbf16>,
    return
  }
  func.func @transform_0(%arg0: i32, %arg1: i32) -> (i32, i32, i32) {
    %c0_i32 = arith.constant 0 : i32
    %c0_i32_0 = arith.constant 0 : i32
    %c0_i32_1 = arith.constant 0 : i32
    return %arg0, %c0_i32, %c0_i32_0 : i32, i32, i32
  }
  func.func @transform_1(%arg0: i32, %arg1: i32) -> (i32, i32) {
    %c0_i32 = arith.constant 0 : i32
    %c0_i32_0 = arith.constant 0 : i32
    %c0_i32_1 = arith.constant 0 : i32
    return %c0_i32, %c0_i32_0 : i32, i32
  }
  func.func @transform_2(%arg0: i32, %arg1: i32) -> (i32, i32) {
    %c0_i32 = arith.constant 0 : i32
    %c0_i32_0 = arith.constant 0 : i32
    %c0_i32_1 = arith.constant 0 : i32
    return %c0_i32, %c0_i32_0 : i32, i32
  }
  func.func @transform_3(%arg0: i32, %arg1: i32) -> (i32, i32, i32) {
    %c0_i32 = arith.constant 0 : i32
    %c0_i32_0 = arith.constant 0 : i32
    return %arg0, %arg1, %c0_i32 : i32, i32, i32
  }
}

module attributes {stable_mosaic.version = 11 : i64} {
  func.func @_fused_conv_kernel(%arg0: i32, %arg1: i32, %arg2: memref<1x20x32xbf16, #tpu.memory_space<vmem>>, %arg3: memref<288x128xbf16, #tpu.memory_space<vmem>>, %arg4: memref<1x128xf32, #tpu.memory_space<vmem>>, %arg5: memref<1x8x128xbf16, #tpu.memory_space<vmem>>, %arg6: memref<8x288xbf16, #tpu.memory_space<vmem>>) attributes {dimension_semantics = [#tpu.dimension_semantics<parallel>, #tpu.dimension_semantics<parallel>], iteration_bounds = array<i64: 2, 1>, scalar_prefetch = 0 : i64, scratch_operands = 1 : i64, tpu.core_type = #tpu.core_type<tc>, window_params = [{transform_indices = @transform_0, window_bounds = array<i64: 1, 20, 32>}, {pipeline_mode = #tpu.pipeline_mode<synchronous>, transform_indices = @transform_1, window_bounds = array<i64: 288, 128>}, {pipeline_mode = #tpu.pipeline_mode<synchronous>, transform_indices = @transform_2, window_bounds = array<i64: 1, 128>}, {transform_indices = @transform_3, window_bounds = array<i64: 1, 8, 128>}]} {
    %c0 = arith.constant 0 : index
    %c0_0 = arith.constant 0 : index
    %0 = vector.load %arg4[%c0, %c0_0] : memref<1x128xf32, #tpu.memory_space<vmem>>, vector<1x128xf32>
    %1 = vector.shape_cast %0 : vector<1x128xf32> to vector<1x128xf32>
    %2 = vector.broadcast %1 : vector<1x128xf32> to vector<8x128xf32>
    %c0_1 = arith.constant 0 : index
    %c0_2 = arith.constant 0 : index
    %c0_3 = arith.constant 0 : index
    %3 = vector.load %arg2[%c0_1, %c0_2, %c0_3] : memref<1x20x32xbf16, #tpu.memory_space<vmem>>, vector<1x8x32xbf16>
    %4 = vector.shape_cast %3 : vector<1x8x32xbf16> to vector<8x32xbf16>
    %c0_4 = arith.constant 0 : index
    %c0_5 = arith.constant 0 : index
    %5 = vector.load %arg6[%c0_4, %c0_5] : memref<8x288xbf16, #tpu.memory_space<vmem>>, vector<8x32xbf16>
    tpu.vector_store %arg6[%c0_4, %c0_5], %4 {strides = array<i32>} : memref<8x288xbf16, #tpu.memory_space<vmem>>, vector<8x32xbf16>,
    %c0_6 = arith.constant 0 : index
    %c1 = arith.constant 1 : index
    %c0_7 = arith.constant 0 : index
    %6 = vector.load %arg2[%c0_6, %c1, %c0_7] : memref<1x20x32xbf16, #tpu.memory_space<vmem>>, vector<1x8x32xbf16>
    %7 = vector.shape_cast %6 : vector<1x8x32xbf16> to vector<8x32xbf16>
    %c0_8 = arith.constant 0 : index
    %c32 = arith.constant 32 : index
    %8 = vector.load %arg6[%c0_8, %c32] : memref<8x288xbf16, #tpu.memory_space<vmem>>, vector<8x32xbf16>
    tpu.vector_store %arg6[%c0_8, %c32], %7 {strides = array<i32>} : memref<8x288xbf16, #tpu.memory_space<vmem>>, vector<8x32xbf16>,
    %c0_9 = arith.constant 0 : index
    %c2 = arith.constant 2 : index
    %c0_10 = arith.constant 0 : index
    %9 = vector.load %arg2[%c0_9, %c2, %c0_10] : memref<1x20x32xbf16, #tpu.memory_space<vmem>>, vector<1x8x32xbf16>
    %10 = vector.shape_cast %9 : vector<1x8x32xbf16> to vector<8x32xbf16>
    %c0_11 = arith.constant 0 : index
    %c64 = arith.constant 64 : index
    %11 = vector.load %arg6[%c0_11, %c64] : memref<8x288xbf16, #tpu.memory_space<vmem>>, vector<8x32xbf16>
    tpu.vector_store %arg6[%c0_11, %c64], %10 {strides = array<i32>} : memref<8x288xbf16, #tpu.memory_space<vmem>>, vector<8x32xbf16>,
    %c0_12 = arith.constant 0 : index
    %c4 = arith.constant 4 : index
    %c0_13 = arith.constant 0 : index
    %12 = vector.load %arg2[%c0_12, %c4, %c0_13] : memref<1x20x32xbf16, #tpu.memory_space<vmem>>, vector<1x8x32xbf16>
    %13 = vector.shape_cast %12 : vector<1x8x32xbf16> to vector<8x32xbf16>
    %c0_14 = arith.constant 0 : index
    %c96 = arith.constant 96 : index
    %14 = vector.load %arg6[%c0_14, %c96] : memref<8x288xbf16, #tpu.memory_space<vmem>>, vector<8x32xbf16>
    tpu.vector_store %arg6[%c0_14, %c96], %13 {strides = array<i32>} : memref<8x288xbf16, #tpu.memory_space<vmem>>, vector<8x32xbf16>,
    %c0_15 = arith.constant 0 : index
    %c5 = arith.constant 5 : index
    %c0_16 = arith.constant 0 : index
    %15 = vector.load %arg2[%c0_15, %c5, %c0_16] : memref<1x20x32xbf16, #tpu.memory_space<vmem>>, vector<1x8x32xbf16>
    %16 = vector.shape_cast %15 : vector<1x8x32xbf16> to vector<8x32xbf16>
    %c0_17 = arith.constant 0 : index
    %c128 = arith.constant 128 : index
    %17 = vector.load %arg6[%c0_17, %c128] : memref<8x288xbf16, #tpu.memory_space<vmem>>, vector<8x32xbf16>
    tpu.vector_store %arg6[%c0_17, %c128], %16 {strides = array<i32>} : memref<8x288xbf16, #tpu.memory_space<vmem>>, vector<8x32xbf16>,
    %c0_18 = arith.constant 0 : index
    %c6 = arith.constant 6 : index
    %c0_19 = arith.constant 0 : index
    %18 = vector.load %arg2[%c0_18, %c6, %c0_19] : memref<1x20x32xbf16, #tpu.memory_space<vmem>>, vector<1x8x32xbf16>
    %19 = vector.shape_cast %18 : vector<1x8x32xbf16> to vector<8x32xbf16>
    %c0_20 = arith.constant 0 : index
    %c160 = arith.constant 160 : index
    %20 = vector.load %arg6[%c0_20, %c160] : memref<8x288xbf16, #tpu.memory_space<vmem>>, vector<8x32xbf16>
    tpu.vector_store %arg6[%c0_20, %c160], %19 {strides = array<i32>} : memref<8x288xbf16, #tpu.memory_space<vmem>>, vector<8x32xbf16>,
    %c0_21 = arith.constant 0 : index
    %c8 = arith.constant 8 : index
    %c0_22 = arith.constant 0 : index
    %21 = vector.load %arg2[%c0_21, %c8, %c0_22] : memref<1x20x32xbf16, #tpu.memory_space<vmem>>, vector<1x8x32xbf16>
    %22 = vector.shape_cast %21 : vector<1x8x32xbf16> to vector<8x32xbf16>
    %c0_23 = arith.constant 0 : index
    %c192 = arith.constant 192 : index
    %23 = vector.load %arg6[%c0_23, %c192] : memref<8x288xbf16, #tpu.memory_space<vmem>>, vector<8x32xbf16>
    tpu.vector_store %arg6[%c0_23, %c192], %22 {strides = array<i32>} : memref<8x288xbf16, #tpu.memory_space<vmem>>, vector<8x32xbf16>,
    %c0_24 = arith.constant 0 : index
    %c9 = arith.constant 9 : index
    %c0_25 = arith.constant 0 : index
    %24 = vector.load %arg2[%c0_24, %c9, %c0_25] : memref<1x20x32xbf16, #tpu.memory_space<vmem>>, vector<1x8x32xbf16>
    %25 = vector.shape_cast %24 : vector<1x8x32xbf16> to vector<8x32xbf16>
    %c0_26 = arith.constant 0 : index
    %c224 = arith.constant 224 : index
    %26 = vector.load %arg6[%c0_26, %c224] : memref<8x288xbf16, #tpu.memory_space<vmem>>, vector<8x32xbf16>
    tpu.vector_store %arg6[%c0_26, %c224], %25 {strides = array<i32>} : memref<8x288xbf16, #tpu.memory_space<vmem>>, vector<8x32xbf16>,
    %c0_27 = arith.constant 0 : index
    %c10 = arith.constant 10 : index
    %c0_28 = arith.constant 0 : index
    %27 = vector.load %arg2[%c0_27, %c10, %c0_28] : memref<1x20x32xbf16, #tpu.memory_space<vmem>>, vector<1x8x32xbf16>
    %28 = vector.shape_cast %27 : vector<1x8x32xbf16> to vector<8x32xbf16>
    %c0_29 = arith.constant 0 : index
    %c256 = arith.constant 256 : index
    %29 = vector.load %arg6[%c0_29, %c256] : memref<8x288xbf16, #tpu.memory_space<vmem>>, vector<8x32xbf16>
    tpu.vector_store %arg6[%c0_29, %c256], %28 {strides = array<i32>} : memref<8x288xbf16, #tpu.memory_space<vmem>>, vector<8x32xbf16>,
    %c0_30 = arith.constant 0 : index
    %c0_31 = arith.constant 0 : index
    %30 = vector.load %arg6[%c0_30, %c0_31] : memref<8x288xbf16, #tpu.memory_space<vmem>>, vector<8x288xbf16>
    %c0_32 = arith.constant 0 : index
    %c0_33 = arith.constant 0 : index
    %31 = vector.load %arg3[%c0_32, %c0_33] : memref<288x128xbf16, #tpu.memory_space<vmem>>, vector<288x128xbf16>
    %cst = arith.constant dense<0.000000e+00> : vector<8x128xf32>
    %32 = tpu.matmul %30, %31, %cst {dimension_numbers = #tpu.dot_dimension_numbers<[1], [0], [0], [1], [0, 0, 1, 1], [], []>} : vector<8x288xbf16>, vector<288x128xbf16>, vector<8x128xf32> -> vector<8x128xf32>
    %33 = arith.addf %2, %32 : vector<8x128xf32>
    %cst_34 = arith.constant 0.000000e+00 : f32
    %34 = vector.broadcast %cst_34 : f32 to vector<8x128xf32>
    %35 = arith.maximumf %33, %34 : vector<8x128xf32>
    %36 = arith.truncf %35 : vector<8x128xf32> to vector<8x128xbf16>
    %c0_35 = arith.constant 0 : index
    %c0_36 = arith.constant 0 : index
    %c0_37 = arith.constant 0 : index
    %37 = vector.load %arg5[%c0_35, %c0_36, %c0_37] : memref<1x8x128xbf16, #tpu.memory_space<vmem>>, vector<1x8x128xbf16>
    %38 = vector.shape_cast %37 : vector<1x8x128xbf16> to vector<8x128xbf16>
    %39 = vector.shape_cast %36 : vector<8x128xbf16> to vector<1x8x128xbf16>
    tpu.vector_store %arg5[%c0_35, %c0_36, %c0_37], %39 {strides = array<i32>} : memref<1x8x128xbf16, #tpu.memory_space<vmem>>, vector<1x8x128xbf16>,
    return
  }
  func.func @transform_0(%arg0: i32, %arg1: i32) -> (i32, i32, i32) {
    %c0_i32 = arith.constant 0 : i32
    %c0_i32_0 = arith.constant 0 : i32
    %c0_i32_1 = arith.constant 0 : i32
    return %arg0, %c0_i32, %c0_i32_0 : i32, i32, i32
  }
  func.func @transform_1(%arg0: i32, %arg1: i32) -> (i32, i32) {
    %c0_i32 = arith.constant 0 : i32
    %c0_i32_0 = arith.constant 0 : i32
    %c0_i32_1 = arith.constant 0 : i32
    return %c0_i32, %c0_i32_0 : i32, i32
  }
  func.func @transform_2(%arg0: i32, %arg1: i32) -> (i32, i32) {
    %c0_i32 = arith.constant 0 : i32
    %c0_i32_0 = arith.constant 0 : i32
    %c0_i32_1 = arith.constant 0 : i32
    return %c0_i32, %c0_i32_0 : i32, i32
  }
  func.func @transform_3(%arg0: i32, %arg1: i32) -> (i32, i32, i32) {
    %c0_i32 = arith.constant 0 : i32
    %c0_i32_0 = arith.constant 0 : i32
    return %arg0, %arg1, %c0_i32 : i32, i32, i32
  }
}

module attributes {stable_mosaic.version = 11 : i64} {
  func.func @_fused_conv_kernel(%arg0: i32, %arg1: i32, %arg2: memref<1x42x32xbf16, #tpu.memory_space<vmem>>, %arg3: memref<288x128xbf16, #tpu.memory_space<vmem>>, %arg4: memref<1x128xf32, #tpu.memory_space<vmem>>, %arg5: memref<1x24x128xbf16, #tpu.memory_space<vmem>>, %arg6: memref<24x288xbf16, #tpu.memory_space<vmem>>) attributes {dimension_semantics = [#tpu.dimension_semantics<parallel>, #tpu.dimension_semantics<parallel>], iteration_bounds = array<i64: 2, 1>, scalar_prefetch = 0 : i64, scratch_operands = 1 : i64, tpu.core_type = #tpu.core_type<tc>, window_params = [{transform_indices = @transform_0, window_bounds = array<i64: 1, 42, 32>}, {pipeline_mode = #tpu.pipeline_mode<synchronous>, transform_indices = @transform_1, window_bounds = array<i64: 288, 128>}, {pipeline_mode = #tpu.pipeline_mode<synchronous>, transform_indices = @transform_2, window_bounds = array<i64: 1, 128>}, {transform_indices = @transform_3, window_bounds = array<i64: 1, 24, 128>}]} {
    %c0 = arith.constant 0 : index
    %c0_0 = arith.constant 0 : index
    %0 = vector.load %arg4[%c0, %c0_0] : memref<1x128xf32, #tpu.memory_space<vmem>>, vector<1x128xf32>
    %1 = vector.shape_cast %0 : vector<1x128xf32> to vector<1x128xf32>
    %2 = vector.broadcast %1 : vector<1x128xf32> to vector<24x128xf32>
    %c0_1 = arith.constant 0 : index
    %c0_2 = arith.constant 0 : index
    %c0_3 = arith.constant 0 : index
    %3 = vector.load %arg2[%c0_1, %c0_2, %c0_3] : memref<1x42x32xbf16, #tpu.memory_space<vmem>>, vector<1x24x32xbf16>
    %4 = vector.shape_cast %3 : vector<1x24x32xbf16> to vector<24x32xbf16>
    %c0_4 = arith.constant 0 : index
    %c0_5 = arith.constant 0 : index
    %5 = vector.load %arg6[%c0_4, %c0_5] : memref<24x288xbf16, #tpu.memory_space<vmem>>, vector<24x32xbf16>
    tpu.vector_store %arg6[%c0_4, %c0_5], %4 {strides = array<i32>} : memref<24x288xbf16, #tpu.memory_space<vmem>>, vector<24x32xbf16>,
    %c0_6 = arith.constant 0 : index
    %c1 = arith.constant 1 : index
    %c0_7 = arith.constant 0 : index
    %6 = vector.load %arg2[%c0_6, %c1, %c0_7] : memref<1x42x32xbf16, #tpu.memory_space<vmem>>, vector<1x24x32xbf16>
    %7 = vector.shape_cast %6 : vector<1x24x32xbf16> to vector<24x32xbf16>
    %c0_8 = arith.constant 0 : index
    %c32 = arith.constant 32 : index
    %8 = vector.load %arg6[%c0_8, %c32] : memref<24x288xbf16, #tpu.memory_space<vmem>>, vector<24x32xbf16>
    tpu.vector_store %arg6[%c0_8, %c32], %7 {strides = array<i32>} : memref<24x288xbf16, #tpu.memory_space<vmem>>, vector<24x32xbf16>,
    %c0_9 = arith.constant 0 : index
    %c2 = arith.constant 2 : index
    %c0_10 = arith.constant 0 : index
    %9 = vector.load %arg2[%c0_9, %c2, %c0_10] : memref<1x42x32xbf16, #tpu.memory_space<vmem>>, vector<1x24x32xbf16>
    %10 = vector.shape_cast %9 : vector<1x24x32xbf16> to vector<24x32xbf16>
    %c0_11 = arith.constant 0 : index
    %c64 = arith.constant 64 : index
    %11 = vector.load %arg6[%c0_11, %c64] : memref<24x288xbf16, #tpu.memory_space<vmem>>, vector<24x32xbf16>
    tpu.vector_store %arg6[%c0_11, %c64], %10 {strides = array<i32>} : memref<24x288xbf16, #tpu.memory_space<vmem>>, vector<24x32xbf16>,
    %c0_12 = arith.constant 0 : index
    %c6 = arith.constant 6 : index
    %c0_13 = arith.constant 0 : index
    %12 = vector.load %arg2[%c0_12, %c6, %c0_13] : memref<1x42x32xbf16, #tpu.memory_space<vmem>>, vector<1x24x32xbf16>
    %13 = vector.shape_cast %12 : vector<1x24x32xbf16> to vector<24x32xbf16>
    %c0_14 = arith.constant 0 : index
    %c96 = arith.constant 96 : index
    %14 = vector.load %arg6[%c0_14, %c96] : memref<24x288xbf16, #tpu.memory_space<vmem>>, vector<24x32xbf16>
    tpu.vector_store %arg6[%c0_14, %c96], %13 {strides = array<i32>} : memref<24x288xbf16, #tpu.memory_space<vmem>>, vector<24x32xbf16>,
    %c0_15 = arith.constant 0 : index
    %c7 = arith.constant 7 : index
    %c0_16 = arith.constant 0 : index
    %15 = vector.load %arg2[%c0_15, %c7, %c0_16] : memref<1x42x32xbf16, #tpu.memory_space<vmem>>, vector<1x24x32xbf16>
    %16 = vector.shape_cast %15 : vector<1x24x32xbf16> to vector<24x32xbf16>
    %c0_17 = arith.constant 0 : index
    %c128 = arith.constant 128 : index
    %17 = vector.load %arg6[%c0_17, %c128] : memref<24x288xbf16, #tpu.memory_space<vmem>>, vector<24x32xbf16>
    tpu.vector_store %arg6[%c0_17, %c128], %16 {strides = array<i32>} : memref<24x288xbf16, #tpu.memory_space<vmem>>, vector<24x32xbf16>,
    %c0_18 = arith.constant 0 : index
    %c8 = arith.constant 8 : index
    %c0_19 = arith.constant 0 : index
    %18 = vector.load %arg2[%c0_18, %c8, %c0_19] : memref<1x42x32xbf16, #tpu.memory_space<vmem>>, vector<1x24x32xbf16>
    %19 = vector.shape_cast %18 : vector<1x24x32xbf16> to vector<24x32xbf16>
    %c0_20 = arith.constant 0 : index
    %c160 = arith.constant 160 : index
    %20 = vector.load %arg6[%c0_20, %c160] : memref<24x288xbf16, #tpu.memory_space<vmem>>, vector<24x32xbf16>
    tpu.vector_store %arg6[%c0_20, %c160], %19 {strides = array<i32>} : memref<24x288xbf16, #tpu.memory_space<vmem>>, vector<24x32xbf16>,
    %c0_21 = arith.constant 0 : index
    %c12 = arith.constant 12 : index
    %c0_22 = arith.constant 0 : index
    %21 = vector.load %arg2[%c0_21, %c12, %c0_22] : memref<1x42x32xbf16, #tpu.memory_space<vmem>>, vector<1x24x32xbf16>
    %22 = vector.shape_cast %21 : vector<1x24x32xbf16> to vector<24x32xbf16>
    %c0_23 = arith.constant 0 : index
    %c192 = arith.constant 192 : index
    %23 = vector.load %arg6[%c0_23, %c192] : memref<24x288xbf16, #tpu.memory_space<vmem>>, vector<24x32xbf16>
    tpu.vector_store %arg6[%c0_23, %c192], %22 {strides = array<i32>} : memref<24x288xbf16, #tpu.memory_space<vmem>>, vector<24x32xbf16>,
    %c0_24 = arith.constant 0 : index
    %c13 = arith.constant 13 : index
    %c0_25 = arith.constant 0 : index
    %24 = vector.load %arg2[%c0_24, %c13, %c0_25] : memref<1x42x32xbf16, #tpu.memory_space<vmem>>, vector<1x24x32xbf16>
    %25 = vector.shape_cast %24 : vector<1x24x32xbf16> to vector<24x32xbf16>
    %c0_26 = arith.constant 0 : index
    %c224 = arith.constant 224 : index
    %26 = vector.load %arg6[%c0_26, %c224] : memref<24x288xbf16, #tpu.memory_space<vmem>>, vector<24x32xbf16>
    tpu.vector_store %arg6[%c0_26, %c224], %25 {strides = array<i32>} : memref<24x288xbf16, #tpu.memory_space<vmem>>, vector<24x32xbf16>,
    %c0_27 = arith.constant 0 : index
    %c14 = arith.constant 14 : index
    %c0_28 = arith.constant 0 : index
    %27 = vector.load %arg2[%c0_27, %c14, %c0_28] : memref<1x42x32xbf16, #tpu.memory_space<vmem>>, vector<1x24x32xbf16>
    %28 = vector.shape_cast %27 : vector<1x24x32xbf16> to vector<24x32xbf16>
    %c0_29 = arith.constant 0 : index
    %c256 = arith.constant 256 : index
    %29 = vector.load %arg6[%c0_29, %c256] : memref<24x288xbf16, #tpu.memory_space<vmem>>, vector<24x32xbf16>
    tpu.vector_store %arg6[%c0_29, %c256], %28 {strides = array<i32>} : memref<24x288xbf16, #tpu.memory_space<vmem>>, vector<24x32xbf16>,
    %c0_30 = arith.constant 0 : index
    %c0_31 = arith.constant 0 : index
    %30 = vector.load %arg6[%c0_30, %c0_31] : memref<24x288xbf16, #tpu.memory_space<vmem>>, vector<24x288xbf16>
    %c0_32 = arith.constant 0 : index
    %c0_33 = arith.constant 0 : index
    %31 = vector.load %arg3[%c0_32, %c0_33] : memref<288x128xbf16, #tpu.memory_space<vmem>>, vector<288x128xbf16>
    %cst = arith.constant dense<0.000000e+00> : vector<24x128xf32>
    %32 = tpu.matmul %30, %31, %cst {dimension_numbers = #tpu.dot_dimension_numbers<[1], [0], [0], [1], [0, 0, 1, 1], [], []>} : vector<24x288xbf16>, vector<288x128xbf16>, vector<24x128xf32> -> vector<24x128xf32>
    %33 = arith.addf %2, %32 : vector<24x128xf32>
    %cst_34 = arith.constant 0.000000e+00 : f32
    %34 = vector.broadcast %cst_34 : f32 to vector<24x128xf32>
    %35 = arith.maximumf %33, %34 : vector<24x128xf32>
    %36 = arith.truncf %35 : vector<24x128xf32> to vector<24x128xbf16>
    %c0_35 = arith.constant 0 : index
    %c0_36 = arith.constant 0 : index
    %c0_37 = arith.constant 0 : index
    %37 = vector.load %arg5[%c0_35, %c0_36, %c0_37] : memref<1x24x128xbf16, #tpu.memory_space<vmem>>, vector<1x24x128xbf16>
    %38 = vector.shape_cast %37 : vector<1x24x128xbf16> to vector<24x128xbf16>
    %39 = vector.shape_cast %36 : vector<24x128xbf16> to vector<1x24x128xbf16>
    tpu.vector_store %arg5[%c0_35, %c0_36, %c0_37], %39 {strides = array<i32>} : memref<1x24x128xbf16, #tpu.memory_space<vmem>>, vector<1x24x128xbf16>,
    return
  }
  func.func @transform_0(%arg0: i32, %arg1: i32) -> (i32, i32, i32) {
    %c0_i32 = arith.constant 0 : i32
    %c0_i32_0 = arith.constant 0 : i32
    %c0_i32_1 = arith.constant 0 : i32
    return %arg0, %c0_i32, %c0_i32_0 : i32, i32, i32
  }
  func.func @transform_1(%arg0: i32, %arg1: i32) -> (i32, i32) {
    %c0_i32 = arith.constant 0 : i32
    %c0_i32_0 = arith.constant 0 : i32
    %c0_i32_1 = arith.constant 0 : i32
    return %c0_i32, %c0_i32_0 : i32, i32
  }
  func.func @transform_2(%arg0: i32, %arg1: i32) -> (i32, i32) {
    %c0_i32 = arith.constant 0 : i32
    %c0_i32_0 = arith.constant 0 : i32
    %c0_i32_1 = arith.constant 0 : i32
    return %c0_i32, %c0_i32_0 : i32, i32
  }
  func.func @transform_3(%arg0: i32, %arg1: i32) -> (i32, i32, i32) {
    %c0_i32 = arith.constant 0 : i32
    %c0_i32_0 = arith.constant 0 : i32
    return %arg0, %arg1, %c0_i32 : i32, i32, i32
  }
}

module attributes {stable_mosaic.version = 11 : i64} {
  func.func @_fused_conv_kernel(%arg0: i32, %arg1: i32, %arg2: memref<1x110x32xbf16, #tpu.memory_space<vmem>>, %arg3: memref<288x128xbf16, #tpu.memory_space<vmem>>, %arg4: memref<1x128xf32, #tpu.memory_space<vmem>>, %arg5: memref<1x80x128xbf16, #tpu.memory_space<vmem>>, %arg6: memref<80x288xbf16, #tpu.memory_space<vmem>>) attributes {dimension_semantics = [#tpu.dimension_semantics<parallel>, #tpu.dimension_semantics<parallel>], iteration_bounds = array<i64: 2, 1>, scalar_prefetch = 0 : i64, scratch_operands = 1 : i64, tpu.core_type = #tpu.core_type<tc>, window_params = [{transform_indices = @transform_0, window_bounds = array<i64: 1, 110, 32>}, {pipeline_mode = #tpu.pipeline_mode<synchronous>, transform_indices = @transform_1, window_bounds = array<i64: 288, 128>}, {pipeline_mode = #tpu.pipeline_mode<synchronous>, transform_indices = @transform_2, window_bounds = array<i64: 1, 128>}, {transform_indices = @transform_3, window_bounds = array<i64: 1, 80, 128>}]} {
    %c0 = arith.constant 0 : index
    %c0_0 = arith.constant 0 : index
    %0 = vector.load %arg4[%c0, %c0_0] : memref<1x128xf32, #tpu.memory_space<vmem>>, vector<1x128xf32>
    %1 = vector.shape_cast %0 : vector<1x128xf32> to vector<1x128xf32>
    %2 = vector.broadcast %1 : vector<1x128xf32> to vector<80x128xf32>
    %c0_1 = arith.constant 0 : index
    %c0_2 = arith.constant 0 : index
    %c0_3 = arith.constant 0 : index
    %3 = vector.load %arg2[%c0_1, %c0_2, %c0_3] : memref<1x110x32xbf16, #tpu.memory_space<vmem>>, vector<1x80x32xbf16>
    %4 = vector.shape_cast %3 : vector<1x80x32xbf16> to vector<80x32xbf16>
    %c0_4 = arith.constant 0 : index
    %c0_5 = arith.constant 0 : index
    %5 = vector.load %arg6[%c0_4, %c0_5] : memref<80x288xbf16, #tpu.memory_space<vmem>>, vector<80x32xbf16>
    tpu.vector_store %arg6[%c0_4, %c0_5], %4 {strides = array<i32>} : memref<80x288xbf16, #tpu.memory_space<vmem>>, vector<80x32xbf16>,
    %c0_6 = arith.constant 0 : index
    %c1 = arith.constant 1 : index
    %c0_7 = arith.constant 0 : index
    %6 = vector.load %arg2[%c0_6, %c1, %c0_7] : memref<1x110x32xbf16, #tpu.memory_space<vmem>>, vector<1x80x32xbf16>
    %7 = vector.shape_cast %6 : vector<1x80x32xbf16> to vector<80x32xbf16>
    %c0_8 = arith.constant 0 : index
    %c32 = arith.constant 32 : index
    %8 = vector.load %arg6[%c0_8, %c32] : memref<80x288xbf16, #tpu.memory_space<vmem>>, vector<80x32xbf16>
    tpu.vector_store %arg6[%c0_8, %c32], %7 {strides = array<i32>} : memref<80x288xbf16, #tpu.memory_space<vmem>>, vector<80x32xbf16>,
    %c0_9 = arith.constant 0 : index
    %c2 = arith.constant 2 : index
    %c0_10 = arith.constant 0 : index
    %9 = vector.load %arg2[%c0_9, %c2, %c0_10] : memref<1x110x32xbf16, #tpu.memory_space<vmem>>, vector<1x80x32xbf16>
    %10 = vector.shape_cast %9 : vector<1x80x32xbf16> to vector<80x32xbf16>
    %c0_11 = arith.constant 0 : index
    %c64 = arith.constant 64 : index
    %11 = vector.load %arg6[%c0_11, %c64] : memref<80x288xbf16, #tpu.memory_space<vmem>>, vector<80x32xbf16>
    tpu.vector_store %arg6[%c0_11, %c64], %10 {strides = array<i32>} : memref<80x288xbf16, #tpu.memory_space<vmem>>, vector<80x32xbf16>,
    %c0_12 = arith.constant 0 : index
    %c10 = arith.constant 10 : index
    %c0_13 = arith.constant 0 : index
    %12 = vector.load %arg2[%c0_12, %c10, %c0_13] : memref<1x110x32xbf16, #tpu.memory_space<vmem>>, vector<1x80x32xbf16>
    %13 = vector.shape_cast %12 : vector<1x80x32xbf16> to vector<80x32xbf16>
    %c0_14 = arith.constant 0 : index
    %c96 = arith.constant 96 : index
    %14 = vector.load %arg6[%c0_14, %c96] : memref<80x288xbf16, #tpu.memory_space<vmem>>, vector<80x32xbf16>
    tpu.vector_store %arg6[%c0_14, %c96], %13 {strides = array<i32>} : memref<80x288xbf16, #tpu.memory_space<vmem>>, vector<80x32xbf16>,
    %c0_15 = arith.constant 0 : index
    %c11 = arith.constant 11 : index
    %c0_16 = arith.constant 0 : index
    %15 = vector.load %arg2[%c0_15, %c11, %c0_16] : memref<1x110x32xbf16, #tpu.memory_space<vmem>>, vector<1x80x32xbf16>
    %16 = vector.shape_cast %15 : vector<1x80x32xbf16> to vector<80x32xbf16>
    %c0_17 = arith.constant 0 : index
    %c128 = arith.constant 128 : index
    %17 = vector.load %arg6[%c0_17, %c128] : memref<80x288xbf16, #tpu.memory_space<vmem>>, vector<80x32xbf16>
    tpu.vector_store %arg6[%c0_17, %c128], %16 {strides = array<i32>} : memref<80x288xbf16, #tpu.memory_space<vmem>>, vector<80x32xbf16>,
    %c0_18 = arith.constant 0 : index
    %c12 = arith.constant 12 : index
    %c0_19 = arith.constant 0 : index
    %18 = vector.load %arg2[%c0_18, %c12, %c0_19] : memref<1x110x32xbf16, #tpu.memory_space<vmem>>, vector<1x80x32xbf16>
    %19 = vector.shape_cast %18 : vector<1x80x32xbf16> to vector<80x32xbf16>
    %c0_20 = arith.constant 0 : index
    %c160 = arith.constant 160 : index
    %20 = vector.load %arg6[%c0_20, %c160] : memref<80x288xbf16, #tpu.memory_space<vmem>>, vector<80x32xbf16>
    tpu.vector_store %arg6[%c0_20, %c160], %19 {strides = array<i32>} : memref<80x288xbf16, #tpu.memory_space<vmem>>, vector<80x32xbf16>,
    %c0_21 = arith.constant 0 : index
    %c20 = arith.constant 20 : index
    %c0_22 = arith.constant 0 : index
    %21 = vector.load %arg2[%c0_21, %c20, %c0_22] : memref<1x110x32xbf16, #tpu.memory_space<vmem>>, vector<1x80x32xbf16>
    %22 = vector.shape_cast %21 : vector<1x80x32xbf16> to vector<80x32xbf16>
    %c0_23 = arith.constant 0 : index
    %c192 = arith.constant 192 : index
    %23 = vector.load %arg6[%c0_23, %c192] : memref<80x288xbf16, #tpu.memory_space<vmem>>, vector<80x32xbf16>
    tpu.vector_store %arg6[%c0_23, %c192], %22 {strides = array<i32>} : memref<80x288xbf16, #tpu.memory_space<vmem>>, vector<80x32xbf16>,
    %c0_24 = arith.constant 0 : index
    %c21 = arith.constant 21 : index
    %c0_25 = arith.constant 0 : index
    %24 = vector.load %arg2[%c0_24, %c21, %c0_25] : memref<1x110x32xbf16, #tpu.memory_space<vmem>>, vector<1x80x32xbf16>
    %25 = vector.shape_cast %24 : vector<1x80x32xbf16> to vector<80x32xbf16>
    %c0_26 = arith.constant 0 : index
    %c224 = arith.constant 224 : index
    %26 = vector.load %arg6[%c0_26, %c224] : memref<80x288xbf16, #tpu.memory_space<vmem>>, vector<80x32xbf16>
    tpu.vector_store %arg6[%c0_26, %c224], %25 {strides = array<i32>} : memref<80x288xbf16, #tpu.memory_space<vmem>>, vector<80x32xbf16>,
    %c0_27 = arith.constant 0 : index
    %c22 = arith.constant 22 : index
    %c0_28 = arith.constant 0 : index
    %27 = vector.load %arg2[%c0_27, %c22, %c0_28] : memref<1x110x32xbf16, #tpu.memory_space<vmem>>, vector<1x80x32xbf16>
    %28 = vector.shape_cast %27 : vector<1x80x32xbf16> to vector<80x32xbf16>
    %c0_29 = arith.constant 0 : index
    %c256 = arith.constant 256 : index
    %29 = vector.load %arg6[%c0_29, %c256] : memref<80x288xbf16, #tpu.memory_space<vmem>>, vector<80x32xbf16>
    tpu.vector_store %arg6[%c0_29, %c256], %28 {strides = array<i32>} : memref<80x288xbf16, #tpu.memory_space<vmem>>, vector<80x32xbf16>,
    %c0_30 = arith.constant 0 : index
    %c0_31 = arith.constant 0 : index
    %30 = vector.load %arg6[%c0_30, %c0_31] : memref<80x288xbf16, #tpu.memory_space<vmem>>, vector<80x288xbf16>
    %c0_32 = arith.constant 0 : index
    %c0_33 = arith.constant 0 : index
    %31 = vector.load %arg3[%c0_32, %c0_33] : memref<288x128xbf16, #tpu.memory_space<vmem>>, vector<288x128xbf16>
    %cst = arith.constant dense<0.000000e+00> : vector<80x128xf32>
    %32 = tpu.matmul %30, %31, %cst {dimension_numbers = #tpu.dot_dimension_numbers<[1], [0], [0], [1], [0, 0, 1, 1], [], []>} : vector<80x288xbf16>, vector<288x128xbf16>, vector<80x128xf32> -> vector<80x128xf32>
    %33 = arith.addf %2, %32 : vector<80x128xf32>
    %cst_34 = arith.constant 0.000000e+00 : f32
    %34 = vector.broadcast %cst_34 : f32 to vector<80x128xf32>
    %35 = arith.maximumf %33, %34 : vector<80x128xf32>
    %36 = arith.truncf %35 : vector<80x128xf32> to vector<80x128xbf16>
    %c0_35 = arith.constant 0 : index
    %c0_36 = arith.constant 0 : index
    %c0_37 = arith.constant 0 : index
    %37 = vector.load %arg5[%c0_35, %c0_36, %c0_37] : memref<1x80x128xbf16, #tpu.memory_space<vmem>>, vector<1x80x128xbf16>
    %38 = vector.shape_cast %37 : vector<1x80x128xbf16> to vector<80x128xbf16>
    %39 = vector.shape_cast %36 : vector<80x128xbf16> to vector<1x80x128xbf16>
    tpu.vector_store %arg5[%c0_35, %c0_36, %c0_37], %39 {strides = array<i32>} : memref<1x80x128xbf16, #tpu.memory_space<vmem>>, vector<1x80x128xbf16>,
    return
  }
  func.func @transform_0(%arg0: i32, %arg1: i32) -> (i32, i32, i32) {
    %c0_i32 = arith.constant 0 : i32
    %c0_i32_0 = arith.constant 0 : i32
    %c0_i32_1 = arith.constant 0 : i32
    return %arg0, %c0_i32, %c0_i32_0 : i32, i32, i32
  }
  func.func @transform_1(%arg0: i32, %arg1: i32) -> (i32, i32) {
    %c0_i32 = arith.constant 0 : i32
    %c0_i32_0 = arith.constant 0 : i32
    %c0_i32_1 = arith.constant 0 : i32
    return %c0_i32, %c0_i32_0 : i32, i32
  }
  func.func @transform_2(%arg0: i32, %arg1: i32) -> (i32, i32) {
    %c0_i32 = arith.constant 0 : i32
    %c0_i32_0 = arith.constant 0 : i32
    %c0_i32_1 = arith.constant 0 : i32
    return %c0_i32, %c0_i32_0 : i32, i32
  }
  func.func @transform_3(%arg0: i32, %arg1: i32) -> (i32, i32, i32) {
    %c0_i32 = arith.constant 0 : i32
    %c0_i32_0 = arith.constant 0 : i32
    return %arg0, %arg1, %c0_i32 : i32, i32, i32
  }
}

module attributes {stable_mosaic.version = 11 : i64} {
  func.func @_final_convT_kernel(%arg0: i32, %arg1: memref<1x32x342xbf16, #tpu.memory_space<vmem>>, %arg2: memref<36x32xbf16, #tpu.memory_space<vmem>>, %arg3: memref<4x1xf32, #tpu.memory_space<vmem>>, %arg4: memref<1x4x288xf32, #tpu.memory_space<vmem>>) attributes {dimension_semantics = [#tpu.dimension_semantics<parallel>], iteration_bounds = array<i64: 2>, scalar_prefetch = 0 : i64, scratch_operands = 0 : i64, tpu.core_type = #tpu.core_type<tc>, window_params = [{transform_indices = @transform_0, window_bounds = array<i64: 1, 32, 342>}, {pipeline_mode = #tpu.pipeline_mode<synchronous>, transform_indices = @transform_1, window_bounds = array<i64: 36, 32>}, {pipeline_mode = #tpu.pipeline_mode<synchronous>, transform_indices = @transform_2, window_bounds = array<i64: 4, 1>}, {transform_indices = @transform_3, window_bounds = array<i64: 1, 4, 288>}]} {
    %c0 = arith.constant 0 : index
    %c0_0 = arith.constant 0 : index
    %0 = vector.load %arg3[%c0, %c0_0] : memref<4x1xf32, #tpu.memory_space<vmem>>, vector<4x1xf32>
    %1 = vector.shape_cast %0 : vector<4x1xf32> to vector<4x1xf32>
    %2 = vector.broadcast %1 : vector<4x1xf32> to vector<4x288xf32>
    %c0_1 = arith.constant 0 : index
    %c0_2 = arith.constant 0 : index
    %3 = vector.load %arg2[%c0_1, %c0_2] : memref<36x32xbf16, #tpu.memory_space<vmem>>, vector<4x32xbf16>
    %c0_3 = arith.constant 0 : index
    %c0_4 = arith.constant 0 : index
    %c0_5 = arith.constant 0 : index
    %4 = vector.load %arg1[%c0_3, %c0_4, %c0_5] : memref<1x32x342xbf16, #tpu.memory_space<vmem>>, vector<1x32x288xbf16>
    %5 = vector.shape_cast %4 : vector<1x32x288xbf16> to vector<32x288xbf16>
    %cst = arith.constant dense<0.000000e+00> : vector<4x288xf32>
    %6 = tpu.matmul %3, %5, %cst {dimension_numbers = #tpu.dot_dimension_numbers<[1], [0], [0], [1], [0, 0, 1, 1], [], []>} : vector<4x32xbf16>, vector<32x288xbf16>, vector<4x288xf32> -> vector<4x288xf32>
    %7 = arith.addf %2, %6 : vector<4x288xf32>
    %c4 = arith.constant 4 : index
    %c0_6 = arith.constant 0 : index
    %8 = vector.load %arg2[%c4, %c0_6] : memref<36x32xbf16, #tpu.memory_space<vmem>>, vector<4x32xbf16>
    %c0_7 = arith.constant 0 : index
    %c0_8 = arith.constant 0 : index
    %c1 = arith.constant 1 : index
    %9 = vector.load %arg1[%c0_7, %c0_8, %c1] : memref<1x32x342xbf16, #tpu.memory_space<vmem>>, vector<1x32x288xbf16>
    %10 = vector.shape_cast %9 : vector<1x32x288xbf16> to vector<32x288xbf16>
    %cst_9 = arith.constant dense<0.000000e+00> : vector<4x288xf32>
    %11 = tpu.matmul %8, %10, %cst_9 {dimension_numbers = #tpu.dot_dimension_numbers<[1], [0], [0], [1], [0, 0, 1, 1], [], []>} : vector<4x32xbf16>, vector<32x288xbf16>, vector<4x288xf32> -> vector<4x288xf32>
    %12 = arith.addf %7, %11 : vector<4x288xf32>
    %c8 = arith.constant 8 : index
    %c0_10 = arith.constant 0 : index
    %13 = vector.load %arg2[%c8, %c0_10] : memref<36x32xbf16, #tpu.memory_space<vmem>>, vector<4x32xbf16>
    %c0_11 = arith.constant 0 : index
    %c0_12 = arith.constant 0 : index
    %c2 = arith.constant 2 : index
    %14 = vector.load %arg1[%c0_11, %c0_12, %c2] : memref<1x32x342xbf16, #tpu.memory_space<vmem>>, vector<1x32x288xbf16>
    %15 = vector.shape_cast %14 : vector<1x32x288xbf16> to vector<32x288xbf16>
    %cst_13 = arith.constant dense<0.000000e+00> : vector<4x288xf32>
    %16 = tpu.matmul %13, %15, %cst_13 {dimension_numbers = #tpu.dot_dimension_numbers<[1], [0], [0], [1], [0, 0, 1, 1], [], []>} : vector<4x32xbf16>, vector<32x288xbf16>, vector<4x288xf32> -> vector<4x288xf32>
    %17 = arith.addf %12, %16 : vector<4x288xf32>
    %c12 = arith.constant 12 : index
    %c0_14 = arith.constant 0 : index
    %18 = vector.load %arg2[%c12, %c0_14] : memref<36x32xbf16, #tpu.memory_space<vmem>>, vector<4x32xbf16>
    %c0_15 = arith.constant 0 : index
    %c0_16 = arith.constant 0 : index
    %c18 = arith.constant 18 : index
    %19 = vector.load %arg1[%c0_15, %c0_16, %c18] : memref<1x32x342xbf16, #tpu.memory_space<vmem>>, vector<1x32x288xbf16>
    %20 = vector.shape_cast %19 : vector<1x32x288xbf16> to vector<32x288xbf16>
    %cst_17 = arith.constant dense<0.000000e+00> : vector<4x288xf32>
    %21 = tpu.matmul %18, %20, %cst_17 {dimension_numbers = #tpu.dot_dimension_numbers<[1], [0], [0], [1], [0, 0, 1, 1], [], []>} : vector<4x32xbf16>, vector<32x288xbf16>, vector<4x288xf32> -> vector<4x288xf32>
    %22 = arith.addf %17, %21 : vector<4x288xf32>
    %c16 = arith.constant 16 : index
    %c0_18 = arith.constant 0 : index
    %23 = vector.load %arg2[%c16, %c0_18] : memref<36x32xbf16, #tpu.memory_space<vmem>>, vector<4x32xbf16>
    %c0_19 = arith.constant 0 : index
    %c0_20 = arith.constant 0 : index
    %c19 = arith.constant 19 : index
    %24 = vector.load %arg1[%c0_19, %c0_20, %c19] : memref<1x32x342xbf16, #tpu.memory_space<vmem>>, vector<1x32x288xbf16>
    %25 = vector.shape_cast %24 : vector<1x32x288xbf16> to vector<32x288xbf16>
    %cst_21 = arith.constant dense<0.000000e+00> : vector<4x288xf32>
    %26 = tpu.matmul %23, %25, %cst_21 {dimension_numbers = #tpu.dot_dimension_numbers<[1], [0], [0], [1], [0, 0, 1, 1], [], []>} : vector<4x32xbf16>, vector<32x288xbf16>, vector<4x288xf32> -> vector<4x288xf32>
    %27 = arith.addf %22, %26 : vector<4x288xf32>
    %c20 = arith.constant 20 : index
    %c0_22 = arith.constant 0 : index
    %28 = vector.load %arg2[%c20, %c0_22] : memref<36x32xbf16, #tpu.memory_space<vmem>>, vector<4x32xbf16>
    %c0_23 = arith.constant 0 : index
    %c0_24 = arith.constant 0 : index
    %c20_25 = arith.constant 20 : index
    %29 = vector.load %arg1[%c0_23, %c0_24, %c20_25] : memref<1x32x342xbf16, #tpu.memory_space<vmem>>, vector<1x32x288xbf16>
    %30 = vector.shape_cast %29 : vector<1x32x288xbf16> to vector<32x288xbf16>
    %cst_26 = arith.constant dense<0.000000e+00> : vector<4x288xf32>
    %31 = tpu.matmul %28, %30, %cst_26 {dimension_numbers = #tpu.dot_dimension_numbers<[1], [0], [0], [1], [0, 0, 1, 1], [], []>} : vector<4x32xbf16>, vector<32x288xbf16>, vector<4x288xf32> -> vector<4x288xf32>
    %32 = arith.addf %27, %31 : vector<4x288xf32>
    %c24 = arith.constant 24 : index
    %c0_27 = arith.constant 0 : index
    %33 = vector.load %arg2[%c24, %c0_27] : memref<36x32xbf16, #tpu.memory_space<vmem>>, vector<4x32xbf16>
    %c0_28 = arith.constant 0 : index
    %c0_29 = arith.constant 0 : index
    %c36 = arith.constant 36 : index
    %34 = vector.load %arg1[%c0_28, %c0_29, %c36] : memref<1x32x342xbf16, #tpu.memory_space<vmem>>, vector<1x32x288xbf16>
    %35 = vector.shape_cast %34 : vector<1x32x288xbf16> to vector<32x288xbf16>
    %cst_30 = arith.constant dense<0.000000e+00> : vector<4x288xf32>
    %36 = tpu.matmul %33, %35, %cst_30 {dimension_numbers = #tpu.dot_dimension_numbers<[1], [0], [0], [1], [0, 0, 1, 1], [], []>} : vector<4x32xbf16>, vector<32x288xbf16>, vector<4x288xf32> -> vector<4x288xf32>
    %37 = arith.addf %32, %36 : vector<4x288xf32>
    %c28 = arith.constant 28 : index
    %c0_31 = arith.constant 0 : index
    %38 = vector.load %arg2[%c28, %c0_31] : memref<36x32xbf16, #tpu.memory_space<vmem>>, vector<4x32xbf16>
    %c0_32 = arith.constant 0 : index
    %c0_33 = arith.constant 0 : index
    %c37 = arith.constant 37 : index
    %39 = vector.load %arg1[%c0_32, %c0_33, %c37] : memref<1x32x342xbf16, #tpu.memory_space<vmem>>, vector<1x32x288xbf16>
    %40 = vector.shape_cast %39 : vector<1x32x288xbf16> to vector<32x288xbf16>
    %cst_34 = arith.constant dense<0.000000e+00> : vector<4x288xf32>
    %41 = tpu.matmul %38, %40, %cst_34 {dimension_numbers = #tpu.dot_dimension_numbers<[1], [0], [0], [1], [0, 0, 1, 1], [], []>} : vector<4x32xbf16>, vector<32x288xbf16>, vector<4x288xf32> -> vector<4x288xf32>
    %42 = arith.addf %37, %41 : vector<4x288xf32>
    %c32 = arith.constant 32 : index
    %c0_35 = arith.constant 0 : index
    %43 = vector.load %arg2[%c32, %c0_35] : memref<36x32xbf16, #tpu.memory_space<vmem>>, vector<4x32xbf16>
    %c0_36 = arith.constant 0 : index
    %c0_37 = arith.constant 0 : index
    %c38 = arith.constant 38 : index
    %44 = vector.load %arg1[%c0_36, %c0_37, %c38] : memref<1x32x342xbf16, #tpu.memory_space<vmem>>, vector<1x32x288xbf16>
    %45 = vector.shape_cast %44 : vector<1x32x288xbf16> to vector<32x288xbf16>
    %cst_38 = arith.constant dense<0.000000e+00> : vector<4x288xf32>
    %46 = tpu.matmul %43, %45, %cst_38 {dimension_numbers = #tpu.dot_dimension_numbers<[1], [0], [0], [1], [0, 0, 1, 1], [], []>} : vector<4x32xbf16>, vector<32x288xbf16>, vector<4x288xf32> -> vector<4x288xf32>
    %47 = arith.addf %42, %46 : vector<4x288xf32>
    %c0_39 = arith.constant 0 : index
    %c0_40 = arith.constant 0 : index
    %c0_41 = arith.constant 0 : index
    %48 = vector.load %arg4[%c0_39, %c0_40, %c0_41] : memref<1x4x288xf32, #tpu.memory_space<vmem>>, vector<1x4x288xf32>
    %49 = vector.shape_cast %48 : vector<1x4x288xf32> to vector<4x288xf32>
    %50 = vector.shape_cast %47 : vector<4x288xf32> to vector<1x4x288xf32>
    tpu.vector_store %arg4[%c0_39, %c0_40, %c0_41], %50 {strides = array<i32>} : memref<1x4x288xf32, #tpu.memory_space<vmem>>, vector<1x4x288xf32>,
    return
  }
  func.func @transform_0(%arg0: i32) -> (i32, i32, i32) {
    %c0_i32 = arith.constant 0 : i32
    %c0_i32_0 = arith.constant 0 : i32
    %c0_i32_1 = arith.constant 0 : i32
    return %arg0, %c0_i32, %c0_i32_0 : i32, i32, i32
  }
  func.func @transform_1(%arg0: i32) -> (i32, i32) {
    %c0_i32 = arith.constant 0 : i32
    %c0_i32_0 = arith.constant 0 : i32
    %c0_i32_1 = arith.constant 0 : i32
    return %c0_i32, %c0_i32_0 : i32, i32
  }
  func.func @transform_2(%arg0: i32) -> (i32, i32) {
    %c0_i32 = arith.constant 0 : i32
    %c0_i32_0 = arith.constant 0 : i32
    %c0_i32_1 = arith.constant 0 : i32
    return %c0_i32, %c0_i32_0 : i32, i32
  }
  func.func @transform_3(%arg0: i32) -> (i32, i32, i32) {
    %c0_i32 = arith.constant 0 : i32
    %c0_i32_0 = arith.constant 0 : i32
    %c0_i32_1 = arith.constant 0 : i32
    return %arg0, %c0_i32, %c0_i32_0 : i32, i32, i32
  }
}

</mosaic_0001>

<llo_original>
// kernel: conv_autoencoder_forward.7
$region0: #{conv_autoencoder_forward.7}
  #allocation0 [shape = 'u32[]', space=smem, size = 0x4, offset = 0x4, fixed_abs, tag = 'smem constant byte address 0x4 - core index']
  #allocation1 [shape = 'u32[144,128]{1,0:T(1,128)}', space=vmem, size = 0x12000, scoped, tag = 'internal scratch']
  #allocation2 [shape = 'bf16[80,144]{1,0:T(8,128)(2,1)}', space=vmem, size = 0xa000, scoped, tag = 'scratch operand']
  %s0 = inlined_call_operand.vmem [shape: bf16[2,110,16], index: 0, kind: input, shape index: {}]
  %s1 = inlined_call_operand.vmem [shape: bf16[144,32], index: 1, kind: input, shape index: {}]
  %s2 = inlined_call_operand.vmem [shape: f32[1,32], index: 2, kind: input, shape index: {}]
  %s3 = inlined_call_operand.vmem [shape: bf16[2,80,32], index: 3, kind: output, shape index: {}]
  %s4 = sld [smem:[#allocation0]]
  $region45: #{conv_autoencoder_forward.7} parent=0
    _
  %s6 = ssub.s32 1, %s4
  %s7 = scalar_select 0, %s6, %s4
  loop: start=0, step=1, limit=4
  $region2: #{conv_autoencoder_forward.7} parent=0 // loop_pre_header
    _
  $region3: #{conv_autoencoder_forward.7} parent=0 // loop_header
    %s9 = sphi 0, %s13
    %p10 = scmp.ge.s32.totalorder %s9, 4
    %s16 = sphi 0, %s28
    %s17 = sphi 0, %s24
    %s18 = sphi 0, %s16
    %s19 = sphi 0, %s17
    %s20 = sphi 0, %s18
    %s21 = sphi 0, %s19
    %s31 = sphi 0, %s33
    %s34 = sphi 0, %s31
    %s35 = sphi 0, %s34
    %s51 = sphi 0, %s35
    %s55 = sphi 0, %s55
    %s57 = sphi 0, %s55
    %s58 = sphi 0, %s57
    %s72 = sphi 0, %s58
    %s76 = sphi 0, %s76
    %s78 = sphi 0, %s76
    %s79 = sphi 0, %s78
    %s93 = sphi 0, %s79
    %s101 = sphi 0, %s103
    %s104 = sphi 0, %s101
    %s105 = sphi 0, %s104
    %s121 = sphi 0, %s105
  $region4: #{conv_autoencoder_forward.7} parent=0 // loop_header_branch
    %12 = sbr.rel (%p10) target = $region8
  $region5: #{conv_autoencoder_forward.7} parent=0 // loop_body
    %s14 = ssub.s32 %s9, 1
    %s15 = ssub.s32 %s9, 2
    %s22 = sadd.s32 1, %s17
    %p23 = scmp.ge.s32.totalorder %s22, 1
    %s24 = scalar_select %p23, 0, %s22
    %s25 = sadd.s32 1, %s16
    %s26 = scalar_select %p23, %s25, %s16
    %p27 = scmp.ge.s32.totalorder %s26, 2
    %s28 = scalar_select %p27, 0, %s26
    %s29 = ssub.s32 %s16, %s28
    %p30 = scmp.eq.s32.totalorder %s29, 0
    %s32 = sadd.s32 %s31, 1
    %s33 = scalar_select %p30, %s31, %s32
    %p36 = pneg %p30
    %p37 = scmp.eq.s32.totalorder %s9, 1
    %p38 = por %p36, %p37
    %p39 = scmp.ne.s32.totalorder %s31, %s34
    %p40 = scmp.eq.s32.totalorder %s9, 0
    %p41 = por %p39, %p40
    %p42 = scmp.ne.s32.totalorder %s31, %s34
    %p43 = scmp.eq.s32.totalorder %s14, 1
    %p44 = por %p42, %p43
    %p45 = scmp.ne.s32.totalorder %s34, %s35
    %p46 = scmp.eq.s32.totalorder %s14, 0
    %p47 = por %p45, %p46
    %p48 = scmp.ne.s32.totalorder %s34, %s35
    %p49 = scmp.eq.s32.totalorder %s15, 1
    %p50 = por %p48, %p49
    %p52 = scmp.ne.s32.totalorder %s35, %s51
    %p53 = scmp.eq.s32.totalorder %s15, 0
    %p54 = por %p52, %p53
    %s56 = sadd.s32 %s55, 1
    %p59 = scmp.eq.s32.totalorder %s9, 1
    %p60 = scmp.ne.s32.totalorder %s55, %s57
    %p61 = scmp.eq.s32.totalorder %s9, 0
    %p62 = por %p60, %p61
    %p63 = scmp.ne.s32.totalorder %s55, %s57
    %p64 = scmp.eq.s32.totalorder %s14, 1
    %p65 = por %p63, %p64
    %p66 = scmp.ne.s32.totalorder %s57, %s58
    %p67 = scmp.eq.s32.totalorder %s14, 0
    %p68 = por %p66, %p67
    %p69 = scmp.ne.s32.totalorder %s57, %s58
    %p70 = scmp.eq.s32.totalorder %s15, 1
    %p71 = por %p69, %p70
    %p73 = scmp.ne.s32.totalorder %s58, %s72
    %p74 = scmp.eq.s32.totalorder %s15, 0
    %p75 = por %p73, %p74
    %s77 = sadd.s32 %s76, 1
    %p80 = scmp.eq.s32.totalorder %s9, 1
    %p81 = scmp.ne.s32.totalorder %s76, %s78
    %p82 = scmp.eq.s32.totalorder %s9, 0
    %p83 = por %p81, %p82
    %p84 = scmp.ne.s32.totalorder %s76, %s78
    %p85 = scmp.eq.s32.totalorder %s14, 1
    %p86 = por %p84, %p85
    %p87 = scmp.ne.s32.totalorder %s78, %s79
    %p88 = scmp.eq.s32.totalorder %s14, 0
    %p89 = por %p87, %p88
    %p90 = scmp.ne.s32.totalorder %s78, %s79
    %p91 = scmp.eq.s32.totalorder %s15, 1
    %p92 = por %p90, %p91
    %p94 = scmp.ne.s32.totalorder %s79, %s93
    %p95 = scmp.eq.s32.totalorder %s15, 0
    %p96 = por %p94, %p95
    %s97 = ssub.s32 %s16, %s28
    %s98 = ssub.s32 %s17, %s24
    %s99 = sor.u32 %s97, %s98
    %p100 = scmp.eq.s32.totalorder %s99, 0
    %s102 = sadd.s32 %s101, 1
    %s103 = scalar_select %p100, %s101, %s102
    %p106 = pneg %p100
    %p107 = scmp.eq.s32.totalorder %s9, 1
    %p108 = por %p106, %p107
    %p109 = scmp.ne.s32.totalorder %s101, %s104
    %p110 = scmp.eq.s32.totalorder %s9, 0
    %p111 = por %p109, %p110
    %p112 = scmp.ne.s32.totalorder %s101, %s104
    %p113 = scmp.eq.s32.totalorder %s14, 1
    %p114 = por %p112, %p113
    %p115 = scmp.ne.s32.totalorder %s104, %s105
    %p116 = scmp.eq.s32.totalorder %s14, 0
    %p117 = por %p115, %p116
    %p118 = scmp.ne.s32.totalorder %s104, %s105
    %p119 = scmp.eq.s32.totalorder %s15, 1
    %p120 = por %p118, %p119
    %p122 = scmp.ne.s32.totalorder %s105, %s121
    %p123 = scmp.eq.s32.totalorder %s15, 0
    %p124 = por %p122, %p123
    %p125 = scmp.le.s32.totalorder 1, %s9
    %p126 = scmp.lt.s32.totalorder %s9, 3
    %p127 = pnand %p125, %p126
    %p128 = pneg %p127
    // Predicated region
    $region9: #{conv_autoencoder_forward.7} parent=5 // pred_check
      _
    $region10: #{conv_autoencoder_forward.7} parent=5 // pred_check_branch
      %130 = sbr.rel (%p127) target = $region12
    $region11: #{conv_autoencoder_forward.7} parent=5 // pred_region
      %s131 = ssub.s32 %s9, 1
      // Predicated region
      $region13: #{conv_autoencoder_forward.7} parent=11 // pred_check
        %p132 = pneg %p68
      $region14: #{conv_autoencoder_forward.7} parent=11 // pred_check_branch
        %134 = sbr.rel (%p132) target = $region16
      $region15: #{conv_autoencoder_forward.7} parent=11 // pred_region
        _
      $region16: #{conv_autoencoder_forward.7} parent=11 // pred_fallthru
        _
      // Predicated region
      $region17: #{conv_autoencoder_forward.7} parent=11 // pred_check
        %p135 = pneg %p89
      $region18: #{conv_autoencoder_forward.7} parent=11 // pred_check_branch
        %137 = sbr.rel (%p135) target = $region20
      $region19: #{conv_autoencoder_forward.7} parent=11 // pred_region
        _
      $region20: #{conv_autoencoder_forward.7} parent=11 // pred_fallthru
        _
    $region12: #{conv_autoencoder_forward.7} parent=5 // pred_fallthru
      _
    %p138 = scmp.lt.s32.totalorder %s9, 2
    // Predicated region
    $region21: #{conv_autoencoder_forward.7} parent=5 // pred_check
      %p139 = pneg %p138
    $region22: #{conv_autoencoder_forward.7} parent=5 // pred_check_branch
      %141 = sbr.rel (%p139) target = $region24
    $region23: #{conv_autoencoder_forward.7} parent=5 // pred_region
      // Predicated region
      $region25: #{conv_autoencoder_forward.7} parent=23 // pred_check
        %p142 = pneg %p41
      $region26: #{conv_autoencoder_forward.7} parent=23 // pred_check_branch
        %144 = sbr.rel (%p142) target = $region28
      $region27: #{conv_autoencoder_forward.7} parent=23 // pred_region
        %p145 = scmp.lt.s32.totalorder %s16, 1
        %s146 = scalar_select %p145, %s16, 1
        %s147 = smul.addr %s146, 14
        %s148 = smul.addr %s147, 4
        %s149 = scalar_lea.vmem %s0, %s148
      $region28: #{conv_autoencoder_forward.7} parent=23 // pred_fallthru
        _
    $region24: #{conv_autoencoder_forward.7} parent=5 // pred_fallthru
      _
    %p150 = scmp.le.s32.totalorder 1, %s9
    %p151 = scmp.lt.s32.totalorder %s9, 3
    %p152 = pnand %p150, %p151
    %p153 = pneg %p152
    // Predicated region
    $region29: #{conv_autoencoder_forward.7} parent=5 // pred_check
      _
    $region30: #{conv_autoencoder_forward.7} parent=5 // pred_check_branch
      %155 = sbr.rel (%p152) target = $region32
    $region31: #{conv_autoencoder_forward.7} parent=5 // pred_region
      %s156 = ssub.s32 %s9, 1
      %p157 = scmp.lt.s32.totalorder %s18, 1
      %s158 = scalar_select %p157, %s18, 1
      %s159 = smul.addr %s158, 14
      %s160 = smul.addr %s159, 4
      %s161 = scalar_lea.vmem %s0, %s160
      %p162 = pneg %p47
      %p163 = pneg %p44
      %p164 = pneg %p68
      %p165 = pneg %p65
      %p166 = pneg %p89
      %p167 = pneg %p86
      %p168 = pneg %p117
      %p169 = pneg %p114
      %s170 = smul.u32 10, %s19
      %p171 = scmp.lt.s32.totalorder %s18, 1
      %s172 = scalar_select %p171, %s18, 1
      %p173 = scmp.lt.s32.totalorder %s170, 9
      %s174 = scalar_select %p173, %s170, 9
      %s175 = smul.addr %s172, 10
      %s176 = sadd.s32 %s174, %s175
      %s177 = smul.addr %s176, 4
      %s178 = scalar_lea.vmem %s3, %s177
      %p179 = scmp.lt.s32.totalorder %s18, 1
      %s180 = scalar_select %p179, %s18, 1
      %s181 = smul.addr %s180, 14
      %s182 = smul.addr %s181, 4
      %s183 = scalar_lea.vmem %s0, %s182
      %s184 = smul.u32 10, %s19
      %p185 = scmp.lt.s32.totalorder %s18, 1
      %s186 = scalar_select %p185, %s18, 1
      %p187 = scmp.lt.s32.totalorder %s184, 9
      %s188 = scalar_select %p187, %s184, 9
      %s189 = smul.addr %s186, 10
      %s190 = sadd.s32 %s188, %s189
      %s191 = smul.addr %s190, 4
      %s192 = scalar_lea.vmem %s3, %s191
      %s193 = smul.u32 10, %s19
      %v195 = vld [vmem:[%s2] sm:$0x1]
      %v197 = vlaneseq
      %v198 = vshrl.u32 %v197, 7
      %v199 = vsub.s32 0, %v198
      %v200 = vrot.slane %v195, %v199
      %v202 = vld [vmem:[%s183] sm:$0xf]
      %v203 = vld [vmem:[%s183 + $0x4] sm:$0xf]
      %v204 = vld [vmem:[%s183 + $0x8] sm:$0xf]
      %v205 = vld [vmem:[%s183 + $0xc] sm:$0xf]
      %v206 = vld [vmem:[%s183 + $0x10] sm:$0xf]
      %v207 = vld [vmem:[%s183 + $0x14] sm:$0xf]
      %v208 = vld [vmem:[%s183 + $0x18] sm:$0xf]
      %v209 = vld [vmem:[%s183 + $0x1c] sm:$0xf]
      %v210 = vld [vmem:[%s183 + $0x20] sm:$0xf]
      %v211 = vld [vmem:[%s183 + $0x24] sm:$0xf]
      %vm212 = vcmask 125952
      %213 = vst.msk [vmem:[#allocation2] sm:$0xf] %vm212, %v202
      %214 = vst.msk [vmem:[#allocation2 + $0x8] sm:$0xf] %vm212, %v203
      %215 = vst.msk [vmem:[#allocation2 + $0x10] sm:$0xf] %vm212, %v204
      %216 = vst.msk [vmem:[#allocation2 + $0x18] sm:$0xf] %vm212, %v205
      %217 = vst.msk [vmem:[#allocation2 + $0x20] sm:$0xf] %vm212, %v206
      %218 = vst.msk [vmem:[#allocation2 + $0x28] sm:$0xf] %vm212, %v207
      %219 = vst.msk [vmem:[#allocation2 + $0x30] sm:$0xf] %vm212, %v208
      %220 = vst.msk [vmem:[#allocation2 + $0x38] sm:$0xf] %vm212, %v209
      %221 = vst.msk [vmem:[#allocation2 + $0x40] sm:$0xf] %vm212, %v210
      %222 = vst.msk [vmem:[#allocation2 + $0x48] sm:$0xf] %vm212, %v211
      %v223 = vld [vmem:[%s183] sm:$0xf]
      %v224 = vld [vmem:[%s183 + $0x4] sm:$0xf]
      %v225 = vld [vmem:[%s183 + $0x8] sm:$0xf]
      %v226 = vld [vmem:[%s183 + $0xc] sm:$0xf]
      %v227 = vld [vmem:[%s183 + $0x10] sm:$0xf]
      %v228 = vld [vmem:[%s183 + $0x14] sm:$0xf]
      %v229 = vld [vmem:[%s183 + $0x18] sm:$0xf]
      %v230 = vld [vmem:[%s183 + $0x1c] sm:$0xf]
      %v231 = vld [vmem:[%s183 + $0x20] sm:$0xf]
      %v232 = vld [vmem:[%s183 + $0x24] sm:$0xf]
      %v233 = vld [vmem:[%s183 + $0x28] sm:$0x1]
      %vm234 = vsmask.f32 3328
      %vm235 = vsmask.f32 7440
      %vm236 = vmor %vm234, %vm235
      %v238 = vshrl.u32 %v223, 16
      %v240 = vrot.slane %v238, 4
      %v241 = vshll.u32 %v223, 16
      %v243 = vrot.slane %v241, 5
      %v244 = vor.u32 %v240, %v243
      %v245 = vrot.slane %v244, 4
      %v247 = vshll.u32 %v224, 16
      %v249 = vrot.slane %v247, 5
      %v250 = vsel %vm236, %v245, %v249
      %v251 = vshrl.u32 %v224, 16
      %v253 = vrot.slane %v251, 4
      %v254 = vor.u32 %v253, %v249
      %v255 = vrot.slane %v254, 4
      %v257 = vshll.u32 %v225, 16
      %v259 = vrot.slane %v257, 5
      %v260 = vsel %vm236, %v255, %v259
      %v261 = vshrl.u32 %v225, 16
      %v263 = vrot.slane %v261, 4
      %v264 = vor.u32 %v263, %v259
      %v265 = vrot.slane %v264, 4
      %v267 = vshll.u32 %v226, 16
      %v269 = vrot.slane %v267, 5
      %v270 = vsel %vm236, %v265, %v269
      %v271 = vshrl.u32 %v226, 16
      %v273 = vrot.slane %v271, 4
      %v274 = vor.u32 %v273, %v269
      %v275 = vrot.slane %v274, 4
      %v277 = vshll.u32 %v227, 16
      %v279 = vrot.slane %v277, 5
      %v280 = vsel %vm236, %v275, %v279
      %v281 = vshrl.u32 %v227, 16
      %v283 = vrot.slane %v281, 4
      %v284 = vor.u32 %v283, %v279
      %v285 = vrot.slane %v284, 4
      %v287 = vshll.u32 %v228, 16
      %v289 = vrot.slane %v287, 5
      %v290 = vsel %vm236, %v285, %v289
      %v291 = vshrl.u32 %v228, 16
      %v293 = vrot.slane %v291, 4
      %v294 = vor.u32 %v293, %v289
      %v295 = vrot.slane %v294, 4
      %v297 = vshll.u32 %v229, 16
      %v299 = vrot.slane %v297, 5
      %v300 = vsel %vm236, %v295, %v299
      %v301 = vshrl.u32 %v229, 16
      %v303 = vrot.slane %v301, 4
      %v304 = vor.u32 %v303, %v299
      %v305 = vrot.slane %v304, 4
      %v307 = vshll.u32 %v230, 16
      %v309 = vrot.slane %v307, 5
      %v310 = vsel %vm236, %v305, %v309
      %v311 = vshrl.u32 %v230, 16
      %v313 = vrot.slane %v311, 4
      %v314 = vor.u32 %v313, %v309
      %v315 = vrot.slane %v314, 4
      %v317 = vshll.u32 %v231, 16
      %v319 = vrot.slane %v317, 5
      %v320 = vsel %vm236, %v315, %v319
      %v321 = vshrl.u32 %v231, 16
      %v323 = vrot.slane %v321, 4
      %v324 = vor.u32 %v323, %v319
      %v325 = vrot.slane %v324, 4
      %v327 = vshll.u32 %v232, 16
      %v329 = vrot.slane %v327, 5
      %v330 = vsel %vm236, %v325, %v329
      %v331 = vshrl.u32 %v232, 16
      %v333 = vrot.slane %v331, 4
      %v334 = vor.u32 %v333, %v329
      %v335 = vrot.slane %v334, 4
      %v337 = vshll.u32 %v233, 16
      %v339 = vrot.slane %v337, 5
      %v340 = vsel %vm236, %v335, %v339
      %341 = vrot.lane.b32.xlu0 %v250, 16
      %v342 = vpop.permute.xlu0 %341
      %343 = vrot.lane.b32.xlu0 %v260, 16
      %v344 = vpop.permute.xlu0 %343
      %345 = vrot.lane.b32.xlu0 %v270, 16
      %v346 = vpop.permute.xlu0 %345
      %347 = vrot.lane.b32.xlu0 %v280, 16
      %v348 = vpop.permute.xlu0 %347
      %349 = vrot.lane.b32.xlu0 %v290, 16
      %v350 = vpop.permute.xlu0 %349
      %351 = vrot.lane.b32.xlu0 %v300, 16
      %v352 = vpop.permute.xlu0 %351
      %353 = vrot.lane.b32.xlu0 %v310, 16
      %v354 = vpop.permute.xlu0 %353
      %355 = vrot.lane.b32.xlu0 %v320, 16
      %v356 = vpop.permute.xlu0 %355
      %357 = vrot.lane.b32.xlu0 %v330, 16
      %v358 = vpop.permute.xlu0 %357
      %359 = vrot.lane.b32.xlu0 %v340, 16
      %v360 = vpop.permute.xlu0 %359
      %vm371 = vcmask 257152
      %372 = vst.msk [vmem:[#allocation2] sm:$0xf] %vm371, %v342
      %373 = vst.msk [vmem:[#allocation2 + $0x8] sm:$0xf] %vm371, %v344
      %374 = vst.msk [vmem:[#allocation2 + $0x10] sm:$0xf] %vm371, %v346
      %375 = vst.msk [vmem:[#allocation2 + $0x18] sm:$0xf] %vm371, %v348
      %376 = vst.msk [vmem:[#allocation2 + $0x20] sm:$0xf] %vm371, %v350
      %377 = vst.msk [vmem:[#allocation2 + $0x28] sm:$0xf] %vm371, %v352
      %378 = vst.msk [vmem:[#allocation2 + $0x30] sm:$0xf] %vm371, %v354
      %379 = vst.msk [vmem:[#allocation2 + $0x38] sm:$0xf] %vm371, %v356
      %380 = vst.msk [vmem:[#allocation2 + $0x40] sm:$0xf] %vm371, %v358
      %381 = vst.msk [vmem:[#allocation2 + $0x48] sm:$0xf] %vm371, %v360
      %v382 = vld [vmem:[%s183] sm:$0xe]
      %v383 = vld [vmem:[%s183 + $0x4] sm:$0xf]
      %v384 = vld [vmem:[%s183 + $0x8] sm:$0xf]
      %v385 = vld [vmem:[%s183 + $0xc] sm:$0xf]
      %v386 = vld [vmem:[%s183 + $0x10] sm:$0xf]
      %v387 = vld [vmem:[%s183 + $0x14] sm:$0xf]
      %v388 = vld [vmem:[%s183 + $0x18] sm:$0xf]
      %v389 = vld [vmem:[%s183 + $0x1c] sm:$0xf]
      %v390 = vld [vmem:[%s183 + $0x20] sm:$0xf]
      %v391 = vld [vmem:[%s183 + $0x24] sm:$0xf]
      %v392 = vld [vmem:[%s183 + $0x28] sm:$0x1]
      %vm404 = vcmask 1042432
      %vm405 = vcmask 1046532
      %vm406 = vmor %vm404, %vm405
      %v407 = vrot.slane %v382, 5
      %v408 = vrot.slane %v407, 4
      %v409 = vrot.slane %v383, 5
      %v410 = vsel %vm406, %v408, %v409
      %v411 = vrot.slane %v409, 4
      %v412 = vrot.slane %v384, 5
      %v413 = vsel %vm406, %v411, %v412
      %v414 = vrot.slane %v412, 4
      %v415 = vrot.slane %v385, 5
      %v416 = vsel %vm406, %v414, %v415
      %v417 = vrot.slane %v415, 4
      %v418 = vrot.slane %v386, 5
      %v419 = vsel %vm406, %v417, %v418
      %v420 = vrot.slane %v418, 4
      %v421 = vrot.slane %v387, 5
      %v422 = vsel %vm406, %v420, %v421
      %v423 = vrot.slane %v421, 4
      %v424 = vrot.slane %v388, 5
      %v425 = vsel %vm406, %v423, %v424
      %v426 = vrot.slane %v424, 4
      %v427 = vrot.slane %v389, 5
      %v428 = vsel %vm406, %v426, %v427
      %v429 = vrot.slane %v427, 4
      %v430 = vrot.slane %v390, 5
      %v431 = vsel %vm406, %v429, %v430
      %v432 = vrot.slane %v430, 4
      %v433 = vrot.slane %v391, 5
      %v434 = vsel %vm406, %v432, %v433
      %v435 = vrot.slane %v433, 4
      %v436 = vrot.slane %v392, 5
      %v437 = vsel %vm406, %v435, %v436
      %438 = vrot.lane.b32.xlu0 %v410, 32
      %v439 = vpop.permute.xlu0 %438
      %440 = vrot.lane.b32.xlu0 %v413, 32
      %v441 = vpop.permute.xlu0 %440
      %442 = vrot.lane.b32.xlu0 %v416, 32
      %v443 = vpop.permute.xlu0 %442
      %444 = vrot.lane.b32.xlu0 %v419, 32
      %v445 = vpop.permute.xlu0 %444
      %446 = vrot.lane.b32.xlu0 %v422, 32
      %v447 = vpop.permute.xlu0 %446
      %448 = vrot.lane.b32.xlu0 %v425, 32
      %v449 = vpop.permute.xlu0 %448
      %450 = vrot.lane.b32.xlu0 %v428, 32
      %v451 = vpop.permute.xlu0 %450
      %452 = vrot.lane.b32.xlu0 %v431, 32
      %v453 = vpop.permute.xlu0 %452
      %454 = vrot.lane.b32.xlu0 %v434, 32
      %v455 = vpop.permute.xlu0 %454
      %456 = vrot.lane.b32.xlu0 %v437, 32
      %v457 = vpop.permute.xlu0 %456
      %vm468 = vcmask 388352
      %469 = vst.msk [vmem:[#allocation2] sm:$0xf] %vm468, %v439
      %470 = vst.msk [vmem:[#allocation2 + $0x8] sm:$0xf] %vm468, %v441
      %471 = vst.msk [vmem:[#allocation2 + $0x10] sm:$0xf] %vm468, %v443
      %472 = vst.msk [vmem:[#allocation2 + $0x18] sm:$0xf] %vm468, %v445
      %473 = vst.msk [vmem:[#allocation2 + $0x20] sm:$0xf] %vm468, %v447
      %474 = vst.msk [vmem:[#allocation2 + $0x28] sm:$0xf] %vm468, %v449
      %475 = vst.msk [vmem:[#allocation2 + $0x30] sm:$0xf] %vm468, %v451
      %476 = vst.msk [vmem:[#allocation2 + $0x38] sm:$0xf] %vm468, %v453
      %477 = vst.msk [vmem:[#allocation2 + $0x40] sm:$0xf] %vm468, %v455
      %478 = vst.msk [vmem:[#allocation2 + $0x48] sm:$0xf] %vm468, %v457
      %v479 = vld [vmem:[%s183 + $0x4] sm:$0xe]
      %v480 = vld [vmem:[%s183 + $0x8] sm:$0xf]
      %v481 = vld [vmem:[%s183 + $0xc] sm:$0xf]
      %v482 = vld [vmem:[%s183 + $0x10] sm:$0xf]
      %v483 = vld [vmem:[%s183 + $0x14] sm:$0xf]
      %v484 = vld [vmem:[%s183 + $0x18] sm:$0xf]
      %v485 = vld [vmem:[%s183 + $0x1c] sm:$0xf]
      %v486 = vld [vmem:[%s183 + $0x20] sm:$0xf]
      %v487 = vld [vmem:[%s183 + $0x24] sm:$0xf]
      %v488 = vld [vmem:[%s183 + $0x28] sm:$0xf]
      %v489 = vld [vmem:[%s183 + $0x2c] sm:$0x1]
      %v501 = vrot.slane %v479, 5
      %v502 = vrot.slane %v501, 4
      %v503 = vrot.slane %v480, 5
      %v504 = vsel %vm406, %v502, %v503
      %v505 = vrot.slane %v503, 4
      %v506 = vrot.slane %v481, 5
      %v507 = vsel %vm406, %v505, %v506
      %v508 = vrot.slane %v506, 4
      %v509 = vrot.slane %v482, 5
      %v510 = vsel %vm406, %v508, %v509
      %v511 = vrot.slane %v509, 4
      %v512 = vrot.slane %v483, 5
      %v513 = vsel %vm406, %v511, %v512
      %v514 = vrot.slane %v512, 4
      %v515 = vrot.slane %v484, 5
      %v516 = vsel %vm406, %v514, %v515
      %v517 = vrot.slane %v515, 4
      %v518 = vrot.slane %v485, 5
      %v519 = vsel %vm406, %v517, %v518
      %v520 = vrot.slane %v518, 4
      %v521 = vrot.slane %v486, 5
      %v522 = vsel %vm406, %v520, %v521
      %v523 = vrot.slane %v521, 4
      %v524 = vrot.slane %v487, 5
      %v525 = vsel %vm406, %v523, %v524
      %v526 = vrot.slane %v524, 4
      %v527 = vrot.slane %v488, 5
      %v528 = vsel %vm406, %v526, %v527
      %v529 = vrot.slane %v527, 4
      %v530 = vrot.slane %v489, 5
      %v531 = vsel %vm406, %v529, %v530
      %532 = vrot.lane.b32.xlu0 %v504, 48
      %v533 = vpop.permute.xlu0 %532
      %534 = vrot.lane.b32.xlu0 %v507, 48
      %v535 = vpop.permute.xlu0 %534
      %536 = vrot.lane.b32.xlu0 %v510, 48
      %v537 = vpop.permute.xlu0 %536
      %538 = vrot.lane.b32.xlu0 %v513, 48
      %v539 = vpop.permute.xlu0 %538
      %540 = vrot.lane.b32.xlu0 %v516, 48
      %v541 = vpop.permute.xlu0 %540
      %542 = vrot.lane.b32.xlu0 %v519, 48
      %v543 = vpop.permute.xlu0 %542
      %544 = vrot.lane.b32.xlu0 %v522, 48
      %v545 = vpop.permute.xlu0 %544
      %546 = vrot.lane.b32.xlu0 %v525, 48
      %v547 = vpop.permute.xlu0 %546
      %548 = vrot.lane.b32.xlu0 %v528, 48
      %v549 = vpop.permute.xlu0 %548
      %550 = vrot.lane.b32.xlu0 %v531, 48
      %v551 = vpop.permute.xlu0 %550
      %vm562 = vcmask 519552
      %563 = vst.msk [vmem:[#allocation2] sm:$0xf] %vm562, %v533
      %564 = vst.msk [vmem:[#allocation2 + $0x8] sm:$0xf] %vm562, %v535
      %565 = vst.msk [vmem:[#allocation2 + $0x10] sm:$0xf] %vm562, %v537
      %566 = vst.msk [vmem:[#allocation2 + $0x18] sm:$0xf] %vm562, %v539
      %567 = vst.msk [vmem:[#allocation2 + $0x20] sm:$0xf] %vm562, %v541
      %568 = vst.msk [vmem:[#allocation2 + $0x28] sm:$0xf] %vm562, %v543
      %569 = vst.msk [vmem:[#allocation2 + $0x30] sm:$0xf] %vm562, %v545
      %570 = vst.msk [vmem:[#allocation2 + $0x38] sm:$0xf] %vm562, %v547
      %571 = vst.msk [vmem:[#allocation2 + $0x40] sm:$0xf] %vm562, %v549
      %572 = vst.msk [vmem:[#allocation2 + $0x48] sm:$0xf] %vm562, %v551
      %v573 = vld [vmem:[%s183 + $0x4] sm:$0xe]
      %v574 = vld [vmem:[%s183 + $0x8] sm:$0xf]
      %v575 = vld [vmem:[%s183 + $0xc] sm:$0xf]
      %v576 = vld [vmem:[%s183 + $0x10] sm:$0xf]
      %v577 = vld [vmem:[%s183 + $0x14] sm:$0xf]
      %v578 = vld [vmem:[%s183 + $0x18] sm:$0xf]
      %v579 = vld [vmem:[%s183 + $0x1c] sm:$0xf]
      %v580 = vld [vmem:[%s183 + $0x20] sm:$0xf]
      %v581 = vld [vmem:[%s183 + $0x24] sm:$0xf]
      %v582 = vld [vmem:[%s183 + $0x28] sm:$0xf]
      %v583 = vld [vmem:[%s183 + $0x2c] sm:$0x3]
      %vm584 = vsmask.f32 2304
      %vm585 = vsmask.f32 6416
      %vm586 = vmor %vm584, %vm585
      %v588 = vshrl.u32 %v573, 16
      %v590 = vrot.slane %v588, 5
      %v591 = vshll.u32 %v573, 16
      %v593 = vrot.slane %v591, 6
      %v594 = vor.u32 %v590, %v593
      %v595 = vrot.slane %v594, 4
      %v597 = vshrl.u32 %v574, 16
      %v599 = vrot.slane %v597, 5
      %v600 = vshll.u32 %v574, 16
      %v602 = vrot.slane %v600, 6
      %v603 = vor.u32 %v599, %v602
      %v604 = vsel %vm586, %v595, %v603
      %v605 = vrot.slane %v603, 4
      %v607 = vshrl.u32 %v575, 16
      %v609 = vrot.slane %v607, 5
      %v610 = vshll.u32 %v575, 16
      %v612 = vrot.slane %v610, 6
      %v613 = vor.u32 %v609, %v612
      %v614 = vsel %vm586, %v605, %v613
      %v615 = vrot.slane %v613, 4
      %v617 = vshrl.u32 %v576, 16
      %v619 = vrot.slane %v617, 5
      %v620 = vshll.u32 %v576, 16
      %v622 = vrot.slane %v620, 6
      %v623 = vor.u32 %v619, %v622
      %v624 = vsel %vm586, %v615, %v623
      %v625 = vrot.slane %v623, 4
      %v627 = vshrl.u32 %v577, 16
      %v629 = vrot.slane %v627, 5
      %v630 = vshll.u32 %v577, 16
      %v632 = vrot.slane %v630, 6
      %v633 = vor.u32 %v629, %v632
      %v634 = vsel %vm586, %v625, %v633
      %v635 = vrot.slane %v633, 4
      %v637 = vshrl.u32 %v578, 16
      %v639 = vrot.slane %v637, 5
      %v640 = vshll.u32 %v578, 16
      %v642 = vrot.slane %v640, 6
      %v643 = vor.u32 %v639, %v642
      %v644 = vsel %vm586, %v635, %v643
      %v645 = vrot.slane %v643, 4
      %v647 = vshrl.u32 %v579, 16
      %v649 = vrot.slane %v647, 5
      %v650 = vshll.u32 %v579, 16
      %v652 = vrot.slane %v650, 6
      %v653 = vor.u32 %v649, %v652
      %v654 = vsel %vm586, %v645, %v653
      %v655 = vrot.slane %v653, 4
      %v657 = vshrl.u32 %v580, 16
      %v659 = vrot.slane %v657, 5
      %v660 = vshll.u32 %v580, 16
      %v662 = vrot.slane %v660, 6
      %v663 = vor.u32 %v659, %v662
      %v664 = vsel %vm586, %v655, %v663
      %v665 = vrot.slane %v663, 4
      %v667 = vshrl.u32 %v581, 16
      %v669 = vrot.slane %v667, 5
      %v670 = vshll.u32 %v581, 16
      %v672 = vrot.slane %v670, 6
      %v673 = vor.u32 %v669, %v672
      %v674 = vsel %vm586, %v665, %v673
      %v675 = vrot.slane %v673, 4
      %v677 = vshrl.u32 %v582, 16
      %v679 = vrot.slane %v677, 5
      %v680 = vshll.u32 %v582, 16
      %v682 = vrot.slane %v680, 6
      %v683 = vor.u32 %v679, %v682
      %v684 = vsel %vm586, %v675, %v683
      %v685 = vrot.slane %v683, 4
      %v687 = vshrl.u32 %v583, 16
      %v689 = vrot.slane %v687, 5
      %v690 = vshll.u32 %v583, 16
      %v692 = vrot.slane %v690, 6
      %v693 = vor.u32 %v689, %v692
      %v694 = vsel %vm586, %v685, %v693
      %695 = vrot.lane.b32.xlu0 %v604, 64
      %v696 = vpop.permute.xlu0 %695
      %697 = vrot.lane.b32.xlu0 %v614, 64
      %v698 = vpop.permute.xlu0 %697
      %699 = vrot.lane.b32.xlu0 %v624, 64
      %v700 = vpop.permute.xlu0 %699
      %701 = vrot.lane.b32.xlu0 %v634, 64
      %v702 = vpop.permute.xlu0 %701
      %703 = vrot.lane.b32.xlu0 %v644, 64
      %v704 = vpop.permute.xlu0 %703
      %705 = vrot.lane.b32.xlu0 %v654, 64
      %v706 = vpop.permute.xlu0 %705
      %707 = vrot.lane.b32.xlu0 %v664, 64
      %v708 = vpop.permute.xlu0 %707
      %709 = vrot.lane.b32.xlu0 %v674, 64
      %v710 = vpop.permute.xlu0 %709
      %711 = vrot.lane.b32.xlu0 %v684, 64
      %v712 = vpop.permute.xlu0 %711
      %713 = vrot.lane.b32.xlu0 %v694, 64
      %v714 = vpop.permute.xlu0 %713
      %vm725 = vcmask 650752
      %726 = vst.msk [vmem:[#allocation2] sm:$0xf] %vm725, %v696
      %727 = vst.msk [vmem:[#allocation2 + $0x8] sm:$0xf] %vm725, %v698
      %728 = vst.msk [vmem:[#allocation2 + $0x10] sm:$0xf] %vm725, %v700
      %729 = vst.msk [vmem:[#allocation2 + $0x18] sm:$0xf] %vm725, %v702
      %730 = vst.msk [vmem:[#allocation2 + $0x20] sm:$0xf] %vm725, %v704
      %731 = vst.msk [vmem:[#allocation2 + $0x28] sm:$0xf] %vm725, %v706
      %732 = vst.msk [vmem:[#allocation2 + $0x30] sm:$0xf] %vm725, %v708
      %733 = vst.msk [vmem:[#allocation2 + $0x38] sm:$0xf] %vm725, %v710
      %734 = vst.msk [vmem:[#allocation2 + $0x40] sm:$0xf] %vm725, %v712
      %735 = vst.msk [vmem:[#allocation2 + $0x48] sm:$0xf] %vm725, %v714
      %v736 = vld [vmem:[%s183 + $0x4] sm:$0xc]
      %v737 = vld [vmem:[%s183 + $0x8] sm:$0xf]
      %v738 = vld [vmem:[%s183 + $0xc] sm:$0xf]
      %v739 = vld [vmem:[%s183 + $0x10] sm:$0xf]
      %v740 = vld [vmem:[%s183 + $0x14] sm:$0xf]
      %v741 = vld [vmem:[%s183 + $0x18] sm:$0xf]
      %v742 = vld [vmem:[%s183 + $0x1c] sm:$0xf]
      %v743 = vld [vmem:[%s183 + $0x20] sm:$0xf]
      %v744 = vld [vmem:[%s183 + $0x24] sm:$0xf]
      %v745 = vld [vmem:[%s183 + $0x28] sm:$0xf]
      %v746 = vld [vmem:[%s183 + $0x2c] sm:$0x3]
      %vm758 = vcmask 1041408
      %vm759 = vcmask 1045508
      %vm760 = vmor %vm758, %vm759
      %v761 = vrot.slane %v736, 6
      %v762 = vrot.slane %v761, 4
      %v763 = vrot.slane %v737, 6
      %v764 = vsel %vm760, %v762, %v763
      %v765 = vrot.slane %v763, 4
      %v766 = vrot.slane %v738, 6
      %v767 = vsel %vm760, %v765, %v766
      %v768 = vrot.slane %v766, 4
      %v769 = vrot.slane %v739, 6
      %v770 = vsel %vm760, %v768, %v769
      %v771 = vrot.slane %v769, 4
      %v772 = vrot.slane %v740, 6
      %v773 = vsel %vm760, %v771, %v772
      %v774 = vrot.slane %v772, 4
      %v775 = vrot.slane %v741, 6
      %v776 = vsel %vm760, %v774, %v775
      %v777 = vrot.slane %v775, 4
      %v778 = vrot.slane %v742, 6
      %v779 = vsel %vm760, %v777, %v778
      %v780 = vrot.slane %v778, 4
      %v781 = vrot.slane %v743, 6
      %v782 = vsel %vm760, %v780, %v781
      %v783 = vrot.slane %v781, 4
      %v784 = vrot.slane %v744, 6
      %v785 = vsel %vm760, %v783, %v784
      %v786 = vrot.slane %v784, 4
      %v787 = vrot.slane %v745, 6
      %v788 = vsel %vm760, %v786, %v787
      %v789 = vrot.slane %v787, 4
      %v790 = vrot.slane %v746, 6
      %v791 = vsel %vm760, %v789, %v790
      %792 = vrot.lane.b32.xlu0 %v764, 80
      %v793 = vpop.permute.xlu0 %792
      %794 = vrot.lane.b32.xlu0 %v767, 80
      %v795 = vpop.permute.xlu0 %794
      %796 = vrot.lane.b32.xlu0 %v770, 80
      %v797 = vpop.permute.xlu0 %796
      %798 = vrot.lane.b32.xlu0 %v773, 80
      %v799 = vpop.permute.xlu0 %798
      %800 = vrot.lane.b32.xlu0 %v776, 80
      %v801 = vpop.permute.xlu0 %800
      %802 = vrot.lane.b32.xlu0 %v779, 80
      %v803 = vpop.permute.xlu0 %802
      %804 = vrot.lane.b32.xlu0 %v782, 80
      %v805 = vpop.permute.xlu0 %804
      %806 = vrot.lane.b32.xlu0 %v785, 80
      %v807 = vpop.permute.xlu0 %806
      %808 = vrot.lane.b32.xlu0 %v788, 80
      %v809 = vpop.permute.xlu0 %808
      %810 = vrot.lane.b32.xlu0 %v791, 80
      %v811 = vpop.permute.xlu0 %810
      %vm822 = vcmask 781952
      %823 = vst.msk [vmem:[#allocation2] sm:$0xf] %vm822, %v793
      %824 = vst.msk [vmem:[#allocation2 + $0x8] sm:$0xf] %vm822, %v795
      %825 = vst.msk [vmem:[#allocation2 + $0x10] sm:$0xf] %vm822, %v797
      %826 = vst.msk [vmem:[#allocation2 + $0x18] sm:$0xf] %vm822, %v799
      %827 = vst.msk [vmem:[#allocation2 + $0x20] sm:$0xf] %vm822, %v801
      %828 = vst.msk [vmem:[#allocation2 + $0x28] sm:$0xf] %vm822, %v803
      %829 = vst.msk [vmem:[#allocation2 + $0x30] sm:$0xf] %vm822, %v805
      %830 = vst.msk [vmem:[#allocation2 + $0x38] sm:$0xf] %vm822, %v807
      %831 = vst.msk [vmem:[#allocation2 + $0x40] sm:$0xf] %vm822, %v809
      %832 = vst.msk [vmem:[#allocation2 + $0x48] sm:$0xf] %vm822, %v811
      %v833 = vld [vmem:[%s183 + $0x8] sm:$0xc]
      %v834 = vld [vmem:[%s183 + $0xc] sm:$0xf]
      %v835 = vld [vmem:[%s183 + $0x10] sm:$0xf]
      %v836 = vld [vmem:[%s183 + $0x14] sm:$0xf]
      %v837 = vld [vmem:[%s183 + $0x18] sm:$0xf]
      %v838 = vld [vmem:[%s183 + $0x1c] sm:$0xf]
      %v839 = vld [vmem:[%s183 + $0x20] sm:$0xf]
      %v840 = vld [vmem:[%s183 + $0x24] sm:$0xf]
      %v841 = vld [vmem:[%s183 + $0x28] sm:$0xf]
      %v842 = vld [vmem:[%s183 + $0x2c] sm:$0xf]
      %v843 = vld [vmem:[%s183 + $0x30] sm:$0x3]
      %v855 = vrot.slane %v833, 6
      %v856 = vrot.slane %v855, 4
      %v857 = vrot.slane %v834, 6
      %v858 = vsel %vm760, %v856, %v857
      %v859 = vrot.slane %v857, 4
      %v860 = vrot.slane %v835, 6
      %v861 = vsel %vm760, %v859, %v860
      %v862 = vrot.slane %v860, 4
      %v863 = vrot.slane %v836, 6
      %v864 = vsel %vm760, %v862, %v863
      %v865 = vrot.slane %v863, 4
      %v866 = vrot.slane %v837, 6
      %v867 = vsel %vm760, %v865, %v866
      %v868 = vrot.slane %v866, 4
      %v869 = vrot.slane %v838, 6
      %v870 = vsel %vm760, %v868, %v869
      %v871 = vrot.slane %v869, 4
      %v872 = vrot.slane %v839, 6
      %v873 = vsel %vm760, %v871, %v872
      %v874 = vrot.slane %v872, 4
      %v875 = vrot.slane %v840, 6
      %v876 = vsel %vm760, %v874, %v875
      %v877 = vrot.slane %v875, 4
      %v878 = vrot.slane %v841, 6
      %v879 = vsel %vm760, %v877, %v878
      %v880 = vrot.slane %v878, 4
      %v881 = vrot.slane %v842, 6
      %v882 = vsel %vm760, %v880, %v881
      %v883 = vrot.slane %v881, 4
      %v884 = vrot.slane %v843, 6
      %v885 = vsel %vm760, %v883, %v884
      %886 = vrot.lane.b32.xlu0 %v858, 96
      %v887 = vpop.permute.xlu0 %886
      %888 = vrot.lane.b32.xlu0 %v861, 96
      %v889 = vpop.permute.xlu0 %888
      %890 = vrot.lane.b32.xlu0 %v864, 96
      %v891 = vpop.permute.xlu0 %890
      %892 = vrot.lane.b32.xlu0 %v867, 96
      %v893 = vpop.permute.xlu0 %892
      %894 = vrot.lane.b32.xlu0 %v870, 96
      %v895 = vpop.permute.xlu0 %894
      %896 = vrot.lane.b32.xlu0 %v873, 96
      %v897 = vpop.permute.xlu0 %896
      %898 = vrot.lane.b32.xlu0 %v876, 96
      %v899 = vpop.permute.xlu0 %898
      %900 = vrot.lane.b32.xlu0 %v879, 96
      %v901 = vpop.permute.xlu0 %900
      %902 = vrot.lane.b32.xlu0 %v882, 96
      %v903 = vpop.permute.xlu0 %902
      %904 = vrot.lane.b32.xlu0 %v885, 96
      %v905 = vpop.permute.xlu0 %904
      %vm916 = vcmask 913152
      %917 = vst.msk [vmem:[#allocation2] sm:$0xf] %vm916, %v887
      %918 = vst.msk [vmem:[#allocation2 + $0x8] sm:$0xf] %vm916, %v889
      %919 = vst.msk [vmem:[#allocation2 + $0x10] sm:$0xf] %vm916, %v891
      %920 = vst.msk [vmem:[#allocation2 + $0x18] sm:$0xf] %vm916, %v893
      %921 = vst.msk [vmem:[#allocation2 + $0x20] sm:$0xf] %vm916, %v895
      %922 = vst.msk [vmem:[#allocation2 + $0x28] sm:$0xf] %vm916, %v897
      %923 = vst.msk [vmem:[#allocation2 + $0x30] sm:$0xf] %vm916, %v899
      %924 = vst.msk [vmem:[#allocation2 + $0x38] sm:$0xf] %vm916, %v901
      %925 = vst.msk [vmem:[#allocation2 + $0x40] sm:$0xf] %vm916, %v903
      %926 = vst.msk [vmem:[#allocation2 + $0x48] sm:$0xf] %vm916, %v905
      %v927 = vld [vmem:[%s183 + $0x8] sm:$0xc]
      %v928 = vld [vmem:[%s183 + $0xc] sm:$0xf]
      %v929 = vld [vmem:[%s183 + $0x10] sm:$0xf]
      %v930 = vld [vmem:[%s183 + $0x14] sm:$0xf]
      %v931 = vld [vmem:[%s183 + $0x18] sm:$0xf]
      %v932 = vld [vmem:[%s183 + $0x1c] sm:$0xf]
      %v933 = vld [vmem:[%s183 + $0x20] sm:$0xf]
      %v934 = vld [vmem:[%s183 + $0x24] sm:$0xf]
      %v935 = vld [vmem:[%s183 + $0x28] sm:$0xf]
      %v936 = vld [vmem:[%s183 + $0x2c] sm:$0xf]
      %v937 = vld [vmem:[%s183 + $0x30] sm:$0x7]
      %vm938 = vsmask.f32 1280
      %vm939 = vsmask.f32 5392
      %vm940 = vmor %vm938, %vm939
      %v942 = vshrl.u32 %v927, 16
      %v944 = vrot.slane %v942, 6
      %v945 = vshll.u32 %v927, 16
      %v947 = vrot.slane %v945, 7
      %v948 = vor.u32 %v944, %v947
      %v949 = vrot.slane %v948, 4
      %v951 = vshrl.u32 %v928, 16
      %v953 = vrot.slane %v951, 6
      %v954 = vshll.u32 %v928, 16
      %v956 = vrot.slane %v954, 7
      %v957 = vor.u32 %v953, %v956
      %v958 = vsel %vm940, %v949, %v957
      %v959 = vrot.slane %v957, 4
      %v961 = vshrl.u32 %v929, 16
      %v963 = vrot.slane %v961, 6
      %v964 = vshll.u32 %v929, 16
      %v966 = vrot.slane %v964, 7
      %v967 = vor.u32 %v963, %v966
      %v968 = vsel %vm940, %v959, %v967
      %v969 = vrot.slane %v967, 4
      %v971 = vshrl.u32 %v930, 16
      %v973 = vrot.slane %v971, 6
      %v974 = vshll.u32 %v930, 16
      %v976 = vrot.slane %v974, 7
      %v977 = vor.u32 %v973, %v976
      %v978 = vsel %vm940, %v969, %v977
      %v979 = vrot.slane %v977, 4
      %v981 = vshrl.u32 %v931, 16
      %v983 = vrot.slane %v981, 6
      %v984 = vshll.u32 %v931, 16
      %v986 = vrot.slane %v984, 7
      %v987 = vor.u32 %v983, %v986
      %v988 = vsel %vm940, %v979, %v987
      %v989 = vrot.slane %v987, 4
      %v991 = vshrl.u32 %v932, 16
      %v993 = vrot.slane %v991, 6
      %v994 = vshll.u32 %v932, 16
      %v996 = vrot.slane %v994, 7
      %v997 = vor.u32 %v993, %v996
      %v998 = vsel %vm940, %v989, %v997
      %v999 = vrot.slane %v997, 4
      %v1001 = vshrl.u32 %v933, 16
      %v1003 = vrot.slane %v1001, 6
      %v1004 = vshll.u32 %v933, 16
      %v1006 = vrot.slane %v1004, 7
      %v1007 = vor.u32 %v1003, %v1006
      %v1008 = vsel %vm940, %v999, %v1007
      %v1009 = vrot.slane %v1007, 4
      %v1011 = vshrl.u32 %v934, 16
      %v1013 = vrot.slane %v1011, 6
      %v1014 = vshll.u32 %v934, 16
      %v1016 = vrot.slane %v1014, 7
      %v1017 = vor.u32 %v1013, %v1016
      %v1018 = vsel %vm940, %v1009, %v1017
      %v1019 = vrot.slane %v1017, 4
      %v1021 = vshrl.u32 %v935, 16
      %v1023 = vrot.slane %v1021, 6
      %v1024 = vshll.u32 %v935, 16
      %v1026 = vrot.slane %v1024, 7
      %v1027 = vor.u32 %v1023, %v1026
      %v1028 = vsel %vm940, %v1019, %v1027
      %v1029 = vrot.slane %v1027, 4
      %v1031 = vshrl.u32 %v936, 16
      %v1033 = vrot.slane %v1031, 6
      %v1034 = vshll.u32 %v936, 16
      %v1036 = vrot.slane %v1034, 7
      %v1037 = vor.u32 %v1033, %v1036
      %v1038 = vsel %vm940, %v1029, %v1037
      %v1039 = vrot.slane %v1037, 4
      %v1041 = vshrl.u32 %v937, 16
      %v1043 = vrot.slane %v1041, 6
      %v1044 = vshll.u32 %v937, 16
      %v1046 = vrot.slane %v1044, 7
      %v1047 = vor.u32 %v1043, %v1046
      %v1048 = vsel %vm940, %v1039, %v1047
      %1049 = vrot.lane.b32.xlu0 %v958, 112
      %v1050 = vpop.permute.xlu0 %1049
      %1051 = vrot.lane.b32.xlu0 %v968, 112
      %v1052 = vpop.permute.xlu0 %1051
      %1053 = vrot.lane.b32.xlu0 %v978, 112
      %v1054 = vpop.permute.xlu0 %1053
      %1055 = vrot.lane.b32.xlu0 %v988, 112
      %v1056 = vpop.permute.xlu0 %1055
      %1057 = vrot.lane.b32.xlu0 %v998, 112
      %v1058 = vpop.permute.xlu0 %1057
      %1059 = vrot.lane.b32.xlu0 %v1008, 112
      %v1060 = vpop.permute.xlu0 %1059
      %1061 = vrot.lane.b32.xlu0 %v1018, 112
      %v1062 = vpop.permute.xlu0 %1061
      %1063 = vrot.lane.b32.xlu0 %v1028, 112
      %v1064 = vpop.permute.xlu0 %1063
      %1065 = vrot.lane.b32.xlu0 %v1038, 112
      %v1066 = vpop.permute.xlu0 %1065
      %1067 = vrot.lane.b32.xlu0 %v1048, 112
      %v1068 = vpop.permute.xlu0 %1067
      %vm1079 = vcmask 1044352
      %1080 = vst.msk [vmem:[#allocation2] sm:$0xf] %vm1079, %v1050
      %1081 = vst.msk [vmem:[#allocation2 + $0x8] sm:$0xf] %vm1079, %v1052
      %1082 = vst.msk [vmem:[#allocation2 + $0x10] sm:$0xf] %vm1079, %v1054
      %1083 = vst.msk [vmem:[#allocation2 + $0x18] sm:$0xf] %vm1079, %v1056
      %1084 = vst.msk [vmem:[#allocation2 + $0x20] sm:$0xf] %vm1079, %v1058
      %1085 = vst.msk [vmem:[#allocation2 + $0x28] sm:$0xf] %vm1079, %v1060
      %1086 = vst.msk [vmem:[#allocation2 + $0x30] sm:$0xf] %vm1079, %v1062
      %1087 = vst.msk [vmem:[#allocation2 + $0x38] sm:$0xf] %vm1079, %v1064
      %1088 = vst.msk [vmem:[#allocation2 + $0x40] sm:$0xf] %vm1079, %v1066
      %1089 = vst.msk [vmem:[#allocation2 + $0x48] sm:$0xf] %vm1079, %v1068
      %v1090 = vld [vmem:[%s183 + $0x8] sm:$0x8]
      %v1091 = vld [vmem:[%s183 + $0xc] sm:$0xf]
      %v1092 = vld [vmem:[%s183 + $0x10] sm:$0xf]
      %v1093 = vld [vmem:[%s183 + $0x14] sm:$0xf]
      %v1094 = vld [vmem:[%s183 + $0x18] sm:$0xf]
      %v1095 = vld [vmem:[%s183 + $0x1c] sm:$0xf]
      %v1096 = vld [vmem:[%s183 + $0x20] sm:$0xf]
      %v1097 = vld [vmem:[%s183 + $0x24] sm:$0xf]
      %v1098 = vld [vmem:[%s183 + $0x28] sm:$0xf]
      %v1099 = vld [vmem:[%s183 + $0x2c] sm:$0xf]
      %v1100 = vld [vmem:[%s183 + $0x30] sm:$0x7]
      %vm1112 = vcmask 1040384
      %vm1113 = vcmask 1044484
      %vm1114 = vmor %vm1112, %vm1113
      %v1115 = vrot.slane %v1090, 7
      %v1116 = vrot.slane %v1115, 4
      %v1117 = vrot.slane %v1091, 7
      %v1118 = vsel %vm1114, %v1116, %v1117
      %v1119 = vrot.slane %v1117, 4
      %v1120 = vrot.slane %v1092, 7
      %v1121 = vsel %vm1114, %v1119, %v1120
      %v1122 = vrot.slane %v1120, 4
      %v1123 = vrot.slane %v1093, 7
      %v1124 = vsel %vm1114, %v1122, %v1123
      %v1125 = vrot.slane %v1123, 4
      %v1126 = vrot.slane %v1094, 7
      %v1127 = vsel %vm1114, %v1125, %v1126
      %v1128 = vrot.slane %v1126, 4
      %v1129 = vrot.slane %v1095, 7
      %v1130 = vsel %vm1114, %v1128, %v1129
      %v1131 = vrot.slane %v1129, 4
      %v1132 = vrot.slane %v1096, 7
      %v1133 = vsel %vm1114, %v1131, %v1132
      %v1134 = vrot.slane %v1132, 4
      %v1135 = vrot.slane %v1097, 7
      %v1136 = vsel %vm1114, %v1134, %v1135
      %v1137 = vrot.slane %v1135, 4
      %v1138 = vrot.slane %v1098, 7
      %v1139 = vsel %vm1114, %v1137, %v1138
      %v1140 = vrot.slane %v1138, 4
      %v1141 = vrot.slane %v1099, 7
      %v1142 = vsel %vm1114, %v1140, %v1141
      %v1143 = vrot.slane %v1141, 4
      %v1144 = vrot.slane %v1100, 7
      %v1145 = vsel %vm1114, %v1143, %v1144
      %1156 = vst.msk [vmem:[#allocation2 + $0x4] sm:$0xf] %vm212, %v1118
      %1157 = vst.msk [vmem:[#allocation2 + $0xc] sm:$0xf] %vm212, %v1121
      %1158 = vst.msk [vmem:[#allocation2 + $0x14] sm:$0xf] %vm212, %v1124
      %1159 = vst.msk [vmem:[#allocation2 + $0x1c] sm:$0xf] %vm212, %v1127
      %1160 = vst.msk [vmem:[#allocation2 + $0x24] sm:$0xf] %vm212, %v1130
      %1161 = vst.msk [vmem:[#allocation2 + $0x2c] sm:$0xf] %vm212, %v1133
      %1162 = vst.msk [vmem:[#allocation2 + $0x34] sm:$0xf] %vm212, %v1136
      %1163 = vst.msk [vmem:[#allocation2 + $0x3c] sm:$0xf] %vm212, %v1139
      %1164 = vst.msk [vmem:[#allocation2 + $0x44] sm:$0xf] %vm212, %v1142
      %1165 = vst.msk [vmem:[#allocation2 + $0x4c] sm:$0xf] %vm212, %v1145
      %v1166 = vld [vmem:[#allocation2] sm:$0xff]
      %v1167 = vld [vmem:[#allocation2 + $0x8] sm:$0xff]
      %v1168 = vld [vmem:[#allocation2 + $0x10] sm:$0xff]
      %v1169 = vld [vmem:[#allocation2 + $0x18] sm:$0xff]
      %v1170 = vld [vmem:[#allocation2 + $0x20] sm:$0xff]
      %v1171 = vld [vmem:[#allocation2 + $0x28] sm:$0xff]
      %v1172 = vld [vmem:[#allocation2 + $0x30] sm:$0xff]
      %v1173 = vld [vmem:[#allocation2 + $0x38] sm:$0xff]
      %v1174 = vld [vmem:[#allocation2 + $0x40] sm:$0xff]
      %v1175 = vld [vmem:[#allocation2 + $0x48] sm:$0xff]
      %v1176 = vld [vmem:[%s1] sm:$0xf]
      %v1177 = vld [vmem:[%s1 + $0x4] sm:$0xf]
      %v1178 = vld [vmem:[%s1 + $0x8] sm:$0xf]
      %v1179 = vld [vmem:[%s1 + $0xc] sm:$0xf]
      %v1180 = vld [vmem:[%s1 + $0x10] sm:$0xf]
      %v1181 = vld [vmem:[%s1 + $0x14] sm:$0xf]
      %v1182 = vld [vmem:[%s1 + $0x18] sm:$0xf]
      %v1183 = vld [vmem:[%s1 + $0x1c] sm:$0xf]
      %v1184 = vld [vmem:[%s1 + $0x20] sm:$0xf]
      %v1185 = vld [vmem:[%s1 + $0x24] sm:$0xf]
      %v1186 = vld [vmem:[%s1 + $0x28] sm:$0xf]
      %v1187 = vld [vmem:[%s1 + $0x2c] sm:$0xf]
      %v1188 = vld [vmem:[%s1 + $0x30] sm:$0xf]
      %v1189 = vld [vmem:[%s1 + $0x34] sm:$0xf]
      %v1190 = vld [vmem:[%s1 + $0x38] sm:$0xf]
      %v1191 = vld [vmem:[%s1 + $0x3c] sm:$0xf]
      %v1192 = vld [vmem:[%s1 + $0x40] sm:$0xf]
      %v1193 = vld [vmem:[%s1 + $0x44] sm:$0xf]
      %v1204 = vunpack.c.l.b16 %v1166
      %v1205 = vunpack.c.h.b16 %v1166
      %v1206 = vunpack.c.l.b16 %v1167
      %v1207 = vunpack.c.h.b16 %v1167
      %v1208 = vunpack.c.l.b16 %v1168
      %v1209 = vunpack.c.h.b16 %v1168
      %v1210 = vunpack.c.l.b16 %v1169
      %v1211 = vunpack.c.h.b16 %v1169
      %v1212 = vunpack.c.l.b16 %v1170
      %v1213 = vunpack.c.h.b16 %v1170
      %v1214 = vunpack.c.l.b16 %v1171
      %v1215 = vunpack.c.h.b16 %v1171
      %v1216 = vunpack.c.l.b16 %v1172
      %v1217 = vunpack.c.h.b16 %v1172
      %v1218 = vunpack.c.l.b16 %v1173
      %v1219 = vunpack.c.h.b16 %v1173
      %v1220 = vunpack.c.l.b16 %v1174
      %v1221 = vunpack.c.h.b16 %v1174
      %v1222 = vunpack.c.l.b16 %v1175
      %v1223 = vunpack.c.h.b16 %v1175
      %v1224 = vpack.c.b16 %v1206, %v1204
      %v1225 = vpack.c.b16 %v1207, %v1205
      %v1226 = vpack.c.b16 %v1210, %v1208
      %v1227 = vpack.c.b16 %v1211, %v1209
      %v1228 = vpack.c.b16 %v1214, %v1212
      %v1229 = vpack.c.b16 %v1215, %v1213
      %v1230 = vpack.c.b16 %v1218, %v1216
      %v1231 = vpack.c.b16 %v1219, %v1217
      %v1232 = vpack.c.b16 %v1222, %v1220
      %v1233 = vpack.c.b16 %v1223, %v1221
      %v1257 = vunpack.c.l.b16 %v1176
      %v1258 = vunpack.c.l.b16 %v1177
      %v1259 = vunpack.c.l.b16 %v1178
      %v1260 = vunpack.c.l.b16 %v1179
      %v1261 = vunpack.c.l.b16 %v1180
      %v1262 = vunpack.c.l.b16 %v1181
      %v1263 = vunpack.c.l.b16 %v1182
      %v1264 = vunpack.c.l.b16 %v1183
      %v1265 = vunpack.c.l.b16 %v1184
      %v1266 = vunpack.c.l.b16 %v1185
      %v1267 = vunpack.c.l.b16 %v1186
      %v1268 = vunpack.c.l.b16 %v1187
      %v1269 = vunpack.c.l.b16 %v1188
      %v1270 = vunpack.c.l.b16 %v1189
      %v1271 = vunpack.c.l.b16 %v1190
      %v1272 = vunpack.c.l.b16 %v1191
      %v1273 = vunpack.c.l.b16 %v1192
      %v1274 = vunpack.c.l.b16 %v1193
      %v1275 = vpack.c.b16 %v1258, %v1257
      %v1276 = vpack.c.b16 %v1260, %v1259
      %v1277 = vpack.c.b16 %v1262, %v1261
      %v1278 = vpack.c.b16 %v1264, %v1263
      %v1279 = vpack.c.b16 %v1266, %v1265
      %v1280 = vpack.c.b16 %v1268, %v1267
      %v1281 = vpack.c.b16 %v1270, %v1269
      %v1282 = vpack.c.b16 %v1272, %v1271
      %v1283 = vpack.c.b16 %v1274, %v1273
      %vm1293 = vcmask 130048
      %v1295 = vsel %vm1293, %v1225, 0
      %v1298 = vsel %vm1293, %v1227, 0
      %v1301 = vsel %vm1293, %v1229, 0
      %v1304 = vsel %vm1293, %v1231, 0
      %v1307 = vsel %vm1293, %v1233, 0
      %1309 = vmatprep.subr.bf16.mxu0 0
      %1310 = vmatpush1.bf16.msra.mxu0 %v1282
      %1311 = vmatprep.subr.bf16.mxu0 0
      %1312 = vmatpush1.bf16.msra.mxu0 %v1281
      %1313 = vmatprep.subr.bf16.mxu0 0
      %1314 = vmatpush1.bf16.msra.mxu0 %v1280
      %1315 = vmatprep.subr.bf16.mxu0 0
      %1316 = vmatpush1.bf16.msra.mxu0 %v1279
      %1317 = vmatprep.subr.bf16.mxu0 0
      %1318 = vmatpush1.bf16.msra.mxu0 %v1278
      %1319 = vmatprep.subr.bf16.mxu0 0
      %1320 = vmatpush1.bf16.msra.mxu0 %v1277
      %1321 = vmatprep.subr.bf16.mxu0 0
      %1322 = vmatpush1.bf16.msra.mxu0 %v1276
      %1323 = vmatprep.subr.bf16.mxu0 0
      %1324 = vmatpush1.bf16.msra.mxu0 %v1275
      %1325 = vmatprep.subr.bf16.mxu0 0
      %1326 = vmatpush2.bf16.msra.mxu0 0
      %1327 = vmatprep.subr.bf16.mxu0 0
      %1328 = vmatpush2.bf16.msra.mxu0 0
      %1329 = vmatprep.subr.bf16.mxu0 0
      %1330 = vmatpush2.bf16.msra.mxu0 0
      %1331 = vmatprep.subr.bf16.mxu0 0
      %1332 = vmatpush2.bf16.msra.mxu0 0
      %1333 = vmatprep.subr.bf16.mxu0 0
      %1334 = vmatpush2.bf16.msra.mxu0 0
      %1335 = vmatprep.subr.bf16.mxu0 0
      %1336 = vmatpush2.bf16.msra.mxu0 0
      %1337 = vmatprep.subr.bf16.mxu0 0
      %1338 = vmatpush2.bf16.msra.mxu0 0
      %1339 = vmatprep.subr.bf16.mxu0 0
      %1340 = vmatpush2.bf16.msra.mxu0 %v1283
      %1341 = vmatprep.mubr.bf16.mxu0 %v1295
      %1342 = vmatmul.mubr.bf16.gmra.mxu0 %v1224
      %v1343 = vpop.f32.mrf.mxu0
      %v1344 = vadd.f32 0.0, %v1343
      %v1345 = vpop.f32.mrf.mxu0
      %v1346 = vpop.f32.mrf.mxu0
      %v1347 = vadd.f32 0.0, %v1346
      %v1348 = vpop.f32.mrf.mxu0
      %1349 = vmatprep.mubr.bf16.mxu0 %v1298
      %1350 = vmatmul.mubr.bf16.gmra.mxu0 %v1226
      %v1351 = vpop.f32.mrf.mxu0
      %v1352 = vadd.f32 0.0, %v1351
      %v1353 = vpop.f32.mrf.mxu0
      %v1354 = vpop.f32.mrf.mxu0
      %v1355 = vadd.f32 0.0, %v1354
      %v1356 = vpop.f32.mrf.mxu0
      %1357 = vmatprep.mubr.bf16.mxu0 %v1301
      %1358 = vmatmul.mubr.bf16.gmra.mxu0 %v1228
      %v1359 = vpop.f32.mrf.mxu0
      %v1360 = vadd.f32 0.0, %v1359
      %v1361 = vpop.f32.mrf.mxu0
      %v1362 = vpop.f32.mrf.mxu0
      %v1363 = vadd.f32 0.0, %v1362
      %v1364 = vpop.f32.mrf.mxu0
      %1365 = vmatprep.mubr.bf16.mxu0 %v1304
      %1366 = vmatmul.mubr.bf16.gmra.mxu0 %v1230
      %v1367 = vpop.f32.mrf.mxu0
      %v1368 = vadd.f32 0.0, %v1367
      %v1369 = vpop.f32.mrf.mxu0
      %v1370 = vpop.f32.mrf.mxu0
      %v1371 = vadd.f32 0.0, %v1370
      %v1372 = vpop.f32.mrf.mxu0
      %1373 = vmatprep.mubr.bf16.mxu0 %v1307
      %1374 = vmatmul.mubr.bf16.gmra.mxu0 %v1232
      %v1375 = vpop.f32.mrf.mxu0
      %v1376 = vadd.f32 0.0, %v1375
      %v1377 = vpop.f32.mrf.mxu0
      %v1378 = vpop.f32.mrf.mxu0
      %v1379 = vadd.f32 0.0, %v1378
      %v1380 = vpop.f32.mrf.mxu0
      %1381 = vdwg.mxu0
      %v1382 = vadd.f32 %v200, %v1344
      %v1383 = vadd.f32 %v200, %v1347
      %v1384 = vadd.f32 %v200, %v1352
      %v1385 = vadd.f32 %v200, %v1355
      %v1386 = vadd.f32 %v200, %v1360
      %v1387 = vadd.f32 %v200, %v1363
      %v1388 = vadd.f32 %v200, %v1368
      %v1389 = vadd.f32 %v200, %v1371
      %v1390 = vadd.f32 %v200, %v1376
      %v1391 = vadd.f32 %v200, %v1379
      %v1392 = vmax.f32 %v1382, 0.0
      %v1393 = vmax.f32 %v1383, 0.0
      %v1394 = vmax.f32 %v1384, 0.0
      %v1395 = vmax.f32 %v1385, 0.0
      %v1396 = vmax.f32 %v1386, 0.0
      %v1397 = vmax.f32 %v1387, 0.0
      %v1398 = vmax.f32 %v1388, 0.0
      %v1399 = vmax.f32 %v1389, 0.0
      %v1400 = vmax.f32 %v1390, 0.0
      %v1401 = vmax.f32 %v1391, 0.0
      %v1402 = vpack.c.bf16 %v1393, %v1392
      %v1403 = vpack.c.bf16 %v1395, %v1394
      %v1404 = vpack.c.bf16 %v1397, %v1396
      %v1405 = vpack.c.bf16 %v1399, %v1398
      %v1406 = vpack.c.bf16 %v1401, %v1400
      %v1412 = vunpack.c.l.b16 %v1402
      %v1413 = vunpack.c.h.b16 %v1402
      %v1414 = vunpack.c.l.b16 %v1403
      %v1415 = vunpack.c.h.b16 %v1403
      %v1416 = vunpack.c.l.b16 %v1404
      %v1417 = vunpack.c.h.b16 %v1404
      %v1418 = vunpack.c.l.b16 %v1405
      %v1419 = vunpack.c.h.b16 %v1405
      %v1420 = vunpack.c.l.b16 %v1406
      %v1421 = vunpack.c.h.b16 %v1406
      %v1422 = vpack.c.b16 %v1412, %v1412
      %v1423 = vpack.c.b16 %v1413, %v1413
      %v1424 = vpack.c.b16 %v1414, %v1414
      %v1425 = vpack.c.b16 %v1415, %v1415
      %v1426 = vpack.c.b16 %v1416, %v1416
      %v1427 = vpack.c.b16 %v1417, %v1417
      %v1428 = vpack.c.b16 %v1418, %v1418
      %v1429 = vpack.c.b16 %v1419, %v1419
      %v1430 = vpack.c.b16 %v1420, %v1420
      %v1431 = vpack.c.b16 %v1421, %v1421
      %vm1442 = vcmask 257024
      %1443 = vst.msk [vmem:[%s192] sm:$0xf] %vm1442, %v1422
      %1444 = vst.msk [vmem:[%s192 + $0x4] sm:$0xf] %vm1442, %v1423
      %1445 = vst.msk [vmem:[%s192 + $0x8] sm:$0xf] %vm1442, %v1424
      %1446 = vst.msk [vmem:[%s192 + $0xc] sm:$0xf] %vm1442, %v1425
      %1447 = vst.msk [vmem:[%s192 + $0x10] sm:$0xf] %vm1442, %v1426
      %1448 = vst.msk [vmem:[%s192 + $0x14] sm:$0xf] %vm1442, %v1427
      %1449 = vst.msk [vmem:[%s192 + $0x18] sm:$0xf] %vm1442, %v1428
      %1450 = vst.msk [vmem:[%s192 + $0x1c] sm:$0xf] %vm1442, %v1429
      %1451 = vst.msk [vmem:[%s192 + $0x20] sm:$0xf] %vm1442, %v1430
      %1452 = vst.msk [vmem:[%s192 + $0x24] sm:$0xf] %vm1442, %v1431
      %s1453 = smul.u32 10, %s19
      %p1454 = scmp.lt.s32.totalorder %s18, 1
      %s1455 = scalar_select %p1454, %s18, 1
      %p1456 = scmp.lt.s32.totalorder %s1453, 9
      %s1457 = scalar_select %p1456, %s1453, 9
      %s1458 = smul.addr %s1455, 10
      %s1459 = sadd.s32 %s1457, %s1458
      %s1460 = smul.addr %s1459, 4
      %s1461 = scalar_lea.vmem %s3, %s1460
      // Predicated region
      $region33: #{conv_autoencoder_forward.7} parent=31 // pred_check
        %p1462 = pneg %p114
      $region34: #{conv_autoencoder_forward.7} parent=31 // pred_check_branch
        %1464 = sbr.rel (%p1462) target = $region36
      $region35: #{conv_autoencoder_forward.7} parent=31 // pred_region
        %s1465 = smul.u32 10, %s19
      $region36: #{conv_autoencoder_forward.7} parent=31 // pred_fallthru
        _
    $region32: #{conv_autoencoder_forward.7} parent=5 // pred_fallthru
      _
    %p1466 = scmp.le.s32.totalorder 2, %s9
    // Predicated region
    $region37: #{conv_autoencoder_forward.7} parent=5 // pred_check
      %p1467 = pneg %p1466
    $region38: #{conv_autoencoder_forward.7} parent=5 // pred_check_branch
      %1469 = sbr.rel (%p1467) target = $region40
    $region39: #{conv_autoencoder_forward.7} parent=5 // pred_region
      %s1470 = ssub.s32 %s9, 2
      // Predicated region
      $region41: #{conv_autoencoder_forward.7} parent=39 // pred_check
        %p1471 = pneg %p120
      $region42: #{conv_autoencoder_forward.7} parent=39 // pred_check_branch
        %1473 = sbr.rel (%p1471) target = $region44
      $region43: #{conv_autoencoder_forward.7} parent=39 // pred_region
        %s1474 = smul.u32 10, %s21
        %p1475 = scmp.lt.s32.totalorder %s20, 1
        %s1476 = scalar_select %p1475, %s20, 1
        %p1477 = scmp.lt.s32.totalorder %s1474, 9
        %s1478 = scalar_select %p1477, %s1474, 9
        %s1479 = smul.addr %s1476, 10
        %s1480 = sadd.s32 %s1478, %s1479
        %s1481 = smul.addr %s1480, 4
        %s1482 = scalar_lea.vmem %s3, %s1481
      $region44: #{conv_autoencoder_forward.7} parent=39 // pred_fallthru
        _
    $region40: #{conv_autoencoder_forward.7} parent=5 // pred_fallthru
      _
  $region6: #{conv_autoencoder_forward.7} parent=0 // loop_footer
    %s13 = sadd.s32 1, %s9
  $region7: #{conv_autoencoder_forward.7} parent=0 // loop_footer_branch
    %8 = sbr.rel target = $region3
  $region8: #{conv_autoencoder_forward.7} parent=0 // loop_exit
    _

// kernel: conv_autoencoder_forward.8
$region0: #{conv_autoencoder_forward.8}
  #allocation0 [shape = 'u32[]', space=smem, size = 0x4, offset = 0x4, fixed_abs, tag = 'smem constant byte address 0x4 - core index']
  #allocation1 [shape = 'u32[144,128]{1,0:T(1,128)}', space=vmem, size = 0x12000, scoped, tag = 'internal scratch']
  %s0 = inlined_call_operand.vmem [shape: bf16[2,42,128], index: 0, kind: input, shape index: {}]
  %s1 = inlined_call_operand.vmem [shape: bf16[1152,32], index: 1, kind: input, shape index: {}]
  %s2 = inlined_call_operand.vmem [shape: f32[1,32], index: 2, kind: input, shape index: {}]
  %s3 = inlined_call_operand.vmem [shape: bf16[2,24,32], index: 3, kind: output, shape index: {}]
  %s4 = sld [smem:[#allocation0]]
  $region45: #{conv_autoencoder_forward.8} parent=0
    _
  %s6 = ssub.s32 1, %s4
  %s7 = scalar_select 0, %s6, %s4
  loop: start=0, step=1, limit=4
  $region2: #{conv_autoencoder_forward.8} parent=0 // loop_pre_header
    _
  $region3: #{conv_autoencoder_forward.8} parent=0 // loop_header
    %s9 = sphi 0, %s13
    %p10 = scmp.ge.s32.totalorder %s9, 4
    %s16 = sphi 0, %s28
    %s17 = sphi 0, %s24
    %s18 = sphi 0, %s16
    %s19 = sphi 0, %s17
    %s20 = sphi 0, %s18
    %s21 = sphi 0, %s19
    %s31 = sphi 0, %s33
    %s34 = sphi 0, %s31
    %s35 = sphi 0, %s34
    %s51 = sphi 0, %s35
    %s55 = sphi 0, %s55
    %s57 = sphi 0, %s55
    %s58 = sphi 0, %s57
    %s72 = sphi 0, %s58
    %s76 = sphi 0, %s76
    %s78 = sphi 0, %s76
    %s79 = sphi 0, %s78
    %s93 = sphi 0, %s79
    %s101 = sphi 0, %s103
    %s104 = sphi 0, %s101
    %s105 = sphi 0, %s104
    %s121 = sphi 0, %s105
  $region4: #{conv_autoencoder_forward.8} parent=0 // loop_header_branch
    %12 = sbr.rel (%p10) target = $region8
  $region5: #{conv_autoencoder_forward.8} parent=0 // loop_body
    %s14 = ssub.s32 %s9, 1
    %s15 = ssub.s32 %s9, 2
    %s22 = sadd.s32 1, %s17
    %p23 = scmp.ge.s32.totalorder %s22, 1
    %s24 = scalar_select %p23, 0, %s22
    %s25 = sadd.s32 1, %s16
    %s26 = scalar_select %p23, %s25, %s16
    %p27 = scmp.ge.s32.totalorder %s26, 2
    %s28 = scalar_select %p27, 0, %s26
    %s29 = ssub.s32 %s16, %s28
    %p30 = scmp.eq.s32.totalorder %s29, 0
    %s32 = sadd.s32 %s31, 1
    %s33 = scalar_select %p30, %s31, %s32
    %p36 = pneg %p30
    %p37 = scmp.eq.s32.totalorder %s9, 1
    %p38 = por %p36, %p37
    %p39 = scmp.ne.s32.totalorder %s31, %s34
    %p40 = scmp.eq.s32.totalorder %s9, 0
    %p41 = por %p39, %p40
    %p42 = scmp.ne.s32.totalorder %s31, %s34
    %p43 = scmp.eq.s32.totalorder %s14, 1
    %p44 = por %p42, %p43
    %p45 = scmp.ne.s32.totalorder %s34, %s35
    %p46 = scmp.eq.s32.totalorder %s14, 0
    %p47 = por %p45, %p46
    %p48 = scmp.ne.s32.totalorder %s34, %s35
    %p49 = scmp.eq.s32.totalorder %s15, 1
    %p50 = por %p48, %p49
    %p52 = scmp.ne.s32.totalorder %s35, %s51
    %p53 = scmp.eq.s32.totalorder %s15, 0
    %p54 = por %p52, %p53
    %s56 = sadd.s32 %s55, 1
    %p59 = scmp.eq.s32.totalorder %s9, 1
    %p60 = scmp.ne.s32.totalorder %s55, %s57
    %p61 = scmp.eq.s32.totalorder %s9, 0
    %p62 = por %p60, %p61
    %p63 = scmp.ne.s32.totalorder %s55, %s57
    %p64 = scmp.eq.s32.totalorder %s14, 1
    %p65 = por %p63, %p64
    %p66 = scmp.ne.s32.totalorder %s57, %s58
    %p67 = scmp.eq.s32.totalorder %s14, 0
    %p68 = por %p66, %p67
    %p69 = scmp.ne.s32.totalorder %s57, %s58
    %p70 = scmp.eq.s32.totalorder %s15, 1
    %p71 = por %p69, %p70
    %p73 = scmp.ne.s32.totalorder %s58, %s72
    %p74 = scmp.eq.s32.totalorder %s15, 0
    %p75 = por %p73, %p74
    %s77 = sadd.s32 %s76, 1
    %p80 = scmp.eq.s32.totalorder %s9, 1
    %p81 = scmp.ne.s32.totalorder %s76, %s78
    %p82 = scmp.eq.s32.totalorder %s9, 0
    %p83 = por %p81, %p82
    %p84 = scmp.ne.s32.totalorder %s76, %s78
    %p85 = scmp.eq.s32.totalorder %s14, 1
    %p86 = por %p84, %p85
    %p87 = scmp.ne.s32.totalorder %s78, %s79
    %p88 = scmp.eq.s32.totalorder %s14, 0
    %p89 = por %p87, %p88
    %p90 = scmp.ne.s32.totalorder %s78, %s79
    %p91 = scmp.eq.s32.totalorder %s15, 1
    %p92 = por %p90, %p91
    %p94 = scmp.ne.s32.totalorder %s79, %s93
    %p95 = scmp.eq.s32.totalorder %s15, 0
    %p96 = por %p94, %p95
    %s97 = ssub.s32 %s16, %s28
    %s98 = ssub.s32 %s17, %s24
    %s99 = sor.u32 %s97, %s98
    %p100 = scmp.eq.s32.totalorder %s99, 0
    %s102 = sadd.s32 %s101, 1
    %s103 = scalar_select %p100, %s101, %s102
    %p106 = pneg %p100
    %p107 = scmp.eq.s32.totalorder %s9, 1
    %p108 = por %p106, %p107
    %p109 = scmp.ne.s32.totalorder %s101, %s104
    %p110 = scmp.eq.s32.totalorder %s9, 0
    %p111 = por %p109, %p110
    %p112 = scmp.ne.s32.totalorder %s101, %s104
    %p113 = scmp.eq.s32.totalorder %s14, 1
    %p114 = por %p112, %p113
    %p115 = scmp.ne.s32.totalorder %s104, %s105
    %p116 = scmp.eq.s32.totalorder %s14, 0
    %p117 = por %p115, %p116
    %p118 = scmp.ne.s32.totalorder %s104, %s105
    %p119 = scmp.eq.s32.totalorder %s15, 1
    %p120 = por %p118, %p119
    %p122 = scmp.ne.s32.totalorder %s105, %s121
    %p123 = scmp.eq.s32.totalorder %s15, 0
    %p124 = por %p122, %p123
    %p125 = scmp.le.s32.totalorder 1, %s9
    %p126 = scmp.lt.s32.totalorder %s9, 3
    %p127 = pnand %p125, %p126
    %p128 = pneg %p127
    // Predicated region
    $region9: #{conv_autoencoder_forward.8} parent=5 // pred_check
      _
    $region10: #{conv_autoencoder_forward.8} parent=5 // pred_check_branch
      %130 = sbr.rel (%p127) target = $region12
    $region11: #{conv_autoencoder_forward.8} parent=5 // pred_region
      %s131 = ssub.s32 %s9, 1
      // Predicated region
      $region13: #{conv_autoencoder_forward.8} parent=11 // pred_check
        %p132 = pneg %p68
      $region14: #{conv_autoencoder_forward.8} parent=11 // pred_check_branch
        %134 = sbr.rel (%p132) target = $region16
      $region15: #{conv_autoencoder_forward.8} parent=11 // pred_region
        _
      $region16: #{conv_autoencoder_forward.8} parent=11 // pred_fallthru
        _
      // Predicated region
      $region17: #{conv_autoencoder_forward.8} parent=11 // pred_check
        %p135 = pneg %p89
      $region18: #{conv_autoencoder_forward.8} parent=11 // pred_check_branch
        %137 = sbr.rel (%p135) target = $region20
      $region19: #{conv_autoencoder_forward.8} parent=11 // pred_region
        _
      $region20: #{conv_autoencoder_forward.8} parent=11 // pred_fallthru
        _
    $region12: #{conv_autoencoder_forward.8} parent=5 // pred_fallthru
      _
    %p138 = scmp.lt.s32.totalorder %s9, 2
    // Predicated region
    $region21: #{conv_autoencoder_forward.8} parent=5 // pred_check
      %p139 = pneg %p138
    $region22: #{conv_autoencoder_forward.8} parent=5 // pred_check_branch
      %141 = sbr.rel (%p139) target = $region24
    $region23: #{conv_autoencoder_forward.8} parent=5 // pred_region
      // Predicated region
      $region25: #{conv_autoencoder_forward.8} parent=23 // pred_check
        %p142 = pneg %p41
      $region26: #{conv_autoencoder_forward.8} parent=23 // pred_check_branch
        %144 = sbr.rel (%p142) target = $region28
      $region27: #{conv_autoencoder_forward.8} parent=23 // pred_region
        %p145 = scmp.lt.s32.totalorder %s16, 1
        %s146 = scalar_select %p145, %s16, 1
        %s147 = smul.addr %s146, 6
        %s148 = smul.addr %s147, 4
        %s149 = scalar_lea.vmem %s0, %s148
      $region28: #{conv_autoencoder_forward.8} parent=23 // pred_fallthru
        _
    $region24: #{conv_autoencoder_forward.8} parent=5 // pred_fallthru
      _
    %p150 = scmp.le.s32.totalorder 1, %s9
    %p151 = scmp.lt.s32.totalorder %s9, 3
    %p152 = pnand %p150, %p151
    %p153 = pneg %p152
    // Predicated region
    $region29: #{conv_autoencoder_forward.8} parent=5 // pred_check
      _
    $region30: #{conv_autoencoder_forward.8} parent=5 // pred_check_branch
      %155 = sbr.rel (%p152) target = $region32
    $region31: #{conv_autoencoder_forward.8} parent=5 // pred_region
      %s156 = ssub.s32 %s9, 1
      %p157 = scmp.lt.s32.totalorder %s18, 1
      %s158 = scalar_select %p157, %s18, 1
      %s159 = smul.addr %s158, 6
      %s160 = smul.addr %s159, 4
      %s161 = scalar_lea.vmem %s0, %s160
      %p162 = pneg %p47
      %p163 = pneg %p44
      %p164 = pneg %p68
      %p165 = pneg %p65
      %p166 = pneg %p89
      %p167 = pneg %p86
      %p168 = pneg %p117
      %p169 = pneg %p114
      %s170 = smul.u32 3, %s19
      %p171 = scmp.lt.s32.totalorder %s18, 1
      %s172 = scalar_select %p171, %s18, 1
      %p173 = scmp.lt.s32.totalorder %s170, 2
      %s174 = scalar_select %p173, %s170, 2
      %s175 = smul.addr %s172, 3
      %s176 = sadd.s32 %s174, %s175
      %s177 = smul.addr %s176, 4
      %s178 = scalar_lea.vmem %s3, %s177
      %p179 = scmp.lt.s32.totalorder %s18, 1
      %s180 = scalar_select %p179, %s18, 1
      %s181 = smul.addr %s180, 6
      %s182 = smul.addr %s181, 4
      %s183 = scalar_lea.vmem %s0, %s182
      %s184 = smul.u32 3, %s19
      %p185 = scmp.lt.s32.totalorder %s18, 1
      %s186 = scalar_select %p185, %s18, 1
      %p187 = scmp.lt.s32.totalorder %s184, 2
      %s188 = scalar_select %p187, %s184, 2
      %s189 = smul.addr %s186, 3
      %s190 = sadd.s32 %s188, %s189
      %s191 = smul.addr %s190, 4
      %s192 = scalar_lea.vmem %s3, %s191
      %s193 = smul.u32 3, %s19
      %v195 = vld [vmem:[%s2] sm:$0x1]
      %v197 = vlaneseq
      %v198 = vshrl.u32 %v197, 7
      %v199 = vsub.s32 0, %v198
      %v200 = vrot.slane %v195, %v199
      %v202 = vld [vmem:[%s183] sm:$0xf]
      %v203 = vld [vmem:[%s183 + $0x4] sm:$0xf]
      %v204 = vld [vmem:[%s183 + $0x8] sm:$0xf]
      %v205 = vld [vmem:[%s1] sm:$0xf]
      %v206 = vld [vmem:[%s1 + $0x4] sm:$0xf]
      %v207 = vld [vmem:[%s1 + $0x8] sm:$0xf]
      %v208 = vld [vmem:[%s1 + $0xc] sm:$0xf]
      %v209 = vld [vmem:[%s1 + $0x10] sm:$0xf]
      %v210 = vld [vmem:[%s1 + $0x14] sm:$0xf]
      %v211 = vld [vmem:[%s1 + $0x18] sm:$0xf]
      %v212 = vld [vmem:[%s1 + $0x1c] sm:$0xf]
      %v213 = vld [vmem:[%s1 + $0x20] sm:$0xf]
      %v214 = vld [vmem:[%s1 + $0x24] sm:$0xf]
      %v215 = vld [vmem:[%s1 + $0x28] sm:$0xf]
      %v216 = vld [vmem:[%s1 + $0x2c] sm:$0xf]
      %v217 = vld [vmem:[%s1 + $0x30] sm:$0xf]
      %v218 = vld [vmem:[%s1 + $0x34] sm:$0xf]
      %v219 = vld [vmem:[%s1 + $0x38] sm:$0xf]
      %v220 = vld [vmem:[%s1 + $0x3c] sm:$0xf]
      %v224 = vunpack.c.l.b16 %v202
      %v225 = vunpack.c.l.b16 %v203
      %v226 = vunpack.c.l.b16 %v204
      %v227 = vpack.c.b16 %v225, %v224
      %v228 = vpack.c.b16 %v226, %v226
      %v247 = vunpack.c.l.b16 %v205
      %v248 = vunpack.c.l.b16 %v206
      %v249 = vunpack.c.l.b16 %v207
      %v250 = vunpack.c.l.b16 %v208
      %v251 = vunpack.c.l.b16 %v209
      %v252 = vunpack.c.l.b16 %v210
      %v253 = vunpack.c.l.b16 %v211
      %v254 = vunpack.c.l.b16 %v212
      %v255 = vunpack.c.l.b16 %v213
      %v256 = vunpack.c.l.b16 %v214
      %v257 = vunpack.c.l.b16 %v215
      %v258 = vunpack.c.l.b16 %v216
      %v259 = vunpack.c.l.b16 %v217
      %v260 = vunpack.c.l.b16 %v218
      %v261 = vunpack.c.l.b16 %v219
      %v262 = vunpack.c.l.b16 %v220
      %v263 = vpack.c.b16 %v248, %v247
      %v264 = vpack.c.b16 %v250, %v249
      %v265 = vpack.c.b16 %v252, %v251
      %v266 = vpack.c.b16 %v254, %v253
      %v267 = vpack.c.b16 %v256, %v255
      %v268 = vpack.c.b16 %v258, %v257
      %v269 = vpack.c.b16 %v260, %v259
      %v270 = vpack.c.b16 %v262, %v261
      %279 = vmatprep.subr.bf16.mxu0 0
      %280 = vmatpush1.bf16.msra.mxu0 %v270
      %281 = vmatprep.subr.bf16.mxu0 0
      %282 = vmatpush1.bf16.msra.mxu0 %v269
      %283 = vmatprep.subr.bf16.mxu0 0
      %284 = vmatpush1.bf16.msra.mxu0 %v268
      %285 = vmatprep.subr.bf16.mxu0 0
      %286 = vmatpush1.bf16.msra.mxu0 %v267
      %287 = vmatprep.subr.bf16.mxu0 0
      %288 = vmatpush1.bf16.msra.mxu0 %v266
      %289 = vmatprep.subr.bf16.mxu0 0
      %290 = vmatpush1.bf16.msra.mxu0 %v265
      %291 = vmatprep.subr.bf16.mxu0 0
      %292 = vmatpush1.bf16.msra.mxu0 %v264
      %293 = vmatprep.subr.bf16.mxu0 0
      %294 = vmatpush1.bf16.msra.mxu0 %v263
      %295 = vmatprep.subr.bf16.mxu0 0
      %296 = vmatpush2.bf16.msra.mxu0 0
      %297 = vmatprep.subr.bf16.mxu0 0
      %298 = vmatpush2.bf16.msra.mxu0 0
      %299 = vmatprep.subr.bf16.mxu0 0
      %300 = vmatpush2.bf16.msra.mxu0 0
      %301 = vmatprep.subr.bf16.mxu0 0
      %302 = vmatpush2.bf16.msra.mxu0 0
      %303 = vmatprep.subr.bf16.mxu0 0
      %304 = vmatpush2.bf16.msra.mxu0 0
      %305 = vmatprep.subr.bf16.mxu0 0
      %306 = vmatpush2.bf16.msra.mxu0 0
      %307 = vmatprep.subr.bf16.mxu0 0
      %308 = vmatpush2.bf16.msra.mxu0 0
      %309 = vmatprep.subr.bf16.mxu0 0
      %310 = vmatpush2.bf16.msra.mxu0 0
      %311 = vmatprep.mubr.bf16.mxu0 0
      %312 = vmatmul.mubr.bf16.gmra.mxu0 %v227
      %v313 = vpop.f32.mrf.mxu0
      %v314 = vadd.f32 0.0, %v313
      %v315 = vpop.f32.mrf.mxu0
      %v316 = vpop.f32.mrf.mxu0
      %v317 = vadd.f32 0.0, %v316
      %v318 = vpop.f32.mrf.mxu0
      %319 = vmatprep.mubr.bf16.mxu0 0
      %320 = vmatmul.mubr.bf16.gmra.mxu0 %v228
      %v321 = vpop.f32.mrf.mxu0
      %v322 = vadd.f32 0.0, %v321
      %v323 = vpop.f32.mrf.mxu0
      %v324 = vpop.f32.mrf.mxu0
      %v325 = vpop.f32.mrf.mxu0
      %326 = vdwg.mxu0
      %v327 = vadd.f32 %v200, %v314
      %v328 = vadd.f32 %v200, %v317
      %v329 = vadd.f32 %v200, %v322
      %v330 = vld [vmem:[%s183] sm:$0xf]
      %v331 = vld [vmem:[%s183 + $0x4] sm:$0xf]
      %v332 = vld [vmem:[%s183 + $0x8] sm:$0xf]
      %v333 = vld [vmem:[%s183 + $0xc] sm:$0x1]
      %v334 = vld [vmem:[%s1 + $0x40] sm:$0xf]
      %v335 = vld [vmem:[%s1 + $0x44] sm:$0xf]
      %v336 = vld [vmem:[%s1 + $0x48] sm:$0xf]
      %v337 = vld [vmem:[%s1 + $0x4c] sm:$0xf]
      %v338 = vld [vmem:[%s1 + $0x50] sm:$0xf]
      %v339 = vld [vmem:[%s1 + $0x54] sm:$0xf]
      %v340 = vld [vmem:[%s1 + $0x58] sm:$0xf]
      %v341 = vld [vmem:[%s1 + $0x5c] sm:$0xf]
      %v342 = vld [vmem:[%s1 + $0x60] sm:$0xf]
      %v343 = vld [vmem:[%s1 + $0x64] sm:$0xf]
      %v344 = vld [vmem:[%s1 + $0x68] sm:$0xf]
      %v345 = vld [vmem:[%s1 + $0x6c] sm:$0xf]
      %v346 = vld [vmem:[%s1 + $0x70] sm:$0xf]
      %v347 = vld [vmem:[%s1 + $0x74] sm:$0xf]
      %v348 = vld [vmem:[%s1 + $0x78] sm:$0xf]
      %v349 = vld [vmem:[%s1 + $0x7c] sm:$0xf]
      %v354 = vunpack.c.l.b16 %v330
      %v355 = vunpack.c.l.b16 %v331
      %v356 = vunpack.c.l.b16 %v332
      %v357 = vunpack.c.l.b16 %v333
      %v358 = vpack.c.b16 %v355, %v354
      %v359 = vpack.c.b16 %v357, %v356
      %vm360 = vsmask.f32 7424
      %v362 = vshrl.u32 %v358, 16
      %v364 = vshll.u32 %v358, 16
      %v366 = vrot.slane %v364, 1
      %v367 = vor.u32 %v362, %v366
      %v369 = vshll.u32 %v359, 16
      %v371 = vrot.slane %v369, 1
      %v372 = vsel %vm360, %v367, %v371
      %v373 = vshrl.u32 %v359, 16
      %v375 = vor.u32 %v373, %v371
      %v394 = vunpack.c.l.b16 %v334
      %v395 = vunpack.c.l.b16 %v335
      %v396 = vunpack.c.l.b16 %v336
      %v397 = vunpack.c.l.b16 %v337
      %v398 = vunpack.c.l.b16 %v338
      %v399 = vunpack.c.l.b16 %v339
      %v400 = vunpack.c.l.b16 %v340
      %v401 = vunpack.c.l.b16 %v341
      %v402 = vunpack.c.l.b16 %v342
      %v403 = vunpack.c.l.b16 %v343
      %v404 = vunpack.c.l.b16 %v344
      %v405 = vunpack.c.l.b16 %v345
      %v406 = vunpack.c.l.b16 %v346
      %v407 = vunpack.c.l.b16 %v347
      %v408 = vunpack.c.l.b16 %v348
      %v409 = vunpack.c.l.b16 %v349
      %v410 = vpack.c.b16 %v395, %v394
      %v411 = vpack.c.b16 %v397, %v396
      %v412 = vpack.c.b16 %v399, %v398
      %v413 = vpack.c.b16 %v401, %v400
      %v414 = vpack.c.b16 %v403, %v402
      %v415 = vpack.c.b16 %v405, %v404
      %v416 = vpack.c.b16 %v407, %v406
      %v417 = vpack.c.b16 %v409, %v408
      %426 = vmatprep.subr.bf16.mxu0 0
      %427 = vmatpush1.bf16.msra.mxu0 %v417
      %428 = vmatprep.subr.bf16.mxu0 0
      %429 = vmatpush1.bf16.msra.mxu0 %v416
      %430 = vmatprep.subr.bf16.mxu0 0
      %431 = vmatpush1.bf16.msra.mxu0 %v415
      %432 = vmatprep.subr.bf16.mxu0 0
      %433 = vmatpush1.bf16.msra.mxu0 %v414
      %434 = vmatprep.subr.bf16.mxu0 0
      %435 = vmatpush1.bf16.msra.mxu0 %v413
      %436 = vmatprep.subr.bf16.mxu0 0
      %437 = vmatpush1.bf16.msra.mxu0 %v412
      %438 = vmatprep.subr.bf16.mxu0 0
      %439 = vmatpush1.bf16.msra.mxu0 %v411
      %440 = vmatprep.subr.bf16.mxu0 0
      %441 = vmatpush1.bf16.msra.mxu0 %v410
      %442 = vmatprep.subr.bf16.mxu0 0
      %443 = vmatpush2.bf16.msra.mxu0 0
      %444 = vmatprep.subr.bf16.mxu0 0
      %445 = vmatpush2.bf16.msra.mxu0 0
      %446 = vmatprep.subr.bf16.mxu0 0
      %447 = vmatpush2.bf16.msra.mxu0 0
      %448 = vmatprep.subr.bf16.mxu0 0
      %449 = vmatpush2.bf16.msra.mxu0 0
      %450 = vmatprep.subr.bf16.mxu0 0
      %451 = vmatpush2.bf16.msra.mxu0 0
      %452 = vmatprep.subr.bf16.mxu0 0
      %453 = vmatpush2.bf16.msra.mxu0 0
      %454 = vmatprep.subr.bf16.mxu0 0
      %455 = vmatpush2.bf16.msra.mxu0 0
      %456 = vmatprep.subr.bf16.mxu0 0
      %457 = vmatpush2.bf16.msra.mxu0 0
      %458 = vmatprep.mubr.bf16.mxu0 0
      %459 = vmatmul.mubr.bf16.gmra.mxu0 %v372
      %v460 = vpop.f32.mrf.mxu0
      %v461 = vadd.f32 0.0, %v460
      %v462 = vpop.f32.mrf.mxu0
      %v463 = vpop.f32.mrf.mxu0
      %v464 = vadd.f32 0.0, %v463
      %v465 = vpop.f32.mrf.mxu0
      %466 = vmatprep.mubr.bf16.mxu0 0
      %467 = vmatmul.mubr.bf16.gmra.mxu0 %v375
      %v468 = vpop.f32.mrf.mxu0
      %v469 = vadd.f32 0.0, %v468
      %v470 = vpop.f32.mrf.mxu0
      %v471 = vpop.f32.mrf.mxu0
      %v472 = vpop.f32.mrf.mxu0
      %473 = vdwg.mxu0
      %v474 = vadd.f32 %v327, %v461
      %v475 = vadd.f32 %v328, %v464
      %v476 = vadd.f32 %v329, %v469
      %v477 = vld [vmem:[%s183] sm:$0xe]
      %v478 = vld [vmem:[%s1 + $0x80] sm:$0xf]
      %v479 = vld [vmem:[%s1 + $0x84] sm:$0xf]
      %v480 = vld [vmem:[%s1 + $0x88] sm:$0xf]
      %v481 = vld [vmem:[%s1 + $0x8c] sm:$0xf]
      %v482 = vld [vmem:[%s1 + $0x90] sm:$0xf]
      %v483 = vld [vmem:[%s1 + $0x94] sm:$0xf]
      %v484 = vld [vmem:[%s1 + $0x98] sm:$0xf]
      %v485 = vld [vmem:[%s1 + $0x9c] sm:$0xf]
      %v486 = vld [vmem:[%s1 + $0xa0] sm:$0xf]
      %v487 = vld [vmem:[%s1 + $0xa4] sm:$0xf]
      %v488 = vld [vmem:[%s1 + $0xa8] sm:$0xf]
      %v489 = vld [vmem:[%s1 + $0xac] sm:$0xf]
      %v490 = vld [vmem:[%s1 + $0xb0] sm:$0xf]
      %v491 = vld [vmem:[%s1 + $0xb4] sm:$0xf]
      %v492 = vld [vmem:[%s1 + $0xb8] sm:$0xf]
      %v493 = vld [vmem:[%s1 + $0xbc] sm:$0xf]
      %v495 = vunpack.c.l.b16 %v477
      %v496 = vpack.c.b16 %v355, %v495
      %vm497 = vcmask 1046528
      %v498 = vrot.slane %v496, 1
      %v499 = vrot.slane %v359, 1
      %v500 = vsel %vm497, %v498, %v499
      %v519 = vunpack.c.l.b16 %v478
      %v520 = vunpack.c.l.b16 %v479
      %v521 = vunpack.c.l.b16 %v480
      %v522 = vunpack.c.l.b16 %v481
      %v523 = vunpack.c.l.b16 %v482
      %v524 = vunpack.c.l.b16 %v483
      %v525 = vunpack.c.l.b16 %v484
      %v526 = vunpack.c.l.b16 %v485
      %v527 = vunpack.c.l.b16 %v486
      %v528 = vunpack.c.l.b16 %v487
      %v529 = vunpack.c.l.b16 %v488
      %v530 = vunpack.c.l.b16 %v489
      %v531 = vunpack.c.l.b16 %v490
      %v532 = vunpack.c.l.b16 %v491
      %v533 = vunpack.c.l.b16 %v492
      %v534 = vunpack.c.l.b16 %v493
      %v535 = vpack.c.b16 %v520, %v519
      %v536 = vpack.c.b16 %v522, %v521
      %v537 = vpack.c.b16 %v524, %v523
      %v538 = vpack.c.b16 %v526, %v525
      %v539 = vpack.c.b16 %v528, %v527
      %v540 = vpack.c.b16 %v530, %v529
      %v541 = vpack.c.b16 %v532, %v531
      %v542 = vpack.c.b16 %v534, %v533
      %551 = vmatprep.subr.bf16.mxu0 0
      %552 = vmatpush1.bf16.msra.mxu0 %v542
      %553 = vmatprep.subr.bf16.mxu0 0
      %554 = vmatpush1.bf16.msra.mxu0 %v541
      %555 = vmatprep.subr.bf16.mxu0 0
      %556 = vmatpush1.bf16.msra.mxu0 %v540
      %557 = vmatprep.subr.bf16.mxu0 0
      %558 = vmatpush1.bf16.msra.mxu0 %v539
      %559 = vmatprep.subr.bf16.mxu0 0
      %560 = vmatpush1.bf16.msra.mxu0 %v538
      %561 = vmatprep.subr.bf16.mxu0 0
      %562 = vmatpush1.bf16.msra.mxu0 %v537
      %563 = vmatprep.subr.bf16.mxu0 0
      %564 = vmatpush1.bf16.msra.mxu0 %v536
      %565 = vmatprep.subr.bf16.mxu0 0
      %566 = vmatpush1.bf16.msra.mxu0 %v535
      %567 = vmatprep.subr.bf16.mxu0 0
      %568 = vmatpush2.bf16.msra.mxu0 0
      %569 = vmatprep.subr.bf16.mxu0 0
      %570 = vmatpush2.bf16.msra.mxu0 0
      %571 = vmatprep.subr.bf16.mxu0 0
      %572 = vmatpush2.bf16.msra.mxu0 0
      %573 = vmatprep.subr.bf16.mxu0 0
      %574 = vmatpush2.bf16.msra.mxu0 0
      %575 = vmatprep.subr.bf16.mxu0 0
      %576 = vmatpush2.bf16.msra.mxu0 0
      %577 = vmatprep.subr.bf16.mxu0 0
      %578 = vmatpush2.bf16.msra.mxu0 0
      %579 = vmatprep.subr.bf16.mxu0 0
      %580 = vmatpush2.bf16.msra.mxu0 0
      %581 = vmatprep.subr.bf16.mxu0 0
      %582 = vmatpush2.bf16.msra.mxu0 0
      %583 = vmatprep.mubr.bf16.mxu0 0
      %584 = vmatmul.mubr.bf16.gmra.mxu0 %v500
      %v585 = vpop.f32.mrf.mxu0
      %v586 = vadd.f32 0.0, %v585
      %v587 = vpop.f32.mrf.mxu0
      %v588 = vpop.f32.mrf.mxu0
      %v589 = vadd.f32 0.0, %v588
      %v590 = vpop.f32.mrf.mxu0
      %591 = vmatprep.mubr.bf16.mxu0 0
      %592 = vmatmul.mubr.bf16.gmra.mxu0 %v499
      %v593 = vpop.f32.mrf.mxu0
      %v594 = vadd.f32 0.0, %v593
      %v595 = vpop.f32.mrf.mxu0
      %v596 = vpop.f32.mrf.mxu0
      %v597 = vpop.f32.mrf.mxu0
      %598 = vdwg.mxu0
      %v599 = vadd.f32 %v474, %v586
      %v600 = vadd.f32 %v475, %v589
      %v601 = vadd.f32 %v476, %v594
      %v602 = vld [vmem:[%s183] sm:$0x8]
      %v603 = vld [vmem:[%s183 + $0xc] sm:$0x7]
      %v604 = vld [vmem:[%s1 + $0xc0] sm:$0xf]
      %v605 = vld [vmem:[%s1 + $0xc4] sm:$0xf]
      %v606 = vld [vmem:[%s1 + $0xc8] sm:$0xf]
      %v607 = vld [vmem:[%s1 + $0xcc] sm:$0xf]
      %v608 = vld [vmem:[%s1 + $0xd0] sm:$0xf]
      %v609 = vld [vmem:[%s1 + $0xd4] sm:$0xf]
      %v610 = vld [vmem:[%s1 + $0xd8] sm:$0xf]
      %v611 = vld [vmem:[%s1 + $0xdc] sm:$0xf]
      %v612 = vld [vmem:[%s1 + $0xe0] sm:$0xf]
      %v613 = vld [vmem:[%s1 + $0xe4] sm:$0xf]
      %v614 = vld [vmem:[%s1 + $0xe8] sm:$0xf]
      %v615 = vld [vmem:[%s1 + $0xec] sm:$0xf]
      %v616 = vld [vmem:[%s1 + $0xf0] sm:$0xf]
      %v617 = vld [vmem:[%s1 + $0xf4] sm:$0xf]
      %v618 = vld [vmem:[%s1 + $0xf8] sm:$0xf]
      %v619 = vld [vmem:[%s1 + $0xfc] sm:$0xf]
      %v622 = vunpack.c.l.b16 %v602
      %v623 = vunpack.c.l.b16 %v603
      %v624 = vpack.c.b16 %v355, %v622
      %v625 = vpack.c.b16 %v623, %v356
      %vm626 = vcmask 1044480
      %v627 = vrot.slane %v624, 3
      %v628 = vrot.slane %v625, 3
      %v629 = vsel %vm626, %v627, %v628
      %v648 = vunpack.c.l.b16 %v604
      %v649 = vunpack.c.l.b16 %v605
      %v650 = vunpack.c.l.b16 %v606
      %v651 = vunpack.c.l.b16 %v607
      %v652 = vunpack.c.l.b16 %v608
      %v653 = vunpack.c.l.b16 %v609
      %v654 = vunpack.c.l.b16 %v610
      %v655 = vunpack.c.l.b16 %v611
      %v656 = vunpack.c.l.b16 %v612
      %v657 = vunpack.c.l.b16 %v613
      %v658 = vunpack.c.l.b16 %v614
      %v659 = vunpack.c.l.b16 %v615
      %v660 = vunpack.c.l.b16 %v616
      %v661 = vunpack.c.l.b16 %v617
      %v662 = vunpack.c.l.b16 %v618
      %v663 = vunpack.c.l.b16 %v619
      %v664 = vpack.c.b16 %v649, %v648
      %v665 = vpack.c.b16 %v651, %v650
      %v666 = vpack.c.b16 %v653, %v652
      %v667 = vpack.c.b16 %v655, %v654
      %v668 = vpack.c.b16 %v657, %v656
      %v669 = vpack.c.b16 %v659, %v658
      %v670 = vpack.c.b16 %v661, %v660
      %v671 = vpack.c.b16 %v663, %v662
      %680 = vmatprep.subr.bf16.mxu0 0
      %681 = vmatpush1.bf16.msra.mxu0 %v671
      %682 = vmatprep.subr.bf16.mxu0 0
      %683 = vmatpush1.bf16.msra.mxu0 %v670
      %684 = vmatprep.subr.bf16.mxu0 0
      %685 = vmatpush1.bf16.msra.mxu0 %v669
      %686 = vmatprep.subr.bf16.mxu0 0
      %687 = vmatpush1.bf16.msra.mxu0 %v668
      %688 = vmatprep.subr.bf16.mxu0 0
      %689 = vmatpush1.bf16.msra.mxu0 %v667
      %690 = vmatprep.subr.bf16.mxu0 0
      %691 = vmatpush1.bf16.msra.mxu0 %v666
      %692 = vmatprep.subr.bf16.mxu0 0
      %693 = vmatpush1.bf16.msra.mxu0 %v665
      %694 = vmatprep.subr.bf16.mxu0 0
      %695 = vmatpush1.bf16.msra.mxu0 %v664
      %696 = vmatprep.subr.bf16.mxu0 0
      %697 = vmatpush2.bf16.msra.mxu0 0
      %698 = vmatprep.subr.bf16.mxu0 0
      %699 = vmatpush2.bf16.msra.mxu0 0
      %700 = vmatprep.subr.bf16.mxu0 0
      %701 = vmatpush2.bf16.msra.mxu0 0
      %702 = vmatprep.subr.bf16.mxu0 0
      %703 = vmatpush2.bf16.msra.mxu0 0
      %704 = vmatprep.subr.bf16.mxu0 0
      %705 = vmatpush2.bf16.msra.mxu0 0
      %706 = vmatprep.subr.bf16.mxu0 0
      %707 = vmatpush2.bf16.msra.mxu0 0
      %708 = vmatprep.subr.bf16.mxu0 0
      %709 = vmatpush2.bf16.msra.mxu0 0
      %710 = vmatprep.subr.bf16.mxu0 0
      %711 = vmatpush2.bf16.msra.mxu0 0
      %712 = vmatprep.mubr.bf16.mxu0 0
      %713 = vmatmul.mubr.bf16.gmra.mxu0 %v629
      %v714 = vpop.f32.mrf.mxu0
      %v715 = vadd.f32 0.0, %v714
      %v716 = vpop.f32.mrf.mxu0
      %v717 = vpop.f32.mrf.mxu0
      %v718 = vadd.f32 0.0, %v717
      %v719 = vpop.f32.mrf.mxu0
      %720 = vmatprep.mubr.bf16.mxu0 0
      %721 = vmatmul.mubr.bf16.gmra.mxu0 %v628
      %v722 = vpop.f32.mrf.mxu0
      %v723 = vadd.f32 0.0, %v722
      %v724 = vpop.f32.mrf.mxu0
      %v725 = vpop.f32.mrf.mxu0
      %v726 = vpop.f32.mrf.mxu0
      %727 = vdwg.mxu0
      %v728 = vadd.f32 %v599, %v715
      %v729 = vadd.f32 %v600, %v718
      %v730 = vadd.f32 %v601, %v723
      %v731 = vld [vmem:[%s183 + $0xc] sm:$0xf]
      %v732 = vld [vmem:[%s1 + $0x100] sm:$0xf]
      %v733 = vld [vmem:[%s1 + $0x104] sm:$0xf]
      %v734 = vld [vmem:[%s1 + $0x108] sm:$0xf]
      %v735 = vld [vmem:[%s1 + $0x10c] sm:$0xf]
      %v736 = vld [vmem:[%s1 + $0x110] sm:$0xf]
      %v737 = vld [vmem:[%s1 + $0x114] sm:$0xf]
      %v738 = vld [vmem:[%s1 + $0x118] sm:$0xf]
      %v739 = vld [vmem:[%s1 + $0x11c] sm:$0xf]
      %v740 = vld [vmem:[%s1 + $0x120] sm:$0xf]
      %v741 = vld [vmem:[%s1 + $0x124] sm:$0xf]
      %v742 = vld [vmem:[%s1 + $0x128] sm:$0xf]
      %v743 = vld [vmem:[%s1 + $0x12c] sm:$0xf]
      %v744 = vld [vmem:[%s1 + $0x130] sm:$0xf]
      %v745 = vld [vmem:[%s1 + $0x134] sm:$0xf]
      %v746 = vld [vmem:[%s1 + $0x138] sm:$0xf]
      %v747 = vld [vmem:[%s1 + $0x13c] sm:$0xf]
      %v749 = vunpack.c.l.b16 %v731
      %v750 = vpack.c.b16 %v749, %v356
      %vm751 = vsmask.f32 4352
      %v753 = vshrl.u32 %v624, 16
      %v755 = vrot.slane %v753, 3
      %v756 = vshll.u32 %v624, 16
      %v758 = vrot.slane %v756, 4
      %v759 = vor.u32 %v755, %v758
      %v761 = vshrl.u32 %v750, 16
      %v763 = vrot.slane %v761, 3
      %v764 = vshll.u32 %v750, 16
      %v766 = vrot.slane %v764, 4
      %v767 = vor.u32 %v763, %v766
      %v768 = vsel %vm751, %v759, %v767
      %v787 = vunpack.c.l.b16 %v732
      %v788 = vunpack.c.l.b16 %v733
      %v789 = vunpack.c.l.b16 %v734
      %v790 = vunpack.c.l.b16 %v735
      %v791 = vunpack.c.l.b16 %v736
      %v792 = vunpack.c.l.b16 %v737
      %v793 = vunpack.c.l.b16 %v738
      %v794 = vunpack.c.l.b16 %v739
      %v795 = vunpack.c.l.b16 %v740
      %v796 = vunpack.c.l.b16 %v741
      %v797 = vunpack.c.l.b16 %v742
      %v798 = vunpack.c.l.b16 %v743
      %v799 = vunpack.c.l.b16 %v744
      %v800 = vunpack.c.l.b16 %v745
      %v801 = vunpack.c.l.b16 %v746
      %v802 = vunpack.c.l.b16 %v747
      %v803 = vpack.c.b16 %v788, %v787
      %v804 = vpack.c.b16 %v790, %v789
      %v805 = vpack.c.b16 %v792, %v791
      %v806 = vpack.c.b16 %v794, %v793
      %v807 = vpack.c.b16 %v796, %v795
      %v808 = vpack.c.b16 %v798, %v797
      %v809 = vpack.c.b16 %v800, %v799
      %v810 = vpack.c.b16 %v802, %v801
      %819 = vmatprep.subr.bf16.mxu0 0
      %820 = vmatpush1.bf16.msra.mxu0 %v810
      %821 = vmatprep.subr.bf16.mxu0 0
      %822 = vmatpush1.bf16.msra.mxu0 %v809
      %823 = vmatprep.subr.bf16.mxu0 0
      %824 = vmatpush1.bf16.msra.mxu0 %v808
      %825 = vmatprep.subr.bf16.mxu0 0
      %826 = vmatpush1.bf16.msra.mxu0 %v807
      %827 = vmatprep.subr.bf16.mxu0 0
      %828 = vmatpush1.bf16.msra.mxu0 %v806
      %829 = vmatprep.subr.bf16.mxu0 0
      %830 = vmatpush1.bf16.msra.mxu0 %v805
      %831 = vmatprep.subr.bf16.mxu0 0
      %832 = vmatpush1.bf16.msra.mxu0 %v804
      %833 = vmatprep.subr.bf16.mxu0 0
      %834 = vmatpush1.bf16.msra.mxu0 %v803
      %835 = vmatprep.subr.bf16.mxu0 0
      %836 = vmatpush2.bf16.msra.mxu0 0
      %837 = vmatprep.subr.bf16.mxu0 0
      %838 = vmatpush2.bf16.msra.mxu0 0
      %839 = vmatprep.subr.bf16.mxu0 0
      %840 = vmatpush2.bf16.msra.mxu0 0
      %841 = vmatprep.subr.bf16.mxu0 0
      %842 = vmatpush2.bf16.msra.mxu0 0
      %843 = vmatprep.subr.bf16.mxu0 0
      %844 = vmatpush2.bf16.msra.mxu0 0
      %845 = vmatprep.subr.bf16.mxu0 0
      %846 = vmatpush2.bf16.msra.mxu0 0
      %847 = vmatprep.subr.bf16.mxu0 0
      %848 = vmatpush2.bf16.msra.mxu0 0
      %849 = vmatprep.subr.bf16.mxu0 0
      %850 = vmatpush2.bf16.msra.mxu0 0
      %851 = vmatprep.mubr.bf16.mxu0 0
      %852 = vmatmul.mubr.bf16.gmra.mxu0 %v768
      %v853 = vpop.f32.mrf.mxu0
      %v854 = vadd.f32 0.0, %v853
      %v855 = vpop.f32.mrf.mxu0
      %v856 = vpop.f32.mrf.mxu0
      %v857 = vadd.f32 0.0, %v856
      %v858 = vpop.f32.mrf.mxu0
      %859 = vmatprep.mubr.bf16.mxu0 0
      %860 = vmatmul.mubr.bf16.gmra.mxu0 %v767
      %v861 = vpop.f32.mrf.mxu0
      %v862 = vadd.f32 0.0, %v861
      %v863 = vpop.f32.mrf.mxu0
      %v864 = vpop.f32.mrf.mxu0
      %v865 = vpop.f32.mrf.mxu0
      %866 = vdwg.mxu0
      %v867 = vadd.f32 %v728, %v854
      %v868 = vadd.f32 %v729, %v857
      %v869 = vadd.f32 %v730, %v862
      %v870 = vld [vmem:[%s1 + $0x140] sm:$0xf]
      %v871 = vld [vmem:[%s1 + $0x144] sm:$0xf]
      %v872 = vld [vmem:[%s1 + $0x148] sm:$0xf]
      %v873 = vld [vmem:[%s1 + $0x14c] sm:$0xf]
      %v874 = vld [vmem:[%s1 + $0x150] sm:$0xf]
      %v875 = vld [vmem:[%s1 + $0x154] sm:$0xf]
      %v876 = vld [vmem:[%s1 + $0x158] sm:$0xf]
      %v877 = vld [vmem:[%s1 + $0x15c] sm:$0xf]
      %v878 = vld [vmem:[%s1 + $0x160] sm:$0xf]
      %v879 = vld [vmem:[%s1 + $0x164] sm:$0xf]
      %v880 = vld [vmem:[%s1 + $0x168] sm:$0xf]
      %v881 = vld [vmem:[%s1 + $0x16c] sm:$0xf]
      %v882 = vld [vmem:[%s1 + $0x170] sm:$0xf]
      %v883 = vld [vmem:[%s1 + $0x174] sm:$0xf]
      %v884 = vld [vmem:[%s1 + $0x178] sm:$0xf]
      %v885 = vld [vmem:[%s1 + $0x17c] sm:$0xf]
      %v886 = vpack.c.b16 %v356, %v355
      %v887 = vpack.c.b16 %v749, %v749
      %v906 = vunpack.c.l.b16 %v870
      %v907 = vunpack.c.l.b16 %v871
      %v908 = vunpack.c.l.b16 %v872
      %v909 = vunpack.c.l.b16 %v873
      %v910 = vunpack.c.l.b16 %v874
      %v911 = vunpack.c.l.b16 %v875
      %v912 = vunpack.c.l.b16 %v876
      %v913 = vunpack.c.l.b16 %v877
      %v914 = vunpack.c.l.b16 %v878
      %v915 = vunpack.c.l.b16 %v879
      %v916 = vunpack.c.l.b16 %v880
      %v917 = vunpack.c.l.b16 %v881
      %v918 = vunpack.c.l.b16 %v882
      %v919 = vunpack.c.l.b16 %v883
      %v920 = vunpack.c.l.b16 %v884
      %v921 = vunpack.c.l.b16 %v885
      %v922 = vpack.c.b16 %v907, %v906
      %v923 = vpack.c.b16 %v909, %v908
      %v924 = vpack.c.b16 %v911, %v910
      %v925 = vpack.c.b16 %v913, %v912
      %v926 = vpack.c.b16 %v915, %v914
      %v927 = vpack.c.b16 %v917, %v916
      %v928 = vpack.c.b16 %v919, %v918
      %v929 = vpack.c.b16 %v921, %v920
      %938 = vmatprep.subr.bf16.mxu0 0
      %939 = vmatpush1.bf16.msra.mxu0 %v929
      %940 = vmatprep.subr.bf16.mxu0 0
      %941 = vmatpush1.bf16.msra.mxu0 %v928
      %942 = vmatprep.subr.bf16.mxu0 0
      %943 = vmatpush1.bf16.msra.mxu0 %v927
      %944 = vmatprep.subr.bf16.mxu0 0
      %945 = vmatpush1.bf16.msra.mxu0 %v926
      %946 = vmatprep.subr.bf16.mxu0 0
      %947 = vmatpush1.bf16.msra.mxu0 %v925
      %948 = vmatprep.subr.bf16.mxu0 0
      %949 = vmatpush1.bf16.msra.mxu0 %v924
      %950 = vmatprep.subr.bf16.mxu0 0
      %951 = vmatpush1.bf16.msra.mxu0 %v923
      %952 = vmatprep.subr.bf16.mxu0 0
      %953 = vmatpush1.bf16.msra.mxu0 %v922
      %954 = vmatprep.subr.bf16.mxu0 0
      %955 = vmatpush2.bf16.msra.mxu0 0
      %956 = vmatprep.subr.bf16.mxu0 0
      %957 = vmatpush2.bf16.msra.mxu0 0
      %958 = vmatprep.subr.bf16.mxu0 0
      %959 = vmatpush2.bf16.msra.mxu0 0
      %960 = vmatprep.subr.bf16.mxu0 0
      %961 = vmatpush2.bf16.msra.mxu0 0
      %962 = vmatprep.subr.bf16.mxu0 0
      %963 = vmatpush2.bf16.msra.mxu0 0
      %964 = vmatprep.subr.bf16.mxu0 0
      %965 = vmatpush2.bf16.msra.mxu0 0
      %966 = vmatprep.subr.bf16.mxu0 0
      %967 = vmatpush2.bf16.msra.mxu0 0
      %968 = vmatprep.subr.bf16.mxu0 0
      %969 = vmatpush2.bf16.msra.mxu0 0
      %970 = vmatprep.mubr.bf16.mxu0 0
      %971 = vmatmul.mubr.bf16.gmra.mxu0 %v886
      %v972 = vpop.f32.mrf.mxu0
      %v973 = vadd.f32 0.0, %v972
      %v974 = vpop.f32.mrf.mxu0
      %v975 = vpop.f32.mrf.mxu0
      %v976 = vadd.f32 0.0, %v975
      %v977 = vpop.f32.mrf.mxu0
      %978 = vmatprep.mubr.bf16.mxu0 0
      %979 = vmatmul.mubr.bf16.gmra.mxu0 %v887
      %v980 = vpop.f32.mrf.mxu0
      %v981 = vadd.f32 0.0, %v980
      %v982 = vpop.f32.mrf.mxu0
      %v983 = vpop.f32.mrf.mxu0
      %v984 = vpop.f32.mrf.mxu0
      %985 = vdwg.mxu0
      %v986 = vadd.f32 %v867, %v973
      %v987 = vadd.f32 %v868, %v976
      %v988 = vadd.f32 %v869, %v981
      %v989 = vld [vmem:[%s183 + $0x4] sm:$0xc]
      %v990 = vld [vmem:[%s183 + $0x8] sm:$0xf]
      %v991 = vld [vmem:[%s183 + $0xc] sm:$0xf]
      %v992 = vld [vmem:[%s183 + $0x10] sm:$0x3]
      %v993 = vld [vmem:[%s1 + $0x180] sm:$0xf]
      %v994 = vld [vmem:[%s1 + $0x184] sm:$0xf]
      %v995 = vld [vmem:[%s1 + $0x188] sm:$0xf]
      %v996 = vld [vmem:[%s1 + $0x18c] sm:$0xf]
      %v997 = vld [vmem:[%s1 + $0x190] sm:$0xf]
      %v998 = vld [vmem:[%s1 + $0x194] sm:$0xf]
      %v999 = vld [vmem:[%s1 + $0x198] sm:$0xf]
      %v1000 = vld [vmem:[%s1 + $0x19c] sm:$0xf]
      %v1001 = vld [vmem:[%s1 + $0x1a0] sm:$0xf]
      %v1002 = vld [vmem:[%s1 + $0x1a4] sm:$0xf]
      %v1003 = vld [vmem:[%s1 + $0x1a8] sm:$0xf]
      %v1004 = vld [vmem:[%s1 + $0x1ac] sm:$0xf]
      %v1005 = vld [vmem:[%s1 + $0x1b0] sm:$0xf]
      %v1006 = vld [vmem:[%s1 + $0x1b4] sm:$0xf]
      %v1007 = vld [vmem:[%s1 + $0x1b8] sm:$0xf]
      %v1008 = vld [vmem:[%s1 + $0x1bc] sm:$0xf]
      %v1013 = vunpack.c.l.b16 %v989
      %v1014 = vunpack.c.l.b16 %v990
      %v1015 = vunpack.c.l.b16 %v991
      %v1016 = vunpack.c.l.b16 %v992
      %v1017 = vpack.c.b16 %v1014, %v1013
      %v1018 = vpack.c.b16 %v1016, %v1015
      %vm1019 = vcmask 1045504
      %v1020 = vrot.slane %v1017, 2
      %v1021 = vrot.slane %v1018, 2
      %v1022 = vsel %vm1019, %v1020, %v1021
      %v1041 = vunpack.c.l.b16 %v993
      %v1042 = vunpack.c.l.b16 %v994
      %v1043 = vunpack.c.l.b16 %v995
      %v1044 = vunpack.c.l.b16 %v996
      %v1045 = vunpack.c.l.b16 %v997
      %v1046 = vunpack.c.l.b16 %v998
      %v1047 = vunpack.c.l.b16 %v999
      %v1048 = vunpack.c.l.b16 %v1000
      %v1049 = vunpack.c.l.b16 %v1001
      %v1050 = vunpack.c.l.b16 %v1002
      %v1051 = vunpack.c.l.b16 %v1003
      %v1052 = vunpack.c.l.b16 %v1004
      %v1053 = vunpack.c.l.b16 %v1005
      %v1054 = vunpack.c.l.b16 %v1006
      %v1055 = vunpack.c.l.b16 %v1007
      %v1056 = vunpack.c.l.b16 %v1008
      %v1057 = vpack.c.b16 %v1042, %v1041
      %v1058 = vpack.c.b16 %v1044, %v1043
      %v1059 = vpack.c.b16 %v1046, %v1045
      %v1060 = vpack.c.b16 %v1048, %v1047
      %v1061 = vpack.c.b16 %v1050, %v1049
      %v1062 = vpack.c.b16 %v1052, %v1051
      %v1063 = vpack.c.b16 %v1054, %v1053
      %v1064 = vpack.c.b16 %v1056, %v1055
      %1073 = vmatprep.subr.bf16.mxu0 0
      %1074 = vmatpush1.bf16.msra.mxu0 %v1064
      %1075 = vmatprep.subr.bf16.mxu0 0
      %1076 = vmatpush1.bf16.msra.mxu0 %v1063
      %1077 = vmatprep.subr.bf16.mxu0 0
      %1078 = vmatpush1.bf16.msra.mxu0 %v1062
      %1079 = vmatprep.subr.bf16.mxu0 0
      %1080 = vmatpush1.bf16.msra.mxu0 %v1061
      %1081 = vmatprep.subr.bf16.mxu0 0
      %1082 = vmatpush1.bf16.msra.mxu0 %v1060
      %1083 = vmatprep.subr.bf16.mxu0 0
      %1084 = vmatpush1.bf16.msra.mxu0 %v1059
      %1085 = vmatprep.subr.bf16.mxu0 0
      %1086 = vmatpush1.bf16.msra.mxu0 %v1058
      %1087 = vmatprep.subr.bf16.mxu0 0
      %1088 = vmatpush1.bf16.msra.mxu0 %v1057
      %1089 = vmatprep.subr.bf16.mxu0 0
      %1090 = vmatpush2.bf16.msra.mxu0 0
      %1091 = vmatprep.subr.bf16.mxu0 0
      %1092 = vmatpush2.bf16.msra.mxu0 0
      %1093 = vmatprep.subr.bf16.mxu0 0
      %1094 = vmatpush2.bf16.msra.mxu0 0
      %1095 = vmatprep.subr.bf16.mxu0 0
      %1096 = vmatpush2.bf16.msra.mxu0 0
      %1097 = vmatprep.subr.bf16.mxu0 0
      %1098 = vmatpush2.bf16.msra.mxu0 0
      %1099 = vmatprep.subr.bf16.mxu0 0
      %1100 = vmatpush2.bf16.msra.mxu0 0
      %1101 = vmatprep.subr.bf16.mxu0 0
      %1102 = vmatpush2.bf16.msra.mxu0 0
      %1103 = vmatprep.subr.bf16.mxu0 0
      %1104 = vmatpush2.bf16.msra.mxu0 0
      %1105 = vmatprep.mubr.bf16.mxu0 0
      %1106 = vmatmul.mubr.bf16.gmra.mxu0 %v1022
      %v1107 = vpop.f32.mrf.mxu0
      %v1108 = vadd.f32 0.0, %v1107
      %v1109 = vpop.f32.mrf.mxu0
      %v1110 = vpop.f32.mrf.mxu0
      %v1111 = vadd.f32 0.0, %v1110
      %v1112 = vpop.f32.mrf.mxu0
      %1113 = vmatprep.mubr.bf16.mxu0 0
      %1114 = vmatmul.mubr.bf16.gmra.mxu0 %v1021
      %v1115 = vpop.f32.mrf.mxu0
      %v1116 = vadd.f32 0.0, %v1115
      %v1117 = vpop.f32.mrf.mxu0
      %v1118 = vpop.f32.mrf.mxu0
      %v1119 = vpop.f32.mrf.mxu0
      %1120 = vdwg.mxu0
      %v1121 = vadd.f32 %v986, %v1108
      %v1122 = vadd.f32 %v987, %v1111
      %v1123 = vadd.f32 %v988, %v1116
      %v1124 = vld [vmem:[%s183 + $0x10] sm:$0x7]
      %v1125 = vld [vmem:[%s1 + $0x1c0] sm:$0xf]
      %v1126 = vld [vmem:[%s1 + $0x1c4] sm:$0xf]
      %v1127 = vld [vmem:[%s1 + $0x1c8] sm:$0xf]
      %v1128 = vld [vmem:[%s1 + $0x1cc] sm:$0xf]
      %v1129 = vld [vmem:[%s1 + $0x1d0] sm:$0xf]
      %v1130 = vld [vmem:[%s1 + $0x1d4] sm:$0xf]
      %v1131 = vld [vmem:[%s1 + $0x1d8] sm:$0xf]
      %v1132 = vld [vmem:[%s1 + $0x1dc] sm:$0xf]
      %v1133 = vld [vmem:[%s1 + $0x1e0] sm:$0xf]
      %v1134 = vld [vmem:[%s1 + $0x1e4] sm:$0xf]
      %v1135 = vld [vmem:[%s1 + $0x1e8] sm:$0xf]
      %v1136 = vld [vmem:[%s1 + $0x1ec] sm:$0xf]
      %v1137 = vld [vmem:[%s1 + $0x1f0] sm:$0xf]
      %v1138 = vld [vmem:[%s1 + $0x1f4] sm:$0xf]
      %v1139 = vld [vmem:[%s1 + $0x1f8] sm:$0xf]
      %v1140 = vld [vmem:[%s1 + $0x1fc] sm:$0xf]
      %v1142 = vunpack.c.l.b16 %v1124
      %v1143 = vpack.c.b16 %v1142, %v1015
      %vm1144 = vsmask.f32 5376
      %v1146 = vshrl.u32 %v1017, 16
      %v1148 = vrot.slane %v1146, 2
      %v1149 = vshll.u32 %v1017, 16
      %v1151 = vrot.slane %v1149, 3
      %v1152 = vor.u32 %v1148, %v1151
      %v1154 = vshrl.u32 %v1143, 16
      %v1156 = vrot.slane %v1154, 2
      %v1157 = vshll.u32 %v1143, 16
      %v1159 = vrot.slane %v1157, 3
      %v1160 = vor.u32 %v1156, %v1159
      %v1161 = vsel %vm1144, %v1152, %v1160
      %v1180 = vunpack.c.l.b16 %v1125
      %v1181 = vunpack.c.l.b16 %v1126
      %v1182 = vunpack.c.l.b16 %v1127
      %v1183 = vunpack.c.l.b16 %v1128
      %v1184 = vunpack.c.l.b16 %v1129
      %v1185 = vunpack.c.l.b16 %v1130
      %v1186 = vunpack.c.l.b16 %v1131
      %v1187 = vunpack.c.l.b16 %v1132
      %v1188 = vunpack.c.l.b16 %v1133
      %v1189 = vunpack.c.l.b16 %v1134
      %v1190 = vunpack.c.l.b16 %v1135
      %v1191 = vunpack.c.l.b16 %v1136
      %v1192 = vunpack.c.l.b16 %v1137
      %v1193 = vunpack.c.l.b16 %v1138
      %v1194 = vunpack.c.l.b16 %v1139
      %v1195 = vunpack.c.l.b16 %v1140
      %v1196 = vpack.c.b16 %v1181, %v1180
      %v1197 = vpack.c.b16 %v1183, %v1182
      %v1198 = vpack.c.b16 %v1185, %v1184
      %v1199 = vpack.c.b16 %v1187, %v1186
      %v1200 = vpack.c.b16 %v1189, %v1188
      %v1201 = vpack.c.b16 %v1191, %v1190
      %v1202 = vpack.c.b16 %v1193, %v1192
      %v1203 = vpack.c.b16 %v1195, %v1194
      %1212 = vmatprep.subr.bf16.mxu0 0
      %1213 = vmatpush1.bf16.msra.mxu0 %v1203
      %1214 = vmatprep.subr.bf16.mxu0 0
      %1215 = vmatpush1.bf16.msra.mxu0 %v1202
      %1216 = vmatprep.subr.bf16.mxu0 0
      %1217 = vmatpush1.bf16.msra.mxu0 %v1201
      %1218 = vmatprep.subr.bf16.mxu0 0
      %1219 = vmatpush1.bf16.msra.mxu0 %v1200
      %1220 = vmatprep.subr.bf16.mxu0 0
      %1221 = vmatpush1.bf16.msra.mxu0 %v1199
      %1222 = vmatprep.subr.bf16.mxu0 0
      %1223 = vmatpush1.bf16.msra.mxu0 %v1198
      %1224 = vmatprep.subr.bf16.mxu0 0
      %1225 = vmatpush1.bf16.msra.mxu0 %v1197
      %1226 = vmatprep.subr.bf16.mxu0 0
      %1227 = vmatpush1.bf16.msra.mxu0 %v1196
      %1228 = vmatprep.subr.bf16.mxu0 0
      %1229 = vmatpush2.bf16.msra.mxu0 0
      %1230 = vmatprep.subr.bf16.mxu0 0
      %1231 = vmatpush2.bf16.msra.mxu0 0
      %1232 = vmatprep.subr.bf16.mxu0 0
      %1233 = vmatpush2.bf16.msra.mxu0 0
      %1234 = vmatprep.subr.bf16.mxu0 0
      %1235 = vmatpush2.bf16.msra.mxu0 0
      %1236 = vmatprep.subr.bf16.mxu0 0
      %1237 = vmatpush2.bf16.msra.mxu0 0
      %1238 = vmatprep.subr.bf16.mxu0 0
      %1239 = vmatpush2.bf16.msra.mxu0 0
      %1240 = vmatprep.subr.bf16.mxu0 0
      %1241 = vmatpush2.bf16.msra.mxu0 0
      %1242 = vmatprep.subr.bf16.mxu0 0
      %1243 = vmatpush2.bf16.msra.mxu0 0
      %1244 = vmatprep.mubr.bf16.mxu0 0
      %1245 = vmatmul.mubr.bf16.gmra.mxu0 %v1161
      %v1246 = vpop.f32.mrf.mxu0
      %v1247 = vadd.f32 0.0, %v1246
      %v1248 = vpop.f32.mrf.mxu0
      %v1249 = vpop.f32.mrf.mxu0
      %v1250 = vadd.f32 0.0, %v1249
      %v1251 = vpop.f32.mrf.mxu0
      %1252 = vmatprep.mubr.bf16.mxu0 0
      %1253 = vmatmul.mubr.bf16.gmra.mxu0 %v1160
      %v1254 = vpop.f32.mrf.mxu0
      %v1255 = vadd.f32 0.0, %v1254
      %v1256 = vpop.f32.mrf.mxu0
      %v1257 = vpop.f32.mrf.mxu0
      %v1258 = vpop.f32.mrf.mxu0
      %1259 = vdwg.mxu0
      %v1260 = vadd.f32 %v1121, %v1247
      %v1261 = vadd.f32 %v1122, %v1250
      %v1262 = vadd.f32 %v1123, %v1255
      %v1263 = vld [vmem:[%s183 + $0x4] sm:$0x8]
      %v1264 = vld [vmem:[%s1 + $0x200] sm:$0xf]
      %v1265 = vld [vmem:[%s1 + $0x204] sm:$0xf]
      %v1266 = vld [vmem:[%s1 + $0x208] sm:$0xf]
      %v1267 = vld [vmem:[%s1 + $0x20c] sm:$0xf]
      %v1268 = vld [vmem:[%s1 + $0x210] sm:$0xf]
      %v1269 = vld [vmem:[%s1 + $0x214] sm:$0xf]
      %v1270 = vld [vmem:[%s1 + $0x218] sm:$0xf]
      %v1271 = vld [vmem:[%s1 + $0x21c] sm:$0xf]
      %v1272 = vld [vmem:[%s1 + $0x220] sm:$0xf]
      %v1273 = vld [vmem:[%s1 + $0x224] sm:$0xf]
      %v1274 = vld [vmem:[%s1 + $0x228] sm:$0xf]
      %v1275 = vld [vmem:[%s1 + $0x22c] sm:$0xf]
      %v1276 = vld [vmem:[%s1 + $0x230] sm:$0xf]
      %v1277 = vld [vmem:[%s1 + $0x234] sm:$0xf]
      %v1278 = vld [vmem:[%s1 + $0x238] sm:$0xf]
      %v1279 = vld [vmem:[%s1 + $0x23c] sm:$0xf]
      %v1281 = vunpack.c.l.b16 %v1263
      %v1282 = vpack.c.b16 %v1014, %v1281
      %v1283 = vrot.slane %v1282, 3
      %v1284 = vrot.slane %v1143, 3
      %v1285 = vsel %vm626, %v1283, %v1284
      %v1304 = vunpack.c.l.b16 %v1264
      %v1305 = vunpack.c.l.b16 %v1265
      %v1306 = vunpack.c.l.b16 %v1266
      %v1307 = vunpack.c.l.b16 %v1267
      %v1308 = vunpack.c.l.b16 %v1268
      %v1309 = vunpack.c.l.b16 %v1269
      %v1310 = vunpack.c.l.b16 %v1270
      %v1311 = vunpack.c.l.b16 %v1271
      %v1312 = vunpack.c.l.b16 %v1272
      %v1313 = vunpack.c.l.b16 %v1273
      %v1314 = vunpack.c.l.b16 %v1274
      %v1315 = vunpack.c.l.b16 %v1275
      %v1316 = vunpack.c.l.b16 %v1276
      %v1317 = vunpack.c.l.b16 %v1277
      %v1318 = vunpack.c.l.b16 %v1278
      %v1319 = vunpack.c.l.b16 %v1279
      %v1320 = vpack.c.b16 %v1305, %v1304
      %v1321 = vpack.c.b16 %v1307, %v1306
      %v1322 = vpack.c.b16 %v1309, %v1308
      %v1323 = vpack.c.b16 %v1311, %v1310
      %v1324 = vpack.c.b16 %v1313, %v1312
      %v1325 = vpack.c.b16 %v1315, %v1314
      %v1326 = vpack.c.b16 %v1317, %v1316
      %v1327 = vpack.c.b16 %v1319, %v1318
      %1336 = vmatprep.subr.bf16.mxu0 0
      %1337 = vmatpush1.bf16.msra.mxu0 %v1327
      %1338 = vmatprep.subr.bf16.mxu0 0
      %1339 = vmatpush1.bf16.msra.mxu0 %v1326
      %1340 = vmatprep.subr.bf16.mxu0 0
      %1341 = vmatpush1.bf16.msra.mxu0 %v1325
      %1342 = vmatprep.subr.bf16.mxu0 0
      %1343 = vmatpush1.bf16.msra.mxu0 %v1324
      %1344 = vmatprep.subr.bf16.mxu0 0
      %1345 = vmatpush1.bf16.msra.mxu0 %v1323
      %1346 = vmatprep.subr.bf16.mxu0 0
      %1347 = vmatpush1.bf16.msra.mxu0 %v1322
      %1348 = vmatprep.subr.bf16.mxu0 0
      %1349 = vmatpush1.bf16.msra.mxu0 %v1321
      %1350 = vmatprep.subr.bf16.mxu0 0
      %1351 = vmatpush1.bf16.msra.mxu0 %v1320
      %1352 = vmatprep.subr.bf16.mxu0 0
      %1353 = vmatpush2.bf16.msra.mxu0 0
      %1354 = vmatprep.subr.bf16.mxu0 0
      %1355 = vmatpush2.bf16.msra.mxu0 0
      %1356 = vmatprep.subr.bf16.mxu0 0
      %1357 = vmatpush2.bf16.msra.mxu0 0
      %1358 = vmatprep.subr.bf16.mxu0 0
      %1359 = vmatpush2.bf16.msra.mxu0 0
      %1360 = vmatprep.subr.bf16.mxu0 0
      %1361 = vmatpush2.bf16.msra.mxu0 0
      %1362 = vmatprep.subr.bf16.mxu0 0
      %1363 = vmatpush2.bf16.msra.mxu0 0
      %1364 = vmatprep.subr.bf16.mxu0 0
      %1365 = vmatpush2.bf16.msra.mxu0 0
      %1366 = vmatprep.subr.bf16.mxu0 0
      %1367 = vmatpush2.bf16.msra.mxu0 0
      %1368 = vmatprep.mubr.bf16.mxu0 0
      %1369 = vmatmul.mubr.bf16.gmra.mxu0 %v1285
      %v1370 = vpop.f32.mrf.mxu0
      %v1371 = vadd.f32 0.0, %v1370
      %v1372 = vpop.f32.mrf.mxu0
      %v1373 = vpop.f32.mrf.mxu0
      %v1374 = vadd.f32 0.0, %v1373
      %v1375 = vpop.f32.mrf.mxu0
      %1376 = vmatprep.mubr.bf16.mxu0 0
      %1377 = vmatmul.mubr.bf16.gmra.mxu0 %v1284
      %v1378 = vpop.f32.mrf.mxu0
      %v1379 = vadd.f32 0.0, %v1378
      %v1380 = vpop.f32.mrf.mxu0
      %v1381 = vpop.f32.mrf.mxu0
      %v1382 = vpop.f32.mrf.mxu0
      %1383 = vdwg.mxu0
      %v1384 = vadd.f32 %v1260, %v1371
      %v1385 = vadd.f32 %v1261, %v1374
      %v1386 = vadd.f32 %v1262, %v1379
      %v1387 = vmax.f32 %v1384, 0.0
      %v1388 = vmax.f32 %v1385, 0.0
      %v1389 = vmax.f32 %v1386, 0.0
      %v1390 = vpack.c.bf16 %v1388, %v1387
      %v1391 = vpack.c.bf16 %v1389, %v1389
      %v1394 = vunpack.c.l.b16 %v1390
      %v1395 = vunpack.c.h.b16 %v1390
      %v1396 = vunpack.c.l.b16 %v1391
      %v1397 = vpack.c.b16 %v1394, %v1394
      %v1398 = vpack.c.b16 %v1395, %v1395
      %v1399 = vpack.c.b16 %v1396, %v1396
      %vm1403 = vcmask 257024
      %1404 = vst.msk [vmem:[%s192] sm:$0xf] %vm1403, %v1397
      %1405 = vst.msk [vmem:[%s192 + $0x4] sm:$0xf] %vm1403, %v1398
      %1406 = vst.msk [vmem:[%s192 + $0x8] sm:$0xf] %vm1403, %v1399
      %s1407 = smul.u32 3, %s19
      %p1408 = scmp.lt.s32.totalorder %s18, 1
      %s1409 = scalar_select %p1408, %s18, 1
      %p1410 = scmp.lt.s32.totalorder %s1407, 2
      %s1411 = scalar_select %p1410, %s1407, 2
      %s1412 = smul.addr %s1409, 3
      %s1413 = sadd.s32 %s1411, %s1412
      %s1414 = smul.addr %s1413, 4
      %s1415 = scalar_lea.vmem %s3, %s1414
      // Predicated region
      $region33: #{conv_autoencoder_forward.8} parent=31 // pred_check
        %p1416 = pneg %p114
      $region34: #{conv_autoencoder_forward.8} parent=31 // pred_check_branch
        %1418 = sbr.rel (%p1416) target = $region36
      $region35: #{conv_autoencoder_forward.8} parent=31 // pred_region
        %s1419 = smul.u32 3, %s19
      $region36: #{conv_autoencoder_forward.8} parent=31 // pred_fallthru
        _
    $region32: #{conv_autoencoder_forward.8} parent=5 // pred_fallthru
      _
    %p1420 = scmp.le.s32.totalorder 2, %s9
    // Predicated region
    $region37: #{conv_autoencoder_forward.8} parent=5 // pred_check
      %p1421 = pneg %p1420
    $region38: #{conv_autoencoder_forward.8} parent=5 // pred_check_branch
      %1423 = sbr.rel (%p1421) target = $region40
    $region39: #{conv_autoencoder_forward.8} parent=5 // pred_region
      %s1424 = ssub.s32 %s9, 2
      // Predicated region
      $region41: #{conv_autoencoder_forward.8} parent=39 // pred_check
        %p1425 = pneg %p120
      $region42: #{conv_autoencoder_forward.8} parent=39 // pred_check_branch
        %1427 = sbr.rel (%p1425) target = $region44
      $region43: #{conv_autoencoder_forward.8} parent=39 // pred_region
        %s1428 = smul.u32 3, %s21
        %p1429 = scmp.lt.s32.totalorder %s20, 1
        %s1430 = scalar_select %p1429, %s20, 1
        %p1431 = scmp.lt.s32.totalorder %s1428, 2
        %s1432 = scalar_select %p1431, %s1428, 2
        %s1433 = smul.addr %s1430, 3
        %s1434 = sadd.s32 %s1432, %s1433
        %s1435 = smul.addr %s1434, 4
        %s1436 = scalar_lea.vmem %s3, %s1435
      $region44: #{conv_autoencoder_forward.8} parent=39 // pred_fallthru
        _
    $region40: #{conv_autoencoder_forward.8} parent=5 // pred_fallthru
      _
  $region6: #{conv_autoencoder_forward.8} parent=0 // loop_footer
    %s13 = sadd.s32 1, %s9
  $region7: #{conv_autoencoder_forward.8} parent=0 // loop_footer_branch
    %8 = sbr.rel target = $region3
  $region8: #{conv_autoencoder_forward.8} parent=0 // loop_exit
    _

// kernel: conv_autoencoder_forward.9
$region0: #{conv_autoencoder_forward.9}
  #allocation0 [shape = 'u32[]', space=smem, size = 0x4, offset = 0x4, fixed_abs, tag = 'smem constant byte address 0x4 - core index']
  #allocation1 [shape = 'u32[144,128]{1,0:T(1,128)}', space=vmem, size = 0x12000, scoped, tag = 'internal scratch']
  %s0 = inlined_call_operand.vmem [shape: bf16[2,20,128], index: 0, kind: input, shape index: {}]
  %s1 = inlined_call_operand.vmem [shape: bf16[1152,32], index: 1, kind: input, shape index: {}]
  %s2 = inlined_call_operand.vmem [shape: f32[1,32], index: 2, kind: input, shape index: {}]
  %s3 = inlined_call_operand.vmem [shape: bf16[2,8,32], index: 3, kind: output, shape index: {}]
  %s4 = sld [smem:[#allocation0]]
  $region45: #{conv_autoencoder_forward.9} parent=0
    _
  %s6 = ssub.s32 1, %s4
  %s7 = scalar_select 0, %s6, %s4
  loop: start=0, step=1, limit=4
  $region2: #{conv_autoencoder_forward.9} parent=0 // loop_pre_header
    _
  $region3: #{conv_autoencoder_forward.9} parent=0 // loop_header
    %s9 = sphi 0, %s13
    %p10 = scmp.ge.s32.totalorder %s9, 4
    %s16 = sphi 0, %s28
    %s17 = sphi 0, %s24
    %s18 = sphi 0, %s16
    %s19 = sphi 0, %s17
    %s20 = sphi 0, %s18
    %s21 = sphi 0, %s19
    %s31 = sphi 0, %s33
    %s34 = sphi 0, %s31
    %s35 = sphi 0, %s34
    %s51 = sphi 0, %s35
    %s55 = sphi 0, %s55
    %s57 = sphi 0, %s55
    %s58 = sphi 0, %s57
    %s72 = sphi 0, %s58
    %s76 = sphi 0, %s76
    %s78 = sphi 0, %s76
    %s79 = sphi 0, %s78
    %s93 = sphi 0, %s79
    %s101 = sphi 0, %s103
    %s104 = sphi 0, %s101
    %s105 = sphi 0, %s104
    %s121 = sphi 0, %s105
  $region4: #{conv_autoencoder_forward.9} parent=0 // loop_header_branch
    %12 = sbr.rel (%p10) target = $region8
  $region5: #{conv_autoencoder_forward.9} parent=0 // loop_body
    %s14 = ssub.s32 %s9, 1
    %s15 = ssub.s32 %s9, 2
    %s22 = sadd.s32 1, %s17
    %p23 = scmp.ge.s32.totalorder %s22, 1
    %s24 = scalar_select %p23, 0, %s22
    %s25 = sadd.s32 1, %s16
    %s26 = scalar_select %p23, %s25, %s16
    %p27 = scmp.ge.s32.totalorder %s26, 2
    %s28 = scalar_select %p27, 0, %s26
    %s29 = ssub.s32 %s16, %s28
    %p30 = scmp.eq.s32.totalorder %s29, 0
    %s32 = sadd.s32 %s31, 1
    %s33 = scalar_select %p30, %s31, %s32
    %p36 = pneg %p30
    %p37 = scmp.eq.s32.totalorder %s9, 1
    %p38 = por %p36, %p37
    %p39 = scmp.ne.s32.totalorder %s31, %s34
    %p40 = scmp.eq.s32.totalorder %s9, 0
    %p41 = por %p39, %p40
    %p42 = scmp.ne.s32.totalorder %s31, %s34
    %p43 = scmp.eq.s32.totalorder %s14, 1
    %p44 = por %p42, %p43
    %p45 = scmp.ne.s32.totalorder %s34, %s35
    %p46 = scmp.eq.s32.totalorder %s14, 0
    %p47 = por %p45, %p46
    %p48 = scmp.ne.s32.totalorder %s34, %s35
    %p49 = scmp.eq.s32.totalorder %s15, 1
    %p50 = por %p48, %p49
    %p52 = scmp.ne.s32.totalorder %s35, %s51
    %p53 = scmp.eq.s32.totalorder %s15, 0
    %p54 = por %p52, %p53
    %s56 = sadd.s32 %s55, 1
    %p59 = scmp.eq.s32.totalorder %s9, 1
    %p60 = scmp.ne.s32.totalorder %s55, %s57
    %p61 = scmp.eq.s32.totalorder %s9, 0
    %p62 = por %p60, %p61
    %p63 = scmp.ne.s32.totalorder %s55, %s57
    %p64 = scmp.eq.s32.totalorder %s14, 1
    %p65 = por %p63, %p64
    %p66 = scmp.ne.s32.totalorder %s57, %s58
    %p67 = scmp.eq.s32.totalorder %s14, 0
    %p68 = por %p66, %p67
    %p69 = scmp.ne.s32.totalorder %s57, %s58
    %p70 = scmp.eq.s32.totalorder %s15, 1
    %p71 = por %p69, %p70
    %p73 = scmp.ne.s32.totalorder %s58, %s72
    %p74 = scmp.eq.s32.totalorder %s15, 0
    %p75 = por %p73, %p74
    %s77 = sadd.s32 %s76, 1
    %p80 = scmp.eq.s32.totalorder %s9, 1
    %p81 = scmp.ne.s32.totalorder %s76, %s78
    %p82 = scmp.eq.s32.totalorder %s9, 0
    %p83 = por %p81, %p82
    %p84 = scmp.ne.s32.totalorder %s76, %s78
    %p85 = scmp.eq.s32.totalorder %s14, 1
    %p86 = por %p84, %p85
    %p87 = scmp.ne.s32.totalorder %s78, %s79
    %p88 = scmp.eq.s32.totalorder %s14, 0
    %p89 = por %p87, %p88
    %p90 = scmp.ne.s32.totalorder %s78, %s79
    %p91 = scmp.eq.s32.totalorder %s15, 1
    %p92 = por %p90, %p91
    %p94 = scmp.ne.s32.totalorder %s79, %s93
    %p95 = scmp.eq.s32.totalorder %s15, 0
    %p96 = por %p94, %p95
    %s97 = ssub.s32 %s16, %s28
    %s98 = ssub.s32 %s17, %s24
    %s99 = sor.u32 %s97, %s98
    %p100 = scmp.eq.s32.totalorder %s99, 0
    %s102 = sadd.s32 %s101, 1
    %s103 = scalar_select %p100, %s101, %s102
    %p106 = pneg %p100
    %p107 = scmp.eq.s32.totalorder %s9, 1
    %p108 = por %p106, %p107
    %p109 = scmp.ne.s32.totalorder %s101, %s104
    %p110 = scmp.eq.s32.totalorder %s9, 0
    %p111 = por %p109, %p110
    %p112 = scmp.ne.s32.totalorder %s101, %s104
    %p113 = scmp.eq.s32.totalorder %s14, 1
    %p114 = por %p112, %p113
    %p115 = scmp.ne.s32.totalorder %s104, %s105
    %p116 = scmp.eq.s32.totalorder %s14, 0
    %p117 = por %p115, %p116
    %p118 = scmp.ne.s32.totalorder %s104, %s105
    %p119 = scmp.eq.s32.totalorder %s15, 1
    %p120 = por %p118, %p119
    %p122 = scmp.ne.s32.totalorder %s105, %s121
    %p123 = scmp.eq.s32.totalorder %s15, 0
    %p124 = por %p122, %p123
    %p125 = scmp.le.s32.totalorder 1, %s9
    %p126 = scmp.lt.s32.totalorder %s9, 3
    %p127 = pnand %p125, %p126
    %p128 = pneg %p127
    // Predicated region
    $region9: #{conv_autoencoder_forward.9} parent=5 // pred_check
      _
    $region10: #{conv_autoencoder_forward.9} parent=5 // pred_check_branch
      %130 = sbr.rel (%p127) target = $region12
    $region11: #{conv_autoencoder_forward.9} parent=5 // pred_region
      %s131 = ssub.s32 %s9, 1
      // Predicated region
      $region13: #{conv_autoencoder_forward.9} parent=11 // pred_check
        %p132 = pneg %p68
      $region14: #{conv_autoencoder_forward.9} parent=11 // pred_check_branch
        %134 = sbr.rel (%p132) target = $region16
      $region15: #{conv_autoencoder_forward.9} parent=11 // pred_region
        _
      $region16: #{conv_autoencoder_forward.9} parent=11 // pred_fallthru
        _
      // Predicated region
      $region17: #{conv_autoencoder_forward.9} parent=11 // pred_check
        %p135 = pneg %p89
      $region18: #{conv_autoencoder_forward.9} parent=11 // pred_check_branch
        %137 = sbr.rel (%p135) target = $region20
      $region19: #{conv_autoencoder_forward.9} parent=11 // pred_region
        _
      $region20: #{conv_autoencoder_forward.9} parent=11 // pred_fallthru
        _
    $region12: #{conv_autoencoder_forward.9} parent=5 // pred_fallthru
      _
    %p138 = scmp.lt.s32.totalorder %s9, 2
    // Predicated region
    $region21: #{conv_autoencoder_forward.9} parent=5 // pred_check
      %p139 = pneg %p138
    $region22: #{conv_autoencoder_forward.9} parent=5 // pred_check_branch
      %141 = sbr.rel (%p139) target = $region24
    $region23: #{conv_autoencoder_forward.9} parent=5 // pred_region
      // Predicated region
      $region25: #{conv_autoencoder_forward.9} parent=23 // pred_check
        %p142 = pneg %p41
      $region26: #{conv_autoencoder_forward.9} parent=23 // pred_check_branch
        %144 = sbr.rel (%p142) target = $region28
      $region27: #{conv_autoencoder_forward.9} parent=23 // pred_region
        %p145 = scmp.lt.s32.totalorder %s16, 1
        %s146 = scalar_select %p145, %s16, 1
        %s147 = smul.addr %s146, 3
        %s148 = smul.addr %s147, 4
        %s149 = scalar_lea.vmem %s0, %s148
      $region28: #{conv_autoencoder_forward.9} parent=23 // pred_fallthru
        _
    $region24: #{conv_autoencoder_forward.9} parent=5 // pred_fallthru
      _
    %p150 = scmp.le.s32.totalorder 1, %s9
    %p151 = scmp.lt.s32.totalorder %s9, 3
    %p152 = pnand %p150, %p151
    %p153 = pneg %p152
    // Predicated region
    $region29: #{conv_autoencoder_forward.9} parent=5 // pred_check
      _
    $region30: #{conv_autoencoder_forward.9} parent=5 // pred_check_branch
      %155 = sbr.rel (%p152) target = $region32
    $region31: #{conv_autoencoder_forward.9} parent=5 // pred_region
      %s156 = ssub.s32 %s9, 1
      %p157 = scmp.lt.s32.totalorder %s18, 1
      %s158 = scalar_select %p157, %s18, 1
      %s159 = smul.addr %s158, 3
      %s160 = smul.addr %s159, 4
      %s161 = scalar_lea.vmem %s0, %s160
      %p162 = pneg %p47
      %p163 = pneg %p44
      %p164 = pneg %p68
      %p165 = pneg %p65
      %p166 = pneg %p89
      %p167 = pneg %p86
      %p168 = pneg %p117
      %p169 = pneg %p114
      %p170 = scmp.lt.s32.totalorder %s18, 1
      %s171 = scalar_select %p170, %s18, 1
      %p172 = scmp.lt.s32.totalorder %s19, 0
      %s173 = scalar_select %p172, %s19, 0
      %s174 = sadd.s32 %s173, %s171
      %s175 = smul.addr %s174, 4
      %s176 = scalar_lea.vmem %s3, %s175
      %p177 = scmp.lt.s32.totalorder %s18, 1
      %s178 = scalar_select %p177, %s18, 1
      %s179 = smul.addr %s178, 3
      %s180 = smul.addr %s179, 4
      %s181 = scalar_lea.vmem %s0, %s180
      %p182 = scmp.lt.s32.totalorder %s18, 1
      %s183 = scalar_select %p182, %s18, 1
      %p184 = scmp.lt.s32.totalorder %s19, 0
      %s185 = scalar_select %p184, %s19, 0
      %s186 = sadd.s32 %s185, %s183
      %s187 = smul.addr %s186, 4
      %s188 = scalar_lea.vmem %s3, %s187
      %v190 = vld [vmem:[%s2] sm:$0x1]
      %v192 = vlaneseq
      %v193 = vshrl.u32 %v192, 7
      %v194 = vsub.s32 0, %v193
      %v195 = vrot.slane %v190, %v194
      %v197 = vld [vmem:[%s181] sm:$0xf]
      %v198 = vld [vmem:[%s1] sm:$0xf]
      %v199 = vld [vmem:[%s1 + $0x4] sm:$0xf]
      %v200 = vld [vmem:[%s1 + $0x8] sm:$0xf]
      %v201 = vld [vmem:[%s1 + $0xc] sm:$0xf]
      %v202 = vld [vmem:[%s1 + $0x10] sm:$0xf]
      %v203 = vld [vmem:[%s1 + $0x14] sm:$0xf]
      %v204 = vld [vmem:[%s1 + $0x18] sm:$0xf]
      %v205 = vld [vmem:[%s1 + $0x1c] sm:$0xf]
      %v206 = vld [vmem:[%s1 + $0x20] sm:$0xf]
      %v207 = vld [vmem:[%s1 + $0x24] sm:$0xf]
      %v208 = vld [vmem:[%s1 + $0x28] sm:$0xf]
      %v209 = vld [vmem:[%s1 + $0x2c] sm:$0xf]
      %v210 = vld [vmem:[%s1 + $0x30] sm:$0xf]
      %v211 = vld [vmem:[%s1 + $0x34] sm:$0xf]
      %v212 = vld [vmem:[%s1 + $0x38] sm:$0xf]
      %v213 = vld [vmem:[%s1 + $0x3c] sm:$0xf]
      %v230 = vunpack.c.l.b16 %v198
      %v231 = vunpack.c.l.b16 %v199
      %v232 = vunpack.c.l.b16 %v200
      %v233 = vunpack.c.l.b16 %v201
      %v234 = vunpack.c.l.b16 %v202
      %v235 = vunpack.c.l.b16 %v203
      %v236 = vunpack.c.l.b16 %v204
      %v237 = vunpack.c.l.b16 %v205
      %v238 = vunpack.c.l.b16 %v206
      %v239 = vunpack.c.l.b16 %v207
      %v240 = vunpack.c.l.b16 %v208
      %v241 = vunpack.c.l.b16 %v209
      %v242 = vunpack.c.l.b16 %v210
      %v243 = vunpack.c.l.b16 %v211
      %v244 = vunpack.c.l.b16 %v212
      %v245 = vunpack.c.l.b16 %v213
      %v246 = vpack.c.b16 %v231, %v230
      %v247 = vpack.c.b16 %v233, %v232
      %v248 = vpack.c.b16 %v235, %v234
      %v249 = vpack.c.b16 %v237, %v236
      %v250 = vpack.c.b16 %v239, %v238
      %v251 = vpack.c.b16 %v241, %v240
      %v252 = vpack.c.b16 %v243, %v242
      %v253 = vpack.c.b16 %v245, %v244
      %262 = vmatprep.subr.bf16.mxu0 0
      %263 = vmatpush1.bf16.msra.mxu0 %v253
      %264 = vmatprep.subr.bf16.mxu0 0
      %265 = vmatpush1.bf16.msra.mxu0 %v252
      %266 = vmatprep.subr.bf16.mxu0 0
      %267 = vmatpush1.bf16.msra.mxu0 %v251
      %268 = vmatprep.subr.bf16.mxu0 0
      %269 = vmatpush1.bf16.msra.mxu0 %v250
      %270 = vmatprep.subr.bf16.mxu0 0
      %271 = vmatpush1.bf16.msra.mxu0 %v249
      %272 = vmatprep.subr.bf16.mxu0 0
      %273 = vmatpush1.bf16.msra.mxu0 %v248
      %274 = vmatprep.subr.bf16.mxu0 0
      %275 = vmatpush1.bf16.msra.mxu0 %v247
      %276 = vmatprep.subr.bf16.mxu0 0
      %277 = vmatpush1.bf16.msra.mxu0 %v246
      %278 = vmatprep.subr.bf16.mxu0 0
      %279 = vmatpush2.bf16.msra.mxu0 0
      %280 = vmatprep.subr.bf16.mxu0 0
      %281 = vmatpush2.bf16.msra.mxu0 0
      %282 = vmatprep.subr.bf16.mxu0 0
      %283 = vmatpush2.bf16.msra.mxu0 0
      %284 = vmatprep.subr.bf16.mxu0 0
      %285 = vmatpush2.bf16.msra.mxu0 0
      %286 = vmatprep.subr.bf16.mxu0 0
      %287 = vmatpush2.bf16.msra.mxu0 0
      %288 = vmatprep.subr.bf16.mxu0 0
      %289 = vmatpush2.bf16.msra.mxu0 0
      %290 = vmatprep.subr.bf16.mxu0 0
      %291 = vmatpush2.bf16.msra.mxu0 0
      %292 = vmatprep.subr.bf16.mxu0 0
      %293 = vmatpush2.bf16.msra.mxu0 0
      %294 = vmatprep.mubr.bf16.mxu0 0
      %295 = vmatmul.mubr.bf16.gmra.mxu0 %v197
      %v296 = vpop.f32.mrf.mxu0
      %v297 = vadd.f32 0.0, %v296
      %v298 = vpop.f32.mrf.mxu0
      %v299 = vpop.f32.mrf.mxu0
      %v300 = vpop.f32.mrf.mxu0
      %301 = vdwg.mxu0
      %v302 = vadd.f32 %v195, %v297
      %v303 = vld [vmem:[%s181] sm:$0xf]
      %v304 = vld [vmem:[%s181 + $0x4] sm:$0x1]
      %v305 = vld [vmem:[%s1 + $0x40] sm:$0xf]
      %v306 = vld [vmem:[%s1 + $0x44] sm:$0xf]
      %v307 = vld [vmem:[%s1 + $0x48] sm:$0xf]
      %v308 = vld [vmem:[%s1 + $0x4c] sm:$0xf]
      %v309 = vld [vmem:[%s1 + $0x50] sm:$0xf]
      %v310 = vld [vmem:[%s1 + $0x54] sm:$0xf]
      %v311 = vld [vmem:[%s1 + $0x58] sm:$0xf]
      %v312 = vld [vmem:[%s1 + $0x5c] sm:$0xf]
      %v313 = vld [vmem:[%s1 + $0x60] sm:$0xf]
      %v314 = vld [vmem:[%s1 + $0x64] sm:$0xf]
      %v315 = vld [vmem:[%s1 + $0x68] sm:$0xf]
      %v316 = vld [vmem:[%s1 + $0x6c] sm:$0xf]
      %v317 = vld [vmem:[%s1 + $0x70] sm:$0xf]
      %v318 = vld [vmem:[%s1 + $0x74] sm:$0xf]
      %v319 = vld [vmem:[%s1 + $0x78] sm:$0xf]
      %v320 = vld [vmem:[%s1 + $0x7c] sm:$0xf]
      %v323 = vunpack.c.l.b16 %v303
      %v324 = vunpack.c.l.b16 %v304
      %v325 = vpack.c.b16 %v324, %v323
      %v327 = vshrl.u32 %v325, 16
      %v329 = vshll.u32 %v325, 16
      %v331 = vrot.slane %v329, 1
      %v332 = vor.u32 %v327, %v331
      %v350 = vunpack.c.l.b16 %v305
      %v351 = vunpack.c.l.b16 %v306
      %v352 = vunpack.c.l.b16 %v307
      %v353 = vunpack.c.l.b16 %v308
      %v354 = vunpack.c.l.b16 %v309
      %v355 = vunpack.c.l.b16 %v310
      %v356 = vunpack.c.l.b16 %v311
      %v357 = vunpack.c.l.b16 %v312
      %v358 = vunpack.c.l.b16 %v313
      %v359 = vunpack.c.l.b16 %v314
      %v360 = vunpack.c.l.b16 %v315
      %v361 = vunpack.c.l.b16 %v316
      %v362 = vunpack.c.l.b16 %v317
      %v363 = vunpack.c.l.b16 %v318
      %v364 = vunpack.c.l.b16 %v319
      %v365 = vunpack.c.l.b16 %v320
      %v366 = vpack.c.b16 %v351, %v350
      %v367 = vpack.c.b16 %v353, %v352
      %v368 = vpack.c.b16 %v355, %v354
      %v369 = vpack.c.b16 %v357, %v356
      %v370 = vpack.c.b16 %v359, %v358
      %v371 = vpack.c.b16 %v361, %v360
      %v372 = vpack.c.b16 %v363, %v362
      %v373 = vpack.c.b16 %v365, %v364
      %382 = vmatprep.subr.bf16.mxu0 0
      %383 = vmatpush1.bf16.msra.mxu0 %v373
      %384 = vmatprep.subr.bf16.mxu0 0
      %385 = vmatpush1.bf16.msra.mxu0 %v372
      %386 = vmatprep.subr.bf16.mxu0 0
      %387 = vmatpush1.bf16.msra.mxu0 %v371
      %388 = vmatprep.subr.bf16.mxu0 0
      %389 = vmatpush1.bf16.msra.mxu0 %v370
      %390 = vmatprep.subr.bf16.mxu0 0
      %391 = vmatpush1.bf16.msra.mxu0 %v369
      %392 = vmatprep.subr.bf16.mxu0 0
      %393 = vmatpush1.bf16.msra.mxu0 %v368
      %394 = vmatprep.subr.bf16.mxu0 0
      %395 = vmatpush1.bf16.msra.mxu0 %v367
      %396 = vmatprep.subr.bf16.mxu0 0
      %397 = vmatpush1.bf16.msra.mxu0 %v366
      %398 = vmatprep.subr.bf16.mxu0 0
      %399 = vmatpush2.bf16.msra.mxu0 0
      %400 = vmatprep.subr.bf16.mxu0 0
      %401 = vmatpush2.bf16.msra.mxu0 0
      %402 = vmatprep.subr.bf16.mxu0 0
      %403 = vmatpush2.bf16.msra.mxu0 0
      %404 = vmatprep.subr.bf16.mxu0 0
      %405 = vmatpush2.bf16.msra.mxu0 0
      %406 = vmatprep.subr.bf16.mxu0 0
      %407 = vmatpush2.bf16.msra.mxu0 0
      %408 = vmatprep.subr.bf16.mxu0 0
      %409 = vmatpush2.bf16.msra.mxu0 0
      %410 = vmatprep.subr.bf16.mxu0 0
      %411 = vmatpush2.bf16.msra.mxu0 0
      %412 = vmatprep.subr.bf16.mxu0 0
      %413 = vmatpush2.bf16.msra.mxu0 0
      %414 = vmatprep.mubr.bf16.mxu0 0
      %415 = vmatmul.mubr.bf16.gmra.mxu0 %v332
      %v416 = vpop.f32.mrf.mxu0
      %v417 = vadd.f32 0.0, %v416
      %v418 = vpop.f32.mrf.mxu0
      %v419 = vpop.f32.mrf.mxu0
      %v420 = vpop.f32.mrf.mxu0
      %421 = vdwg.mxu0
      %v422 = vadd.f32 %v302, %v417
      %v423 = vld [vmem:[%s181] sm:$0xe]
      %v424 = vld [vmem:[%s1 + $0x80] sm:$0xf]
      %v425 = vld [vmem:[%s1 + $0x84] sm:$0xf]
      %v426 = vld [vmem:[%s1 + $0x88] sm:$0xf]
      %v427 = vld [vmem:[%s1 + $0x8c] sm:$0xf]
      %v428 = vld [vmem:[%s1 + $0x90] sm:$0xf]
      %v429 = vld [vmem:[%s1 + $0x94] sm:$0xf]
      %v430 = vld [vmem:[%s1 + $0x98] sm:$0xf]
      %v431 = vld [vmem:[%s1 + $0x9c] sm:$0xf]
      %v432 = vld [vmem:[%s1 + $0xa0] sm:$0xf]
      %v433 = vld [vmem:[%s1 + $0xa4] sm:$0xf]
      %v434 = vld [vmem:[%s1 + $0xa8] sm:$0xf]
      %v435 = vld [vmem:[%s1 + $0xac] sm:$0xf]
      %v436 = vld [vmem:[%s1 + $0xb0] sm:$0xf]
      %v437 = vld [vmem:[%s1 + $0xb4] sm:$0xf]
      %v438 = vld [vmem:[%s1 + $0xb8] sm:$0xf]
      %v439 = vld [vmem:[%s1 + $0xbc] sm:$0xf]
      %v441 = vunpack.c.l.b16 %v423
      %v442 = vpack.c.b16 %v324, %v441
      %v443 = vrot.slane %v442, 1
      %v461 = vunpack.c.l.b16 %v424
      %v462 = vunpack.c.l.b16 %v425
      %v463 = vunpack.c.l.b16 %v426
      %v464 = vunpack.c.l.b16 %v427
      %v465 = vunpack.c.l.b16 %v428
      %v466 = vunpack.c.l.b16 %v429
      %v467 = vunpack.c.l.b16 %v430
      %v468 = vunpack.c.l.b16 %v431
      %v469 = vunpack.c.l.b16 %v432
      %v470 = vunpack.c.l.b16 %v433
      %v471 = vunpack.c.l.b16 %v434
      %v472 = vunpack.c.l.b16 %v435
      %v473 = vunpack.c.l.b16 %v436
      %v474 = vunpack.c.l.b16 %v437
      %v475 = vunpack.c.l.b16 %v438
      %v476 = vunpack.c.l.b16 %v439
      %v477 = vpack.c.b16 %v462, %v461
      %v478 = vpack.c.b16 %v464, %v463
      %v479 = vpack.c.b16 %v466, %v465
      %v480 = vpack.c.b16 %v468, %v467
      %v481 = vpack.c.b16 %v470, %v469
      %v482 = vpack.c.b16 %v472, %v471
      %v483 = vpack.c.b16 %v474, %v473
      %v484 = vpack.c.b16 %v476, %v475
      %493 = vmatprep.subr.bf16.mxu0 0
      %494 = vmatpush1.bf16.msra.mxu0 %v484
      %495 = vmatprep.subr.bf16.mxu0 0
      %496 = vmatpush1.bf16.msra.mxu0 %v483
      %497 = vmatprep.subr.bf16.mxu0 0
      %498 = vmatpush1.bf16.msra.mxu0 %v482
      %499 = vmatprep.subr.bf16.mxu0 0
      %500 = vmatpush1.bf16.msra.mxu0 %v481
      %501 = vmatprep.subr.bf16.mxu0 0
      %502 = vmatpush1.bf16.msra.mxu0 %v480
      %503 = vmatprep.subr.bf16.mxu0 0
      %504 = vmatpush1.bf16.msra.mxu0 %v479
      %505 = vmatprep.subr.bf16.mxu0 0
      %506 = vmatpush1.bf16.msra.mxu0 %v478
      %507 = vmatprep.subr.bf16.mxu0 0
      %508 = vmatpush1.bf16.msra.mxu0 %v477
      %509 = vmatprep.subr.bf16.mxu0 0
      %510 = vmatpush2.bf16.msra.mxu0 0
      %511 = vmatprep.subr.bf16.mxu0 0
      %512 = vmatpush2.bf16.msra.mxu0 0
      %513 = vmatprep.subr.bf16.mxu0 0
      %514 = vmatpush2.bf16.msra.mxu0 0
      %515 = vmatprep.subr.bf16.mxu0 0
      %516 = vmatpush2.bf16.msra.mxu0 0
      %517 = vmatprep.subr.bf16.mxu0 0
      %518 = vmatpush2.bf16.msra.mxu0 0
      %519 = vmatprep.subr.bf16.mxu0 0
      %520 = vmatpush2.bf16.msra.mxu0 0
      %521 = vmatprep.subr.bf16.mxu0 0
      %522 = vmatpush2.bf16.msra.mxu0 0
      %523 = vmatprep.subr.bf16.mxu0 0
      %524 = vmatpush2.bf16.msra.mxu0 0
      %525 = vmatprep.mubr.bf16.mxu0 0
      %526 = vmatmul.mubr.bf16.gmra.mxu0 %v443
      %v527 = vpop.f32.mrf.mxu0
      %v528 = vadd.f32 0.0, %v527
      %v529 = vpop.f32.mrf.mxu0
      %v530 = vpop.f32.mrf.mxu0
      %v531 = vpop.f32.mrf.mxu0
      %532 = vdwg.mxu0
      %v533 = vadd.f32 %v422, %v528
      %v534 = vld [vmem:[%s181] sm:$0xc]
      %v535 = vld [vmem:[%s181 + $0x4] sm:$0x3]
      %v536 = vld [vmem:[%s1 + $0xc0] sm:$0xf]
      %v537 = vld [vmem:[%s1 + $0xc4] sm:$0xf]
      %v538 = vld [vmem:[%s1 + $0xc8] sm:$0xf]
      %v539 = vld [vmem:[%s1 + $0xcc] sm:$0xf]
      %v540 = vld [vmem:[%s1 + $0xd0] sm:$0xf]
      %v541 = vld [vmem:[%s1 + $0xd4] sm:$0xf]
      %v542 = vld [vmem:[%s1 + $0xd8] sm:$0xf]
      %v543 = vld [vmem:[%s1 + $0xdc] sm:$0xf]
      %v544 = vld [vmem:[%s1 + $0xe0] sm:$0xf]
      %v545 = vld [vmem:[%s1 + $0xe4] sm:$0xf]
      %v546 = vld [vmem:[%s1 + $0xe8] sm:$0xf]
      %v547 = vld [vmem:[%s1 + $0xec] sm:$0xf]
      %v548 = vld [vmem:[%s1 + $0xf0] sm:$0xf]
      %v549 = vld [vmem:[%s1 + $0xf4] sm:$0xf]
      %v550 = vld [vmem:[%s1 + $0xf8] sm:$0xf]
      %v551 = vld [vmem:[%s1 + $0xfc] sm:$0xf]
      %v554 = vunpack.c.l.b16 %v534
      %v555 = vunpack.c.l.b16 %v535
      %v556 = vpack.c.b16 %v555, %v554
      %v557 = vrot.slane %v556, 2
      %v575 = vunpack.c.l.b16 %v536
      %v576 = vunpack.c.l.b16 %v537
      %v577 = vunpack.c.l.b16 %v538
      %v578 = vunpack.c.l.b16 %v539
      %v579 = vunpack.c.l.b16 %v540
      %v580 = vunpack.c.l.b16 %v541
      %v581 = vunpack.c.l.b16 %v542
      %v582 = vunpack.c.l.b16 %v543
      %v583 = vunpack.c.l.b16 %v544
      %v584 = vunpack.c.l.b16 %v545
      %v585 = vunpack.c.l.b16 %v546
      %v586 = vunpack.c.l.b16 %v547
      %v587 = vunpack.c.l.b16 %v548
      %v588 = vunpack.c.l.b16 %v549
      %v589 = vunpack.c.l.b16 %v550
      %v590 = vunpack.c.l.b16 %v551
      %v591 = vpack.c.b16 %v576, %v575
      %v592 = vpack.c.b16 %v578, %v577
      %v593 = vpack.c.b16 %v580, %v579
      %v594 = vpack.c.b16 %v582, %v581
      %v595 = vpack.c.b16 %v584, %v583
      %v596 = vpack.c.b16 %v586, %v585
      %v597 = vpack.c.b16 %v588, %v587
      %v598 = vpack.c.b16 %v590, %v589
      %607 = vmatprep.subr.bf16.mxu0 0
      %608 = vmatpush1.bf16.msra.mxu0 %v598
      %609 = vmatprep.subr.bf16.mxu0 0
      %610 = vmatpush1.bf16.msra.mxu0 %v597
      %611 = vmatprep.subr.bf16.mxu0 0
      %612 = vmatpush1.bf16.msra.mxu0 %v596
      %613 = vmatprep.subr.bf16.mxu0 0
      %614 = vmatpush1.bf16.msra.mxu0 %v595
      %615 = vmatprep.subr.bf16.mxu0 0
      %616 = vmatpush1.bf16.msra.mxu0 %v594
      %617 = vmatprep.subr.bf16.mxu0 0
      %618 = vmatpush1.bf16.msra.mxu0 %v593
      %619 = vmatprep.subr.bf16.mxu0 0
      %620 = vmatpush1.bf16.msra.mxu0 %v592
      %621 = vmatprep.subr.bf16.mxu0 0
      %622 = vmatpush1.bf16.msra.mxu0 %v591
      %623 = vmatprep.subr.bf16.mxu0 0
      %624 = vmatpush2.bf16.msra.mxu0 0
      %625 = vmatprep.subr.bf16.mxu0 0
      %626 = vmatpush2.bf16.msra.mxu0 0
      %627 = vmatprep.subr.bf16.mxu0 0
      %628 = vmatpush2.bf16.msra.mxu0 0
      %629 = vmatprep.subr.bf16.mxu0 0
      %630 = vmatpush2.bf16.msra.mxu0 0
      %631 = vmatprep.subr.bf16.mxu0 0
      %632 = vmatpush2.bf16.msra.mxu0 0
      %633 = vmatprep.subr.bf16.mxu0 0
      %634 = vmatpush2.bf16.msra.mxu0 0
      %635 = vmatprep.subr.bf16.mxu0 0
      %636 = vmatpush2.bf16.msra.mxu0 0
      %637 = vmatprep.subr.bf16.mxu0 0
      %638 = vmatpush2.bf16.msra.mxu0 0
      %639 = vmatprep.mubr.bf16.mxu0 0
      %640 = vmatmul.mubr.bf16.gmra.mxu0 %v557
      %v641 = vpop.f32.mrf.mxu0
      %v642 = vadd.f32 0.0, %v641
      %v643 = vpop.f32.mrf.mxu0
      %v644 = vpop.f32.mrf.mxu0
      %v645 = vpop.f32.mrf.mxu0
      %646 = vdwg.mxu0
      %v647 = vadd.f32 %v533, %v642
      %v648 = vld [vmem:[%s181 + $0x4] sm:$0x7]
      %v649 = vld [vmem:[%s1 + $0x100] sm:$0xf]
      %v650 = vld [vmem:[%s1 + $0x104] sm:$0xf]
      %v651 = vld [vmem:[%s1 + $0x108] sm:$0xf]
      %v652 = vld [vmem:[%s1 + $0x10c] sm:$0xf]
      %v653 = vld [vmem:[%s1 + $0x110] sm:$0xf]
      %v654 = vld [vmem:[%s1 + $0x114] sm:$0xf]
      %v655 = vld [vmem:[%s1 + $0x118] sm:$0xf]
      %v656 = vld [vmem:[%s1 + $0x11c] sm:$0xf]
      %v657 = vld [vmem:[%s1 + $0x120] sm:$0xf]
      %v658 = vld [vmem:[%s1 + $0x124] sm:$0xf]
      %v659 = vld [vmem:[%s1 + $0x128] sm:$0xf]
      %v660 = vld [vmem:[%s1 + $0x12c] sm:$0xf]
      %v661 = vld [vmem:[%s1 + $0x130] sm:$0xf]
      %v662 = vld [vmem:[%s1 + $0x134] sm:$0xf]
      %v663 = vld [vmem:[%s1 + $0x138] sm:$0xf]
      %v664 = vld [vmem:[%s1 + $0x13c] sm:$0xf]
      %v666 = vunpack.c.l.b16 %v648
      %v667 = vpack.c.b16 %v666, %v554
      %v669 = vshrl.u32 %v667, 16
      %v671 = vrot.slane %v669, 2
      %v672 = vshll.u32 %v667, 16
      %v674 = vrot.slane %v672, 3
      %v675 = vor.u32 %v671, %v674
      %v693 = vunpack.c.l.b16 %v649
      %v694 = vunpack.c.l.b16 %v650
      %v695 = vunpack.c.l.b16 %v651
      %v696 = vunpack.c.l.b16 %v652
      %v697 = vunpack.c.l.b16 %v653
      %v698 = vunpack.c.l.b16 %v654
      %v699 = vunpack.c.l.b16 %v655
      %v700 = vunpack.c.l.b16 %v656
      %v701 = vunpack.c.l.b16 %v657
      %v702 = vunpack.c.l.b16 %v658
      %v703 = vunpack.c.l.b16 %v659
      %v704 = vunpack.c.l.b16 %v660
      %v705 = vunpack.c.l.b16 %v661
      %v706 = vunpack.c.l.b16 %v662
      %v707 = vunpack.c.l.b16 %v663
      %v708 = vunpack.c.l.b16 %v664
      %v709 = vpack.c.b16 %v694, %v693
      %v710 = vpack.c.b16 %v696, %v695
      %v711 = vpack.c.b16 %v698, %v697
      %v712 = vpack.c.b16 %v700, %v699
      %v713 = vpack.c.b16 %v702, %v701
      %v714 = vpack.c.b16 %v704, %v703
      %v715 = vpack.c.b16 %v706, %v705
      %v716 = vpack.c.b16 %v708, %v707
      %725 = vmatprep.subr.bf16.mxu0 0
      %726 = vmatpush1.bf16.msra.mxu0 %v716
      %727 = vmatprep.subr.bf16.mxu0 0
      %728 = vmatpush1.bf16.msra.mxu0 %v715
      %729 = vmatprep.subr.bf16.mxu0 0
      %730 = vmatpush1.bf16.msra.mxu0 %v714
      %731 = vmatprep.subr.bf16.mxu0 0
      %732 = vmatpush1.bf16.msra.mxu0 %v713
      %733 = vmatprep.subr.bf16.mxu0 0
      %734 = vmatpush1.bf16.msra.mxu0 %v712
      %735 = vmatprep.subr.bf16.mxu0 0
      %736 = vmatpush1.bf16.msra.mxu0 %v711
      %737 = vmatprep.subr.bf16.mxu0 0
      %738 = vmatpush1.bf16.msra.mxu0 %v710
      %739 = vmatprep.subr.bf16.mxu0 0
      %740 = vmatpush1.bf16.msra.mxu0 %v709
      %741 = vmatprep.subr.bf16.mxu0 0
      %742 = vmatpush2.bf16.msra.mxu0 0
      %743 = vmatprep.subr.bf16.mxu0 0
      %744 = vmatpush2.bf16.msra.mxu0 0
      %745 = vmatprep.subr.bf16.mxu0 0
      %746 = vmatpush2.bf16.msra.mxu0 0
      %747 = vmatprep.subr.bf16.mxu0 0
      %748 = vmatpush2.bf16.msra.mxu0 0
      %749 = vmatprep.subr.bf16.mxu0 0
      %750 = vmatpush2.bf16.msra.mxu0 0
      %751 = vmatprep.subr.bf16.mxu0 0
      %752 = vmatpush2.bf16.msra.mxu0 0
      %753 = vmatprep.subr.bf16.mxu0 0
      %754 = vmatpush2.bf16.msra.mxu0 0
      %755 = vmatprep.subr.bf16.mxu0 0
      %756 = vmatpush2.bf16.msra.mxu0 0
      %757 = vmatprep.mubr.bf16.mxu0 0
      %758 = vmatmul.mubr.bf16.gmra.mxu0 %v675
      %v759 = vpop.f32.mrf.mxu0
      %v760 = vadd.f32 0.0, %v759
      %v761 = vpop.f32.mrf.mxu0
      %v762 = vpop.f32.mrf.mxu0
      %v763 = vpop.f32.mrf.mxu0
      %764 = vdwg.mxu0
      %v765 = vadd.f32 %v647, %v760
      %v766 = vld [vmem:[%s181] sm:$0x8]
      %v767 = vld [vmem:[%s1 + $0x140] sm:$0xf]
      %v768 = vld [vmem:[%s1 + $0x144] sm:$0xf]
      %v769 = vld [vmem:[%s1 + $0x148] sm:$0xf]
      %v770 = vld [vmem:[%s1 + $0x14c] sm:$0xf]
      %v771 = vld [vmem:[%s1 + $0x150] sm:$0xf]
      %v772 = vld [vmem:[%s1 + $0x154] sm:$0xf]
      %v773 = vld [vmem:[%s1 + $0x158] sm:$0xf]
      %v774 = vld [vmem:[%s1 + $0x15c] sm:$0xf]
      %v775 = vld [vmem:[%s1 + $0x160] sm:$0xf]
      %v776 = vld [vmem:[%s1 + $0x164] sm:$0xf]
      %v777 = vld [vmem:[%s1 + $0x168] sm:$0xf]
      %v778 = vld [vmem:[%s1 + $0x16c] sm:$0xf]
      %v779 = vld [vmem:[%s1 + $0x170] sm:$0xf]
      %v780 = vld [vmem:[%s1 + $0x174] sm:$0xf]
      %v781 = vld [vmem:[%s1 + $0x178] sm:$0xf]
      %v782 = vld [vmem:[%s1 + $0x17c] sm:$0xf]
      %v784 = vunpack.c.l.b16 %v766
      %v785 = vpack.c.b16 %v666, %v784
      %v786 = vrot.slane %v785, 3
      %v804 = vunpack.c.l.b16 %v767
      %v805 = vunpack.c.l.b16 %v768
      %v806 = vunpack.c.l.b16 %v769
      %v807 = vunpack.c.l.b16 %v770
      %v808 = vunpack.c.l.b16 %v771
      %v809 = vunpack.c.l.b16 %v772
      %v810 = vunpack.c.l.b16 %v773
      %v811 = vunpack.c.l.b16 %v774
      %v812 = vunpack.c.l.b16 %v775
      %v813 = vunpack.c.l.b16 %v776
      %v814 = vunpack.c.l.b16 %v777
      %v815 = vunpack.c.l.b16 %v778
      %v816 = vunpack.c.l.b16 %v779
      %v817 = vunpack.c.l.b16 %v780
      %v818 = vunpack.c.l.b16 %v781
      %v819 = vunpack.c.l.b16 %v782
      %v820 = vpack.c.b16 %v805, %v804
      %v821 = vpack.c.b16 %v807, %v806
      %v822 = vpack.c.b16 %v809, %v808
      %v823 = vpack.c.b16 %v811, %v810
      %v824 = vpack.c.b16 %v813, %v812
      %v825 = vpack.c.b16 %v815, %v814
      %v826 = vpack.c.b16 %v817, %v816
      %v827 = vpack.c.b16 %v819, %v818
      %836 = vmatprep.subr.bf16.mxu0 0
      %837 = vmatpush1.bf16.msra.mxu0 %v827
      %838 = vmatprep.subr.bf16.mxu0 0
      %839 = vmatpush1.bf16.msra.mxu0 %v826
      %840 = vmatprep.subr.bf16.mxu0 0
      %841 = vmatpush1.bf16.msra.mxu0 %v825
      %842 = vmatprep.subr.bf16.mxu0 0
      %843 = vmatpush1.bf16.msra.mxu0 %v824
      %844 = vmatprep.subr.bf16.mxu0 0
      %845 = vmatpush1.bf16.msra.mxu0 %v823
      %846 = vmatprep.subr.bf16.mxu0 0
      %847 = vmatpush1.bf16.msra.mxu0 %v822
      %848 = vmatprep.subr.bf16.mxu0 0
      %849 = vmatpush1.bf16.msra.mxu0 %v821
      %850 = vmatprep.subr.bf16.mxu0 0
      %851 = vmatpush1.bf16.msra.mxu0 %v820
      %852 = vmatprep.subr.bf16.mxu0 0
      %853 = vmatpush2.bf16.msra.mxu0 0
      %854 = vmatprep.subr.bf16.mxu0 0
      %855 = vmatpush2.bf16.msra.mxu0 0
      %856 = vmatprep.subr.bf16.mxu0 0
      %857 = vmatpush2.bf16.msra.mxu0 0
      %858 = vmatprep.subr.bf16.mxu0 0
      %859 = vmatpush2.bf16.msra.mxu0 0
      %860 = vmatprep.subr.bf16.mxu0 0
      %861 = vmatpush2.bf16.msra.mxu0 0
      %862 = vmatprep.subr.bf16.mxu0 0
      %863 = vmatpush2.bf16.msra.mxu0 0
      %864 = vmatprep.subr.bf16.mxu0 0
      %865 = vmatpush2.bf16.msra.mxu0 0
      %866 = vmatprep.subr.bf16.mxu0 0
      %867 = vmatpush2.bf16.msra.mxu0 0
      %868 = vmatprep.mubr.bf16.mxu0 0
      %869 = vmatmul.mubr.bf16.gmra.mxu0 %v786
      %v870 = vpop.f32.mrf.mxu0
      %v871 = vadd.f32 0.0, %v870
      %v872 = vpop.f32.mrf.mxu0
      %v873 = vpop.f32.mrf.mxu0
      %v874 = vpop.f32.mrf.mxu0
      %875 = vdwg.mxu0
      %v876 = vadd.f32 %v765, %v871
      %v877 = vld [vmem:[%s181 + $0x4] sm:$0xf]
      %v878 = vld [vmem:[%s1 + $0x180] sm:$0xf]
      %v879 = vld [vmem:[%s1 + $0x184] sm:$0xf]
      %v880 = vld [vmem:[%s1 + $0x188] sm:$0xf]
      %v881 = vld [vmem:[%s1 + $0x18c] sm:$0xf]
      %v882 = vld [vmem:[%s1 + $0x190] sm:$0xf]
      %v883 = vld [vmem:[%s1 + $0x194] sm:$0xf]
      %v884 = vld [vmem:[%s1 + $0x198] sm:$0xf]
      %v885 = vld [vmem:[%s1 + $0x19c] sm:$0xf]
      %v886 = vld [vmem:[%s1 + $0x1a0] sm:$0xf]
      %v887 = vld [vmem:[%s1 + $0x1a4] sm:$0xf]
      %v888 = vld [vmem:[%s1 + $0x1a8] sm:$0xf]
      %v889 = vld [vmem:[%s1 + $0x1ac] sm:$0xf]
      %v890 = vld [vmem:[%s1 + $0x1b0] sm:$0xf]
      %v891 = vld [vmem:[%s1 + $0x1b4] sm:$0xf]
      %v892 = vld [vmem:[%s1 + $0x1b8] sm:$0xf]
      %v893 = vld [vmem:[%s1 + $0x1bc] sm:$0xf]
      %v910 = vunpack.c.l.b16 %v878
      %v911 = vunpack.c.l.b16 %v879
      %v912 = vunpack.c.l.b16 %v880
      %v913 = vunpack.c.l.b16 %v881
      %v914 = vunpack.c.l.b16 %v882
      %v915 = vunpack.c.l.b16 %v883
      %v916 = vunpack.c.l.b16 %v884
      %v917 = vunpack.c.l.b16 %v885
      %v918 = vunpack.c.l.b16 %v886
      %v919 = vunpack.c.l.b16 %v887
      %v920 = vunpack.c.l.b16 %v888
      %v921 = vunpack.c.l.b16 %v889
      %v922 = vunpack.c.l.b16 %v890
      %v923 = vunpack.c.l.b16 %v891
      %v924 = vunpack.c.l.b16 %v892
      %v925 = vunpack.c.l.b16 %v893
      %v926 = vpack.c.b16 %v911, %v910
      %v927 = vpack.c.b16 %v913, %v912
      %v928 = vpack.c.b16 %v915, %v914
      %v929 = vpack.c.b16 %v917, %v916
      %v930 = vpack.c.b16 %v919, %v918
      %v931 = vpack.c.b16 %v921, %v920
      %v932 = vpack.c.b16 %v923, %v922
      %v933 = vpack.c.b16 %v925, %v924
      %942 = vmatprep.subr.bf16.mxu0 0
      %943 = vmatpush1.bf16.msra.mxu0 %v933
      %944 = vmatprep.subr.bf16.mxu0 0
      %945 = vmatpush1.bf16.msra.mxu0 %v932
      %946 = vmatprep.subr.bf16.mxu0 0
      %947 = vmatpush1.bf16.msra.mxu0 %v931
      %948 = vmatprep.subr.bf16.mxu0 0
      %949 = vmatpush1.bf16.msra.mxu0 %v930
      %950 = vmatprep.subr.bf16.mxu0 0
      %951 = vmatpush1.bf16.msra.mxu0 %v929
      %952 = vmatprep.subr.bf16.mxu0 0
      %953 = vmatpush1.bf16.msra.mxu0 %v928
      %954 = vmatprep.subr.bf16.mxu0 0
      %955 = vmatpush1.bf16.msra.mxu0 %v927
      %956 = vmatprep.subr.bf16.mxu0 0
      %957 = vmatpush1.bf16.msra.mxu0 %v926
      %958 = vmatprep.subr.bf16.mxu0 0
      %959 = vmatpush2.bf16.msra.mxu0 0
      %960 = vmatprep.subr.bf16.mxu0 0
      %961 = vmatpush2.bf16.msra.mxu0 0
      %962 = vmatprep.subr.bf16.mxu0 0
      %963 = vmatpush2.bf16.msra.mxu0 0
      %964 = vmatprep.subr.bf16.mxu0 0
      %965 = vmatpush2.bf16.msra.mxu0 0
      %966 = vmatprep.subr.bf16.mxu0 0
      %967 = vmatpush2.bf16.msra.mxu0 0
      %968 = vmatprep.subr.bf16.mxu0 0
      %969 = vmatpush2.bf16.msra.mxu0 0
      %970 = vmatprep.subr.bf16.mxu0 0
      %971 = vmatpush2.bf16.msra.mxu0 0
      %972 = vmatprep.subr.bf16.mxu0 0
      %973 = vmatpush2.bf16.msra.mxu0 0
      %974 = vmatprep.mubr.bf16.mxu0 0
      %975 = vmatmul.mubr.bf16.gmra.mxu0 %v877
      %v976 = vpop.f32.mrf.mxu0
      %v977 = vadd.f32 0.0, %v976
      %v978 = vpop.f32.mrf.mxu0
      %v979 = vpop.f32.mrf.mxu0
      %v980 = vpop.f32.mrf.mxu0
      %981 = vdwg.mxu0
      %v982 = vadd.f32 %v876, %v977
      %v983 = vld [vmem:[%s181 + $0x4] sm:$0xf]
      %v984 = vld [vmem:[%s181 + $0x8] sm:$0x1]
      %v985 = vld [vmem:[%s1 + $0x1c0] sm:$0xf]
      %v986 = vld [vmem:[%s1 + $0x1c4] sm:$0xf]
      %v987 = vld [vmem:[%s1 + $0x1c8] sm:$0xf]
      %v988 = vld [vmem:[%s1 + $0x1cc] sm:$0xf]
      %v989 = vld [vmem:[%s1 + $0x1d0] sm:$0xf]
      %v990 = vld [vmem:[%s1 + $0x1d4] sm:$0xf]
      %v991 = vld [vmem:[%s1 + $0x1d8] sm:$0xf]
      %v992 = vld [vmem:[%s1 + $0x1dc] sm:$0xf]
      %v993 = vld [vmem:[%s1 + $0x1e0] sm:$0xf]
      %v994 = vld [vmem:[%s1 + $0x1e4] sm:$0xf]
      %v995 = vld [vmem:[%s1 + $0x1e8] sm:$0xf]
      %v996 = vld [vmem:[%s1 + $0x1ec] sm:$0xf]
      %v997 = vld [vmem:[%s1 + $0x1f0] sm:$0xf]
      %v998 = vld [vmem:[%s1 + $0x1f4] sm:$0xf]
      %v999 = vld [vmem:[%s1 + $0x1f8] sm:$0xf]
      %v1000 = vld [vmem:[%s1 + $0x1fc] sm:$0xf]
      %v1003 = vunpack.c.l.b16 %v983
      %v1004 = vunpack.c.l.b16 %v984
      %v1005 = vpack.c.b16 %v1004, %v1003
      %v1007 = vshrl.u32 %v1005, 16
      %v1009 = vshll.u32 %v1005, 16
      %v1011 = vrot.slane %v1009, 1
      %v1012 = vor.u32 %v1007, %v1011
      %v1030 = vunpack.c.l.b16 %v985
      %v1031 = vunpack.c.l.b16 %v986
      %v1032 = vunpack.c.l.b16 %v987
      %v1033 = vunpack.c.l.b16 %v988
      %v1034 = vunpack.c.l.b16 %v989
      %v1035 = vunpack.c.l.b16 %v990
      %v1036 = vunpack.c.l.b16 %v991
      %v1037 = vunpack.c.l.b16 %v992
      %v1038 = vunpack.c.l.b16 %v993
      %v1039 = vunpack.c.l.b16 %v994
      %v1040 = vunpack.c.l.b16 %v995
      %v1041 = vunpack.c.l.b16 %v996
      %v1042 = vunpack.c.l.b16 %v997
      %v1043 = vunpack.c.l.b16 %v998
      %v1044 = vunpack.c.l.b16 %v999
      %v1045 = vunpack.c.l.b16 %v1000
      %v1046 = vpack.c.b16 %v1031, %v1030
      %v1047 = vpack.c.b16 %v1033, %v1032
      %v1048 = vpack.c.b16 %v1035, %v1034
      %v1049 = vpack.c.b16 %v1037, %v1036
      %v1050 = vpack.c.b16 %v1039, %v1038
      %v1051 = vpack.c.b16 %v1041, %v1040
      %v1052 = vpack.c.b16 %v1043, %v1042
      %v1053 = vpack.c.b16 %v1045, %v1044
      %1062 = vmatprep.subr.bf16.mxu0 0
      %1063 = vmatpush1.bf16.msra.mxu0 %v1053
      %1064 = vmatprep.subr.bf16.mxu0 0
      %1065 = vmatpush1.bf16.msra.mxu0 %v1052
      %1066 = vmatprep.subr.bf16.mxu0 0
      %1067 = vmatpush1.bf16.msra.mxu0 %v1051
      %1068 = vmatprep.subr.bf16.mxu0 0
      %1069 = vmatpush1.bf16.msra.mxu0 %v1050
      %1070 = vmatprep.subr.bf16.mxu0 0
      %1071 = vmatpush1.bf16.msra.mxu0 %v1049
      %1072 = vmatprep.subr.bf16.mxu0 0
      %1073 = vmatpush1.bf16.msra.mxu0 %v1048
      %1074 = vmatprep.subr.bf16.mxu0 0
      %1075 = vmatpush1.bf16.msra.mxu0 %v1047
      %1076 = vmatprep.subr.bf16.mxu0 0
      %1077 = vmatpush1.bf16.msra.mxu0 %v1046
      %1078 = vmatprep.subr.bf16.mxu0 0
      %1079 = vmatpush2.bf16.msra.mxu0 0
      %1080 = vmatprep.subr.bf16.mxu0 0
      %1081 = vmatpush2.bf16.msra.mxu0 0
      %1082 = vmatprep.subr.bf16.mxu0 0
      %1083 = vmatpush2.bf16.msra.mxu0 0
      %1084 = vmatprep.subr.bf16.mxu0 0
      %1085 = vmatpush2.bf16.msra.mxu0 0
      %1086 = vmatprep.subr.bf16.mxu0 0
      %1087 = vmatpush2.bf16.msra.mxu0 0
      %1088 = vmatprep.subr.bf16.mxu0 0
      %1089 = vmatpush2.bf16.msra.mxu0 0
      %1090 = vmatprep.subr.bf16.mxu0 0
      %1091 = vmatpush2.bf16.msra.mxu0 0
      %1092 = vmatprep.subr.bf16.mxu0 0
      %1093 = vmatpush2.bf16.msra.mxu0 0
      %1094 = vmatprep.mubr.bf16.mxu0 0
      %1095 = vmatmul.mubr.bf16.gmra.mxu0 %v1012
      %v1096 = vpop.f32.mrf.mxu0
      %v1097 = vadd.f32 0.0, %v1096
      %v1098 = vpop.f32.mrf.mxu0
      %v1099 = vpop.f32.mrf.mxu0
      %v1100 = vpop.f32.mrf.mxu0
      %1101 = vdwg.mxu0
      %v1102 = vadd.f32 %v982, %v1097
      %v1103 = vld [vmem:[%s181 + $0x4] sm:$0xe]
      %v1104 = vld [vmem:[%s1 + $0x200] sm:$0xf]
      %v1105 = vld [vmem:[%s1 + $0x204] sm:$0xf]
      %v1106 = vld [vmem:[%s1 + $0x208] sm:$0xf]
      %v1107 = vld [vmem:[%s1 + $0x20c] sm:$0xf]
      %v1108 = vld [vmem:[%s1 + $0x210] sm:$0xf]
      %v1109 = vld [vmem:[%s1 + $0x214] sm:$0xf]
      %v1110 = vld [vmem:[%s1 + $0x218] sm:$0xf]
      %v1111 = vld [vmem:[%s1 + $0x21c] sm:$0xf]
      %v1112 = vld [vmem:[%s1 + $0x220] sm:$0xf]
      %v1113 = vld [vmem:[%s1 + $0x224] sm:$0xf]
      %v1114 = vld [vmem:[%s1 + $0x228] sm:$0xf]
      %v1115 = vld [vmem:[%s1 + $0x22c] sm:$0xf]
      %v1116 = vld [vmem:[%s1 + $0x230] sm:$0xf]
      %v1117 = vld [vmem:[%s1 + $0x234] sm:$0xf]
      %v1118 = vld [vmem:[%s1 + $0x238] sm:$0xf]
      %v1119 = vld [vmem:[%s1 + $0x23c] sm:$0xf]
      %v1121 = vunpack.c.l.b16 %v1103
      %v1122 = vpack.c.b16 %v1004, %v1121
      %v1123 = vrot.slane %v1122, 1
      %v1141 = vunpack.c.l.b16 %v1104
      %v1142 = vunpack.c.l.b16 %v1105
      %v1143 = vunpack.c.l.b16 %v1106
      %v1144 = vunpack.c.l.b16 %v1107
      %v1145 = vunpack.c.l.b16 %v1108
      %v1146 = vunpack.c.l.b16 %v1109
      %v1147 = vunpack.c.l.b16 %v1110
      %v1148 = vunpack.c.l.b16 %v1111
      %v1149 = vunpack.c.l.b16 %v1112
      %v1150 = vunpack.c.l.b16 %v1113
      %v1151 = vunpack.c.l.b16 %v1114
      %v1152 = vunpack.c.l.b16 %v1115
      %v1153 = vunpack.c.l.b16 %v1116
      %v1154 = vunpack.c.l.b16 %v1117
      %v1155 = vunpack.c.l.b16 %v1118
      %v1156 = vunpack.c.l.b16 %v1119
      %v1157 = vpack.c.b16 %v1142, %v1141
      %v1158 = vpack.c.b16 %v1144, %v1143
      %v1159 = vpack.c.b16 %v1146, %v1145
      %v1160 = vpack.c.b16 %v1148, %v1147
      %v1161 = vpack.c.b16 %v1150, %v1149
      %v1162 = vpack.c.b16 %v1152, %v1151
      %v1163 = vpack.c.b16 %v1154, %v1153
      %v1164 = vpack.c.b16 %v1156, %v1155
      %1173 = vmatprep.subr.bf16.mxu0 0
      %1174 = vmatpush1.bf16.msra.mxu0 %v1164
      %1175 = vmatprep.subr.bf16.mxu0 0
      %1176 = vmatpush1.bf16.msra.mxu0 %v1163
      %1177 = vmatprep.subr.bf16.mxu0 0
      %1178 = vmatpush1.bf16.msra.mxu0 %v1162
      %1179 = vmatprep.subr.bf16.mxu0 0
      %1180 = vmatpush1.bf16.msra.mxu0 %v1161
      %1181 = vmatprep.subr.bf16.mxu0 0
      %1182 = vmatpush1.bf16.msra.mxu0 %v1160
      %1183 = vmatprep.subr.bf16.mxu0 0
      %1184 = vmatpush1.bf16.msra.mxu0 %v1159
      %1185 = vmatprep.subr.bf16.mxu0 0
      %1186 = vmatpush1.bf16.msra.mxu0 %v1158
      %1187 = vmatprep.subr.bf16.mxu0 0
      %1188 = vmatpush1.bf16.msra.mxu0 %v1157
      %1189 = vmatprep.subr.bf16.mxu0 0
      %1190 = vmatpush2.bf16.msra.mxu0 0
      %1191 = vmatprep.subr.bf16.mxu0 0
      %1192 = vmatpush2.bf16.msra.mxu0 0
      %1193 = vmatprep.subr.bf16.mxu0 0
      %1194 = vmatpush2.bf16.msra.mxu0 0
      %1195 = vmatprep.subr.bf16.mxu0 0
      %1196 = vmatpush2.bf16.msra.mxu0 0
      %1197 = vmatprep.subr.bf16.mxu0 0
      %1198 = vmatpush2.bf16.msra.mxu0 0
      %1199 = vmatprep.subr.bf16.mxu0 0
      %1200 = vmatpush2.bf16.msra.mxu0 0
      %1201 = vmatprep.subr.bf16.mxu0 0
      %1202 = vmatpush2.bf16.msra.mxu0 0
      %1203 = vmatprep.subr.bf16.mxu0 0
      %1204 = vmatpush2.bf16.msra.mxu0 0
      %1205 = vmatprep.mubr.bf16.mxu0 0
      %1206 = vmatmul.mubr.bf16.gmra.mxu0 %v1123
      %v1207 = vpop.f32.mrf.mxu0
      %v1208 = vadd.f32 0.0, %v1207
      %v1209 = vpop.f32.mrf.mxu0
      %v1210 = vpop.f32.mrf.mxu0
      %v1211 = vpop.f32.mrf.mxu0
      %1212 = vdwg.mxu0
      %v1213 = vadd.f32 %v1102, %v1208
      %v1214 = vmax.f32 %v1213, 0.0
      %v1215 = vpack.c.bf16 %v1214, %v1214
      %vm1216 = vcmask 257024
      %1217 = vst.msk [vmem:[%s188] sm:$0xf] %vm1216, %v1215
      %p1218 = scmp.lt.s32.totalorder %s18, 1
      %s1219 = scalar_select %p1218, %s18, 1
      %p1220 = scmp.lt.s32.totalorder %s19, 0
      %s1221 = scalar_select %p1220, %s19, 0
      %s1222 = sadd.s32 %s1221, %s1219
      %s1223 = smul.addr %s1222, 4
      %s1224 = scalar_lea.vmem %s3, %s1223
      // Predicated region
      $region33: #{conv_autoencoder_forward.9} parent=31 // pred_check
        %p1225 = pneg %p114
      $region34: #{conv_autoencoder_forward.9} parent=31 // pred_check_branch
        %1227 = sbr.rel (%p1225) target = $region36
      $region35: #{conv_autoencoder_forward.9} parent=31 // pred_region
        _
      $region36: #{conv_autoencoder_forward.9} parent=31 // pred_fallthru
        _
    $region32: #{conv_autoencoder_forward.9} parent=5 // pred_fallthru
      _
    %p1228 = scmp.le.s32.totalorder 2, %s9
    // Predicated region
    $region37: #{conv_autoencoder_forward.9} parent=5 // pred_check
      %p1229 = pneg %p1228
    $region38: #{conv_autoencoder_forward.9} parent=5 // pred_check_branch
      %1231 = sbr.rel (%p1229) target = $region40
    $region39: #{conv_autoencoder_forward.9} parent=5 // pred_region
      %s1232 = ssub.s32 %s9, 2
      // Predicated region
      $region41: #{conv_autoencoder_forward.9} parent=39 // pred_check
        %p1233 = pneg %p120
      $region42: #{conv_autoencoder_forward.9} parent=39 // pred_check_branch
        %1235 = sbr.rel (%p1233) target = $region44
      $region43: #{conv_autoencoder_forward.9} parent=39 // pred_region
        %p1236 = scmp.lt.s32.totalorder %s20, 1
        %s1237 = scalar_select %p1236, %s20, 1
        %p1238 = scmp.lt.s32.totalorder %s21, 0
        %s1239 = scalar_select %p1238, %s21, 0
        %s1240 = sadd.s32 %s1239, %s1237
        %s1241 = smul.addr %s1240, 4
        %s1242 = scalar_lea.vmem %s3, %s1241
      $region44: #{conv_autoencoder_forward.9} parent=39 // pred_fallthru
        _
    $region40: #{conv_autoencoder_forward.9} parent=5 // pred_fallthru
      _
  $region6: #{conv_autoencoder_forward.9} parent=0 // loop_footer
    %s13 = sadd.s32 1, %s9
  $region7: #{conv_autoencoder_forward.9} parent=0 // loop_footer_branch
    %8 = sbr.rel target = $region3
  $region8: #{conv_autoencoder_forward.9} parent=0 // loop_exit
    _

// kernel: tile.18
$region0: #{tile.18}
  #allocation0 [shape = 's32[1]{0}', space=sflag, size = 0x4, scoped, tag = 'scoped memory for tile.18']
  %s0 = inlined_call_operand.vmem [shape: f32[32], index: 0, kind: input, shape index: {}]
  %s1 = inlined_call_operand.vmem [shape: f32[4,32], index: 1, kind: output, shape index: {}]
  // Predicated region
  $region2: #{tile.18} parent=0 // pred_check
    _
  $region3: #{tile.18} parent=0 // pred_check_branch
    %3 = sbr.rel (0) target = $region5
  $region4: #{tile.18} parent=0 // pred_region
    _
  $region5: #{tile.18} parent=0 // pred_fallthru
    _
  %v4 = vld [vmem:[%s0] ss:$0 sm:$0xff]
  %5 = vst [vmem:[%s1] sm:$0xf] %v4

// kernel: tile.19
$region0: #{tile.19}
  %s0 = inlined_call_operand.vmem [shape: f32[4,32], index: 0, kind: input, shape index: {}]
  %s1 = inlined_call_operand.vmem [shape: f32[1,128], index: 1, kind: output, shape index: {}]
  $region1: #{tile.19} parent=0
    #allocation0 [shape = 'u8[4096]{0}', space=vmem, size = 0x1000, scoped, tag = 'scoped mem for output reshape']
    #allocation1 [shape = 'u8[4096]{0}', space=vmem, size = 0x1000, scoped, tag = 'scoped mem for input reshape']
    %s3 = sshll.u32 1, 4
    %s4 = ssub.s32 %s3, 1
    %v5 = vld [vmem:[%s0] sm:%s4]
    %6 = vst [vmem:[#allocation1] sm:%s4] %v5
    %v7 = vld [vmem:[#allocation1] sm:$0x1]
    %vm8 = vcmask 261120
    %9 = vst.msk [vmem:[#allocation0] sm:$0x1] %vm8, %v7
    %s10 = scalar_lea.vmem [#allocation1], 3
    %v11 = vld [vmem:[%s10] sm:$0x1]
    %12 = vrot.lane.b32.xlu0 %v11, 96
    %v13 = vpop.permute.xlu0 %12
    %vm14 = vcmask 1048320
    %15 = vst.msk [vmem:[#allocation0] sm:$0x1] %vm14, %v13
    %s16 = scalar_lea.vmem [#allocation1], 2
    %v17 = vld [vmem:[%s16] sm:$0x1]
    %18 = vrot.lane.b32.xlu0 %v17, 64
    %v19 = vpop.permute.xlu0 %18
    %vm20 = vcmask 785920
    %21 = vst.msk [vmem:[#allocation0] sm:$0x1] %vm20, %v19
    %s22 = scalar_lea.vmem [#allocation1], 1
    %v23 = vld [vmem:[%s22] sm:$0x1]
    %24 = vrot.lane.b32.xlu0 %v23, 32
    %v25 = vpop.permute.xlu0 %24
    %vm26 = vcmask 523520
    %27 = vst.msk [vmem:[#allocation0] sm:$0x1] %vm26, %v25
    %s29 = sshll.u32 1, 1
    %s30 = ssub.s32 %s29, 1
    %v32 = vld [vmem:[#allocation0] sm:%s30]
    %s33 = sshll.u32 1, 1
    %s34 = ssub.s32 %s33, 1
    %35 = vst [vmem:[%s1] sm:%s34] %v32

// kernel: conv_autoencoder_forward.10
$region0: #{conv_autoencoder_forward.10}
  #allocation0 [shape = 'u32[]', space=smem, size = 0x4, offset = 0x4, fixed_abs, tag = 'smem constant byte address 0x4 - core index']
  #allocation1 [shape = 'u32[144,128]{1,0:T(1,128)}', space=vmem, size = 0x12000, scoped, tag = 'internal scratch']
  #allocation2 [shape = 'bf16[8,288]{1,0:T(8,128)(2,1)}', space=vmem, size = 0x1800, scoped, tag = 'scratch operand']
  %s0 = inlined_call_operand.vmem [shape: bf16[2,20,32], index: 0, kind: input, shape index: {}]
  %s1 = inlined_call_operand.vmem [shape: bf16[288,128], index: 1, kind: input, shape index: {}]
  %s2 = inlined_call_operand.vmem [shape: f32[1,128], index: 2, kind: input, shape index: {}]
  %s3 = inlined_call_operand.vmem [shape: bf16[2,8,128], index: 3, kind: output, shape index: {}]
  %s4 = sld [smem:[#allocation0]]
  $region45: #{conv_autoencoder_forward.10} parent=0
    _
  %s6 = ssub.s32 1, %s4
  %s7 = scalar_select 0, %s6, %s4
  loop: start=0, step=1, limit=4
  $region2: #{conv_autoencoder_forward.10} parent=0 // loop_pre_header
    _
  $region3: #{conv_autoencoder_forward.10} parent=0 // loop_header
    %s9 = sphi 0, %s13
    %p10 = scmp.ge.s32.totalorder %s9, 4
    %s16 = sphi 0, %s28
    %s17 = sphi 0, %s24
    %s18 = sphi 0, %s16
    %s19 = sphi 0, %s17
    %s20 = sphi 0, %s18
    %s21 = sphi 0, %s19
    %s31 = sphi 0, %s33
    %s34 = sphi 0, %s31
    %s35 = sphi 0, %s34
    %s51 = sphi 0, %s35
    %s55 = sphi 0, %s55
    %s57 = sphi 0, %s55
    %s58 = sphi 0, %s57
    %s72 = sphi 0, %s58
    %s76 = sphi 0, %s76
    %s78 = sphi 0, %s76
    %s79 = sphi 0, %s78
    %s93 = sphi 0, %s79
    %s101 = sphi 0, %s103
    %s104 = sphi 0, %s101
    %s105 = sphi 0, %s104
    %s121 = sphi 0, %s105
  $region4: #{conv_autoencoder_forward.10} parent=0 // loop_header_branch
    %12 = sbr.rel (%p10) target = $region8
  $region5: #{conv_autoencoder_forward.10} parent=0 // loop_body
    %s14 = ssub.s32 %s9, 1
    %s15 = ssub.s32 %s9, 2
    %s22 = sadd.s32 1, %s17
    %p23 = scmp.ge.s32.totalorder %s22, 1
    %s24 = scalar_select %p23, 0, %s22
    %s25 = sadd.s32 1, %s16
    %s26 = scalar_select %p23, %s25, %s16
    %p27 = scmp.ge.s32.totalorder %s26, 2
    %s28 = scalar_select %p27, 0, %s26
    %s29 = ssub.s32 %s16, %s28
    %p30 = scmp.eq.s32.totalorder %s29, 0
    %s32 = sadd.s32 %s31, 1
    %s33 = scalar_select %p30, %s31, %s32
    %p36 = pneg %p30
    %p37 = scmp.eq.s32.totalorder %s9, 1
    %p38 = por %p36, %p37
    %p39 = scmp.ne.s32.totalorder %s31, %s34
    %p40 = scmp.eq.s32.totalorder %s9, 0
    %p41 = por %p39, %p40
    %p42 = scmp.ne.s32.totalorder %s31, %s34
    %p43 = scmp.eq.s32.totalorder %s14, 1
    %p44 = por %p42, %p43
    %p45 = scmp.ne.s32.totalorder %s34, %s35
    %p46 = scmp.eq.s32.totalorder %s14, 0
    %p47 = por %p45, %p46
    %p48 = scmp.ne.s32.totalorder %s34, %s35
    %p49 = scmp.eq.s32.totalorder %s15, 1
    %p50 = por %p48, %p49
    %p52 = scmp.ne.s32.totalorder %s35, %s51
    %p53 = scmp.eq.s32.totalorder %s15, 0
    %p54 = por %p52, %p53
    %s56 = sadd.s32 %s55, 1
    %p59 = scmp.eq.s32.totalorder %s9, 1
    %p60 = scmp.ne.s32.totalorder %s55, %s57
    %p61 = scmp.eq.s32.totalorder %s9, 0
    %p62 = por %p60, %p61
    %p63 = scmp.ne.s32.totalorder %s55, %s57
    %p64 = scmp.eq.s32.totalorder %s14, 1
    %p65 = por %p63, %p64
    %p66 = scmp.ne.s32.totalorder %s57, %s58
    %p67 = scmp.eq.s32.totalorder %s14, 0
    %p68 = por %p66, %p67
    %p69 = scmp.ne.s32.totalorder %s57, %s58
    %p70 = scmp.eq.s32.totalorder %s15, 1
    %p71 = por %p69, %p70
    %p73 = scmp.ne.s32.totalorder %s58, %s72
    %p74 = scmp.eq.s32.totalorder %s15, 0
    %p75 = por %p73, %p74
    %s77 = sadd.s32 %s76, 1
    %p80 = scmp.eq.s32.totalorder %s9, 1
    %p81 = scmp.ne.s32.totalorder %s76, %s78
    %p82 = scmp.eq.s32.totalorder %s9, 0
    %p83 = por %p81, %p82
    %p84 = scmp.ne.s32.totalorder %s76, %s78
    %p85 = scmp.eq.s32.totalorder %s14, 1
    %p86 = por %p84, %p85
    %p87 = scmp.ne.s32.totalorder %s78, %s79
    %p88 = scmp.eq.s32.totalorder %s14, 0
    %p89 = por %p87, %p88
    %p90 = scmp.ne.s32.totalorder %s78, %s79
    %p91 = scmp.eq.s32.totalorder %s15, 1
    %p92 = por %p90, %p91
    %p94 = scmp.ne.s32.totalorder %s79, %s93
    %p95 = scmp.eq.s32.totalorder %s15, 0
    %p96 = por %p94, %p95
    %s97 = ssub.s32 %s16, %s28
    %s98 = ssub.s32 %s17, %s24
    %s99 = sor.u32 %s97, %s98
    %p100 = scmp.eq.s32.totalorder %s99, 0
    %s102 = sadd.s32 %s101, 1
    %s103 = scalar_select %p100, %s101, %s102
    %p106 = pneg %p100
    %p107 = scmp.eq.s32.totalorder %s9, 1
    %p108 = por %p106, %p107
    %p109 = scmp.ne.s32.totalorder %s101, %s104
    %p110 = scmp.eq.s32.totalorder %s9, 0
    %p111 = por %p109, %p110
    %p112 = scmp.ne.s32.totalorder %s101, %s104
    %p113 = scmp.eq.s32.totalorder %s14, 1
    %p114 = por %p112, %p113
    %p115 = scmp.ne.s32.totalorder %s104, %s105
    %p116 = scmp.eq.s32.totalorder %s14, 0
    %p117 = por %p115, %p116
    %p118 = scmp.ne.s32.totalorder %s104, %s105
    %p119 = scmp.eq.s32.totalorder %s15, 1
    %p120 = por %p118, %p119
    %p122 = scmp.ne.s32.totalorder %s105, %s121
    %p123 = scmp.eq.s32.totalorder %s15, 0
    %p124 = por %p122, %p123
    %p125 = scmp.le.s32.totalorder 1, %s9
    %p126 = scmp.lt.s32.totalorder %s9, 3
    %p127 = pnand %p125, %p126
    %p128 = pneg %p127
    // Predicated region
    $region9: #{conv_autoencoder_forward.10} parent=5 // pred_check
      _
    $region10: #{conv_autoencoder_forward.10} parent=5 // pred_check_branch
      %130 = sbr.rel (%p127) target = $region12
    $region11: #{conv_autoencoder_forward.10} parent=5 // pred_region
      %s131 = ssub.s32 %s9, 1
      // Predicated region
      $region13: #{conv_autoencoder_forward.10} parent=11 // pred_check
        %p132 = pneg %p68
      $region14: #{conv_autoencoder_forward.10} parent=11 // pred_check_branch
        %134 = sbr.rel (%p132) target = $region16
      $region15: #{conv_autoencoder_forward.10} parent=11 // pred_region
        _
      $region16: #{conv_autoencoder_forward.10} parent=11 // pred_fallthru
        _
      // Predicated region
      $region17: #{conv_autoencoder_forward.10} parent=11 // pred_check
        %p135 = pneg %p89
      $region18: #{conv_autoencoder_forward.10} parent=11 // pred_check_branch
        %137 = sbr.rel (%p135) target = $region20
      $region19: #{conv_autoencoder_forward.10} parent=11 // pred_region
        _
      $region20: #{conv_autoencoder_forward.10} parent=11 // pred_fallthru
        _
    $region12: #{conv_autoencoder_forward.10} parent=5 // pred_fallthru
      _
    %p138 = scmp.lt.s32.totalorder %s9, 2
    // Predicated region
    $region21: #{conv_autoencoder_forward.10} parent=5 // pred_check
      %p139 = pneg %p138
    $region22: #{conv_autoencoder_forward.10} parent=5 // pred_check_branch
      %141 = sbr.rel (%p139) target = $region24
    $region23: #{conv_autoencoder_forward.10} parent=5 // pred_region
      // Predicated region
      $region25: #{conv_autoencoder_forward.10} parent=23 // pred_check
        %p142 = pneg %p41
      $region26: #{conv_autoencoder_forward.10} parent=23 // pred_check_branch
        %144 = sbr.rel (%p142) target = $region28
      $region27: #{conv_autoencoder_forward.10} parent=23 // pred_region
        %p145 = scmp.lt.s32.totalorder %s16, 1
        %s146 = scalar_select %p145, %s16, 1
        %s147 = smul.addr %s146, 3
        %s148 = smul.addr %s147, 4
        %s149 = scalar_lea.vmem %s0, %s148
      $region28: #{conv_autoencoder_forward.10} parent=23 // pred_fallthru
        _
    $region24: #{conv_autoencoder_forward.10} parent=5 // pred_fallthru
      _
    %p150 = scmp.le.s32.totalorder 1, %s9
    %p151 = scmp.lt.s32.totalorder %s9, 3
    %p152 = pnand %p150, %p151
    %p153 = pneg %p152
    // Predicated region
    $region29: #{conv_autoencoder_forward.10} parent=5 // pred_check
      _
    $region30: #{conv_autoencoder_forward.10} parent=5 // pred_check_branch
      %155 = sbr.rel (%p152) target = $region32
    $region31: #{conv_autoencoder_forward.10} parent=5 // pred_region
      %s156 = ssub.s32 %s9, 1
      %p157 = scmp.lt.s32.totalorder %s18, 1
      %s158 = scalar_select %p157, %s18, 1
      %s159 = smul.addr %s158, 3
      %s160 = smul.addr %s159, 4
      %s161 = scalar_lea.vmem %s0, %s160
      %p162 = pneg %p47
      %p163 = pneg %p44
      %p164 = pneg %p68
      %p165 = pneg %p65
      %p166 = pneg %p89
      %p167 = pneg %p86
      %p168 = pneg %p117
      %p169 = pneg %p114
      %p170 = scmp.lt.s32.totalorder %s18, 1
      %s171 = scalar_select %p170, %s18, 1
      %p172 = scmp.lt.s32.totalorder %s19, 0
      %s173 = scalar_select %p172, %s19, 0
      %s174 = sadd.s32 %s173, %s171
      %s175 = smul.addr %s174, 4
      %s176 = scalar_lea.vmem %s3, %s175
      %p177 = scmp.lt.s32.totalorder %s18, 1
      %s178 = scalar_select %p177, %s18, 1
      %s179 = smul.addr %s178, 3
      %s180 = smul.addr %s179, 4
      %s181 = scalar_lea.vmem %s0, %s180
      %p182 = scmp.lt.s32.totalorder %s18, 1
      %s183 = scalar_select %p182, %s18, 1
      %p184 = scmp.lt.s32.totalorder %s19, 0
      %s185 = scalar_select %p184, %s19, 0
      %s186 = sadd.s32 %s185, %s183
      %s187 = smul.addr %s186, 4
      %s188 = scalar_lea.vmem %s3, %s187
      %v190 = vld [vmem:[%s2] sm:$0x1]
      %v192 = vlaneseq
      %v193 = vshrl.u32 %v192, 7
      %v194 = vsub.s32 0, %v193
      %v195 = vrot.slane %v190, %v194
      %v197 = vld [vmem:[%s181] sm:$0xf]
      %vm198 = vcmask 257024
      %199 = vst.msk [vmem:[#allocation2] sm:$0xf] %vm198, %v197
      %v200 = vld [vmem:[%s181] sm:$0xf]
      %v201 = vld [vmem:[%s181 + $0x4] sm:$0x1]
      %vm202 = vsmask.f32 3328
      %vm203 = vsmask.f32 7440
      %vm204 = vmor %vm202, %vm203
      %v206 = vshrl.u32 %v200, 16
      %v208 = vrot.slane %v206, 4
      %v209 = vshll.u32 %v200, 16
      %v211 = vrot.slane %v209, 5
      %v212 = vor.u32 %v208, %v211
      %v213 = vrot.slane %v212, 4
      %v215 = vshll.u32 %v201, 16
      %v217 = vrot.slane %v215, 5
      %v218 = vsel %vm204, %v213, %v217
      %219 = vrot.lane.b32.xlu0 %v218, 32
      %v220 = vpop.permute.xlu0 %219
      %vm222 = vcmask 519424
      %223 = vst.msk [vmem:[#allocation2] sm:$0xf] %vm222, %v220
      %v224 = vld [vmem:[%s181] sm:$0xe]
      %v225 = vld [vmem:[%s181 + $0x4] sm:$0x1]
      %vm228 = vcmask 1042432
      %vm229 = vcmask 1046532
      %vm230 = vmor %vm228, %vm229
      %v231 = vrot.slane %v224, 5
      %v232 = vrot.slane %v231, 4
      %v233 = vrot.slane %v225, 5
      %v234 = vsel %vm230, %v232, %v233
      %235 = vrot.lane.b32.xlu0 %v234, 64
      %v236 = vpop.permute.xlu0 %235
      %vm238 = vcmask 781824
      %239 = vst.msk [vmem:[#allocation2] sm:$0xf] %vm238, %v236
      %v240 = vld [vmem:[%s181] sm:$0xc]
      %v241 = vld [vmem:[%s181 + $0x4] sm:$0x3]
      %vm244 = vcmask 1041408
      %vm245 = vcmask 1045508
      %vm246 = vmor %vm244, %vm245
      %v247 = vrot.slane %v240, 6
      %v248 = vrot.slane %v247, 4
      %v249 = vrot.slane %v241, 6
      %v250 = vsel %vm246, %v248, %v249
      %251 = vrot.lane.b32.xlu0 %v250, 96
      %v252 = vpop.permute.xlu0 %251
      %vm254 = vcmask 1044224
      %255 = vst.msk [vmem:[#allocation2] sm:$0xf] %vm254, %v252
      %v256 = vld [vmem:[%s181] sm:$0xc]
      %v257 = vld [vmem:[%s181 + $0x4] sm:$0x7]
      %vm258 = vsmask.f32 1280
      %vm259 = vsmask.f32 5392
      %vm260 = vmor %vm258, %vm259
      %v262 = vshrl.u32 %v256, 16
      %v264 = vrot.slane %v262, 6
      %v265 = vshll.u32 %v256, 16
      %v267 = vrot.slane %v265, 7
      %v268 = vor.u32 %v264, %v267
      %v269 = vrot.slane %v268, 4
      %v271 = vshrl.u32 %v257, 16
      %v273 = vrot.slane %v271, 6
      %v274 = vshll.u32 %v257, 16
      %v276 = vrot.slane %v274, 7
      %v277 = vor.u32 %v273, %v276
      %v278 = vsel %vm260, %v269, %v277
      %280 = vst.msk [vmem:[#allocation2 + $0x4] sm:$0xf] %vm198, %v278
      %v281 = vld [vmem:[%s181] sm:$0x8]
      %v282 = vld [vmem:[%s181 + $0x4] sm:$0x7]
      %vm285 = vcmask 1040384
      %vm286 = vcmask 1044484
      %vm287 = vmor %vm285, %vm286
      %v288 = vrot.slane %v281, 7
      %v289 = vrot.slane %v288, 4
      %v290 = vrot.slane %v282, 7
      %v291 = vsel %vm287, %v289, %v290
      %292 = vrot.lane.b32.xlu0 %v291, 32
      %v293 = vpop.permute.xlu0 %292
      %295 = vst.msk [vmem:[#allocation2 + $0x4] sm:$0xf] %vm222, %v293
      %v296 = vld [vmem:[%s181 + $0x4] sm:$0xf]
      %298 = vrot.lane.b32.xlu0 %v296, 64
      %v299 = vpop.permute.xlu0 %298
      %301 = vst.msk [vmem:[#allocation2 + $0x4] sm:$0xf] %vm238, %v299
      %v302 = vld [vmem:[%s181 + $0x4] sm:$0xf]
      %v303 = vld [vmem:[%s181 + $0x8] sm:$0x1]
      %v305 = vshrl.u32 %v302, 16
      %v307 = vrot.slane %v305, 4
      %v308 = vshll.u32 %v302, 16
      %v310 = vrot.slane %v308, 5
      %v311 = vor.u32 %v307, %v310
      %v312 = vrot.slane %v311, 4
      %v314 = vshll.u32 %v303, 16
      %v316 = vrot.slane %v314, 5
      %v317 = vsel %vm204, %v312, %v316
      %318 = vrot.lane.b32.xlu0 %v317, 96
      %v319 = vpop.permute.xlu0 %318
      %321 = vst.msk [vmem:[#allocation2 + $0x4] sm:$0xf] %vm254, %v319
      %v322 = vld [vmem:[%s181 + $0x4] sm:$0xe]
      %v323 = vld [vmem:[%s181 + $0x8] sm:$0x1]
      %v326 = vrot.slane %v322, 5
      %v327 = vrot.slane %v326, 4
      %v328 = vrot.slane %v323, 5
      %v329 = vsel %vm230, %v327, %v328
      %331 = vst.msk [vmem:[#allocation2 + $0x8] sm:$0xf] %vm198, %v329
      %v332 = vld [vmem:[#allocation2] sm:$0xff]
      %v333 = vld [vmem:[#allocation2 + $0x8] sm:$0xf]
      %v334 = vld [vmem:[%s1] sm:$0xf]
      %v335 = vld [vmem:[%s1 + $0x4] sm:$0xf]
      %v336 = vld [vmem:[%s1 + $0x8] sm:$0xf]
      %v337 = vld [vmem:[%s1 + $0xc] sm:$0xf]
      %v338 = vld [vmem:[%s1 + $0x10] sm:$0xf]
      %v339 = vld [vmem:[%s1 + $0x14] sm:$0xf]
      %v340 = vld [vmem:[%s1 + $0x18] sm:$0xf]
      %v341 = vld [vmem:[%s1 + $0x1c] sm:$0xf]
      %v342 = vld [vmem:[%s1 + $0x20] sm:$0xf]
      %v343 = vld [vmem:[%s1 + $0x24] sm:$0xf]
      %v344 = vld [vmem:[%s1 + $0x28] sm:$0xf]
      %v345 = vld [vmem:[%s1 + $0x2c] sm:$0xf]
      %v346 = vld [vmem:[%s1 + $0x30] sm:$0xf]
      %v347 = vld [vmem:[%s1 + $0x34] sm:$0xf]
      %v348 = vld [vmem:[%s1 + $0x38] sm:$0xf]
      %v349 = vld [vmem:[%s1 + $0x3c] sm:$0xf]
      %v350 = vld [vmem:[%s1 + $0x40] sm:$0xf]
      %v351 = vld [vmem:[%s1 + $0x44] sm:$0xf]
      %v352 = vld [vmem:[%s1 + $0x48] sm:$0xf]
      %v353 = vld [vmem:[%s1 + $0x4c] sm:$0xf]
      %v354 = vld [vmem:[%s1 + $0x50] sm:$0xf]
      %v355 = vld [vmem:[%s1 + $0x54] sm:$0xf]
      %v356 = vld [vmem:[%s1 + $0x58] sm:$0xf]
      %v357 = vld [vmem:[%s1 + $0x5c] sm:$0xf]
      %v358 = vld [vmem:[%s1 + $0x60] sm:$0xf]
      %v359 = vld [vmem:[%s1 + $0x64] sm:$0xf]
      %v360 = vld [vmem:[%s1 + $0x68] sm:$0xf]
      %v361 = vld [vmem:[%s1 + $0x6c] sm:$0xf]
      %v362 = vld [vmem:[%s1 + $0x70] sm:$0xf]
      %v363 = vld [vmem:[%s1 + $0x74] sm:$0xf]
      %v364 = vld [vmem:[%s1 + $0x78] sm:$0xf]
      %v365 = vld [vmem:[%s1 + $0x7c] sm:$0xf]
      %v366 = vld [vmem:[%s1 + $0x80] sm:$0xf]
      %v367 = vld [vmem:[%s1 + $0x84] sm:$0xf]
      %v368 = vld [vmem:[%s1 + $0x88] sm:$0xf]
      %v369 = vld [vmem:[%s1 + $0x8c] sm:$0xf]
      %v372 = vunpack.c.l.b16 %v332
      %v373 = vunpack.c.h.b16 %v332
      %v374 = vunpack.c.l.b16 %v333
      %v375 = vpack.c.b16 %v372, %v372
      %v376 = vpack.c.b16 %v373, %v373
      %v377 = vpack.c.b16 %v374, %v374
      %v416 = vunpack.c.l.b16 %v334
      %v417 = vunpack.c.l.b16 %v335
      %v418 = vunpack.c.l.b16 %v336
      %v419 = vunpack.c.l.b16 %v337
      %v420 = vunpack.c.l.b16 %v338
      %v421 = vunpack.c.l.b16 %v339
      %v422 = vunpack.c.l.b16 %v340
      %v423 = vunpack.c.l.b16 %v341
      %v424 = vunpack.c.l.b16 %v342
      %v425 = vunpack.c.l.b16 %v343
      %v426 = vunpack.c.l.b16 %v344
      %v427 = vunpack.c.l.b16 %v345
      %v428 = vunpack.c.l.b16 %v346
      %v429 = vunpack.c.l.b16 %v347
      %v430 = vunpack.c.l.b16 %v348
      %v431 = vunpack.c.l.b16 %v349
      %v432 = vunpack.c.l.b16 %v350
      %v433 = vunpack.c.l.b16 %v351
      %v434 = vunpack.c.l.b16 %v352
      %v435 = vunpack.c.l.b16 %v353
      %v436 = vunpack.c.l.b16 %v354
      %v437 = vunpack.c.l.b16 %v355
      %v438 = vunpack.c.l.b16 %v356
      %v439 = vunpack.c.l.b16 %v357
      %v440 = vunpack.c.l.b16 %v358
      %v441 = vunpack.c.l.b16 %v359
      %v442 = vunpack.c.l.b16 %v360
      %v443 = vunpack.c.l.b16 %v361
      %v444 = vunpack.c.l.b16 %v362
      %v445 = vunpack.c.l.b16 %v363
      %v446 = vunpack.c.l.b16 %v364
      %v447 = vunpack.c.l.b16 %v365
      %v448 = vunpack.c.l.b16 %v366
      %v449 = vunpack.c.l.b16 %v367
      %v450 = vunpack.c.l.b16 %v368
      %v451 = vunpack.c.l.b16 %v369
      %v452 = vpack.c.b16 %v417, %v416
      %v453 = vpack.c.b16 %v419, %v418
      %v454 = vpack.c.b16 %v421, %v420
      %v455 = vpack.c.b16 %v423, %v422
      %v456 = vpack.c.b16 %v425, %v424
      %v457 = vpack.c.b16 %v427, %v426
      %v458 = vpack.c.b16 %v429, %v428
      %v459 = vpack.c.b16 %v431, %v430
      %v460 = vpack.c.b16 %v433, %v432
      %v461 = vpack.c.b16 %v435, %v434
      %v462 = vpack.c.b16 %v437, %v436
      %v463 = vpack.c.b16 %v439, %v438
      %v464 = vpack.c.b16 %v441, %v440
      %v465 = vpack.c.b16 %v443, %v442
      %v466 = vpack.c.b16 %v445, %v444
      %v467 = vpack.c.b16 %v447, %v446
      %v468 = vpack.c.b16 %v449, %v448
      %v469 = vpack.c.b16 %v451, %v450
      %vm488 = vcmask 261120
      %v490 = vsel %vm488, %v377, 0
      %492 = vmatprep.subr.bf16.mxu0 0
      %493 = vmatpush1.bf16.msra.mxu0 %v459
      %494 = vmatprep.subr.bf16.mxu0 0
      %495 = vmatpush1.bf16.msra.mxu0 %v458
      %496 = vmatprep.subr.bf16.mxu0 0
      %497 = vmatpush1.bf16.msra.mxu0 %v457
      %498 = vmatprep.subr.bf16.mxu0 0
      %499 = vmatpush1.bf16.msra.mxu0 %v456
      %500 = vmatprep.subr.bf16.mxu0 0
      %501 = vmatpush1.bf16.msra.mxu0 %v455
      %502 = vmatprep.subr.bf16.mxu0 0
      %503 = vmatpush1.bf16.msra.mxu0 %v454
      %504 = vmatprep.subr.bf16.mxu0 0
      %505 = vmatpush1.bf16.msra.mxu0 %v453
      %506 = vmatprep.subr.bf16.mxu0 0
      %507 = vmatpush1.bf16.msra.mxu0 %v452
      %508 = vmatprep.subr.bf16.mxu0 0
      %509 = vmatpush2.bf16.msra.mxu0 %v467
      %510 = vmatprep.subr.bf16.mxu0 0
      %511 = vmatpush2.bf16.msra.mxu0 %v466
      %512 = vmatprep.subr.bf16.mxu0 0
      %513 = vmatpush2.bf16.msra.mxu0 %v465
      %514 = vmatprep.subr.bf16.mxu0 0
      %515 = vmatpush2.bf16.msra.mxu0 %v464
      %516 = vmatprep.subr.bf16.mxu0 0
      %517 = vmatpush2.bf16.msra.mxu0 %v463
      %518 = vmatprep.subr.bf16.mxu0 0
      %519 = vmatpush2.bf16.msra.mxu0 %v462
      %520 = vmatprep.subr.bf16.mxu0 0
      %521 = vmatpush2.bf16.msra.mxu0 %v461
      %522 = vmatprep.subr.bf16.mxu0 0
      %523 = vmatpush2.bf16.msra.mxu0 %v460
      %524 = vmatprep.mubr.bf16.mxu0 %v376
      %525 = vmatmul.mubr.bf16.gmra.mxu0 %v375
      %v526 = vpop.f32.mrf.mxu0
      %v527 = vadd.f32 0.0, %v526
      %v528 = vpop.f32.mrf.mxu0
      %v529 = vpop.f32.mrf.mxu0
      %v530 = vpop.f32.mrf.mxu0
      %531 = vdwg.mxu0
      %532 = vmatprep.subr.bf16.mxu0 0
      %533 = vmatpush1.bf16.msra.mxu0 0
      %534 = vmatprep.subr.bf16.mxu0 0
      %535 = vmatpush1.bf16.msra.mxu0 0
      %536 = vmatprep.subr.bf16.mxu0 0
      %537 = vmatpush1.bf16.msra.mxu0 0
      %538 = vmatprep.subr.bf16.mxu0 0
      %539 = vmatpush1.bf16.msra.mxu0 0
      %540 = vmatprep.subr.bf16.mxu0 0
      %541 = vmatpush1.bf16.msra.mxu0 0
      %542 = vmatprep.subr.bf16.mxu0 0
      %543 = vmatpush1.bf16.msra.mxu0 0
      %544 = vmatprep.subr.bf16.mxu0 0
      %545 = vmatpush1.bf16.msra.mxu0 %v469
      %546 = vmatprep.subr.bf16.mxu0 0
      %547 = vmatpush1.bf16.msra.mxu0 %v468
      %548 = vmatprep.subr.bf16.mxu0 0
      %549 = vmatpush2.bf16.msra.mxu0 0
      %550 = vmatprep.subr.bf16.mxu0 0
      %551 = vmatpush2.bf16.msra.mxu0 0
      %552 = vmatprep.subr.bf16.mxu0 0
      %553 = vmatpush2.bf16.msra.mxu0 0
      %554 = vmatprep.subr.bf16.mxu0 0
      %555 = vmatpush2.bf16.msra.mxu0 0
      %556 = vmatprep.subr.bf16.mxu0 0
      %557 = vmatpush2.bf16.msra.mxu0 0
      %558 = vmatprep.subr.bf16.mxu0 0
      %559 = vmatpush2.bf16.msra.mxu0 0
      %560 = vmatprep.subr.bf16.mxu0 0
      %561 = vmatpush2.bf16.msra.mxu0 0
      %562 = vmatprep.subr.bf16.mxu0 0
      %563 = vmatpush2.bf16.msra.mxu0 0
      %564 = vmatprep.mubr.bf16.mxu0 0
      %565 = vmatmul.mubr.bf16.gmra.mxu0 %v490
      %v566 = vpop.f32.mrf.mxu0
      %v567 = vadd.f32 %v527, %v566
      %v568 = vpop.f32.mrf.mxu0
      %v569 = vpop.f32.mrf.mxu0
      %v570 = vpop.f32.mrf.mxu0
      %571 = vdwg.mxu0
      %v572 = vadd.f32 %v195, %v567
      %v573 = vmax.f32 %v572, 0.0
      %v574 = vpack.c.bf16 %v573, %v573
      %575 = vst [vmem:[%s188] sm:$0xf] %v574
      %p576 = scmp.lt.s32.totalorder %s18, 1
      %s577 = scalar_select %p576, %s18, 1
      %p578 = scmp.lt.s32.totalorder %s19, 0
      %s579 = scalar_select %p578, %s19, 0
      %s580 = sadd.s32 %s579, %s577
      %s581 = smul.addr %s580, 4
      %s582 = scalar_lea.vmem %s3, %s581
      // Predicated region
      $region33: #{conv_autoencoder_forward.10} parent=31 // pred_check
        %p583 = pneg %p114
      $region34: #{conv_autoencoder_forward.10} parent=31 // pred_check_branch
        %585 = sbr.rel (%p583) target = $region36
      $region35: #{conv_autoencoder_forward.10} parent=31 // pred_region
        _
      $region36: #{conv_autoencoder_forward.10} parent=31 // pred_fallthru
        _
    $region32: #{conv_autoencoder_forward.10} parent=5 // pred_fallthru
      _
    %p586 = scmp.le.s32.totalorder 2, %s9
    // Predicated region
    $region37: #{conv_autoencoder_forward.10} parent=5 // pred_check
      %p587 = pneg %p586
    $region38: #{conv_autoencoder_forward.10} parent=5 // pred_check_branch
      %589 = sbr.rel (%p587) target = $region40
    $region39: #{conv_autoencoder_forward.10} parent=5 // pred_region
      %s590 = ssub.s32 %s9, 2
      // Predicated region
      $region41: #{conv_autoencoder_forward.10} parent=39 // pred_check
        %p591 = pneg %p120
      $region42: #{conv_autoencoder_forward.10} parent=39 // pred_check_branch
        %593 = sbr.rel (%p591) target = $region44
      $region43: #{conv_autoencoder_forward.10} parent=39 // pred_region
        %p594 = scmp.lt.s32.totalorder %s20, 1
        %s595 = scalar_select %p594, %s20, 1
        %p596 = scmp.lt.s32.totalorder %s21, 0
        %s597 = scalar_select %p596, %s21, 0
        %s598 = sadd.s32 %s597, %s595
        %s599 = smul.addr %s598, 4
        %s600 = scalar_lea.vmem %s3, %s599
      $region44: #{conv_autoencoder_forward.10} parent=39 // pred_fallthru
        _
    $region40: #{conv_autoencoder_forward.10} parent=5 // pred_fallthru
      _
  $region6: #{conv_autoencoder_forward.10} parent=0 // loop_footer
    %s13 = sadd.s32 1, %s9
  $region7: #{conv_autoencoder_forward.10} parent=0 // loop_footer_branch
    %8 = sbr.rel target = $region3
  $region8: #{conv_autoencoder_forward.10} parent=0 // loop_exit
    _

// kernel: conv_autoencoder_forward.11
$region0: #{conv_autoencoder_forward.11}
  #allocation0 [shape = 'u32[]', space=smem, size = 0x4, offset = 0x4, fixed_abs, tag = 'smem constant byte address 0x4 - core index']
  #allocation1 [shape = 'u32[144,128]{1,0:T(1,128)}', space=vmem, size = 0x12000, scoped, tag = 'internal scratch']
  #allocation2 [shape = 'bf16[24,288]{1,0:T(8,128)(2,1)}', space=vmem, size = 0x4800, scoped, tag = 'scratch operand']
  %s0 = inlined_call_operand.vmem [shape: bf16[2,42,32], index: 0, kind: input, shape index: {}]
  %s1 = inlined_call_operand.vmem [shape: bf16[288,128], index: 1, kind: input, shape index: {}]
  %s2 = inlined_call_operand.vmem [shape: f32[1,128], index: 2, kind: input, shape index: {}]
  %s3 = inlined_call_operand.vmem [shape: bf16[2,24,128], index: 3, kind: output, shape index: {}]
  %s4 = sld [smem:[#allocation0]]
  $region45: #{conv_autoencoder_forward.11} parent=0
    _
  %s6 = ssub.s32 1, %s4
  %s7 = scalar_select 0, %s6, %s4
  loop: start=0, step=1, limit=4
  $region2: #{conv_autoencoder_forward.11} parent=0 // loop_pre_header
    _
  $region3: #{conv_autoencoder_forward.11} parent=0 // loop_header
    %s9 = sphi 0, %s13
    %p10 = scmp.ge.s32.totalorder %s9, 4
    %s16 = sphi 0, %s28
    %s17 = sphi 0, %s24
    %s18 = sphi 0, %s16
    %s19 = sphi 0, %s17
    %s20 = sphi 0, %s18
    %s21 = sphi 0, %s19
    %s31 = sphi 0, %s33
    %s34 = sphi 0, %s31
    %s35 = sphi 0, %s34
    %s51 = sphi 0, %s35
    %s55 = sphi 0, %s55
    %s57 = sphi 0, %s55
    %s58 = sphi 0, %s57
    %s72 = sphi 0, %s58
    %s76 = sphi 0, %s76
    %s78 = sphi 0, %s76
    %s79 = sphi 0, %s78
    %s93 = sphi 0, %s79
    %s101 = sphi 0, %s103
    %s104 = sphi 0, %s101
    %s105 = sphi 0, %s104
    %s121 = sphi 0, %s105
  $region4: #{conv_autoencoder_forward.11} parent=0 // loop_header_branch
    %12 = sbr.rel (%p10) target = $region8
  $region5: #{conv_autoencoder_forward.11} parent=0 // loop_body
    %s14 = ssub.s32 %s9, 1
    %s15 = ssub.s32 %s9, 2
    %s22 = sadd.s32 1, %s17
    %p23 = scmp.ge.s32.totalorder %s22, 1
    %s24 = scalar_select %p23, 0, %s22
    %s25 = sadd.s32 1, %s16
    %s26 = scalar_select %p23, %s25, %s16
    %p27 = scmp.ge.s32.totalorder %s26, 2
    %s28 = scalar_select %p27, 0, %s26
    %s29 = ssub.s32 %s16, %s28
    %p30 = scmp.eq.s32.totalorder %s29, 0
    %s32 = sadd.s32 %s31, 1
    %s33 = scalar_select %p30, %s31, %s32
    %p36 = pneg %p30
    %p37 = scmp.eq.s32.totalorder %s9, 1
    %p38 = por %p36, %p37
    %p39 = scmp.ne.s32.totalorder %s31, %s34
    %p40 = scmp.eq.s32.totalorder %s9, 0
    %p41 = por %p39, %p40
    %p42 = scmp.ne.s32.totalorder %s31, %s34
    %p43 = scmp.eq.s32.totalorder %s14, 1
    %p44 = por %p42, %p43
    %p45 = scmp.ne.s32.totalorder %s34, %s35
    %p46 = scmp.eq.s32.totalorder %s14, 0
    %p47 = por %p45, %p46
    %p48 = scmp.ne.s32.totalorder %s34, %s35
    %p49 = scmp.eq.s32.totalorder %s15, 1
    %p50 = por %p48, %p49
    %p52 = scmp.ne.s32.totalorder %s35, %s51
    %p53 = scmp.eq.s32.totalorder %s15, 0
    %p54 = por %p52, %p53
    %s56 = sadd.s32 %s55, 1
    %p59 = scmp.eq.s32.totalorder %s9, 1
    %p60 = scmp.ne.s32.totalorder %s55, %s57
    %p61 = scmp.eq.s32.totalorder %s9, 0
    %p62 = por %p60, %p61
    %p63 = scmp.ne.s32.totalorder %s55, %s57
    %p64 = scmp.eq.s32.totalorder %s14, 1
    %p65 = por %p63, %p64
    %p66 = scmp.ne.s32.totalorder %s57, %s58
    %p67 = scmp.eq.s32.totalorder %s14, 0
    %p68 = por %p66, %p67
    %p69 = scmp.ne.s32.totalorder %s57, %s58
    %p70 = scmp.eq.s32.totalorder %s15, 1
    %p71 = por %p69, %p70
    %p73 = scmp.ne.s32.totalorder %s58, %s72
    %p74 = scmp.eq.s32.totalorder %s15, 0
    %p75 = por %p73, %p74
    %s77 = sadd.s32 %s76, 1
    %p80 = scmp.eq.s32.totalorder %s9, 1
    %p81 = scmp.ne.s32.totalorder %s76, %s78
    %p82 = scmp.eq.s32.totalorder %s9, 0
    %p83 = por %p81, %p82
    %p84 = scmp.ne.s32.totalorder %s76, %s78
    %p85 = scmp.eq.s32.totalorder %s14, 1
    %p86 = por %p84, %p85
    %p87 = scmp.ne.s32.totalorder %s78, %s79
    %p88 = scmp.eq.s32.totalorder %s14, 0
    %p89 = por %p87, %p88
    %p90 = scmp.ne.s32.totalorder %s78, %s79
    %p91 = scmp.eq.s32.totalorder %s15, 1
    %p92 = por %p90, %p91
    %p94 = scmp.ne.s32.totalorder %s79, %s93
    %p95 = scmp.eq.s32.totalorder %s15, 0
    %p96 = por %p94, %p95
    %s97 = ssub.s32 %s16, %s28
    %s98 = ssub.s32 %s17, %s24
    %s99 = sor.u32 %s97, %s98
    %p100 = scmp.eq.s32.totalorder %s99, 0
    %s102 = sadd.s32 %s101, 1
    %s103 = scalar_select %p100, %s101, %s102
    %p106 = pneg %p100
    %p107 = scmp.eq.s32.totalorder %s9, 1
    %p108 = por %p106, %p107
    %p109 = scmp.ne.s32.totalorder %s101, %s104
    %p110 = scmp.eq.s32.totalorder %s9, 0
    %p111 = por %p109, %p110
    %p112 = scmp.ne.s32.totalorder %s101, %s104
    %p113 = scmp.eq.s32.totalorder %s14, 1
    %p114 = por %p112, %p113
    %p115 = scmp.ne.s32.totalorder %s104, %s105
    %p116 = scmp.eq.s32.totalorder %s14, 0
    %p117 = por %p115, %p116
    %p118 = scmp.ne.s32.totalorder %s104, %s105
    %p119 = scmp.eq.s32.totalorder %s15, 1
    %p120 = por %p118, %p119
    %p122 = scmp.ne.s32.totalorder %s105, %s121
    %p123 = scmp.eq.s32.totalorder %s15, 0
    %p124 = por %p122, %p123
    %p125 = scmp.le.s32.totalorder 1, %s9
    %p126 = scmp.lt.s32.totalorder %s9, 3
    %p127 = pnand %p125, %p126
    %p128 = pneg %p127
    // Predicated region
    $region9: #{conv_autoencoder_forward.11} parent=5 // pred_check
      _
    $region10: #{conv_autoencoder_forward.11} parent=5 // pred_check_branch
      %130 = sbr.rel (%p127) target = $region12
    $region11: #{conv_autoencoder_forward.11} parent=5 // pred_region
      %s131 = ssub.s32 %s9, 1
      // Predicated region
      $region13: #{conv_autoencoder_forward.11} parent=11 // pred_check
        %p132 = pneg %p68
      $region14: #{conv_autoencoder_forward.11} parent=11 // pred_check_branch
        %134 = sbr.rel (%p132) target = $region16
      $region15: #{conv_autoencoder_forward.11} parent=11 // pred_region
        _
      $region16: #{conv_autoencoder_forward.11} parent=11 // pred_fallthru
        _
      // Predicated region
      $region17: #{conv_autoencoder_forward.11} parent=11 // pred_check
        %p135 = pneg %p89
      $region18: #{conv_autoencoder_forward.11} parent=11 // pred_check_branch
        %137 = sbr.rel (%p135) target = $region20
      $region19: #{conv_autoencoder_forward.11} parent=11 // pred_region
        _
      $region20: #{conv_autoencoder_forward.11} parent=11 // pred_fallthru
        _
    $region12: #{conv_autoencoder_forward.11} parent=5 // pred_fallthru
      _
    %p138 = scmp.lt.s32.totalorder %s9, 2
    // Predicated region
    $region21: #{conv_autoencoder_forward.11} parent=5 // pred_check
      %p139 = pneg %p138
    $region22: #{conv_autoencoder_forward.11} parent=5 // pred_check_branch
      %141 = sbr.rel (%p139) target = $region24
    $region23: #{conv_autoencoder_forward.11} parent=5 // pred_region
      // Predicated region
      $region25: #{conv_autoencoder_forward.11} parent=23 // pred_check
        %p142 = pneg %p41
      $region26: #{conv_autoencoder_forward.11} parent=23 // pred_check_branch
        %144 = sbr.rel (%p142) target = $region28
      $region27: #{conv_autoencoder_forward.11} parent=23 // pred_region
        %p145 = scmp.lt.s32.totalorder %s16, 1
        %s146 = scalar_select %p145, %s16, 1
        %s147 = smul.addr %s146, 6
        %s148 = smul.addr %s147, 4
        %s149 = scalar_lea.vmem %s0, %s148
      $region28: #{conv_autoencoder_forward.11} parent=23 // pred_fallthru
        _
    $region24: #{conv_autoencoder_forward.11} parent=5 // pred_fallthru
      _
    %p150 = scmp.le.s32.totalorder 1, %s9
    %p151 = scmp.lt.s32.totalorder %s9, 3
    %p152 = pnand %p150, %p151
    %p153 = pneg %p152
    // Predicated region
    $region29: #{conv_autoencoder_forward.11} parent=5 // pred_check
      _
    $region30: #{conv_autoencoder_forward.11} parent=5 // pred_check_branch
      %155 = sbr.rel (%p152) target = $region32
    $region31: #{conv_autoencoder_forward.11} parent=5 // pred_region
      %s156 = ssub.s32 %s9, 1
      %p157 = scmp.lt.s32.totalorder %s18, 1
      %s158 = scalar_select %p157, %s18, 1
      %s159 = smul.addr %s158, 6
      %s160 = smul.addr %s159, 4
      %s161 = scalar_lea.vmem %s0, %s160
      %p162 = pneg %p47
      %p163 = pneg %p44
      %p164 = pneg %p68
      %p165 = pneg %p65
      %p166 = pneg %p89
      %p167 = pneg %p86
      %p168 = pneg %p117
      %p169 = pneg %p114
      %s170 = smul.u32 3, %s19
      %p171 = scmp.lt.s32.totalorder %s18, 1
      %s172 = scalar_select %p171, %s18, 1
      %p173 = scmp.lt.s32.totalorder %s170, 2
      %s174 = scalar_select %p173, %s170, 2
      %s175 = smul.addr %s172, 3
      %s176 = sadd.s32 %s174, %s175
      %s177 = smul.addr %s176, 4
      %s178 = scalar_lea.vmem %s3, %s177
      %p179 = scmp.lt.s32.totalorder %s18, 1
      %s180 = scalar_select %p179, %s18, 1
      %s181 = smul.addr %s180, 6
      %s182 = smul.addr %s181, 4
      %s183 = scalar_lea.vmem %s0, %s182
      %s184 = smul.u32 3, %s19
      %p185 = scmp.lt.s32.totalorder %s18, 1
      %s186 = scalar_select %p185, %s18, 1
      %p187 = scmp.lt.s32.totalorder %s184, 2
      %s188 = scalar_select %p187, %s184, 2
      %s189 = smul.addr %s186, 3
      %s190 = sadd.s32 %s188, %s189
      %s191 = smul.addr %s190, 4
      %s192 = scalar_lea.vmem %s3, %s191
      %s193 = smul.u32 3, %s19
      %v195 = vld [vmem:[%s2] sm:$0x1]
      %v197 = vlaneseq
      %v198 = vshrl.u32 %v197, 7
      %v199 = vsub.s32 0, %v198
      %v200 = vrot.slane %v195, %v199
      %v202 = vld [vmem:[%s183] sm:$0xf]
      %v203 = vld [vmem:[%s183 + $0x4] sm:$0xf]
      %v204 = vld [vmem:[%s183 + $0x8] sm:$0xf]
      %vm205 = vcmask 257024
      %206 = vst.msk [vmem:[#allocation2] sm:$0xf] %vm205, %v202
      %207 = vst.msk [vmem:[#allocation2 + $0xc] sm:$0xf] %vm205, %v203
      %208 = vst.msk [vmem:[#allocation2 + $0x18] sm:$0xf] %vm205, %v204
      %v209 = vld [vmem:[%s183] sm:$0xf]
      %v210 = vld [vmem:[%s183 + $0x4] sm:$0xf]
      %v211 = vld [vmem:[%s183 + $0x8] sm:$0xf]
      %v212 = vld [vmem:[%s183 + $0xc] sm:$0x1]
      %vm213 = vsmask.f32 3328
      %vm214 = vsmask.f32 7440
      %vm215 = vmor %vm213, %vm214
      %v217 = vshrl.u32 %v209, 16
      %v219 = vrot.slane %v217, 4
      %v220 = vshll.u32 %v209, 16
      %v222 = vrot.slane %v220, 5
      %v223 = vor.u32 %v219, %v222
      %v224 = vrot.slane %v223, 4
      %v226 = vshll.u32 %v210, 16
      %v228 = vrot.slane %v226, 5
      %v229 = vsel %vm215, %v224, %v228
      %v230 = vshrl.u32 %v210, 16
      %v232 = vrot.slane %v230, 4
      %v233 = vor.u32 %v232, %v228
      %v234 = vrot.slane %v233, 4
      %v236 = vshll.u32 %v211, 16
      %v238 = vrot.slane %v236, 5
      %v239 = vsel %vm215, %v234, %v238
      %v240 = vshrl.u32 %v211, 16
      %v242 = vrot.slane %v240, 4
      %v243 = vor.u32 %v242, %v238
      %v244 = vrot.slane %v243, 4
      %v246 = vshll.u32 %v212, 16
      %v248 = vrot.slane %v246, 5
      %v249 = vsel %vm215, %v244, %v248
      %250 = vrot.lane.b32.xlu0 %v229, 32
      %v251 = vpop.permute.xlu0 %250
      %252 = vrot.lane.b32.xlu0 %v239, 32
      %v253 = vpop.permute.xlu0 %252
      %254 = vrot.lane.b32.xlu0 %v249, 32
      %v255 = vpop.permute.xlu0 %254
      %vm259 = vcmask 519424
      %260 = vst.msk [vmem:[#allocation2] sm:$0xf] %vm259, %v251
      %261 = vst.msk [vmem:[#allocation2 + $0xc] sm:$0xf] %vm259, %v253
      %262 = vst.msk [vmem:[#allocation2 + $0x18] sm:$0xf] %vm259, %v255
      %v263 = vld [vmem:[%s183] sm:$0xe]
      %v264 = vld [vmem:[%s183 + $0x4] sm:$0xf]
      %v265 = vld [vmem:[%s183 + $0x8] sm:$0xf]
      %v266 = vld [vmem:[%s183 + $0xc] sm:$0x1]
      %vm271 = vcmask 1042432
      %vm272 = vcmask 1046532
      %vm273 = vmor %vm271, %vm272
      %v274 = vrot.slane %v263, 5
      %v275 = vrot.slane %v274, 4
      %v276 = vrot.slane %v264, 5
      %v277 = vsel %vm273, %v275, %v276
      %v278 = vrot.slane %v276, 4
      %v279 = vrot.slane %v265, 5
      %v280 = vsel %vm273, %v278, %v279
      %v281 = vrot.slane %v279, 4
      %v282 = vrot.slane %v266, 5
      %v283 = vsel %vm273, %v281, %v282
      %284 = vrot.lane.b32.xlu0 %v277, 64
      %v285 = vpop.permute.xlu0 %284
      %286 = vrot.lane.b32.xlu0 %v280, 64
      %v287 = vpop.permute.xlu0 %286
      %288 = vrot.lane.b32.xlu0 %v283, 64
      %v289 = vpop.permute.xlu0 %288
      %vm293 = vcmask 781824
      %294 = vst.msk [vmem:[#allocation2] sm:$0xf] %vm293, %v285
      %295 = vst.msk [vmem:[#allocation2 + $0xc] sm:$0xf] %vm293, %v287
      %296 = vst.msk [vmem:[#allocation2 + $0x18] sm:$0xf] %vm293, %v289
      %v297 = vld [vmem:[%s183] sm:$0x8]
      %v298 = vld [vmem:[%s183 + $0x4] sm:$0xf]
      %v299 = vld [vmem:[%s183 + $0x8] sm:$0xf]
      %v300 = vld [vmem:[%s183 + $0xc] sm:$0x7]
      %vm305 = vcmask 1040384
      %vm306 = vcmask 1044484
      %vm307 = vmor %vm305, %vm306
      %v308 = vrot.slane %v297, 7
      %v309 = vrot.slane %v308, 4
      %v310 = vrot.slane %v298, 7
      %v311 = vsel %vm307, %v309, %v310
      %v312 = vrot.slane %v310, 4
      %v313 = vrot.slane %v299, 7
      %v314 = vsel %vm307, %v312, %v313
      %v315 = vrot.slane %v313, 4
      %v316 = vrot.slane %v300, 7
      %v317 = vsel %vm307, %v315, %v316
      %318 = vrot.lane.b32.xlu0 %v311, 96
      %v319 = vpop.permute.xlu0 %318
      %320 = vrot.lane.b32.xlu0 %v314, 96
      %v321 = vpop.permute.xlu0 %320
      %322 = vrot.lane.b32.xlu0 %v317, 96
      %v323 = vpop.permute.xlu0 %322
      %vm327 = vcmask 1044224
      %328 = vst.msk [vmem:[#allocation2] sm:$0xf] %vm327, %v319
      %329 = vst.msk [vmem:[#allocation2 + $0xc] sm:$0xf] %vm327, %v321
      %330 = vst.msk [vmem:[#allocation2 + $0x18] sm:$0xf] %vm327, %v323
      %v331 = vld [vmem:[%s183] sm:$0x8]
      %v332 = vld [vmem:[%s183 + $0x4] sm:$0xf]
      %v333 = vld [vmem:[%s183 + $0x8] sm:$0xf]
      %v334 = vld [vmem:[%s183 + $0xc] sm:$0xf]
      %vm335 = vsmask.f32 256
      %vm336 = vsmask.f32 4368
      %vm337 = vmor %vm335, %vm336
      %v339 = vshrl.u32 %v331, 16
      %v341 = vrot.slane %v339, 7
      %v342 = vrot.slane %v341, 4
      %v344 = vshrl.u32 %v332, 16
      %v346 = vrot.slane %v344, 7
      %v347 = vshll.u32 %v332, 16
      %v349 = vor.u32 %v346, %v347
      %v350 = vsel %vm337, %v342, %v349
      %v351 = vrot.slane %v346, 4
      %v353 = vshrl.u32 %v333, 16
      %v355 = vrot.slane %v353, 7
      %v356 = vshll.u32 %v333, 16
      %v358 = vor.u32 %v355, %v356
      %v359 = vsel %vm337, %v351, %v358
      %v360 = vrot.slane %v355, 4
      %v362 = vshrl.u32 %v334, 16
      %v364 = vrot.slane %v362, 7
      %v365 = vshll.u32 %v334, 16
      %v367 = vor.u32 %v364, %v365
      %v368 = vsel %vm337, %v360, %v367
      %372 = vst.msk [vmem:[#allocation2 + $0x4] sm:$0xf] %vm205, %v350
      %373 = vst.msk [vmem:[#allocation2 + $0x10] sm:$0xf] %vm205, %v359
      %374 = vst.msk [vmem:[#allocation2 + $0x1c] sm:$0xf] %vm205, %v368
      %v375 = vld [vmem:[%s183 + $0x4] sm:$0xf]
      %v376 = vld [vmem:[%s183 + $0x8] sm:$0xf]
      %v377 = vld [vmem:[%s183 + $0xc] sm:$0xf]
      %381 = vrot.lane.b32.xlu0 %v375, 32
      %v382 = vpop.permute.xlu0 %381
      %383 = vrot.lane.b32.xlu0 %v376, 32
      %v384 = vpop.permute.xlu0 %383
      %385 = vrot.lane.b32.xlu0 %v377, 32
      %v386 = vpop.permute.xlu0 %385
      %390 = vst.msk [vmem:[#allocation2 + $0x4] sm:$0xf] %vm259, %v382
      %391 = vst.msk [vmem:[#allocation2 + $0x10] sm:$0xf] %vm259, %v384
      %392 = vst.msk [vmem:[#allocation2 + $0x1c] sm:$0xf] %vm259, %v386
      %v393 = vld [vmem:[%s183 + $0x4] sm:$0xc]
      %v394 = vld [vmem:[%s183 + $0x8] sm:$0xf]
      %v395 = vld [vmem:[%s183 + $0xc] sm:$0xf]
      %v396 = vld [vmem:[%s183 + $0x10] sm:$0x3]
      %vm401 = vcmask 1041408
      %vm402 = vcmask 1045508
      %vm403 = vmor %vm401, %vm402
      %v404 = vrot.slane %v393, 6
      %v405 = vrot.slane %v404, 4
      %v406 = vrot.slane %v394, 6
      %v407 = vsel %vm403, %v405, %v406
      %v408 = vrot.slane %v406, 4
      %v409 = vrot.slane %v395, 6
      %v410 = vsel %vm403, %v408, %v409
      %v411 = vrot.slane %v409, 4
      %v412 = vrot.slane %v396, 6
      %v413 = vsel %vm403, %v411, %v412
      %414 = vrot.lane.b32.xlu0 %v407, 64
      %v415 = vpop.permute.xlu0 %414
      %416 = vrot.lane.b32.xlu0 %v410, 64
      %v417 = vpop.permute.xlu0 %416
      %418 = vrot.lane.b32.xlu0 %v413, 64
      %v419 = vpop.permute.xlu0 %418
      %423 = vst.msk [vmem:[#allocation2 + $0x4] sm:$0xf] %vm293, %v415
      %424 = vst.msk [vmem:[#allocation2 + $0x10] sm:$0xf] %vm293, %v417
      %425 = vst.msk [vmem:[#allocation2 + $0x1c] sm:$0xf] %vm293, %v419
      %v426 = vld [vmem:[%s183 + $0x4] sm:$0xc]
      %v427 = vld [vmem:[%s183 + $0x8] sm:$0xf]
      %v428 = vld [vmem:[%s183 + $0xc] sm:$0xf]
      %v429 = vld [vmem:[%s183 + $0x10] sm:$0x7]
      %vm430 = vsmask.f32 1280
      %vm431 = vsmask.f32 5392
      %vm432 = vmor %vm430, %vm431
      %v434 = vshrl.u32 %v426, 16
      %v436 = vrot.slane %v434, 6
      %v437 = vshll.u32 %v426, 16
      %v439 = vrot.slane %v437, 7
      %v440 = vor.u32 %v436, %v439
      %v441 = vrot.slane %v440, 4
      %v443 = vshrl.u32 %v427, 16
      %v445 = vrot.slane %v443, 6
      %v446 = vshll.u32 %v427, 16
      %v448 = vrot.slane %v446, 7
      %v449 = vor.u32 %v445, %v448
      %v450 = vsel %vm432, %v441, %v449
      %v451 = vrot.slane %v449, 4
      %v453 = vshrl.u32 %v428, 16
      %v455 = vrot.slane %v453, 6
      %v456 = vshll.u32 %v428, 16
      %v458 = vrot.slane %v456, 7
      %v459 = vor.u32 %v455, %v458
      %v460 = vsel %vm432, %v451, %v459
      %v461 = vrot.slane %v459, 4
      %v463 = vshrl.u32 %v429, 16
      %v465 = vrot.slane %v463, 6
      %v466 = vshll.u32 %v429, 16
      %v468 = vrot.slane %v466, 7
      %v469 = vor.u32 %v465, %v468
      %v470 = vsel %vm432, %v461, %v469
      %471 = vrot.lane.b32.xlu0 %v450, 96
      %v472 = vpop.permute.xlu0 %471
      %473 = vrot.lane.b32.xlu0 %v460, 96
      %v474 = vpop.permute.xlu0 %473
      %475 = vrot.lane.b32.xlu0 %v470, 96
      %v476 = vpop.permute.xlu0 %475
      %480 = vst.msk [vmem:[#allocation2 + $0x4] sm:$0xf] %vm327, %v472
      %481 = vst.msk [vmem:[#allocation2 + $0x10] sm:$0xf] %vm327, %v474
      %482 = vst.msk [vmem:[#allocation2 + $0x1c] sm:$0xf] %vm327, %v476
      %v483 = vld [vmem:[%s183 + $0x4] sm:$0x8]
      %v484 = vld [vmem:[%s183 + $0x8] sm:$0xf]
      %v485 = vld [vmem:[%s183 + $0xc] sm:$0xf]
      %v486 = vld [vmem:[%s183 + $0x10] sm:$0x7]
      %v491 = vrot.slane %v483, 7
      %v492 = vrot.slane %v491, 4
      %v493 = vrot.slane %v484, 7
      %v494 = vsel %vm307, %v492, %v493
      %v495 = vrot.slane %v493, 4
      %v496 = vrot.slane %v485, 7
      %v497 = vsel %vm307, %v495, %v496
      %v498 = vrot.slane %v496, 4
      %v499 = vrot.slane %v486, 7
      %v500 = vsel %vm307, %v498, %v499
      %504 = vst.msk [vmem:[#allocation2 + $0x8] sm:$0xf] %vm205, %v494
      %505 = vst.msk [vmem:[#allocation2 + $0x14] sm:$0xf] %vm205, %v497
      %506 = vst.msk [vmem:[#allocation2 + $0x20] sm:$0xf] %vm205, %v500
      %v507 = vld [vmem:[#allocation2] sm:$0xff]
      %v508 = vld [vmem:[#allocation2 + $0x8] sm:$0xf]
      %v509 = vld [vmem:[#allocation2 + $0xc] sm:$0xff]
      %v510 = vld [vmem:[#allocation2 + $0x14] sm:$0xf]
      %v511 = vld [vmem:[#allocation2 + $0x18] sm:$0xff]
      %v512 = vld [vmem:[#allocation2 + $0x20] sm:$0xf]
      %v513 = vld [vmem:[%s1] sm:$0xf]
      %v514 = vld [vmem:[%s1 + $0x4] sm:$0xf]
      %v515 = vld [vmem:[%s1 + $0x8] sm:$0xf]
      %v516 = vld [vmem:[%s1 + $0xc] sm:$0xf]
      %v517 = vld [vmem:[%s1 + $0x10] sm:$0xf]
      %v518 = vld [vmem:[%s1 + $0x14] sm:$0xf]
      %v519 = vld [vmem:[%s1 + $0x18] sm:$0xf]
      %v520 = vld [vmem:[%s1 + $0x1c] sm:$0xf]
      %v521 = vld [vmem:[%s1 + $0x20] sm:$0xf]
      %v522 = vld [vmem:[%s1 + $0x24] sm:$0xf]
      %v523 = vld [vmem:[%s1 + $0x28] sm:$0xf]
      %v524 = vld [vmem:[%s1 + $0x2c] sm:$0xf]
      %v525 = vld [vmem:[%s1 + $0x30] sm:$0xf]
      %v526 = vld [vmem:[%s1 + $0x34] sm:$0xf]
      %v527 = vld [vmem:[%s1 + $0x38] sm:$0xf]
      %v528 = vld [vmem:[%s1 + $0x3c] sm:$0xf]
      %v529 = vld [vmem:[%s1 + $0x40] sm:$0xf]
      %v530 = vld [vmem:[%s1 + $0x44] sm:$0xf]
      %v531 = vld [vmem:[%s1 + $0x48] sm:$0xf]
      %v532 = vld [vmem:[%s1 + $0x4c] sm:$0xf]
      %v533 = vld [vmem:[%s1 + $0x50] sm:$0xf]
      %v534 = vld [vmem:[%s1 + $0x54] sm:$0xf]
      %v535 = vld [vmem:[%s1 + $0x58] sm:$0xf]
      %v536 = vld [vmem:[%s1 + $0x5c] sm:$0xf]
      %v537 = vld [vmem:[%s1 + $0x60] sm:$0xf]
      %v538 = vld [vmem:[%s1 + $0x64] sm:$0xf]
      %v539 = vld [vmem:[%s1 + $0x68] sm:$0xf]
      %v540 = vld [vmem:[%s1 + $0x6c] sm:$0xf]
      %v541 = vld [vmem:[%s1 + $0x70] sm:$0xf]
      %v542 = vld [vmem:[%s1 + $0x74] sm:$0xf]
      %v543 = vld [vmem:[%s1 + $0x78] sm:$0xf]
      %v544 = vld [vmem:[%s1 + $0x7c] sm:$0xf]
      %v545 = vld [vmem:[%s1 + $0x80] sm:$0xf]
      %v546 = vld [vmem:[%s1 + $0x84] sm:$0xf]
      %v547 = vld [vmem:[%s1 + $0x88] sm:$0xf]
      %v548 = vld [vmem:[%s1 + $0x8c] sm:$0xf]
      %v555 = vunpack.c.l.b16 %v507
      %v556 = vunpack.c.h.b16 %v507
      %v557 = vunpack.c.l.b16 %v508
      %v558 = vunpack.c.l.b16 %v509
      %v559 = vunpack.c.h.b16 %v509
      %v560 = vunpack.c.l.b16 %v510
      %v561 = vunpack.c.l.b16 %v511
      %v562 = vunpack.c.h.b16 %v511
      %v563 = vunpack.c.l.b16 %v512
      %v564 = vpack.c.b16 %v558, %v555
      %v565 = vpack.c.b16 %v559, %v556
      %v566 = vpack.c.b16 %v560, %v557
      %v567 = vpack.c.b16 %v561, %v561
      %v568 = vpack.c.b16 %v562, %v562
      %v569 = vpack.c.b16 %v563, %v563
      %v610 = vunpack.c.l.b16 %v513
      %v611 = vunpack.c.l.b16 %v514
      %v612 = vunpack.c.l.b16 %v515
      %v613 = vunpack.c.l.b16 %v516
      %v614 = vunpack.c.l.b16 %v517
      %v615 = vunpack.c.l.b16 %v518
      %v616 = vunpack.c.l.b16 %v519
      %v617 = vunpack.c.l.b16 %v520
      %v618 = vunpack.c.l.b16 %v521
      %v619 = vunpack.c.l.b16 %v522
      %v620 = vunpack.c.l.b16 %v523
      %v621 = vunpack.c.l.b16 %v524
      %v622 = vunpack.c.l.b16 %v525
      %v623 = vunpack.c.l.b16 %v526
      %v624 = vunpack.c.l.b16 %v527
      %v625 = vunpack.c.l.b16 %v528
      %v626 = vunpack.c.l.b16 %v529
      %v627 = vunpack.c.l.b16 %v530
      %v628 = vunpack.c.l.b16 %v531
      %v629 = vunpack.c.l.b16 %v532
      %v630 = vunpack.c.l.b16 %v533
      %v631 = vunpack.c.l.b16 %v534
      %v632 = vunpack.c.l.b16 %v535
      %v633 = vunpack.c.l.b16 %v536
      %v634 = vunpack.c.l.b16 %v537
      %v635 = vunpack.c.l.b16 %v538
      %v636 = vunpack.c.l.b16 %v539
      %v637 = vunpack.c.l.b16 %v540
      %v638 = vunpack.c.l.b16 %v541
      %v639 = vunpack.c.l.b16 %v542
      %v640 = vunpack.c.l.b16 %v543
      %v641 = vunpack.c.l.b16 %v544
      %v642 = vunpack.c.l.b16 %v545
      %v643 = vunpack.c.l.b16 %v546
      %v644 = vunpack.c.l.b16 %v547
      %v645 = vunpack.c.l.b16 %v548
      %v646 = vpack.c.b16 %v611, %v610
      %v647 = vpack.c.b16 %v613, %v612
      %v648 = vpack.c.b16 %v615, %v614
      %v649 = vpack.c.b16 %v617, %v616
      %v650 = vpack.c.b16 %v619, %v618
      %v651 = vpack.c.b16 %v621, %v620
      %v652 = vpack.c.b16 %v623, %v622
      %v653 = vpack.c.b16 %v625, %v624
      %v654 = vpack.c.b16 %v627, %v626
      %v655 = vpack.c.b16 %v629, %v628
      %v656 = vpack.c.b16 %v631, %v630
      %v657 = vpack.c.b16 %v633, %v632
      %v658 = vpack.c.b16 %v635, %v634
      %v659 = vpack.c.b16 %v637, %v636
      %v660 = vpack.c.b16 %v639, %v638
      %v661 = vpack.c.b16 %v641, %v640
      %v662 = vpack.c.b16 %v643, %v642
      %v663 = vpack.c.b16 %v645, %v644
      %vm682 = vcmask 261120
      %v684 = vsel %vm682, %v566, 0
      %v687 = vsel %vm682, %v569, 0
      %689 = vmatprep.subr.bf16.mxu0 0
      %690 = vmatpush1.bf16.msra.mxu0 %v653
      %691 = vmatprep.subr.bf16.mxu0 0
      %692 = vmatpush1.bf16.msra.mxu0 %v652
      %693 = vmatprep.subr.bf16.mxu0 0
      %694 = vmatpush1.bf16.msra.mxu0 %v651
      %695 = vmatprep.subr.bf16.mxu0 0
      %696 = vmatpush1.bf16.msra.mxu0 %v650
      %697 = vmatprep.subr.bf16.mxu0 0
      %698 = vmatpush1.bf16.msra.mxu0 %v649
      %699 = vmatprep.subr.bf16.mxu0 0
      %700 = vmatpush1.bf16.msra.mxu0 %v648
      %701 = vmatprep.subr.bf16.mxu0 0
      %702 = vmatpush1.bf16.msra.mxu0 %v647
      %703 = vmatprep.subr.bf16.mxu0 0
      %704 = vmatpush1.bf16.msra.mxu0 %v646
      %705 = vmatprep.subr.bf16.mxu0 0
      %706 = vmatpush2.bf16.msra.mxu0 %v661
      %707 = vmatprep.subr.bf16.mxu0 0
      %708 = vmatpush2.bf16.msra.mxu0 %v660
      %709 = vmatprep.subr.bf16.mxu0 0
      %710 = vmatpush2.bf16.msra.mxu0 %v659
      %711 = vmatprep.subr.bf16.mxu0 0
      %712 = vmatpush2.bf16.msra.mxu0 %v658
      %713 = vmatprep.subr.bf16.mxu0 0
      %714 = vmatpush2.bf16.msra.mxu0 %v657
      %715 = vmatprep.subr.bf16.mxu0 0
      %716 = vmatpush2.bf16.msra.mxu0 %v656
      %717 = vmatprep.subr.bf16.mxu0 0
      %718 = vmatpush2.bf16.msra.mxu0 %v655
      %719 = vmatprep.subr.bf16.mxu0 0
      %720 = vmatpush2.bf16.msra.mxu0 %v654
      %721 = vmatprep.mubr.bf16.mxu0 %v565
      %722 = vmatmul.mubr.bf16.gmra.mxu0 %v564
      %v723 = vpop.f32.mrf.mxu0
      %v724 = vadd.f32 0.0, %v723
      %v725 = vpop.f32.mrf.mxu0
      %v726 = vpop.f32.mrf.mxu0
      %v727 = vadd.f32 0.0, %v726
      %v728 = vpop.f32.mrf.mxu0
      %729 = vmatprep.mubr.bf16.mxu0 %v568
      %730 = vmatmul.mubr.bf16.gmra.mxu0 %v567
      %v731 = vpop.f32.mrf.mxu0
      %v732 = vadd.f32 0.0, %v731
      %v733 = vpop.f32.mrf.mxu0
      %v734 = vpop.f32.mrf.mxu0
      %v735 = vpop.f32.mrf.mxu0
      %736 = vdwg.mxu0
      %737 = vmatprep.subr.bf16.mxu0 0
      %738 = vmatpush1.bf16.msra.mxu0 0
      %739 = vmatprep.subr.bf16.mxu0 0
      %740 = vmatpush1.bf16.msra.mxu0 0
      %741 = vmatprep.subr.bf16.mxu0 0
      %742 = vmatpush1.bf16.msra.mxu0 0
      %743 = vmatprep.subr.bf16.mxu0 0
      %744 = vmatpush1.bf16.msra.mxu0 0
      %745 = vmatprep.subr.bf16.mxu0 0
      %746 = vmatpush1.bf16.msra.mxu0 0
      %747 = vmatprep.subr.bf16.mxu0 0
      %748 = vmatpush1.bf16.msra.mxu0 0
      %749 = vmatprep.subr.bf16.mxu0 0
      %750 = vmatpush1.bf16.msra.mxu0 %v663
      %751 = vmatprep.subr.bf16.mxu0 0
      %752 = vmatpush1.bf16.msra.mxu0 %v662
      %753 = vmatprep.subr.bf16.mxu0 0
      %754 = vmatpush2.bf16.msra.mxu0 0
      %755 = vmatprep.subr.bf16.mxu0 0
      %756 = vmatpush2.bf16.msra.mxu0 0
      %757 = vmatprep.subr.bf16.mxu0 0
      %758 = vmatpush2.bf16.msra.mxu0 0
      %759 = vmatprep.subr.bf16.mxu0 0
      %760 = vmatpush2.bf16.msra.mxu0 0
      %761 = vmatprep.subr.bf16.mxu0 0
      %762 = vmatpush2.bf16.msra.mxu0 0
      %763 = vmatprep.subr.bf16.mxu0 0
      %764 = vmatpush2.bf16.msra.mxu0 0
      %765 = vmatprep.subr.bf16.mxu0 0
      %766 = vmatpush2.bf16.msra.mxu0 0
      %767 = vmatprep.subr.bf16.mxu0 0
      %768 = vmatpush2.bf16.msra.mxu0 0
      %769 = vmatprep.mubr.bf16.mxu0 0
      %770 = vmatmul.mubr.bf16.gmra.mxu0 %v684
      %v771 = vpop.f32.mrf.mxu0
      %v772 = vadd.f32 %v724, %v771
      %v773 = vpop.f32.mrf.mxu0
      %v774 = vpop.f32.mrf.mxu0
      %v775 = vadd.f32 %v727, %v774
      %v776 = vpop.f32.mrf.mxu0
      %777 = vmatprep.mubr.bf16.mxu0 0
      %778 = vmatmul.mubr.bf16.gmra.mxu0 %v687
      %v779 = vpop.f32.mrf.mxu0
      %v780 = vadd.f32 %v732, %v779
      %v781 = vpop.f32.mrf.mxu0
      %v782 = vpop.f32.mrf.mxu0
      %v783 = vpop.f32.mrf.mxu0
      %784 = vdwg.mxu0
      %v785 = vadd.f32 %v200, %v772
      %v786 = vadd.f32 %v200, %v775
      %v787 = vadd.f32 %v200, %v780
      %v788 = vmax.f32 %v785, 0.0
      %v789 = vmax.f32 %v786, 0.0
      %v790 = vmax.f32 %v787, 0.0
      %v791 = vpack.c.bf16 %v789, %v788
      %v792 = vpack.c.bf16 %v790, %v790
      %v795 = vunpack.c.l.b16 %v791
      %v796 = vunpack.c.h.b16 %v791
      %v797 = vunpack.c.l.b16 %v792
      %v798 = vpack.c.b16 %v795, %v795
      %v799 = vpack.c.b16 %v796, %v796
      %v800 = vpack.c.b16 %v797, %v797
      %804 = vst [vmem:[%s192] sm:$0xf] %v798
      %805 = vst [vmem:[%s192 + $0x4] sm:$0xf] %v799
      %806 = vst [vmem:[%s192 + $0x8] sm:$0xf] %v800
      %s807 = smul.u32 3, %s19
      %p808 = scmp.lt.s32.totalorder %s18, 1
      %s809 = scalar_select %p808, %s18, 1
      %p810 = scmp.lt.s32.totalorder %s807, 2
      %s811 = scalar_select %p810, %s807, 2
      %s812 = smul.addr %s809, 3
      %s813 = sadd.s32 %s811, %s812
      %s814 = smul.addr %s813, 4
      %s815 = scalar_lea.vmem %s3, %s814
      // Predicated region
      $region33: #{conv_autoencoder_forward.11} parent=31 // pred_check
        %p816 = pneg %p114
      $region34: #{conv_autoencoder_forward.11} parent=31 // pred_check_branch
        %818 = sbr.rel (%p816) target = $region36
      $region35: #{conv_autoencoder_forward.11} parent=31 // pred_region
        %s819 = smul.u32 3, %s19
      $region36: #{conv_autoencoder_forward.11} parent=31 // pred_fallthru
        _
    $region32: #{conv_autoencoder_forward.11} parent=5 // pred_fallthru
      _
    %p820 = scmp.le.s32.totalorder 2, %s9
    // Predicated region
    $region37: #{conv_autoencoder_forward.11} parent=5 // pred_check
      %p821 = pneg %p820
    $region38: #{conv_autoencoder_forward.11} parent=5 // pred_check_branch
      %823 = sbr.rel (%p821) target = $region40
    $region39: #{conv_autoencoder_forward.11} parent=5 // pred_region
      %s824 = ssub.s32 %s9, 2
      // Predicated region
      $region41: #{conv_autoencoder_forward.11} parent=39 // pred_check
        %p825 = pneg %p120
      $region42: #{conv_autoencoder_forward.11} parent=39 // pred_check_branch
        %827 = sbr.rel (%p825) target = $region44
      $region43: #{conv_autoencoder_forward.11} parent=39 // pred_region
        %s828 = smul.u32 3, %s21
        %p829 = scmp.lt.s32.totalorder %s20, 1
        %s830 = scalar_select %p829, %s20, 1
        %p831 = scmp.lt.s32.totalorder %s828, 2
        %s832 = scalar_select %p831, %s828, 2
        %s833 = smul.addr %s830, 3
        %s834 = sadd.s32 %s832, %s833
        %s835 = smul.addr %s834, 4
        %s836 = scalar_lea.vmem %s3, %s835
      $region44: #{conv_autoencoder_forward.11} parent=39 // pred_fallthru
        _
    $region40: #{conv_autoencoder_forward.11} parent=5 // pred_fallthru
      _
  $region6: #{conv_autoencoder_forward.11} parent=0 // loop_footer
    %s13 = sadd.s32 1, %s9
  $region7: #{conv_autoencoder_forward.11} parent=0 // loop_footer_branch
    %8 = sbr.rel target = $region3
  $region8: #{conv_autoencoder_forward.11} parent=0 // loop_exit
    _

// kernel: conv_autoencoder_forward.12
$region0: #{conv_autoencoder_forward.12}
  #allocation0 [shape = 'u32[]', space=smem, size = 0x4, offset = 0x4, fixed_abs, tag = 'smem constant byte address 0x4 - core index']
  #allocation1 [shape = 'u32[144,128]{1,0:T(1,128)}', space=vmem, size = 0x12000, scoped, tag = 'internal scratch']
  #allocation2 [shape = 'bf16[80,288]{1,0:T(8,128)(2,1)}', space=vmem, size = 0xf000, scoped, tag = 'scratch operand']
  %s0 = inlined_call_operand.vmem [shape: bf16[2,110,32], index: 0, kind: input, shape index: {}]
  %s1 = inlined_call_operand.vmem [shape: bf16[288,128], index: 1, kind: input, shape index: {}]
  %s2 = inlined_call_operand.vmem [shape: f32[1,128], index: 2, kind: input, shape index: {}]
  %s3 = inlined_call_operand.vmem [shape: bf16[2,80,128], index: 3, kind: output, shape index: {}]
  %s4 = sld [smem:[#allocation0]]
  $region45: #{conv_autoencoder_forward.12} parent=0
    _
  %s6 = ssub.s32 1, %s4
  %s7 = scalar_select 0, %s6, %s4
  loop: start=0, step=1, limit=4
  $region2: #{conv_autoencoder_forward.12} parent=0 // loop_pre_header
    _
  $region3: #{conv_autoencoder_forward.12} parent=0 // loop_header
    %s9 = sphi 0, %s13
    %p10 = scmp.ge.s32.totalorder %s9, 4
    %s16 = sphi 0, %s28
    %s17 = sphi 0, %s24
    %s18 = sphi 0, %s16
    %s19 = sphi 0, %s17
    %s20 = sphi 0, %s18
    %s21 = sphi 0, %s19
    %s31 = sphi 0, %s33
    %s34 = sphi 0, %s31
    %s35 = sphi 0, %s34
    %s51 = sphi 0, %s35
    %s55 = sphi 0, %s55
    %s57 = sphi 0, %s55
    %s58 = sphi 0, %s57
    %s72 = sphi 0, %s58
    %s76 = sphi 0, %s76
    %s78 = sphi 0, %s76
    %s79 = sphi 0, %s78
    %s93 = sphi 0, %s79
    %s101 = sphi 0, %s103
    %s104 = sphi 0, %s101
    %s105 = sphi 0, %s104
    %s121 = sphi 0, %s105
  $region4: #{conv_autoencoder_forward.12} parent=0 // loop_header_branch
    %12 = sbr.rel (%p10) target = $region8
  $region5: #{conv_autoencoder_forward.12} parent=0 // loop_body
    %s14 = ssub.s32 %s9, 1
    %s15 = ssub.s32 %s9, 2
    %s22 = sadd.s32 1, %s17
    %p23 = scmp.ge.s32.totalorder %s22, 1
    %s24 = scalar_select %p23, 0, %s22
    %s25 = sadd.s32 1, %s16
    %s26 = scalar_select %p23, %s25, %s16
    %p27 = scmp.ge.s32.totalorder %s26, 2
    %s28 = scalar_select %p27, 0, %s26
    %s29 = ssub.s32 %s16, %s28
    %p30 = scmp.eq.s32.totalorder %s29, 0
    %s32 = sadd.s32 %s31, 1
    %s33 = scalar_select %p30, %s31, %s32
    %p36 = pneg %p30
    %p37 = scmp.eq.s32.totalorder %s9, 1
    %p38 = por %p36, %p37
    %p39 = scmp.ne.s32.totalorder %s31, %s34
    %p40 = scmp.eq.s32.totalorder %s9, 0
    %p41 = por %p39, %p40
    %p42 = scmp.ne.s32.totalorder %s31, %s34
    %p43 = scmp.eq.s32.totalorder %s14, 1
    %p44 = por %p42, %p43
    %p45 = scmp.ne.s32.totalorder %s34, %s35
    %p46 = scmp.eq.s32.totalorder %s14, 0
    %p47 = por %p45, %p46
    %p48 = scmp.ne.s32.totalorder %s34, %s35
    %p49 = scmp.eq.s32.totalorder %s15, 1
    %p50 = por %p48, %p49
    %p52 = scmp.ne.s32.totalorder %s35, %s51
    %p53 = scmp.eq.s32.totalorder %s15, 0
    %p54 = por %p52, %p53
    %s56 = sadd.s32 %s55, 1
    %p59 = scmp.eq.s32.totalorder %s9, 1
    %p60 = scmp.ne.s32.totalorder %s55, %s57
    %p61 = scmp.eq.s32.totalorder %s9, 0
    %p62 = por %p60, %p61
    %p63 = scmp.ne.s32.totalorder %s55, %s57
    %p64 = scmp.eq.s32.totalorder %s14, 1
    %p65 = por %p63, %p64
    %p66 = scmp.ne.s32.totalorder %s57, %s58
    %p67 = scmp.eq.s32.totalorder %s14, 0
    %p68 = por %p66, %p67
    %p69 = scmp.ne.s32.totalorder %s57, %s58
    %p70 = scmp.eq.s32.totalorder %s15, 1
    %p71 = por %p69, %p70
    %p73 = scmp.ne.s32.totalorder %s58, %s72
    %p74 = scmp.eq.s32.totalorder %s15, 0
    %p75 = por %p73, %p74
    %s77 = sadd.s32 %s76, 1
    %p80 = scmp.eq.s32.totalorder %s9, 1
    %p81 = scmp.ne.s32.totalorder %s76, %s78
    %p82 = scmp.eq.s32.totalorder %s9, 0
    %p83 = por %p81, %p82
    %p84 = scmp.ne.s32.totalorder %s76, %s78
    %p85 = scmp.eq.s32.totalorder %s14, 1
    %p86 = por %p84, %p85
    %p87 = scmp.ne.s32.totalorder %s78, %s79
    %p88 = scmp.eq.s32.totalorder %s14, 0
    %p89 = por %p87, %p88
    %p90 = scmp.ne.s32.totalorder %s78, %s79
    %p91 = scmp.eq.s32.totalorder %s15, 1
    %p92 = por %p90, %p91
    %p94 = scmp.ne.s32.totalorder %s79, %s93
    %p95 = scmp.eq.s32.totalorder %s15, 0
    %p96 = por %p94, %p95
    %s97 = ssub.s32 %s16, %s28
    %s98 = ssub.s32 %s17, %s24
    %s99 = sor.u32 %s97, %s98
    %p100 = scmp.eq.s32.totalorder %s99, 0
    %s102 = sadd.s32 %s101, 1
    %s103 = scalar_select %p100, %s101, %s102
    %p106 = pneg %p100
    %p107 = scmp.eq.s32.totalorder %s9, 1
    %p108 = por %p106, %p107
    %p109 = scmp.ne.s32.totalorder %s101, %s104
    %p110 = scmp.eq.s32.totalorder %s9, 0
    %p111 = por %p109, %p110
    %p112 = scmp.ne.s32.totalorder %s101, %s104
    %p113 = scmp.eq.s32.totalorder %s14, 1
    %p114 = por %p112, %p113
    %p115 = scmp.ne.s32.totalorder %s104, %s105
    %p116 = scmp.eq.s32.totalorder %s14, 0
    %p117 = por %p115, %p116
    %p118 = scmp.ne.s32.totalorder %s104, %s105
    %p119 = scmp.eq.s32.totalorder %s15, 1
    %p120 = por %p118, %p119
    %p122 = scmp.ne.s32.totalorder %s105, %s121
    %p123 = scmp.eq.s32.totalorder %s15, 0
    %p124 = por %p122, %p123
    %p125 = scmp.le.s32.totalorder 1, %s9
    %p126 = scmp.lt.s32.totalorder %s9, 3
    %p127 = pnand %p125, %p126
    %p128 = pneg %p127
    // Predicated region
    $region9: #{conv_autoencoder_forward.12} parent=5 // pred_check
      _
    $region10: #{conv_autoencoder_forward.12} parent=5 // pred_check_branch
      %130 = sbr.rel (%p127) target = $region12
    $region11: #{conv_autoencoder_forward.12} parent=5 // pred_region
      %s131 = ssub.s32 %s9, 1
      // Predicated region
      $region13: #{conv_autoencoder_forward.12} parent=11 // pred_check
        %p132 = pneg %p68
      $region14: #{conv_autoencoder_forward.12} parent=11 // pred_check_branch
        %134 = sbr.rel (%p132) target = $region16
      $region15: #{conv_autoencoder_forward.12} parent=11 // pred_region
        _
      $region16: #{conv_autoencoder_forward.12} parent=11 // pred_fallthru
        _
      // Predicated region
      $region17: #{conv_autoencoder_forward.12} parent=11 // pred_check
        %p135 = pneg %p89
      $region18: #{conv_autoencoder_forward.12} parent=11 // pred_check_branch
        %137 = sbr.rel (%p135) target = $region20
      $region19: #{conv_autoencoder_forward.12} parent=11 // pred_region
        _
      $region20: #{conv_autoencoder_forward.12} parent=11 // pred_fallthru
        _
    $region12: #{conv_autoencoder_forward.12} parent=5 // pred_fallthru
      _
    %p138 = scmp.lt.s32.totalorder %s9, 2
    // Predicated region
    $region21: #{conv_autoencoder_forward.12} parent=5 // pred_check
      %p139 = pneg %p138
    $region22: #{conv_autoencoder_forward.12} parent=5 // pred_check_branch
      %141 = sbr.rel (%p139) target = $region24
    $region23: #{conv_autoencoder_forward.12} parent=5 // pred_region
      // Predicated region
      $region25: #{conv_autoencoder_forward.12} parent=23 // pred_check
        %p142 = pneg %p41
      $region26: #{conv_autoencoder_forward.12} parent=23 // pred_check_branch
        %144 = sbr.rel (%p142) target = $region28
      $region27: #{conv_autoencoder_forward.12} parent=23 // pred_region
        %p145 = scmp.lt.s32.totalorder %s16, 1
        %s146 = scalar_select %p145, %s16, 1
        %s147 = smul.addr %s146, 14
        %s148 = smul.addr %s147, 4
        %s149 = scalar_lea.vmem %s0, %s148
      $region28: #{conv_autoencoder_forward.12} parent=23 // pred_fallthru
        _
    $region24: #{conv_autoencoder_forward.12} parent=5 // pred_fallthru
      _
    %p150 = scmp.le.s32.totalorder 1, %s9
    %p151 = scmp.lt.s32.totalorder %s9, 3
    %p152 = pnand %p150, %p151
    %p153 = pneg %p152
    // Predicated region
    $region29: #{conv_autoencoder_forward.12} parent=5 // pred_check
      _
    $region30: #{conv_autoencoder_forward.12} parent=5 // pred_check_branch
      %155 = sbr.rel (%p152) target = $region32
    $region31: #{conv_autoencoder_forward.12} parent=5 // pred_region
      %s156 = ssub.s32 %s9, 1
      %p157 = scmp.lt.s32.totalorder %s18, 1
      %s158 = scalar_select %p157, %s18, 1
      %s159 = smul.addr %s158, 14
      %s160 = smul.addr %s159, 4
      %s161 = scalar_lea.vmem %s0, %s160
      %p162 = pneg %p47
      %p163 = pneg %p44
      %p164 = pneg %p68
      %p165 = pneg %p65
      %p166 = pneg %p89
      %p167 = pneg %p86
      %p168 = pneg %p117
      %p169 = pneg %p114
      %s170 = smul.u32 10, %s19
      %p171 = scmp.lt.s32.totalorder %s18, 1
      %s172 = scalar_select %p171, %s18, 1
      %p173 = scmp.lt.s32.totalorder %s170, 9
      %s174 = scalar_select %p173, %s170, 9
      %s175 = smul.addr %s172, 10
      %s176 = sadd.s32 %s174, %s175
      %s177 = smul.addr %s176, 4
      %s178 = scalar_lea.vmem %s3, %s177
      %p179 = scmp.lt.s32.totalorder %s18, 1
      %s180 = scalar_select %p179, %s18, 1
      %s181 = smul.addr %s180, 14
      %s182 = smul.addr %s181, 4
      %s183 = scalar_lea.vmem %s0, %s182
      %s184 = smul.u32 10, %s19
      %p185 = scmp.lt.s32.totalorder %s18, 1
      %s186 = scalar_select %p185, %s18, 1
      %p187 = scmp.lt.s32.totalorder %s184, 9
      %s188 = scalar_select %p187, %s184, 9
      %s189 = smul.addr %s186, 10
      %s190 = sadd.s32 %s188, %s189
      %s191 = smul.addr %s190, 4
      %s192 = scalar_lea.vmem %s3, %s191
      %s193 = smul.u32 10, %s19
      %v195 = vld [vmem:[%s2] sm:$0x1]
      %v197 = vlaneseq
      %v198 = vshrl.u32 %v197, 7
      %v199 = vsub.s32 0, %v198
      %v200 = vrot.slane %v195, %v199
      %v202 = vld [vmem:[%s183] sm:$0xf]
      %v203 = vld [vmem:[%s183 + $0x4] sm:$0xf]
      %v204 = vld [vmem:[%s183 + $0x8] sm:$0xf]
      %v205 = vld [vmem:[%s183 + $0xc] sm:$0xf]
      %v206 = vld [vmem:[%s183 + $0x10] sm:$0xf]
      %v207 = vld [vmem:[%s183 + $0x14] sm:$0xf]
      %v208 = vld [vmem:[%s183 + $0x18] sm:$0xf]
      %v209 = vld [vmem:[%s183 + $0x1c] sm:$0xf]
      %v210 = vld [vmem:[%s183 + $0x20] sm:$0xf]
      %v211 = vld [vmem:[%s183 + $0x24] sm:$0xf]
      %vm212 = vcmask 257024
      %213 = vst.msk [vmem:[#allocation2] sm:$0xf] %vm212, %v202
      %214 = vst.msk [vmem:[#allocation2 + $0xc] sm:$0xf] %vm212, %v203
      %215 = vst.msk [vmem:[#allocation2 + $0x18] sm:$0xf] %vm212, %v204
      %216 = vst.msk [vmem:[#allocation2 + $0x24] sm:$0xf] %vm212, %v205
      %217 = vst.msk [vmem:[#allocation2 + $0x30] sm:$0xf] %vm212, %v206
      %218 = vst.msk [vmem:[#allocation2 + $0x3c] sm:$0xf] %vm212, %v207
      %219 = vst.msk [vmem:[#allocation2 + $0x48] sm:$0xf] %vm212, %v208
      %220 = vst.msk [vmem:[#allocation2 + $0x54] sm:$0xf] %vm212, %v209
      %221 = vst.msk [vmem:[#allocation2 + $0x60] sm:$0xf] %vm212, %v210
      %222 = vst.msk [vmem:[#allocation2 + $0x6c] sm:$0xf] %vm212, %v211
      %v223 = vld [vmem:[%s183] sm:$0xf]
      %v224 = vld [vmem:[%s183 + $0x4] sm:$0xf]
      %v225 = vld [vmem:[%s183 + $0x8] sm:$0xf]
      %v226 = vld [vmem:[%s183 + $0xc] sm:$0xf]
      %v227 = vld [vmem:[%s183 + $0x10] sm:$0xf]
      %v228 = vld [vmem:[%s183 + $0x14] sm:$0xf]
      %v229 = vld [vmem:[%s183 + $0x18] sm:$0xf]
      %v230 = vld [vmem:[%s183 + $0x1c] sm:$0xf]
      %v231 = vld [vmem:[%s183 + $0x20] sm:$0xf]
      %v232 = vld [vmem:[%s183 + $0x24] sm:$0xf]
      %v233 = vld [vmem:[%s183 + $0x28] sm:$0x1]
      %vm234 = vsmask.f32 3328
      %vm235 = vsmask.f32 7440
      %vm236 = vmor %vm234, %vm235
      %v238 = vshrl.u32 %v223, 16
      %v240 = vrot.slane %v238, 4
      %v241 = vshll.u32 %v223, 16
      %v243 = vrot.slane %v241, 5
      %v244 = vor.u32 %v240, %v243
      %v245 = vrot.slane %v244, 4
      %v247 = vshll.u32 %v224, 16
      %v249 = vrot.slane %v247, 5
      %v250 = vsel %vm236, %v245, %v249
      %v251 = vshrl.u32 %v224, 16
      %v253 = vrot.slane %v251, 4
      %v254 = vor.u32 %v253, %v249
      %v255 = vrot.slane %v254, 4
      %v257 = vshll.u32 %v225, 16
      %v259 = vrot.slane %v257, 5
      %v260 = vsel %vm236, %v255, %v259
      %v261 = vshrl.u32 %v225, 16
      %v263 = vrot.slane %v261, 4
      %v264 = vor.u32 %v263, %v259
      %v265 = vrot.slane %v264, 4
      %v267 = vshll.u32 %v226, 16
      %v269 = vrot.slane %v267, 5
      %v270 = vsel %vm236, %v265, %v269
      %v271 = vshrl.u32 %v226, 16
      %v273 = vrot.slane %v271, 4
      %v274 = vor.u32 %v273, %v269
      %v275 = vrot.slane %v274, 4
      %v277 = vshll.u32 %v227, 16
      %v279 = vrot.slane %v277, 5
      %v280 = vsel %vm236, %v275, %v279
      %v281 = vshrl.u32 %v227, 16
      %v283 = vrot.slane %v281, 4
      %v284 = vor.u32 %v283, %v279
      %v285 = vrot.slane %v284, 4
      %v287 = vshll.u32 %v228, 16
      %v289 = vrot.slane %v287, 5
      %v290 = vsel %vm236, %v285, %v289
      %v291 = vshrl.u32 %v228, 16
      %v293 = vrot.slane %v291, 4
      %v294 = vor.u32 %v293, %v289
      %v295 = vrot.slane %v294, 4
      %v297 = vshll.u32 %v229, 16
      %v299 = vrot.slane %v297, 5
      %v300 = vsel %vm236, %v295, %v299
      %v301 = vshrl.u32 %v229, 16
      %v303 = vrot.slane %v301, 4
      %v304 = vor.u32 %v303, %v299
      %v305 = vrot.slane %v304, 4
      %v307 = vshll.u32 %v230, 16
      %v309 = vrot.slane %v307, 5
      %v310 = vsel %vm236, %v305, %v309
      %v311 = vshrl.u32 %v230, 16
      %v313 = vrot.slane %v311, 4
      %v314 = vor.u32 %v313, %v309
      %v315 = vrot.slane %v314, 4
      %v317 = vshll.u32 %v231, 16
      %v319 = vrot.slane %v317, 5
      %v320 = vsel %vm236, %v315, %v319
      %v321 = vshrl.u32 %v231, 16
      %v323 = vrot.slane %v321, 4
      %v324 = vor.u32 %v323, %v319
      %v325 = vrot.slane %v324, 4
      %v327 = vshll.u32 %v232, 16
      %v329 = vrot.slane %v327, 5
      %v330 = vsel %vm236, %v325, %v329
      %v331 = vshrl.u32 %v232, 16
      %v333 = vrot.slane %v331, 4
      %v334 = vor.u32 %v333, %v329
      %v335 = vrot.slane %v334, 4
      %v337 = vshll.u32 %v233, 16
      %v339 = vrot.slane %v337, 5
      %v340 = vsel %vm236, %v335, %v339
      %341 = vrot.lane.b32.xlu0 %v250, 32
      %v342 = vpop.permute.xlu0 %341
      %343 = vrot.lane.b32.xlu0 %v260, 32
      %v344 = vpop.permute.xlu0 %343
      %345 = vrot.lane.b32.xlu0 %v270, 32
      %v346 = vpop.permute.xlu0 %345
      %347 = vrot.lane.b32.xlu0 %v280, 32
      %v348 = vpop.permute.xlu0 %347
      %349 = vrot.lane.b32.xlu0 %v290, 32
      %v350 = vpop.permute.xlu0 %349
      %351 = vrot.lane.b32.xlu0 %v300, 32
      %v352 = vpop.permute.xlu0 %351
      %353 = vrot.lane.b32.xlu0 %v310, 32
      %v354 = vpop.permute.xlu0 %353
      %355 = vrot.lane.b32.xlu0 %v320, 32
      %v356 = vpop.permute.xlu0 %355
      %357 = vrot.lane.b32.xlu0 %v330, 32
      %v358 = vpop.permute.xlu0 %357
      %359 = vrot.lane.b32.xlu0 %v340, 32
      %v360 = vpop.permute.xlu0 %359
      %vm371 = vcmask 519424
      %372 = vst.msk [vmem:[#allocation2] sm:$0xf] %vm371, %v342
      %373 = vst.msk [vmem:[#allocation2 + $0xc] sm:$0xf] %vm371, %v344
      %374 = vst.msk [vmem:[#allocation2 + $0x18] sm:$0xf] %vm371, %v346
      %375 = vst.msk [vmem:[#allocation2 + $0x24] sm:$0xf] %vm371, %v348
      %376 = vst.msk [vmem:[#allocation2 + $0x30] sm:$0xf] %vm371, %v350
      %377 = vst.msk [vmem:[#allocation2 + $0x3c] sm:$0xf] %vm371, %v352
      %378 = vst.msk [vmem:[#allocation2 + $0x48] sm:$0xf] %vm371, %v354
      %379 = vst.msk [vmem:[#allocation2 + $0x54] sm:$0xf] %vm371, %v356
      %380 = vst.msk [vmem:[#allocation2 + $0x60] sm:$0xf] %vm371, %v358
      %381 = vst.msk [vmem:[#allocation2 + $0x6c] sm:$0xf] %vm371, %v360
      %v382 = vld [vmem:[%s183] sm:$0xe]
      %v383 = vld [vmem:[%s183 + $0x4] sm:$0xf]
      %v384 = vld [vmem:[%s183 + $0x8] sm:$0xf]
      %v385 = vld [vmem:[%s183 + $0xc] sm:$0xf]
      %v386 = vld [vmem:[%s183 + $0x10] sm:$0xf]
      %v387 = vld [vmem:[%s183 + $0x14] sm:$0xf]
      %v388 = vld [vmem:[%s183 + $0x18] sm:$0xf]
      %v389 = vld [vmem:[%s183 + $0x1c] sm:$0xf]
      %v390 = vld [vmem:[%s183 + $0x20] sm:$0xf]
      %v391 = vld [vmem:[%s183 + $0x24] sm:$0xf]
      %v392 = vld [vmem:[%s183 + $0x28] sm:$0x1]
      %vm404 = vcmask 1042432
      %vm405 = vcmask 1046532
      %vm406 = vmor %vm404, %vm405
      %v407 = vrot.slane %v382, 5
      %v408 = vrot.slane %v407, 4
      %v409 = vrot.slane %v383, 5
      %v410 = vsel %vm406, %v408, %v409
      %v411 = vrot.slane %v409, 4
      %v412 = vrot.slane %v384, 5
      %v413 = vsel %vm406, %v411, %v412
      %v414 = vrot.slane %v412, 4
      %v415 = vrot.slane %v385, 5
      %v416 = vsel %vm406, %v414, %v415
      %v417 = vrot.slane %v415, 4
      %v418 = vrot.slane %v386, 5
      %v419 = vsel %vm406, %v417, %v418
      %v420 = vrot.slane %v418, 4
      %v421 = vrot.slane %v387, 5
      %v422 = vsel %vm406, %v420, %v421
      %v423 = vrot.slane %v421, 4
      %v424 = vrot.slane %v388, 5
      %v425 = vsel %vm406, %v423, %v424
      %v426 = vrot.slane %v424, 4
      %v427 = vrot.slane %v389, 5
      %v428 = vsel %vm406, %v426, %v427
      %v429 = vrot.slane %v427, 4
      %v430 = vrot.slane %v390, 5
      %v431 = vsel %vm406, %v429, %v430
      %v432 = vrot.slane %v430, 4
      %v433 = vrot.slane %v391, 5
      %v434 = vsel %vm406, %v432, %v433
      %v435 = vrot.slane %v433, 4
      %v436 = vrot.slane %v392, 5
      %v437 = vsel %vm406, %v435, %v436
      %438 = vrot.lane.b32.xlu0 %v410, 64
      %v439 = vpop.permute.xlu0 %438
      %440 = vrot.lane.b32.xlu0 %v413, 64
      %v441 = vpop.permute.xlu0 %440
      %442 = vrot.lane.b32.xlu0 %v416, 64
      %v443 = vpop.permute.xlu0 %442
      %444 = vrot.lane.b32.xlu0 %v419, 64
      %v445 = vpop.permute.xlu0 %444
      %446 = vrot.lane.b32.xlu0 %v422, 64
      %v447 = vpop.permute.xlu0 %446
      %448 = vrot.lane.b32.xlu0 %v425, 64
      %v449 = vpop.permute.xlu0 %448
      %450 = vrot.lane.b32.xlu0 %v428, 64
      %v451 = vpop.permute.xlu0 %450
      %452 = vrot.lane.b32.xlu0 %v431, 64
      %v453 = vpop.permute.xlu0 %452
      %454 = vrot.lane.b32.xlu0 %v434, 64
      %v455 = vpop.permute.xlu0 %454
      %456 = vrot.lane.b32.xlu0 %v437, 64
      %v457 = vpop.permute.xlu0 %456
      %vm468 = vcmask 781824
      %469 = vst.msk [vmem:[#allocation2] sm:$0xf] %vm468, %v439
      %470 = vst.msk [vmem:[#allocation2 + $0xc] sm:$0xf] %vm468, %v441
      %471 = vst.msk [vmem:[#allocation2 + $0x18] sm:$0xf] %vm468, %v443
      %472 = vst.msk [vmem:[#allocation2 + $0x24] sm:$0xf] %vm468, %v445
      %473 = vst.msk [vmem:[#allocation2 + $0x30] sm:$0xf] %vm468, %v447
      %474 = vst.msk [vmem:[#allocation2 + $0x3c] sm:$0xf] %vm468, %v449
      %475 = vst.msk [vmem:[#allocation2 + $0x48] sm:$0xf] %vm468, %v451
      %476 = vst.msk [vmem:[#allocation2 + $0x54] sm:$0xf] %vm468, %v453
      %477 = vst.msk [vmem:[#allocation2 + $0x60] sm:$0xf] %vm468, %v455
      %478 = vst.msk [vmem:[#allocation2 + $0x6c] sm:$0xf] %vm468, %v457
      %v479 = vld [vmem:[%s183 + $0x4] sm:$0xe]
      %v480 = vld [vmem:[%s183 + $0x8] sm:$0xf]
      %v481 = vld [vmem:[%s183 + $0xc] sm:$0xf]
      %v482 = vld [vmem:[%s183 + $0x10] sm:$0xf]
      %v483 = vld [vmem:[%s183 + $0x14] sm:$0xf]
      %v484 = vld [vmem:[%s183 + $0x18] sm:$0xf]
      %v485 = vld [vmem:[%s183 + $0x1c] sm:$0xf]
      %v486 = vld [vmem:[%s183 + $0x20] sm:$0xf]
      %v487 = vld [vmem:[%s183 + $0x24] sm:$0xf]
      %v488 = vld [vmem:[%s183 + $0x28] sm:$0xf]
      %v489 = vld [vmem:[%s183 + $0x2c] sm:$0x1]
      %v501 = vrot.slane %v479, 5
      %v502 = vrot.slane %v501, 4
      %v503 = vrot.slane %v480, 5
      %v504 = vsel %vm406, %v502, %v503
      %v505 = vrot.slane %v503, 4
      %v506 = vrot.slane %v481, 5
      %v507 = vsel %vm406, %v505, %v506
      %v508 = vrot.slane %v506, 4
      %v509 = vrot.slane %v482, 5
      %v510 = vsel %vm406, %v508, %v509
      %v511 = vrot.slane %v509, 4
      %v512 = vrot.slane %v483, 5
      %v513 = vsel %vm406, %v511, %v512
      %v514 = vrot.slane %v512, 4
      %v515 = vrot.slane %v484, 5
      %v516 = vsel %vm406, %v514, %v515
      %v517 = vrot.slane %v515, 4
      %v518 = vrot.slane %v485, 5
      %v519 = vsel %vm406, %v517, %v518
      %v520 = vrot.slane %v518, 4
      %v521 = vrot.slane %v486, 5
      %v522 = vsel %vm406, %v520, %v521
      %v523 = vrot.slane %v521, 4
      %v524 = vrot.slane %v487, 5
      %v525 = vsel %vm406, %v523, %v524
      %v526 = vrot.slane %v524, 4
      %v527 = vrot.slane %v488, 5
      %v528 = vsel %vm406, %v526, %v527
      %v529 = vrot.slane %v527, 4
      %v530 = vrot.slane %v489, 5
      %v531 = vsel %vm406, %v529, %v530
      %532 = vrot.lane.b32.xlu0 %v504, 96
      %v533 = vpop.permute.xlu0 %532
      %534 = vrot.lane.b32.xlu0 %v507, 96
      %v535 = vpop.permute.xlu0 %534
      %536 = vrot.lane.b32.xlu0 %v510, 96
      %v537 = vpop.permute.xlu0 %536
      %538 = vrot.lane.b32.xlu0 %v513, 96
      %v539 = vpop.permute.xlu0 %538
      %540 = vrot.lane.b32.xlu0 %v516, 96
      %v541 = vpop.permute.xlu0 %540
      %542 = vrot.lane.b32.xlu0 %v519, 96
      %v543 = vpop.permute.xlu0 %542
      %544 = vrot.lane.b32.xlu0 %v522, 96
      %v545 = vpop.permute.xlu0 %544
      %546 = vrot.lane.b32.xlu0 %v525, 96
      %v547 = vpop.permute.xlu0 %546
      %548 = vrot.lane.b32.xlu0 %v528, 96
      %v549 = vpop.permute.xlu0 %548
      %550 = vrot.lane.b32.xlu0 %v531, 96
      %v551 = vpop.permute.xlu0 %550
      %vm562 = vcmask 1044224
      %563 = vst.msk [vmem:[#allocation2] sm:$0xf] %vm562, %v533
      %564 = vst.msk [vmem:[#allocation2 + $0xc] sm:$0xf] %vm562, %v535
      %565 = vst.msk [vmem:[#allocation2 + $0x18] sm:$0xf] %vm562, %v537
      %566 = vst.msk [vmem:[#allocation2 + $0x24] sm:$0xf] %vm562, %v539
      %567 = vst.msk [vmem:[#allocation2 + $0x30] sm:$0xf] %vm562, %v541
      %568 = vst.msk [vmem:[#allocation2 + $0x3c] sm:$0xf] %vm562, %v543
      %569 = vst.msk [vmem:[#allocation2 + $0x48] sm:$0xf] %vm562, %v545
      %570 = vst.msk [vmem:[#allocation2 + $0x54] sm:$0xf] %vm562, %v547
      %571 = vst.msk [vmem:[#allocation2 + $0x60] sm:$0xf] %vm562, %v549
      %572 = vst.msk [vmem:[#allocation2 + $0x6c] sm:$0xf] %vm562, %v551
      %v573 = vld [vmem:[%s183 + $0x4] sm:$0xe]
      %v574 = vld [vmem:[%s183 + $0x8] sm:$0xf]
      %v575 = vld [vmem:[%s183 + $0xc] sm:$0xf]
      %v576 = vld [vmem:[%s183 + $0x10] sm:$0xf]
      %v577 = vld [vmem:[%s183 + $0x14] sm:$0xf]
      %v578 = vld [vmem:[%s183 + $0x18] sm:$0xf]
      %v579 = vld [vmem:[%s183 + $0x1c] sm:$0xf]
      %v580 = vld [vmem:[%s183 + $0x20] sm:$0xf]
      %v581 = vld [vmem:[%s183 + $0x24] sm:$0xf]
      %v582 = vld [vmem:[%s183 + $0x28] sm:$0xf]
      %v583 = vld [vmem:[%s183 + $0x2c] sm:$0x3]
      %vm584 = vsmask.f32 2304
      %vm585 = vsmask.f32 6416
      %vm586 = vmor %vm584, %vm585
      %v588 = vshrl.u32 %v573, 16
      %v590 = vrot.slane %v588, 5
      %v591 = vshll.u32 %v573, 16
      %v593 = vrot.slane %v591, 6
      %v594 = vor.u32 %v590, %v593
      %v595 = vrot.slane %v594, 4
      %v597 = vshrl.u32 %v574, 16
      %v599 = vrot.slane %v597, 5
      %v600 = vshll.u32 %v574, 16
      %v602 = vrot.slane %v600, 6
      %v603 = vor.u32 %v599, %v602
      %v604 = vsel %vm586, %v595, %v603
      %v605 = vrot.slane %v603, 4
      %v607 = vshrl.u32 %v575, 16
      %v609 = vrot.slane %v607, 5
      %v610 = vshll.u32 %v575, 16
      %v612 = vrot.slane %v610, 6
      %v613 = vor.u32 %v609, %v612
      %v614 = vsel %vm586, %v605, %v613
      %v615 = vrot.slane %v613, 4
      %v617 = vshrl.u32 %v576, 16
      %v619 = vrot.slane %v617, 5
      %v620 = vshll.u32 %v576, 16
      %v622 = vrot.slane %v620, 6
      %v623 = vor.u32 %v619, %v622
      %v624 = vsel %vm586, %v615, %v623
      %v625 = vrot.slane %v623, 4
      %v627 = vshrl.u32 %v577, 16
      %v629 = vrot.slane %v627, 5
      %v630 = vshll.u32 %v577, 16
      %v632 = vrot.slane %v630, 6
      %v633 = vor.u32 %v629, %v632
      %v634 = vsel %vm586, %v625, %v633
      %v635 = vrot.slane %v633, 4
      %v637 = vshrl.u32 %v578, 16
      %v639 = vrot.slane %v637, 5
      %v640 = vshll.u32 %v578, 16
      %v642 = vrot.slane %v640, 6
      %v643 = vor.u32 %v639, %v642
      %v644 = vsel %vm586, %v635, %v643
      %v645 = vrot.slane %v643, 4
      %v647 = vshrl.u32 %v579, 16
      %v649 = vrot.slane %v647, 5
      %v650 = vshll.u32 %v579, 16
      %v652 = vrot.slane %v650, 6
      %v653 = vor.u32 %v649, %v652
      %v654 = vsel %vm586, %v645, %v653
      %v655 = vrot.slane %v653, 4
      %v657 = vshrl.u32 %v580, 16
      %v659 = vrot.slane %v657, 5
      %v660 = vshll.u32 %v580, 16
      %v662 = vrot.slane %v660, 6
      %v663 = vor.u32 %v659, %v662
      %v664 = vsel %vm586, %v655, %v663
      %v665 = vrot.slane %v663, 4
      %v667 = vshrl.u32 %v581, 16
      %v669 = vrot.slane %v667, 5
      %v670 = vshll.u32 %v581, 16
      %v672 = vrot.slane %v670, 6
      %v673 = vor.u32 %v669, %v672
      %v674 = vsel %vm586, %v665, %v673
      %v675 = vrot.slane %v673, 4
      %v677 = vshrl.u32 %v582, 16
      %v679 = vrot.slane %v677, 5
      %v680 = vshll.u32 %v582, 16
      %v682 = vrot.slane %v680, 6
      %v683 = vor.u32 %v679, %v682
      %v684 = vsel %vm586, %v675, %v683
      %v685 = vrot.slane %v683, 4
      %v687 = vshrl.u32 %v583, 16
      %v689 = vrot.slane %v687, 5
      %v690 = vshll.u32 %v583, 16
      %v692 = vrot.slane %v690, 6
      %v693 = vor.u32 %v689, %v692
      %v694 = vsel %vm586, %v685, %v693
      %705 = vst.msk [vmem:[#allocation2 + $0x4] sm:$0xf] %vm212, %v604
      %706 = vst.msk [vmem:[#allocation2 + $0x10] sm:$0xf] %vm212, %v614
      %707 = vst.msk [vmem:[#allocation2 + $0x1c] sm:$0xf] %vm212, %v624
      %708 = vst.msk [vmem:[#allocation2 + $0x28] sm:$0xf] %vm212, %v634
      %709 = vst.msk [vmem:[#allocation2 + $0x34] sm:$0xf] %vm212, %v644
      %710 = vst.msk [vmem:[#allocation2 + $0x40] sm:$0xf] %vm212, %v654
      %711 = vst.msk [vmem:[#allocation2 + $0x4c] sm:$0xf] %vm212, %v664
      %712 = vst.msk [vmem:[#allocation2 + $0x58] sm:$0xf] %vm212, %v674
      %713 = vst.msk [vmem:[#allocation2 + $0x64] sm:$0xf] %vm212, %v684
      %714 = vst.msk [vmem:[#allocation2 + $0x70] sm:$0xf] %vm212, %v694
      %v715 = vld [vmem:[%s183 + $0x4] sm:$0xc]
      %v716 = vld [vmem:[%s183 + $0x8] sm:$0xf]
      %v717 = vld [vmem:[%s183 + $0xc] sm:$0xf]
      %v718 = vld [vmem:[%s183 + $0x10] sm:$0xf]
      %v719 = vld [vmem:[%s183 + $0x14] sm:$0xf]
      %v720 = vld [vmem:[%s183 + $0x18] sm:$0xf]
      %v721 = vld [vmem:[%s183 + $0x1c] sm:$0xf]
      %v722 = vld [vmem:[%s183 + $0x20] sm:$0xf]
      %v723 = vld [vmem:[%s183 + $0x24] sm:$0xf]
      %v724 = vld [vmem:[%s183 + $0x28] sm:$0xf]
      %v725 = vld [vmem:[%s183 + $0x2c] sm:$0x3]
      %vm737 = vcmask 1041408
      %vm738 = vcmask 1045508
      %vm739 = vmor %vm737, %vm738
      %v740 = vrot.slane %v715, 6
      %v741 = vrot.slane %v740, 4
      %v742 = vrot.slane %v716, 6
      %v743 = vsel %vm739, %v741, %v742
      %v744 = vrot.slane %v742, 4
      %v745 = vrot.slane %v717, 6
      %v746 = vsel %vm739, %v744, %v745
      %v747 = vrot.slane %v745, 4
      %v748 = vrot.slane %v718, 6
      %v749 = vsel %vm739, %v747, %v748
      %v750 = vrot.slane %v748, 4
      %v751 = vrot.slane %v719, 6
      %v752 = vsel %vm739, %v750, %v751
      %v753 = vrot.slane %v751, 4
      %v754 = vrot.slane %v720, 6
      %v755 = vsel %vm739, %v753, %v754
      %v756 = vrot.slane %v754, 4
      %v757 = vrot.slane %v721, 6
      %v758 = vsel %vm739, %v756, %v757
      %v759 = vrot.slane %v757, 4
      %v760 = vrot.slane %v722, 6
      %v761 = vsel %vm739, %v759, %v760
      %v762 = vrot.slane %v760, 4
      %v763 = vrot.slane %v723, 6
      %v764 = vsel %vm739, %v762, %v763
      %v765 = vrot.slane %v763, 4
      %v766 = vrot.slane %v724, 6
      %v767 = vsel %vm739, %v765, %v766
      %v768 = vrot.slane %v766, 4
      %v769 = vrot.slane %v725, 6
      %v770 = vsel %vm739, %v768, %v769
      %771 = vrot.lane.b32.xlu0 %v743, 32
      %v772 = vpop.permute.xlu0 %771
      %773 = vrot.lane.b32.xlu0 %v746, 32
      %v774 = vpop.permute.xlu0 %773
      %775 = vrot.lane.b32.xlu0 %v749, 32
      %v776 = vpop.permute.xlu0 %775
      %777 = vrot.lane.b32.xlu0 %v752, 32
      %v778 = vpop.permute.xlu0 %777
      %779 = vrot.lane.b32.xlu0 %v755, 32
      %v780 = vpop.permute.xlu0 %779
      %781 = vrot.lane.b32.xlu0 %v758, 32
      %v782 = vpop.permute.xlu0 %781
      %783 = vrot.lane.b32.xlu0 %v761, 32
      %v784 = vpop.permute.xlu0 %783
      %785 = vrot.lane.b32.xlu0 %v764, 32
      %v786 = vpop.permute.xlu0 %785
      %787 = vrot.lane.b32.xlu0 %v767, 32
      %v788 = vpop.permute.xlu0 %787
      %789 = vrot.lane.b32.xlu0 %v770, 32
      %v790 = vpop.permute.xlu0 %789
      %801 = vst.msk [vmem:[#allocation2 + $0x4] sm:$0xf] %vm371, %v772
      %802 = vst.msk [vmem:[#allocation2 + $0x10] sm:$0xf] %vm371, %v774
      %803 = vst.msk [vmem:[#allocation2 + $0x1c] sm:$0xf] %vm371, %v776
      %804 = vst.msk [vmem:[#allocation2 + $0x28] sm:$0xf] %vm371, %v778
      %805 = vst.msk [vmem:[#allocation2 + $0x34] sm:$0xf] %vm371, %v780
      %806 = vst.msk [vmem:[#allocation2 + $0x40] sm:$0xf] %vm371, %v782
      %807 = vst.msk [vmem:[#allocation2 + $0x4c] sm:$0xf] %vm371, %v784
      %808 = vst.msk [vmem:[#allocation2 + $0x58] sm:$0xf] %vm371, %v786
      %809 = vst.msk [vmem:[#allocation2 + $0x64] sm:$0xf] %vm371, %v788
      %810 = vst.msk [vmem:[#allocation2 + $0x70] sm:$0xf] %vm371, %v790
      %v811 = vld [vmem:[%s183 + $0x8] sm:$0xc]
      %v812 = vld [vmem:[%s183 + $0xc] sm:$0xf]
      %v813 = vld [vmem:[%s183 + $0x10] sm:$0xf]
      %v814 = vld [vmem:[%s183 + $0x14] sm:$0xf]
      %v815 = vld [vmem:[%s183 + $0x18] sm:$0xf]
      %v816 = vld [vmem:[%s183 + $0x1c] sm:$0xf]
      %v817 = vld [vmem:[%s183 + $0x20] sm:$0xf]
      %v818 = vld [vmem:[%s183 + $0x24] sm:$0xf]
      %v819 = vld [vmem:[%s183 + $0x28] sm:$0xf]
      %v820 = vld [vmem:[%s183 + $0x2c] sm:$0xf]
      %v821 = vld [vmem:[%s183 + $0x30] sm:$0x3]
      %v833 = vrot.slane %v811, 6
      %v834 = vrot.slane %v833, 4
      %v835 = vrot.slane %v812, 6
      %v836 = vsel %vm739, %v834, %v835
      %v837 = vrot.slane %v835, 4
      %v838 = vrot.slane %v813, 6
      %v839 = vsel %vm739, %v837, %v838
      %v840 = vrot.slane %v838, 4
      %v841 = vrot.slane %v814, 6
      %v842 = vsel %vm739, %v840, %v841
      %v843 = vrot.slane %v841, 4
      %v844 = vrot.slane %v815, 6
      %v845 = vsel %vm739, %v843, %v844
      %v846 = vrot.slane %v844, 4
      %v847 = vrot.slane %v816, 6
      %v848 = vsel %vm739, %v846, %v847
      %v849 = vrot.slane %v847, 4
      %v850 = vrot.slane %v817, 6
      %v851 = vsel %vm739, %v849, %v850
      %v852 = vrot.slane %v850, 4
      %v853 = vrot.slane %v818, 6
      %v854 = vsel %vm739, %v852, %v853
      %v855 = vrot.slane %v853, 4
      %v856 = vrot.slane %v819, 6
      %v857 = vsel %vm739, %v855, %v856
      %v858 = vrot.slane %v856, 4
      %v859 = vrot.slane %v820, 6
      %v860 = vsel %vm739, %v858, %v859
      %v861 = vrot.slane %v859, 4
      %v862 = vrot.slane %v821, 6
      %v863 = vsel %vm739, %v861, %v862
      %864 = vrot.lane.b32.xlu0 %v836, 64
      %v865 = vpop.permute.xlu0 %864
      %866 = vrot.lane.b32.xlu0 %v839, 64
      %v867 = vpop.permute.xlu0 %866
      %868 = vrot.lane.b32.xlu0 %v842, 64
      %v869 = vpop.permute.xlu0 %868
      %870 = vrot.lane.b32.xlu0 %v845, 64
      %v871 = vpop.permute.xlu0 %870
      %872 = vrot.lane.b32.xlu0 %v848, 64
      %v873 = vpop.permute.xlu0 %872
      %874 = vrot.lane.b32.xlu0 %v851, 64
      %v875 = vpop.permute.xlu0 %874
      %876 = vrot.lane.b32.xlu0 %v854, 64
      %v877 = vpop.permute.xlu0 %876
      %878 = vrot.lane.b32.xlu0 %v857, 64
      %v879 = vpop.permute.xlu0 %878
      %880 = vrot.lane.b32.xlu0 %v860, 64
      %v881 = vpop.permute.xlu0 %880
      %882 = vrot.lane.b32.xlu0 %v863, 64
      %v883 = vpop.permute.xlu0 %882
      %894 = vst.msk [vmem:[#allocation2 + $0x4] sm:$0xf] %vm468, %v865
      %895 = vst.msk [vmem:[#allocation2 + $0x10] sm:$0xf] %vm468, %v867
      %896 = vst.msk [vmem:[#allocation2 + $0x1c] sm:$0xf] %vm468, %v869
      %897 = vst.msk [vmem:[#allocation2 + $0x28] sm:$0xf] %vm468, %v871
      %898 = vst.msk [vmem:[#allocation2 + $0x34] sm:$0xf] %vm468, %v873
      %899 = vst.msk [vmem:[#allocation2 + $0x40] sm:$0xf] %vm468, %v875
      %900 = vst.msk [vmem:[#allocation2 + $0x4c] sm:$0xf] %vm468, %v877
      %901 = vst.msk [vmem:[#allocation2 + $0x58] sm:$0xf] %vm468, %v879
      %902 = vst.msk [vmem:[#allocation2 + $0x64] sm:$0xf] %vm468, %v881
      %903 = vst.msk [vmem:[#allocation2 + $0x70] sm:$0xf] %vm468, %v883
      %v904 = vld [vmem:[%s183 + $0x8] sm:$0xc]
      %v905 = vld [vmem:[%s183 + $0xc] sm:$0xf]
      %v906 = vld [vmem:[%s183 + $0x10] sm:$0xf]
      %v907 = vld [vmem:[%s183 + $0x14] sm:$0xf]
      %v908 = vld [vmem:[%s183 + $0x18] sm:$0xf]
      %v909 = vld [vmem:[%s183 + $0x1c] sm:$0xf]
      %v910 = vld [vmem:[%s183 + $0x20] sm:$0xf]
      %v911 = vld [vmem:[%s183 + $0x24] sm:$0xf]
      %v912 = vld [vmem:[%s183 + $0x28] sm:$0xf]
      %v913 = vld [vmem:[%s183 + $0x2c] sm:$0xf]
      %v914 = vld [vmem:[%s183 + $0x30] sm:$0x7]
      %vm915 = vsmask.f32 1280
      %vm916 = vsmask.f32 5392
      %vm917 = vmor %vm915, %vm916
      %v919 = vshrl.u32 %v904, 16
      %v921 = vrot.slane %v919, 6
      %v922 = vshll.u32 %v904, 16
      %v924 = vrot.slane %v922, 7
      %v925 = vor.u32 %v921, %v924
      %v926 = vrot.slane %v925, 4
      %v928 = vshrl.u32 %v905, 16
      %v930 = vrot.slane %v928, 6
      %v931 = vshll.u32 %v905, 16
      %v933 = vrot.slane %v931, 7
      %v934 = vor.u32 %v930, %v933
      %v935 = vsel %vm917, %v926, %v934
      %v936 = vrot.slane %v934, 4
      %v938 = vshrl.u32 %v906, 16
      %v940 = vrot.slane %v938, 6
      %v941 = vshll.u32 %v906, 16
      %v943 = vrot.slane %v941, 7
      %v944 = vor.u32 %v940, %v943
      %v945 = vsel %vm917, %v936, %v944
      %v946 = vrot.slane %v944, 4
      %v948 = vshrl.u32 %v907, 16
      %v950 = vrot.slane %v948, 6
      %v951 = vshll.u32 %v907, 16
      %v953 = vrot.slane %v951, 7
      %v954 = vor.u32 %v950, %v953
      %v955 = vsel %vm917, %v946, %v954
      %v956 = vrot.slane %v954, 4
      %v958 = vshrl.u32 %v908, 16
      %v960 = vrot.slane %v958, 6
      %v961 = vshll.u32 %v908, 16
      %v963 = vrot.slane %v961, 7
      %v964 = vor.u32 %v960, %v963
      %v965 = vsel %vm917, %v956, %v964
      %v966 = vrot.slane %v964, 4
      %v968 = vshrl.u32 %v909, 16
      %v970 = vrot.slane %v968, 6
      %v971 = vshll.u32 %v909, 16
      %v973 = vrot.slane %v971, 7
      %v974 = vor.u32 %v970, %v973
      %v975 = vsel %vm917, %v966, %v974
      %v976 = vrot.slane %v974, 4
      %v978 = vshrl.u32 %v910, 16
      %v980 = vrot.slane %v978, 6
      %v981 = vshll.u32 %v910, 16
      %v983 = vrot.slane %v981, 7
      %v984 = vor.u32 %v980, %v983
      %v985 = vsel %vm917, %v976, %v984
      %v986 = vrot.slane %v984, 4
      %v988 = vshrl.u32 %v911, 16
      %v990 = vrot.slane %v988, 6
      %v991 = vshll.u32 %v911, 16
      %v993 = vrot.slane %v991, 7
      %v994 = vor.u32 %v990, %v993
      %v995 = vsel %vm917, %v986, %v994
      %v996 = vrot.slane %v994, 4
      %v998 = vshrl.u32 %v912, 16
      %v1000 = vrot.slane %v998, 6
      %v1001 = vshll.u32 %v912, 16
      %v1003 = vrot.slane %v1001, 7
      %v1004 = vor.u32 %v1000, %v1003
      %v1005 = vsel %vm917, %v996, %v1004
      %v1006 = vrot.slane %v1004, 4
      %v1008 = vshrl.u32 %v913, 16
      %v1010 = vrot.slane %v1008, 6
      %v1011 = vshll.u32 %v913, 16
      %v1013 = vrot.slane %v1011, 7
      %v1014 = vor.u32 %v1010, %v1013
      %v1015 = vsel %vm917, %v1006, %v1014
      %v1016 = vrot.slane %v1014, 4
      %v1018 = vshrl.u32 %v914, 16
      %v1020 = vrot.slane %v1018, 6
      %v1021 = vshll.u32 %v914, 16
      %v1023 = vrot.slane %v1021, 7
      %v1024 = vor.u32 %v1020, %v1023
      %v1025 = vsel %vm917, %v1016, %v1024
      %1026 = vrot.lane.b32.xlu0 %v935, 96
      %v1027 = vpop.permute.xlu0 %1026
      %1028 = vrot.lane.b32.xlu0 %v945, 96
      %v1029 = vpop.permute.xlu0 %1028
      %1030 = vrot.lane.b32.xlu0 %v955, 96
      %v1031 = vpop.permute.xlu0 %1030
      %1032 = vrot.lane.b32.xlu0 %v965, 96
      %v1033 = vpop.permute.xlu0 %1032
      %1034 = vrot.lane.b32.xlu0 %v975, 96
      %v1035 = vpop.permute.xlu0 %1034
      %1036 = vrot.lane.b32.xlu0 %v985, 96
      %v1037 = vpop.permute.xlu0 %1036
      %1038 = vrot.lane.b32.xlu0 %v995, 96
      %v1039 = vpop.permute.xlu0 %1038
      %1040 = vrot.lane.b32.xlu0 %v1005, 96
      %v1041 = vpop.permute.xlu0 %1040
      %1042 = vrot.lane.b32.xlu0 %v1015, 96
      %v1043 = vpop.permute.xlu0 %1042
      %1044 = vrot.lane.b32.xlu0 %v1025, 96
      %v1045 = vpop.permute.xlu0 %1044
      %1056 = vst.msk [vmem:[#allocation2 + $0x4] sm:$0xf] %vm562, %v1027
      %1057 = vst.msk [vmem:[#allocation2 + $0x10] sm:$0xf] %vm562, %v1029
      %1058 = vst.msk [vmem:[#allocation2 + $0x1c] sm:$0xf] %vm562, %v1031
      %1059 = vst.msk [vmem:[#allocation2 + $0x28] sm:$0xf] %vm562, %v1033
      %1060 = vst.msk [vmem:[#allocation2 + $0x34] sm:$0xf] %vm562, %v1035
      %1061 = vst.msk [vmem:[#allocation2 + $0x40] sm:$0xf] %vm562, %v1037
      %1062 = vst.msk [vmem:[#allocation2 + $0x4c] sm:$0xf] %vm562, %v1039
      %1063 = vst.msk [vmem:[#allocation2 + $0x58] sm:$0xf] %vm562, %v1041
      %1064 = vst.msk [vmem:[#allocation2 + $0x64] sm:$0xf] %vm562, %v1043
      %1065 = vst.msk [vmem:[#allocation2 + $0x70] sm:$0xf] %vm562, %v1045
      %v1066 = vld [vmem:[%s183 + $0x8] sm:$0x8]
      %v1067 = vld [vmem:[%s183 + $0xc] sm:$0xf]
      %v1068 = vld [vmem:[%s183 + $0x10] sm:$0xf]
      %v1069 = vld [vmem:[%s183 + $0x14] sm:$0xf]
      %v1070 = vld [vmem:[%s183 + $0x18] sm:$0xf]
      %v1071 = vld [vmem:[%s183 + $0x1c] sm:$0xf]
      %v1072 = vld [vmem:[%s183 + $0x20] sm:$0xf]
      %v1073 = vld [vmem:[%s183 + $0x24] sm:$0xf]
      %v1074 = vld [vmem:[%s183 + $0x28] sm:$0xf]
      %v1075 = vld [vmem:[%s183 + $0x2c] sm:$0xf]
      %v1076 = vld [vmem:[%s183 + $0x30] sm:$0x7]
      %vm1088 = vcmask 1040384
      %vm1089 = vcmask 1044484
      %vm1090 = vmor %vm1088, %vm1089
      %v1091 = vrot.slane %v1066, 7
      %v1092 = vrot.slane %v1091, 4
      %v1093 = vrot.slane %v1067, 7
      %v1094 = vsel %vm1090, %v1092, %v1093
      %v1095 = vrot.slane %v1093, 4
      %v1096 = vrot.slane %v1068, 7
      %v1097 = vsel %vm1090, %v1095, %v1096
      %v1098 = vrot.slane %v1096, 4
      %v1099 = vrot.slane %v1069, 7
      %v1100 = vsel %vm1090, %v1098, %v1099
      %v1101 = vrot.slane %v1099, 4
      %v1102 = vrot.slane %v1070, 7
      %v1103 = vsel %vm1090, %v1101, %v1102
      %v1104 = vrot.slane %v1102, 4
      %v1105 = vrot.slane %v1071, 7
      %v1106 = vsel %vm1090, %v1104, %v1105
      %v1107 = vrot.slane %v1105, 4
      %v1108 = vrot.slane %v1072, 7
      %v1109 = vsel %vm1090, %v1107, %v1108
      %v1110 = vrot.slane %v1108, 4
      %v1111 = vrot.slane %v1073, 7
      %v1112 = vsel %vm1090, %v1110, %v1111
      %v1113 = vrot.slane %v1111, 4
      %v1114 = vrot.slane %v1074, 7
      %v1115 = vsel %vm1090, %v1113, %v1114
      %v1116 = vrot.slane %v1114, 4
      %v1117 = vrot.slane %v1075, 7
      %v1118 = vsel %vm1090, %v1116, %v1117
      %v1119 = vrot.slane %v1117, 4
      %v1120 = vrot.slane %v1076, 7
      %v1121 = vsel %vm1090, %v1119, %v1120
      %1132 = vst.msk [vmem:[#allocation2 + $0x8] sm:$0xf] %vm212, %v1094
      %1133 = vst.msk [vmem:[#allocation2 + $0x14] sm:$0xf] %vm212, %v1097
      %1134 = vst.msk [vmem:[#allocation2 + $0x20] sm:$0xf] %vm212, %v1100
      %1135 = vst.msk [vmem:[#allocation2 + $0x2c] sm:$0xf] %vm212, %v1103
      %1136 = vst.msk [vmem:[#allocation2 + $0x38] sm:$0xf] %vm212, %v1106
      %1137 = vst.msk [vmem:[#allocation2 + $0x44] sm:$0xf] %vm212, %v1109
      %1138 = vst.msk [vmem:[#allocation2 + $0x50] sm:$0xf] %vm212, %v1112
      %1139 = vst.msk [vmem:[#allocation2 + $0x5c] sm:$0xf] %vm212, %v1115
      %1140 = vst.msk [vmem:[#allocation2 + $0x68] sm:$0xf] %vm212, %v1118
      %1141 = vst.msk [vmem:[#allocation2 + $0x74] sm:$0xf] %vm212, %v1121
      %v1142 = vld [vmem:[#allocation2] sm:$0xff]
      %v1143 = vld [vmem:[#allocation2 + $0x8] sm:$0xf]
      %v1144 = vld [vmem:[#allocation2 + $0xc] sm:$0xff]
      %v1145 = vld [vmem:[#allocation2 + $0x14] sm:$0xf]
      %v1146 = vld [vmem:[#allocation2 + $0x18] sm:$0xff]
      %v1147 = vld [vmem:[#allocation2 + $0x20] sm:$0xf]
      %v1148 = vld [vmem:[#allocation2 + $0x24] sm:$0xff]
      %v1149 = vld [vmem:[#allocation2 + $0x2c] sm:$0xf]
      %v1150 = vld [vmem:[#allocation2 + $0x30] sm:$0xff]
      %v1151 = vld [vmem:[#allocation2 + $0x38] sm:$0xf]
      %v1152 = vld [vmem:[#allocation2 + $0x3c] sm:$0xff]
      %v1153 = vld [vmem:[#allocation2 + $0x44] sm:$0xf]
      %v1154 = vld [vmem:[#allocation2 + $0x48] sm:$0xff]
      %v1155 = vld [vmem:[#allocation2 + $0x50] sm:$0xf]
      %v1156 = vld [vmem:[#allocation2 + $0x54] sm:$0xff]
      %v1157 = vld [vmem:[#allocation2 + $0x5c] sm:$0xf]
      %v1158 = vld [vmem:[#allocation2 + $0x60] sm:$0xff]
      %v1159 = vld [vmem:[#allocation2 + $0x68] sm:$0xf]
      %v1160 = vld [vmem:[#allocation2 + $0x6c] sm:$0xff]
      %v1161 = vld [vmem:[#allocation2 + $0x74] sm:$0xf]
      %v1162 = vld [vmem:[%s1] sm:$0xf]
      %v1163 = vld [vmem:[%s1 + $0x4] sm:$0xf]
      %v1164 = vld [vmem:[%s1 + $0x8] sm:$0xf]
      %v1165 = vld [vmem:[%s1 + $0xc] sm:$0xf]
      %v1166 = vld [vmem:[%s1 + $0x10] sm:$0xf]
      %v1167 = vld [vmem:[%s1 + $0x14] sm:$0xf]
      %v1168 = vld [vmem:[%s1 + $0x18] sm:$0xf]
      %v1169 = vld [vmem:[%s1 + $0x1c] sm:$0xf]
      %v1170 = vld [vmem:[%s1 + $0x20] sm:$0xf]
      %v1171 = vld [vmem:[%s1 + $0x24] sm:$0xf]
      %v1172 = vld [vmem:[%s1 + $0x28] sm:$0xf]
      %v1173 = vld [vmem:[%s1 + $0x2c] sm:$0xf]
      %v1174 = vld [vmem:[%s1 + $0x30] sm:$0xf]
      %v1175 = vld [vmem:[%s1 + $0x34] sm:$0xf]
      %v1176 = vld [vmem:[%s1 + $0x38] sm:$0xf]
      %v1177 = vld [vmem:[%s1 + $0x3c] sm:$0xf]
      %v1178 = vld [vmem:[%s1 + $0x40] sm:$0xf]
      %v1179 = vld [vmem:[%s1 + $0x44] sm:$0xf]
      %v1180 = vld [vmem:[%s1 + $0x48] sm:$0xf]
      %v1181 = vld [vmem:[%s1 + $0x4c] sm:$0xf]
      %v1182 = vld [vmem:[%s1 + $0x50] sm:$0xf]
      %v1183 = vld [vmem:[%s1 + $0x54] sm:$0xf]
      %v1184 = vld [vmem:[%s1 + $0x58] sm:$0xf]
      %v1185 = vld [vmem:[%s1 + $0x5c] sm:$0xf]
      %v1186 = vld [vmem:[%s1 + $0x60] sm:$0xf]
      %v1187 = vld [vmem:[%s1 + $0x64] sm:$0xf]
      %v1188 = vld [vmem:[%s1 + $0x68] sm:$0xf]
      %v1189 = vld [vmem:[%s1 + $0x6c] sm:$0xf]
      %v1190 = vld [vmem:[%s1 + $0x70] sm:$0xf]
      %v1191 = vld [vmem:[%s1 + $0x74] sm:$0xf]
      %v1192 = vld [vmem:[%s1 + $0x78] sm:$0xf]
      %v1193 = vld [vmem:[%s1 + $0x7c] sm:$0xf]
      %v1194 = vld [vmem:[%s1 + $0x80] sm:$0xf]
      %v1195 = vld [vmem:[%s1 + $0x84] sm:$0xf]
      %v1196 = vld [vmem:[%s1 + $0x88] sm:$0xf]
      %v1197 = vld [vmem:[%s1 + $0x8c] sm:$0xf]
      %v1218 = vunpack.c.l.b16 %v1142
      %v1219 = vunpack.c.h.b16 %v1142
      %v1220 = vunpack.c.l.b16 %v1143
      %v1221 = vunpack.c.l.b16 %v1144
      %v1222 = vunpack.c.h.b16 %v1144
      %v1223 = vunpack.c.l.b16 %v1145
      %v1224 = vunpack.c.l.b16 %v1146
      %v1225 = vunpack.c.h.b16 %v1146
      %v1226 = vunpack.c.l.b16 %v1147
      %v1227 = vunpack.c.l.b16 %v1148
      %v1228 = vunpack.c.h.b16 %v1148
      %v1229 = vunpack.c.l.b16 %v1149
      %v1230 = vunpack.c.l.b16 %v1150
      %v1231 = vunpack.c.h.b16 %v1150
      %v1232 = vunpack.c.l.b16 %v1151
      %v1233 = vunpack.c.l.b16 %v1152
      %v1234 = vunpack.c.h.b16 %v1152
      %v1235 = vunpack.c.l.b16 %v1153
      %v1236 = vunpack.c.l.b16 %v1154
      %v1237 = vunpack.c.h.b16 %v1154
      %v1238 = vunpack.c.l.b16 %v1155
      %v1239 = vunpack.c.l.b16 %v1156
      %v1240 = vunpack.c.h.b16 %v1156
      %v1241 = vunpack.c.l.b16 %v1157
      %v1242 = vunpack.c.l.b16 %v1158
      %v1243 = vunpack.c.h.b16 %v1158
      %v1244 = vunpack.c.l.b16 %v1159
      %v1245 = vunpack.c.l.b16 %v1160
      %v1246 = vunpack.c.h.b16 %v1160
      %v1247 = vunpack.c.l.b16 %v1161
      %v1248 = vpack.c.b16 %v1221, %v1218
      %v1249 = vpack.c.b16 %v1222, %v1219
      %v1250 = vpack.c.b16 %v1223, %v1220
      %v1251 = vpack.c.b16 %v1227, %v1224
      %v1252 = vpack.c.b16 %v1228, %v1225
      %v1253 = vpack.c.b16 %v1229, %v1226
      %v1254 = vpack.c.b16 %v1233, %v1230
      %v1255 = vpack.c.b16 %v1234, %v1231
      %v1256 = vpack.c.b16 %v1235, %v1232
      %v1257 = vpack.c.b16 %v1239, %v1236
      %v1258 = vpack.c.b16 %v1240, %v1237
      %v1259 = vpack.c.b16 %v1241, %v1238
      %v1260 = vpack.c.b16 %v1245, %v1242
      %v1261 = vpack.c.b16 %v1246, %v1243
      %v1262 = vpack.c.b16 %v1247, %v1244
      %v1309 = vunpack.c.l.b16 %v1162
      %v1310 = vunpack.c.l.b16 %v1163
      %v1311 = vunpack.c.l.b16 %v1164
      %v1312 = vunpack.c.l.b16 %v1165
      %v1313 = vunpack.c.l.b16 %v1166
      %v1314 = vunpack.c.l.b16 %v1167
      %v1315 = vunpack.c.l.b16 %v1168
      %v1316 = vunpack.c.l.b16 %v1169
      %v1317 = vunpack.c.l.b16 %v1170
      %v1318 = vunpack.c.l.b16 %v1171
      %v1319 = vunpack.c.l.b16 %v1172
      %v1320 = vunpack.c.l.b16 %v1173
      %v1321 = vunpack.c.l.b16 %v1174
      %v1322 = vunpack.c.l.b16 %v1175
      %v1323 = vunpack.c.l.b16 %v1176
      %v1324 = vunpack.c.l.b16 %v1177
      %v1325 = vunpack.c.l.b16 %v1178
      %v1326 = vunpack.c.l.b16 %v1179
      %v1327 = vunpack.c.l.b16 %v1180
      %v1328 = vunpack.c.l.b16 %v1181
      %v1329 = vunpack.c.l.b16 %v1182
      %v1330 = vunpack.c.l.b16 %v1183
      %v1331 = vunpack.c.l.b16 %v1184
      %v1332 = vunpack.c.l.b16 %v1185
      %v1333 = vunpack.c.l.b16 %v1186
      %v1334 = vunpack.c.l.b16 %v1187
      %v1335 = vunpack.c.l.b16 %v1188
      %v1336 = vunpack.c.l.b16 %v1189
      %v1337 = vunpack.c.l.b16 %v1190
      %v1338 = vunpack.c.l.b16 %v1191
      %v1339 = vunpack.c.l.b16 %v1192
      %v1340 = vunpack.c.l.b16 %v1193
      %v1341 = vunpack.c.l.b16 %v1194
      %v1342 = vunpack.c.l.b16 %v1195
      %v1343 = vunpack.c.l.b16 %v1196
      %v1344 = vunpack.c.l.b16 %v1197
      %v1345 = vpack.c.b16 %v1310, %v1309
      %v1346 = vpack.c.b16 %v1312, %v1311
      %v1347 = vpack.c.b16 %v1314, %v1313
      %v1348 = vpack.c.b16 %v1316, %v1315
      %v1349 = vpack.c.b16 %v1318, %v1317
      %v1350 = vpack.c.b16 %v1320, %v1319
      %v1351 = vpack.c.b16 %v1322, %v1321
      %v1352 = vpack.c.b16 %v1324, %v1323
      %v1353 = vpack.c.b16 %v1326, %v1325
      %v1354 = vpack.c.b16 %v1328, %v1327
      %v1355 = vpack.c.b16 %v1330, %v1329
      %v1356 = vpack.c.b16 %v1332, %v1331
      %v1357 = vpack.c.b16 %v1334, %v1333
      %v1358 = vpack.c.b16 %v1336, %v1335
      %v1359 = vpack.c.b16 %v1338, %v1337
      %v1360 = vpack.c.b16 %v1340, %v1339
      %v1361 = vpack.c.b16 %v1342, %v1341
      %v1362 = vpack.c.b16 %v1344, %v1343
      %vm1381 = vcmask 261120
      %v1383 = vsel %vm1381, %v1250, 0
      %v1386 = vsel %vm1381, %v1253, 0
      %v1389 = vsel %vm1381, %v1256, 0
      %v1392 = vsel %vm1381, %v1259, 0
      %v1395 = vsel %vm1381, %v1262, 0
      %1397 = vmatprep.subr.bf16.mxu0 0
      %1398 = vmatpush1.bf16.msra.mxu0 %v1352
      %1399 = vmatprep.subr.bf16.mxu0 0
      %1400 = vmatpush1.bf16.msra.mxu0 %v1351
      %1401 = vmatprep.subr.bf16.mxu0 0
      %1402 = vmatpush1.bf16.msra.mxu0 %v1350
      %1403 = vmatprep.subr.bf16.mxu0 0
      %1404 = vmatpush1.bf16.msra.mxu0 %v1349
      %1405 = vmatprep.subr.bf16.mxu0 0
      %1406 = vmatpush1.bf16.msra.mxu0 %v1348
      %1407 = vmatprep.subr.bf16.mxu0 0
      %1408 = vmatpush1.bf16.msra.mxu0 %v1347
      %1409 = vmatprep.subr.bf16.mxu0 0
      %1410 = vmatpush1.bf16.msra.mxu0 %v1346
      %1411 = vmatprep.subr.bf16.mxu0 0
      %1412 = vmatpush1.bf16.msra.mxu0 %v1345
      %1413 = vmatprep.subr.bf16.mxu0 0
      %1414 = vmatpush2.bf16.msra.mxu0 %v1360
      %1415 = vmatprep.subr.bf16.mxu0 0
      %1416 = vmatpush2.bf16.msra.mxu0 %v1359
      %1417 = vmatprep.subr.bf16.mxu0 0
      %1418 = vmatpush2.bf16.msra.mxu0 %v1358
      %1419 = vmatprep.subr.bf16.mxu0 0
      %1420 = vmatpush2.bf16.msra.mxu0 %v1357
      %1421 = vmatprep.subr.bf16.mxu0 0
      %1422 = vmatpush2.bf16.msra.mxu0 %v1356
      %1423 = vmatprep.subr.bf16.mxu0 0
      %1424 = vmatpush2.bf16.msra.mxu0 %v1355
      %1425 = vmatprep.subr.bf16.mxu0 0
      %1426 = vmatpush2.bf16.msra.mxu0 %v1354
      %1427 = vmatprep.subr.bf16.mxu0 0
      %1428 = vmatpush2.bf16.msra.mxu0 %v1353
      %1429 = vmatprep.mubr.bf16.mxu0 %v1249
      %1430 = vmatmul.mubr.bf16.gmra.mxu0 %v1248
      %v1431 = vpop.f32.mrf.mxu0
      %v1432 = vadd.f32 0.0, %v1431
      %v1433 = vpop.f32.mrf.mxu0
      %v1434 = vpop.f32.mrf.mxu0
      %v1435 = vadd.f32 0.0, %v1434
      %v1436 = vpop.f32.mrf.mxu0
      %1437 = vmatprep.mubr.bf16.mxu0 %v1252
      %1438 = vmatmul.mubr.bf16.gmra.mxu0 %v1251
      %v1439 = vpop.f32.mrf.mxu0
      %v1440 = vadd.f32 0.0, %v1439
      %v1441 = vpop.f32.mrf.mxu0
      %v1442 = vpop.f32.mrf.mxu0
      %v1443 = vadd.f32 0.0, %v1442
      %v1444 = vpop.f32.mrf.mxu0
      %1445 = vmatprep.mubr.bf16.mxu0 %v1255
      %1446 = vmatmul.mubr.bf16.gmra.mxu0 %v1254
      %v1447 = vpop.f32.mrf.mxu0
      %v1448 = vadd.f32 0.0, %v1447
      %v1449 = vpop.f32.mrf.mxu0
      %v1450 = vpop.f32.mrf.mxu0
      %v1451 = vadd.f32 0.0, %v1450
      %v1452 = vpop.f32.mrf.mxu0
      %1453 = vmatprep.mubr.bf16.mxu0 %v1258
      %1454 = vmatmul.mubr.bf16.gmra.mxu0 %v1257
      %v1455 = vpop.f32.mrf.mxu0
      %v1456 = vadd.f32 0.0, %v1455
      %v1457 = vpop.f32.mrf.mxu0
      %v1458 = vpop.f32.mrf.mxu0
      %v1459 = vadd.f32 0.0, %v1458
      %v1460 = vpop.f32.mrf.mxu0
      %1461 = vmatprep.mubr.bf16.mxu0 %v1261
      %1462 = vmatmul.mubr.bf16.gmra.mxu0 %v1260
      %v1463 = vpop.f32.mrf.mxu0
      %v1464 = vadd.f32 0.0, %v1463
      %v1465 = vpop.f32.mrf.mxu0
      %v1466 = vpop.f32.mrf.mxu0
      %v1467 = vadd.f32 0.0, %v1466
      %v1468 = vpop.f32.mrf.mxu0
      %1469 = vdwg.mxu0
      %1470 = vmatprep.subr.bf16.mxu0 0
      %1471 = vmatpush1.bf16.msra.mxu0 0
      %1472 = vmatprep.subr.bf16.mxu0 0
      %1473 = vmatpush1.bf16.msra.mxu0 0
      %1474 = vmatprep.subr.bf16.mxu0 0
      %1475 = vmatpush1.bf16.msra.mxu0 0
      %1476 = vmatprep.subr.bf16.mxu0 0
      %1477 = vmatpush1.bf16.msra.mxu0 0
      %1478 = vmatprep.subr.bf16.mxu0 0
      %1479 = vmatpush1.bf16.msra.mxu0 0
      %1480 = vmatprep.subr.bf16.mxu0 0
      %1481 = vmatpush1.bf16.msra.mxu0 0
      %1482 = vmatprep.subr.bf16.mxu0 0
      %1483 = vmatpush1.bf16.msra.mxu0 %v1362
      %1484 = vmatprep.subr.bf16.mxu0 0
      %1485 = vmatpush1.bf16.msra.mxu0 %v1361
      %1486 = vmatprep.subr.bf16.mxu0 0
      %1487 = vmatpush2.bf16.msra.mxu0 0
      %1488 = vmatprep.subr.bf16.mxu0 0
      %1489 = vmatpush2.bf16.msra.mxu0 0
      %1490 = vmatprep.subr.bf16.mxu0 0
      %1491 = vmatpush2.bf16.msra.mxu0 0
      %1492 = vmatprep.subr.bf16.mxu0 0
      %1493 = vmatpush2.bf16.msra.mxu0 0
      %1494 = vmatprep.subr.bf16.mxu0 0
      %1495 = vmatpush2.bf16.msra.mxu0 0
      %1496 = vmatprep.subr.bf16.mxu0 0
      %1497 = vmatpush2.bf16.msra.mxu0 0
      %1498 = vmatprep.subr.bf16.mxu0 0
      %1499 = vmatpush2.bf16.msra.mxu0 0
      %1500 = vmatprep.subr.bf16.mxu0 0
      %1501 = vmatpush2.bf16.msra.mxu0 0
      %1502 = vmatprep.mubr.bf16.mxu0 0
      %1503 = vmatmul.mubr.bf16.gmra.mxu0 %v1383
      %v1504 = vpop.f32.mrf.mxu0
      %v1505 = vadd.f32 %v1432, %v1504
      %v1506 = vpop.f32.mrf.mxu0
      %v1507 = vpop.f32.mrf.mxu0
      %v1508 = vadd.f32 %v1435, %v1507
      %v1509 = vpop.f32.mrf.mxu0
      %1510 = vmatprep.mubr.bf16.mxu0 0
      %1511 = vmatmul.mubr.bf16.gmra.mxu0 %v1386
      %v1512 = vpop.f32.mrf.mxu0
      %v1513 = vadd.f32 %v1440, %v1512
      %v1514 = vpop.f32.mrf.mxu0
      %v1515 = vpop.f32.mrf.mxu0
      %v1516 = vadd.f32 %v1443, %v1515
      %v1517 = vpop.f32.mrf.mxu0
      %1518 = vmatprep.mubr.bf16.mxu0 0
      %1519 = vmatmul.mubr.bf16.gmra.mxu0 %v1389
      %v1520 = vpop.f32.mrf.mxu0
      %v1521 = vadd.f32 %v1448, %v1520
      %v1522 = vpop.f32.mrf.mxu0
      %v1523 = vpop.f32.mrf.mxu0
      %v1524 = vadd.f32 %v1451, %v1523
      %v1525 = vpop.f32.mrf.mxu0
      %1526 = vmatprep.mubr.bf16.mxu0 0
      %1527 = vmatmul.mubr.bf16.gmra.mxu0 %v1392
      %v1528 = vpop.f32.mrf.mxu0
      %v1529 = vadd.f32 %v1456, %v1528
      %v1530 = vpop.f32.mrf.mxu0
      %v1531 = vpop.f32.mrf.mxu0
      %v1532 = vadd.f32 %v1459, %v1531
      %v1533 = vpop.f32.mrf.mxu0
      %1534 = vmatprep.mubr.bf16.mxu0 0
      %1535 = vmatmul.mubr.bf16.gmra.mxu0 %v1395
      %v1536 = vpop.f32.mrf.mxu0
      %v1537 = vadd.f32 %v1464, %v1536
      %v1538 = vpop.f32.mrf.mxu0
      %v1539 = vpop.f32.mrf.mxu0
      %v1540 = vadd.f32 %v1467, %v1539
      %v1541 = vpop.f32.mrf.mxu0
      %1542 = vdwg.mxu0
      %v1543 = vadd.f32 %v200, %v1505
      %v1544 = vadd.f32 %v200, %v1508
      %v1545 = vadd.f32 %v200, %v1513
      %v1546 = vadd.f32 %v200, %v1516
      %v1547 = vadd.f32 %v200, %v1521
      %v1548 = vadd.f32 %v200, %v1524
      %v1549 = vadd.f32 %v200, %v1529
      %v1550 = vadd.f32 %v200, %v1532
      %v1551 = vadd.f32 %v200, %v1537
      %v1552 = vadd.f32 %v200, %v1540
      %v1553 = vmax.f32 %v1543, 0.0
      %v1554 = vmax.f32 %v1544, 0.0
      %v1555 = vmax.f32 %v1545, 0.0
      %v1556 = vmax.f32 %v1546, 0.0
      %v1557 = vmax.f32 %v1547, 0.0
      %v1558 = vmax.f32 %v1548, 0.0
      %v1559 = vmax.f32 %v1549, 0.0
      %v1560 = vmax.f32 %v1550, 0.0
      %v1561 = vmax.f32 %v1551, 0.0
      %v1562 = vmax.f32 %v1552, 0.0
      %v1563 = vpack.c.bf16 %v1554, %v1553
      %v1564 = vpack.c.bf16 %v1556, %v1555
      %v1565 = vpack.c.bf16 %v1558, %v1557
      %v1566 = vpack.c.bf16 %v1560, %v1559
      %v1567 = vpack.c.bf16 %v1562, %v1561
      %v1573 = vunpack.c.l.b16 %v1563
      %v1574 = vunpack.c.h.b16 %v1563
      %v1575 = vunpack.c.l.b16 %v1564
      %v1576 = vunpack.c.h.b16 %v1564
      %v1577 = vunpack.c.l.b16 %v1565
      %v1578 = vunpack.c.h.b16 %v1565
      %v1579 = vunpack.c.l.b16 %v1566
      %v1580 = vunpack.c.h.b16 %v1566
      %v1581 = vunpack.c.l.b16 %v1567
      %v1582 = vunpack.c.h.b16 %v1567
      %v1583 = vpack.c.b16 %v1573, %v1573
      %v1584 = vpack.c.b16 %v1574, %v1574
      %v1585 = vpack.c.b16 %v1575, %v1575
      %v1586 = vpack.c.b16 %v1576, %v1576
      %v1587 = vpack.c.b16 %v1577, %v1577
      %v1588 = vpack.c.b16 %v1578, %v1578
      %v1589 = vpack.c.b16 %v1579, %v1579
      %v1590 = vpack.c.b16 %v1580, %v1580
      %v1591 = vpack.c.b16 %v1581, %v1581
      %v1592 = vpack.c.b16 %v1582, %v1582
      %1603 = vst [vmem:[%s192] sm:$0xf] %v1583
      %1604 = vst [vmem:[%s192 + $0x4] sm:$0xf] %v1584
      %1605 = vst [vmem:[%s192 + $0x8] sm:$0xf] %v1585
      %1606 = vst [vmem:[%s192 + $0xc] sm:$0xf] %v1586
      %1607 = vst [vmem:[%s192 + $0x10] sm:$0xf] %v1587
      %1608 = vst [vmem:[%s192 + $0x14] sm:$0xf] %v1588
      %1609 = vst [vmem:[%s192 + $0x18] sm:$0xf] %v1589
      %1610 = vst [vmem:[%s192 + $0x1c] sm:$0xf] %v1590
      %1611 = vst [vmem:[%s192 + $0x20] sm:$0xf] %v1591
      %1612 = vst [vmem:[%s192 + $0x24] sm:$0xf] %v1592
      %s1613 = smul.u32 10, %s19
      %p1614 = scmp.lt.s32.totalorder %s18, 1
      %s1615 = scalar_select %p1614, %s18, 1
      %p1616 = scmp.lt.s32.totalorder %s1613, 9
      %s1617 = scalar_select %p1616, %s1613, 9
      %s1618 = smul.addr %s1615, 10
      %s1619 = sadd.s32 %s1617, %s1618
      %s1620 = smul.addr %s1619, 4
      %s1621 = scalar_lea.vmem %s3, %s1620
      // Predicated region
      $region33: #{conv_autoencoder_forward.12} parent=31 // pred_check
        %p1622 = pneg %p114
      $region34: #{conv_autoencoder_forward.12} parent=31 // pred_check_branch
        %1624 = sbr.rel (%p1622) target = $region36
      $region35: #{conv_autoencoder_forward.12} parent=31 // pred_region
        %s1625 = smul.u32 10, %s19
      $region36: #{conv_autoencoder_forward.12} parent=31 // pred_fallthru
        _
    $region32: #{conv_autoencoder_forward.12} parent=5 // pred_fallthru
      _
    %p1626 = scmp.le.s32.totalorder 2, %s9
    // Predicated region
    $region37: #{conv_autoencoder_forward.12} parent=5 // pred_check
      %p1627 = pneg %p1626
    $region38: #{conv_autoencoder_forward.12} parent=5 // pred_check_branch
      %1629 = sbr.rel (%p1627) target = $region40
    $region39: #{conv_autoencoder_forward.12} parent=5 // pred_region
      %s1630 = ssub.s32 %s9, 2
      // Predicated region
      $region41: #{conv_autoencoder_forward.12} parent=39 // pred_check
        %p1631 = pneg %p120
      $region42: #{conv_autoencoder_forward.12} parent=39 // pred_check_branch
        %1633 = sbr.rel (%p1631) target = $region44
      $region43: #{conv_autoencoder_forward.12} parent=39 // pred_region
        %s1634 = smul.u32 10, %s21
        %p1635 = scmp.lt.s32.totalorder %s20, 1
        %s1636 = scalar_select %p1635, %s20, 1
        %p1637 = scmp.lt.s32.totalorder %s1634, 9
        %s1638 = scalar_select %p1637, %s1634, 9
        %s1639 = smul.addr %s1636, 10
        %s1640 = sadd.s32 %s1638, %s1639
        %s1641 = smul.addr %s1640, 4
        %s1642 = scalar_lea.vmem %s3, %s1641
      $region44: #{conv_autoencoder_forward.12} parent=39 // pred_fallthru
        _
    $region40: #{conv_autoencoder_forward.12} parent=5 // pred_fallthru
      _
  $region6: #{conv_autoencoder_forward.12} parent=0 // loop_footer
    %s13 = sadd.s32 1, %s9
  $region7: #{conv_autoencoder_forward.12} parent=0 // loop_footer_branch
    %8 = sbr.rel target = $region3
  $region8: #{conv_autoencoder_forward.12} parent=0 // loop_exit
    _

// kernel: conv_autoencoder_forward.13
$region0: #{conv_autoencoder_forward.13}
  #allocation0 [shape = 'u32[]', space=smem, size = 0x4, offset = 0x4, fixed_abs, tag = 'smem constant byte address 0x4 - core index']
  #allocation1 [shape = 'u32[144,128]{1,0:T(1,128)}', space=vmem, size = 0x12000, scoped, tag = 'internal scratch']
  %s0 = inlined_call_operand.vmem [shape: bf16[2,32,342], index: 0, kind: input, shape index: {}]
  %s1 = inlined_call_operand.vmem [shape: bf16[36,32], index: 1, kind: input, shape index: {}]
  %s2 = inlined_call_operand.vmem [shape: f32[4,1], index: 2, kind: input, shape index: {}]
  %s3 = inlined_call_operand.vmem [shape: f32[2,4,288], index: 3, kind: output, shape index: {}]
  %s4 = sld [smem:[#allocation0]]
  $region45: #{conv_autoencoder_forward.13} parent=0
    _
  %s6 = ssub.s32 1, %s4
  %s7 = scalar_select 0, %s6, %s4
  loop: start=0, step=1, limit=4
  $region2: #{conv_autoencoder_forward.13} parent=0 // loop_pre_header
    _
  $region3: #{conv_autoencoder_forward.13} parent=0 // loop_header
    %s9 = sphi 0, %s13
    %p10 = scmp.ge.s32.totalorder %s9, 4
    %s19 = sphi 0, %s21
    %s22 = sphi 0, %s19
    %s23 = sphi 0, %s22
    %s39 = sphi 0, %s23
    %s43 = sphi 0, %s43
    %s45 = sphi 0, %s43
    %s46 = sphi 0, %s45
    %s60 = sphi 0, %s46
    %s64 = sphi 0, %s64
    %s66 = sphi 0, %s64
    %s67 = sphi 0, %s66
    %s81 = sphi 0, %s67
    %s87 = sphi 0, %s89
    %s90 = sphi 0, %s87
    %s91 = sphi 0, %s90
    %s107 = sphi 0, %s91
  $region4: #{conv_autoencoder_forward.13} parent=0 // loop_header_branch
    %12 = sbr.rel (%p10) target = $region8
  $region5: #{conv_autoencoder_forward.13} parent=0 // loop_body
    %s14 = ssub.s32 %s9, 1
    %s15 = ssub.s32 %s9, 2
    %s16 = sadd.s32 %s9, 1
    %s17 = ssub.s32 %s9, %s16
    %p18 = scmp.eq.s32.totalorder %s17, 0
    %s20 = sadd.s32 %s19, 1
    %s21 = scalar_select %p18, %s19, %s20
    %p24 = pneg %p18
    %p25 = scmp.eq.s32.totalorder %s9, 1
    %p26 = por %p24, %p25
    %p27 = scmp.ne.s32.totalorder %s19, %s22
    %p28 = scmp.eq.s32.totalorder %s9, 0
    %p29 = por %p27, %p28
    %p30 = scmp.ne.s32.totalorder %s19, %s22
    %p31 = scmp.eq.s32.totalorder %s14, 1
    %p32 = por %p30, %p31
    %p33 = scmp.ne.s32.totalorder %s22, %s23
    %p34 = scmp.eq.s32.totalorder %s14, 0
    %p35 = por %p33, %p34
    %p36 = scmp.ne.s32.totalorder %s22, %s23
    %p37 = scmp.eq.s32.totalorder %s15, 1
    %p38 = por %p36, %p37
    %p40 = scmp.ne.s32.totalorder %s23, %s39
    %p41 = scmp.eq.s32.totalorder %s15, 0
    %p42 = por %p40, %p41
    %s44 = sadd.s32 %s43, 1
    %p47 = scmp.eq.s32.totalorder %s9, 1
    %p48 = scmp.ne.s32.totalorder %s43, %s45
    %p49 = scmp.eq.s32.totalorder %s9, 0
    %p50 = por %p48, %p49
    %p51 = scmp.ne.s32.totalorder %s43, %s45
    %p52 = scmp.eq.s32.totalorder %s14, 1
    %p53 = por %p51, %p52
    %p54 = scmp.ne.s32.totalorder %s45, %s46
    %p55 = scmp.eq.s32.totalorder %s14, 0
    %p56 = por %p54, %p55
    %p57 = scmp.ne.s32.totalorder %s45, %s46
    %p58 = scmp.eq.s32.totalorder %s15, 1
    %p59 = por %p57, %p58
    %p61 = scmp.ne.s32.totalorder %s46, %s60
    %p62 = scmp.eq.s32.totalorder %s15, 0
    %p63 = por %p61, %p62
    %s65 = sadd.s32 %s64, 1
    %p68 = scmp.eq.s32.totalorder %s9, 1
    %p69 = scmp.ne.s32.totalorder %s64, %s66
    %p70 = scmp.eq.s32.totalorder %s9, 0
    %p71 = por %p69, %p70
    %p72 = scmp.ne.s32.totalorder %s64, %s66
    %p73 = scmp.eq.s32.totalorder %s14, 1
    %p74 = por %p72, %p73
    %p75 = scmp.ne.s32.totalorder %s66, %s67
    %p76 = scmp.eq.s32.totalorder %s14, 0
    %p77 = por %p75, %p76
    %p78 = scmp.ne.s32.totalorder %s66, %s67
    %p79 = scmp.eq.s32.totalorder %s15, 1
    %p80 = por %p78, %p79
    %p82 = scmp.ne.s32.totalorder %s67, %s81
    %p83 = scmp.eq.s32.totalorder %s15, 0
    %p84 = por %p82, %p83
    %s85 = ssub.s32 %s9, %s16
    %p86 = scmp.eq.s32.totalorder %s85, 0
    %s88 = sadd.s32 %s87, 1
    %s89 = scalar_select %p86, %s87, %s88
    %p92 = pneg %p86
    %p93 = scmp.eq.s32.totalorder %s9, 1
    %p94 = por %p92, %p93
    %p95 = scmp.ne.s32.totalorder %s87, %s90
    %p96 = scmp.eq.s32.totalorder %s9, 0
    %p97 = por %p95, %p96
    %p98 = scmp.ne.s32.totalorder %s87, %s90
    %p99 = scmp.eq.s32.totalorder %s14, 1
    %p100 = por %p98, %p99
    %p101 = scmp.ne.s32.totalorder %s90, %s91
    %p102 = scmp.eq.s32.totalorder %s14, 0
    %p103 = por %p101, %p102
    %p104 = scmp.ne.s32.totalorder %s90, %s91
    %p105 = scmp.eq.s32.totalorder %s15, 1
    %p106 = por %p104, %p105
    %p108 = scmp.ne.s32.totalorder %s91, %s107
    %p109 = scmp.eq.s32.totalorder %s15, 0
    %p110 = por %p108, %p109
    %p111 = scmp.le.s32.totalorder 1, %s9
    %p112 = scmp.lt.s32.totalorder %s9, 3
    %p113 = pnand %p111, %p112
    %p114 = pneg %p113
    // Predicated region
    $region9: #{conv_autoencoder_forward.13} parent=5 // pred_check
      _
    $region10: #{conv_autoencoder_forward.13} parent=5 // pred_check_branch
      %116 = sbr.rel (%p113) target = $region12
    $region11: #{conv_autoencoder_forward.13} parent=5 // pred_region
      %s117 = ssub.s32 %s9, 1
      // Predicated region
      $region13: #{conv_autoencoder_forward.13} parent=11 // pred_check
        %p118 = pneg %p56
      $region14: #{conv_autoencoder_forward.13} parent=11 // pred_check_branch
        %120 = sbr.rel (%p118) target = $region16
      $region15: #{conv_autoencoder_forward.13} parent=11 // pred_region
        _
      $region16: #{conv_autoencoder_forward.13} parent=11 // pred_fallthru
        _
      // Predicated region
      $region17: #{conv_autoencoder_forward.13} parent=11 // pred_check
        %p121 = pneg %p77
      $region18: #{conv_autoencoder_forward.13} parent=11 // pred_check_branch
        %123 = sbr.rel (%p121) target = $region20
      $region19: #{conv_autoencoder_forward.13} parent=11 // pred_region
        _
      $region20: #{conv_autoencoder_forward.13} parent=11 // pred_fallthru
        _
    $region12: #{conv_autoencoder_forward.13} parent=5 // pred_fallthru
      _
    %p124 = scmp.lt.s32.totalorder %s9, 2
    // Predicated region
    $region21: #{conv_autoencoder_forward.13} parent=5 // pred_check
      %p125 = pneg %p124
    $region22: #{conv_autoencoder_forward.13} parent=5 // pred_check_branch
      %127 = sbr.rel (%p125) target = $region24
    $region23: #{conv_autoencoder_forward.13} parent=5 // pred_region
      // Predicated region
      $region25: #{conv_autoencoder_forward.13} parent=23 // pred_check
        %p128 = pneg %p29
      $region26: #{conv_autoencoder_forward.13} parent=23 // pred_check_branch
        %130 = sbr.rel (%p128) target = $region28
      $region27: #{conv_autoencoder_forward.13} parent=23 // pred_region
        %p131 = scmp.lt.s32.totalorder %s9, 1
        %s132 = scalar_select %p131, %s9, 1
        %s133 = smul.addr %s132, 12
        %s134 = smul.addr %s133, 4
        %s135 = scalar_lea.vmem %s0, %s134
      $region28: #{conv_autoencoder_forward.13} parent=23 // pred_fallthru
        _
    $region24: #{conv_autoencoder_forward.13} parent=5 // pred_fallthru
      _
    %p136 = scmp.le.s32.totalorder 1, %s9
    %p137 = scmp.lt.s32.totalorder %s9, 3
    %p138 = pnand %p136, %p137
    %p139 = pneg %p138
    // Predicated region
    $region29: #{conv_autoencoder_forward.13} parent=5 // pred_check
      _
    $region30: #{conv_autoencoder_forward.13} parent=5 // pred_check_branch
      %141 = sbr.rel (%p138) target = $region32
    $region31: #{conv_autoencoder_forward.13} parent=5 // pred_region
      %s142 = ssub.s32 %s9, 1
      %p143 = scmp.lt.s32.totalorder %s14, 1
      %s144 = scalar_select %p143, %s14, 1
      %s145 = smul.addr %s144, 12
      %s146 = smul.addr %s145, 4
      %s147 = scalar_lea.vmem %s0, %s146
      %p148 = pneg %p35
      %p149 = pneg %p32
      %p150 = pneg %p56
      %p151 = pneg %p53
      %p152 = pneg %p77
      %p153 = pneg %p74
      %p154 = pneg %p103
      %p155 = pneg %p100
      %p156 = scmp.lt.s32.totalorder %s14, 1
      %s157 = scalar_select %p156, %s14, 1
      %s158 = smul.addr %s157, 3
      %s159 = smul.addr %s158, 4
      %s160 = scalar_lea.vmem %s3, %s159
      %p161 = scmp.lt.s32.totalorder %s14, 1
      %s162 = scalar_select %p161, %s14, 1
      %s163 = smul.addr %s162, 12
      %s164 = smul.addr %s163, 4
      %s165 = scalar_lea.vmem %s0, %s164
      %p166 = scmp.lt.s32.totalorder %s14, 1
      %s167 = scalar_select %p166, %s14, 1
      %s168 = smul.addr %s167, 3
      %s169 = smul.addr %s168, 4
      %s170 = scalar_lea.vmem %s3, %s169
      %v172 = vld [vmem:[%s2] sm:$0xf]
      %174 = vset.pattern.permute.xlu0 0
      %175 = vperm.xlu0 %174, %v172
      %v176 = vpop.permute.xlu0 %175
      %v178 = vld [vmem:[%s1] sm:$0x3]
      %v179 = vld [vmem:[%s165] sm:$0xff]
      %v180 = vld [vmem:[%s165 + $0x8] sm:$0xf]
      %v181 = vld [vmem:[%s165 + $0xc] sm:$0xff]
      %v182 = vld [vmem:[%s165 + $0x14] sm:$0xf]
      %v183 = vld [vmem:[%s165 + $0x18] sm:$0xff]
      %v184 = vld [vmem:[%s165 + $0x20] sm:$0xf]
      %v185 = vld [vmem:[%s165 + $0x24] sm:$0xff]
      %v186 = vld [vmem:[%s165 + $0x2c] sm:$0xf]
      %v195 = vunpack.c.l.b16 %v179
      %v196 = vunpack.c.h.b16 %v179
      %v197 = vunpack.c.l.b16 %v180
      %v198 = vunpack.c.l.b16 %v181
      %v199 = vunpack.c.h.b16 %v181
      %v200 = vunpack.c.l.b16 %v182
      %v201 = vunpack.c.l.b16 %v183
      %v202 = vunpack.c.h.b16 %v183
      %v203 = vunpack.c.l.b16 %v184
      %v204 = vunpack.c.l.b16 %v185
      %v205 = vunpack.c.h.b16 %v185
      %v206 = vunpack.c.l.b16 %v186
      %v207 = vpack.c.b16 %v198, %v195
      %v208 = vpack.c.b16 %v199, %v196
      %v209 = vpack.c.b16 %v200, %v197
      %v210 = vpack.c.b16 %v204, %v201
      %v211 = vpack.c.b16 %v205, %v202
      %v212 = vpack.c.b16 %v206, %v203
      %vm219 = vcmask 261120
      %v221 = vsel %vm219, %v178, 0
      %223 = vmatprep.subr.bf16.mxu0 0
      %224 = vmatpush1.bf16.msra.mxu0 0
      %225 = vmatprep.subr.bf16.mxu0 0
      %226 = vmatpush1.bf16.msra.mxu0 0
      %227 = vmatprep.subr.bf16.mxu0 0
      %228 = vmatpush1.bf16.msra.mxu0 0
      %229 = vmatprep.subr.bf16.mxu0 0
      %230 = vmatpush1.bf16.msra.mxu0 0
      %231 = vmatprep.subr.bf16.mxu0 0
      %232 = vmatpush1.bf16.msra.mxu0 0
      %233 = vmatprep.subr.bf16.mxu0 0
      %234 = vmatpush1.bf16.msra.mxu0 0
      %235 = vmatprep.subr.bf16.mxu0 %v211
      %236 = vmatpush1.bf16.msra.mxu0 %v210
      %237 = vmatprep.subr.bf16.mxu0 %v208
      %238 = vmatpush1.bf16.msra.mxu0 %v207
      %239 = vmatprep.subr.bf16.mxu0 0
      %240 = vmatpush2.bf16.msra.mxu0 0
      %241 = vmatprep.subr.bf16.mxu0 0
      %242 = vmatpush2.bf16.msra.mxu0 0
      %243 = vmatprep.subr.bf16.mxu0 0
      %244 = vmatpush2.bf16.msra.mxu0 0
      %245 = vmatprep.subr.bf16.mxu0 0
      %246 = vmatpush2.bf16.msra.mxu0 0
      %247 = vmatprep.subr.bf16.mxu0 0
      %248 = vmatpush2.bf16.msra.mxu0 0
      %249 = vmatprep.subr.bf16.mxu0 0
      %250 = vmatpush2.bf16.msra.mxu0 0
      %251 = vmatprep.subr.bf16.mxu0 0
      %252 = vmatpush2.bf16.msra.mxu0 0
      %253 = vmatprep.subr.bf16.mxu0 0
      %254 = vmatpush2.bf16.msra.mxu0 0
      %255 = vmatprep.mubr.bf16.mxu0 0
      %256 = vmatmul.mubr.bf16.gmra.mxu0 %v221
      %v257 = vpop.f32.mrf.mxu0
      %v258 = vadd.f32 0.0, %v257
      %v259 = vpop.f32.mrf.mxu0
      %v260 = vadd.f32 0.0, %v259
      %v261 = vpop.f32.mrf.mxu0
      %v262 = vpop.f32.mrf.mxu0
      %263 = vdwg.mxu0
      %264 = vmatprep.subr.bf16.mxu0 0
      %265 = vmatpush1.bf16.msra.mxu0 0
      %266 = vmatprep.subr.bf16.mxu0 0
      %267 = vmatpush1.bf16.msra.mxu0 0
      %268 = vmatprep.subr.bf16.mxu0 0
      %269 = vmatpush1.bf16.msra.mxu0 0
      %270 = vmatprep.subr.bf16.mxu0 0
      %271 = vmatpush1.bf16.msra.mxu0 0
      %272 = vmatprep.subr.bf16.mxu0 0
      %273 = vmatpush1.bf16.msra.mxu0 0
      %274 = vmatprep.subr.bf16.mxu0 0
      %275 = vmatpush1.bf16.msra.mxu0 0
      %276 = vmatprep.subr.bf16.mxu0 0
      %277 = vmatpush1.bf16.msra.mxu0 %v212
      %278 = vmatprep.subr.bf16.mxu0 0
      %279 = vmatpush1.bf16.msra.mxu0 %v209
      %280 = vmatprep.subr.bf16.mxu0 0
      %281 = vmatpush2.bf16.msra.mxu0 0
      %282 = vmatprep.subr.bf16.mxu0 0
      %283 = vmatpush2.bf16.msra.mxu0 0
      %284 = vmatprep.subr.bf16.mxu0 0
      %285 = vmatpush2.bf16.msra.mxu0 0
      %286 = vmatprep.subr.bf16.mxu0 0
      %287 = vmatpush2.bf16.msra.mxu0 0
      %288 = vmatprep.subr.bf16.mxu0 0
      %289 = vmatpush2.bf16.msra.mxu0 0
      %290 = vmatprep.subr.bf16.mxu0 0
      %291 = vmatpush2.bf16.msra.mxu0 0
      %292 = vmatprep.subr.bf16.mxu0 0
      %293 = vmatpush2.bf16.msra.mxu0 0
      %294 = vmatprep.subr.bf16.mxu0 0
      %295 = vmatpush2.bf16.msra.mxu0 0
      %296 = vmatprep.mubr.bf16.mxu0 0
      %297 = vmatmul.mubr.bf16.gmra.mxu0 %v221
      %v298 = vpop.f32.mrf.mxu0
      %v299 = vadd.f32 0.0, %v298
      %v300 = vpop.f32.mrf.mxu0
      %v301 = vpop.f32.mrf.mxu0
      %v302 = vpop.f32.mrf.mxu0
      %303 = vdwg.mxu0
      %v304 = vadd.f32 %v176, %v258
      %v305 = vadd.f32 %v176, %v260
      %v306 = vadd.f32 %v176, %v299
      %v307 = vld [vmem:[%s1] sm:$0xc]
      %v309 = vunpack.c.l.b16 %v307
      %v310 = vpack.c.b16 %v309, %v309
      %v311 = vrot.slane %v310, 2
      %312 = vrot.lane.b32.xlu0 %v207, 127
      %v313 = vpop.permute.xlu0 %312
      %314 = vrot.lane.b32.xlu0 %v208, 127
      %v315 = vpop.permute.xlu0 %314
      %316 = vrot.lane.b32.xlu0 %v209, 127
      %v317 = vpop.permute.xlu0 %316
      %318 = vrot.lane.b32.xlu0 %v210, 127
      %v319 = vpop.permute.xlu0 %318
      %320 = vrot.lane.b32.xlu0 %v211, 127
      %v321 = vpop.permute.xlu0 %320
      %322 = vrot.lane.b32.xlu0 %v212, 127
      %v323 = vpop.permute.xlu0 %322
      %vm324 = vcmask 1039360
      %v325 = vsel %vm324, %v313, %v315
      %v326 = vsel %vm324, %v315, %v317
      %v327 = vsel %vm324, %v319, %v321
      %v328 = vsel %vm324, %v321, %v323
      %v336 = vsel %vm219, %v311, 0
      %338 = vmatprep.subr.bf16.mxu0 0
      %339 = vmatpush1.bf16.msra.mxu0 0
      %340 = vmatprep.subr.bf16.mxu0 0
      %341 = vmatpush1.bf16.msra.mxu0 0
      %342 = vmatprep.subr.bf16.mxu0 0
      %343 = vmatpush1.bf16.msra.mxu0 0
      %344 = vmatprep.subr.bf16.mxu0 0
      %345 = vmatpush1.bf16.msra.mxu0 0
      %346 = vmatprep.subr.bf16.mxu0 0
      %347 = vmatpush1.bf16.msra.mxu0 0
      %348 = vmatprep.subr.bf16.mxu0 0
      %349 = vmatpush1.bf16.msra.mxu0 0
      %350 = vmatprep.subr.bf16.mxu0 %v328
      %351 = vmatpush1.bf16.msra.mxu0 %v327
      %352 = vmatprep.subr.bf16.mxu0 %v326
      %353 = vmatpush1.bf16.msra.mxu0 %v325
      %354 = vmatprep.subr.bf16.mxu0 0
      %355 = vmatpush2.bf16.msra.mxu0 0
      %356 = vmatprep.subr.bf16.mxu0 0
      %357 = vmatpush2.bf16.msra.mxu0 0
      %358 = vmatprep.subr.bf16.mxu0 0
      %359 = vmatpush2.bf16.msra.mxu0 0
      %360 = vmatprep.subr.bf16.mxu0 0
      %361 = vmatpush2.bf16.msra.mxu0 0
      %362 = vmatprep.subr.bf16.mxu0 0
      %363 = vmatpush2.bf16.msra.mxu0 0
      %364 = vmatprep.subr.bf16.mxu0 0
      %365 = vmatpush2.bf16.msra.mxu0 0
      %366 = vmatprep.subr.bf16.mxu0 0
      %367 = vmatpush2.bf16.msra.mxu0 0
      %368 = vmatprep.subr.bf16.mxu0 0
      %369 = vmatpush2.bf16.msra.mxu0 0
      %370 = vmatprep.mubr.bf16.mxu0 0
      %371 = vmatmul.mubr.bf16.gmra.mxu0 %v336
      %v372 = vpop.f32.mrf.mxu0
      %v373 = vadd.f32 0.0, %v372
      %v374 = vpop.f32.mrf.mxu0
      %v375 = vadd.f32 0.0, %v374
      %v376 = vpop.f32.mrf.mxu0
      %v377 = vpop.f32.mrf.mxu0
      %378 = vdwg.mxu0
      %379 = vmatprep.subr.bf16.mxu0 0
      %380 = vmatpush1.bf16.msra.mxu0 0
      %381 = vmatprep.subr.bf16.mxu0 0
      %382 = vmatpush1.bf16.msra.mxu0 0
      %383 = vmatprep.subr.bf16.mxu0 0
      %384 = vmatpush1.bf16.msra.mxu0 0
      %385 = vmatprep.subr.bf16.mxu0 0
      %386 = vmatpush1.bf16.msra.mxu0 0
      %387 = vmatprep.subr.bf16.mxu0 0
      %388 = vmatpush1.bf16.msra.mxu0 0
      %389 = vmatprep.subr.bf16.mxu0 0
      %390 = vmatpush1.bf16.msra.mxu0 0
      %391 = vmatprep.subr.bf16.mxu0 0
      %392 = vmatpush1.bf16.msra.mxu0 %v323
      %393 = vmatprep.subr.bf16.mxu0 0
      %394 = vmatpush1.bf16.msra.mxu0 %v317
      %395 = vmatprep.subr.bf16.mxu0 0
      %396 = vmatpush2.bf16.msra.mxu0 0
      %397 = vmatprep.subr.bf16.mxu0 0
      %398 = vmatpush2.bf16.msra.mxu0 0
      %399 = vmatprep.subr.bf16.mxu0 0
      %400 = vmatpush2.bf16.msra.mxu0 0
      %401 = vmatprep.subr.bf16.mxu0 0
      %402 = vmatpush2.bf16.msra.mxu0 0
      %403 = vmatprep.subr.bf16.mxu0 0
      %404 = vmatpush2.bf16.msra.mxu0 0
      %405 = vmatprep.subr.bf16.mxu0 0
      %406 = vmatpush2.bf16.msra.mxu0 0
      %407 = vmatprep.subr.bf16.mxu0 0
      %408 = vmatpush2.bf16.msra.mxu0 0
      %409 = vmatprep.subr.bf16.mxu0 0
      %410 = vmatpush2.bf16.msra.mxu0 0
      %411 = vmatprep.mubr.bf16.mxu0 0
      %412 = vmatmul.mubr.bf16.gmra.mxu0 %v336
      %v413 = vpop.f32.mrf.mxu0
      %v414 = vadd.f32 0.0, %v413
      %v415 = vpop.f32.mrf.mxu0
      %v416 = vpop.f32.mrf.mxu0
      %v417 = vpop.f32.mrf.mxu0
      %418 = vdwg.mxu0
      %v419 = vadd.f32 %v304, %v373
      %v420 = vadd.f32 %v305, %v375
      %v421 = vadd.f32 %v306, %v414
      %v422 = vld [vmem:[%s1 + $0x4] sm:$0x3]
      %423 = vrot.lane.b32.xlu0 %v207, 126
      %v424 = vpop.permute.xlu0 %423
      %425 = vrot.lane.b32.xlu0 %v208, 126
      %v426 = vpop.permute.xlu0 %425
      %427 = vrot.lane.b32.xlu0 %v209, 126
      %v428 = vpop.permute.xlu0 %427
      %429 = vrot.lane.b32.xlu0 %v210, 126
      %v430 = vpop.permute.xlu0 %429
      %431 = vrot.lane.b32.xlu0 %v211, 126
      %v432 = vpop.permute.xlu0 %431
      %433 = vrot.lane.b32.xlu0 %v212, 126
      %v434 = vpop.permute.xlu0 %433
      %vm435 = vcmask 1031168
      %v436 = vsel %vm435, %v424, %v426
      %v437 = vsel %vm435, %v426, %v428
      %v438 = vsel %vm435, %v430, %v432
      %v439 = vsel %vm435, %v432, %v434
      %v447 = vsel %vm219, %v422, 0
      %449 = vmatprep.subr.bf16.mxu0 0
      %450 = vmatpush1.bf16.msra.mxu0 0
      %451 = vmatprep.subr.bf16.mxu0 0
      %452 = vmatpush1.bf16.msra.mxu0 0
      %453 = vmatprep.subr.bf16.mxu0 0
      %454 = vmatpush1.bf16.msra.mxu0 0
      %455 = vmatprep.subr.bf16.mxu0 0
      %456 = vmatpush1.bf16.msra.mxu0 0
      %457 = vmatprep.subr.bf16.mxu0 0
      %458 = vmatpush1.bf16.msra.mxu0 0
      %459 = vmatprep.subr.bf16.mxu0 0
      %460 = vmatpush1.bf16.msra.mxu0 0
      %461 = vmatprep.subr.bf16.mxu0 %v439
      %462 = vmatpush1.bf16.msra.mxu0 %v438
      %463 = vmatprep.subr.bf16.mxu0 %v437
      %464 = vmatpush1.bf16.msra.mxu0 %v436
      %465 = vmatprep.subr.bf16.mxu0 0
      %466 = vmatpush2.bf16.msra.mxu0 0
      %467 = vmatprep.subr.bf16.mxu0 0
      %468 = vmatpush2.bf16.msra.mxu0 0
      %469 = vmatprep.subr.bf16.mxu0 0
      %470 = vmatpush2.bf16.msra.mxu0 0
      %471 = vmatprep.subr.bf16.mxu0 0
      %472 = vmatpush2.bf16.msra.mxu0 0
      %473 = vmatprep.subr.bf16.mxu0 0
      %474 = vmatpush2.bf16.msra.mxu0 0
      %475 = vmatprep.subr.bf16.mxu0 0
      %476 = vmatpush2.bf16.msra.mxu0 0
      %477 = vmatprep.subr.bf16.mxu0 0
      %478 = vmatpush2.bf16.msra.mxu0 0
      %479 = vmatprep.subr.bf16.mxu0 0
      %480 = vmatpush2.bf16.msra.mxu0 0
      %481 = vmatprep.mubr.bf16.mxu0 0
      %482 = vmatmul.mubr.bf16.gmra.mxu0 %v447
      %v483 = vpop.f32.mrf.mxu0
      %v484 = vadd.f32 0.0, %v483
      %v485 = vpop.f32.mrf.mxu0
      %v486 = vadd.f32 0.0, %v485
      %v487 = vpop.f32.mrf.mxu0
      %v488 = vpop.f32.mrf.mxu0
      %489 = vdwg.mxu0
      %490 = vmatprep.subr.bf16.mxu0 0
      %491 = vmatpush1.bf16.msra.mxu0 0
      %492 = vmatprep.subr.bf16.mxu0 0
      %493 = vmatpush1.bf16.msra.mxu0 0
      %494 = vmatprep.subr.bf16.mxu0 0
      %495 = vmatpush1.bf16.msra.mxu0 0
      %496 = vmatprep.subr.bf16.mxu0 0
      %497 = vmatpush1.bf16.msra.mxu0 0
      %498 = vmatprep.subr.bf16.mxu0 0
      %499 = vmatpush1.bf16.msra.mxu0 0
      %500 = vmatprep.subr.bf16.mxu0 0
      %501 = vmatpush1.bf16.msra.mxu0 0
      %502 = vmatprep.subr.bf16.mxu0 0
      %503 = vmatpush1.bf16.msra.mxu0 %v434
      %504 = vmatprep.subr.bf16.mxu0 0
      %505 = vmatpush1.bf16.msra.mxu0 %v428
      %506 = vmatprep.subr.bf16.mxu0 0
      %507 = vmatpush2.bf16.msra.mxu0 0
      %508 = vmatprep.subr.bf16.mxu0 0
      %509 = vmatpush2.bf16.msra.mxu0 0
      %510 = vmatprep.subr.bf16.mxu0 0
      %511 = vmatpush2.bf16.msra.mxu0 0
      %512 = vmatprep.subr.bf16.mxu0 0
      %513 = vmatpush2.bf16.msra.mxu0 0
      %514 = vmatprep.subr.bf16.mxu0 0
      %515 = vmatpush2.bf16.msra.mxu0 0
      %516 = vmatprep.subr.bf16.mxu0 0
      %517 = vmatpush2.bf16.msra.mxu0 0
      %518 = vmatprep.subr.bf16.mxu0 0
      %519 = vmatpush2.bf16.msra.mxu0 0
      %520 = vmatprep.subr.bf16.mxu0 0
      %521 = vmatpush2.bf16.msra.mxu0 0
      %522 = vmatprep.mubr.bf16.mxu0 0
      %523 = vmatmul.mubr.bf16.gmra.mxu0 %v447
      %v524 = vpop.f32.mrf.mxu0
      %v525 = vadd.f32 0.0, %v524
      %v526 = vpop.f32.mrf.mxu0
      %v527 = vpop.f32.mrf.mxu0
      %v528 = vpop.f32.mrf.mxu0
      %529 = vdwg.mxu0
      %v530 = vadd.f32 %v419, %v484
      %v531 = vadd.f32 %v420, %v486
      %v532 = vadd.f32 %v421, %v525
      %v533 = vld [vmem:[%s1 + $0x4] sm:$0xc]
      %v535 = vunpack.c.l.b16 %v533
      %v536 = vpack.c.b16 %v535, %v535
      %v537 = vrot.slane %v536, 2
      %538 = vrot.lane.b32.xlu0 %v207, 110
      %v539 = vpop.permute.xlu0 %538
      %540 = vrot.lane.b32.xlu0 %v208, 110
      %v541 = vpop.permute.xlu0 %540
      %542 = vrot.lane.b32.xlu0 %v209, 110
      %v543 = vpop.permute.xlu0 %542
      %544 = vrot.lane.b32.xlu0 %v210, 110
      %v545 = vpop.permute.xlu0 %544
      %546 = vrot.lane.b32.xlu0 %v211, 110
      %v547 = vpop.permute.xlu0 %546
      %548 = vrot.lane.b32.xlu0 %v212, 110
      %v549 = vpop.permute.xlu0 %548
      %vm550 = vcmask 900096
      %v551 = vsel %vm550, %v539, %v541
      %v552 = vsel %vm550, %v541, %v543
      %v553 = vsel %vm550, %v545, %v547
      %v554 = vsel %vm550, %v547, %v549
      %v562 = vsel %vm219, %v537, 0
      %564 = vmatprep.subr.bf16.mxu0 0
      %565 = vmatpush1.bf16.msra.mxu0 0
      %566 = vmatprep.subr.bf16.mxu0 0
      %567 = vmatpush1.bf16.msra.mxu0 0
      %568 = vmatprep.subr.bf16.mxu0 0
      %569 = vmatpush1.bf16.msra.mxu0 0
      %570 = vmatprep.subr.bf16.mxu0 0
      %571 = vmatpush1.bf16.msra.mxu0 0
      %572 = vmatprep.subr.bf16.mxu0 0
      %573 = vmatpush1.bf16.msra.mxu0 0
      %574 = vmatprep.subr.bf16.mxu0 0
      %575 = vmatpush1.bf16.msra.mxu0 0
      %576 = vmatprep.subr.bf16.mxu0 %v554
      %577 = vmatpush1.bf16.msra.mxu0 %v553
      %578 = vmatprep.subr.bf16.mxu0 %v552
      %579 = vmatpush1.bf16.msra.mxu0 %v551
      %580 = vmatprep.subr.bf16.mxu0 0
      %581 = vmatpush2.bf16.msra.mxu0 0
      %582 = vmatprep.subr.bf16.mxu0 0
      %583 = vmatpush2.bf16.msra.mxu0 0
      %584 = vmatprep.subr.bf16.mxu0 0
      %585 = vmatpush2.bf16.msra.mxu0 0
      %586 = vmatprep.subr.bf16.mxu0 0
      %587 = vmatpush2.bf16.msra.mxu0 0
      %588 = vmatprep.subr.bf16.mxu0 0
      %589 = vmatpush2.bf16.msra.mxu0 0
      %590 = vmatprep.subr.bf16.mxu0 0
      %591 = vmatpush2.bf16.msra.mxu0 0
      %592 = vmatprep.subr.bf16.mxu0 0
      %593 = vmatpush2.bf16.msra.mxu0 0
      %594 = vmatprep.subr.bf16.mxu0 0
      %595 = vmatpush2.bf16.msra.mxu0 0
      %596 = vmatprep.mubr.bf16.mxu0 0
      %597 = vmatmul.mubr.bf16.gmra.mxu0 %v562
      %v598 = vpop.f32.mrf.mxu0
      %v599 = vadd.f32 0.0, %v598
      %v600 = vpop.f32.mrf.mxu0
      %v601 = vadd.f32 0.0, %v600
      %v602 = vpop.f32.mrf.mxu0
      %v603 = vpop.f32.mrf.mxu0
      %604 = vdwg.mxu0
      %605 = vmatprep.subr.bf16.mxu0 0
      %606 = vmatpush1.bf16.msra.mxu0 0
      %607 = vmatprep.subr.bf16.mxu0 0
      %608 = vmatpush1.bf16.msra.mxu0 0
      %609 = vmatprep.subr.bf16.mxu0 0
      %610 = vmatpush1.bf16.msra.mxu0 0
      %611 = vmatprep.subr.bf16.mxu0 0
      %612 = vmatpush1.bf16.msra.mxu0 0
      %613 = vmatprep.subr.bf16.mxu0 0
      %614 = vmatpush1.bf16.msra.mxu0 0
      %615 = vmatprep.subr.bf16.mxu0 0
      %616 = vmatpush1.bf16.msra.mxu0 0
      %617 = vmatprep.subr.bf16.mxu0 0
      %618 = vmatpush1.bf16.msra.mxu0 %v549
      %619 = vmatprep.subr.bf16.mxu0 0
      %620 = vmatpush1.bf16.msra.mxu0 %v543
      %621 = vmatprep.subr.bf16.mxu0 0
      %622 = vmatpush2.bf16.msra.mxu0 0
      %623 = vmatprep.subr.bf16.mxu0 0
      %624 = vmatpush2.bf16.msra.mxu0 0
      %625 = vmatprep.subr.bf16.mxu0 0
      %626 = vmatpush2.bf16.msra.mxu0 0
      %627 = vmatprep.subr.bf16.mxu0 0
      %628 = vmatpush2.bf16.msra.mxu0 0
      %629 = vmatprep.subr.bf16.mxu0 0
      %630 = vmatpush2.bf16.msra.mxu0 0
      %631 = vmatprep.subr.bf16.mxu0 0
      %632 = vmatpush2.bf16.msra.mxu0 0
      %633 = vmatprep.subr.bf16.mxu0 0
      %634 = vmatpush2.bf16.msra.mxu0 0
      %635 = vmatprep.subr.bf16.mxu0 0
      %636 = vmatpush2.bf16.msra.mxu0 0
      %637 = vmatprep.mubr.bf16.mxu0 0
      %638 = vmatmul.mubr.bf16.gmra.mxu0 %v562
      %v639 = vpop.f32.mrf.mxu0
      %v640 = vadd.f32 0.0, %v639
      %v641 = vpop.f32.mrf.mxu0
      %v642 = vpop.f32.mrf.mxu0
      %v643 = vpop.f32.mrf.mxu0
      %644 = vdwg.mxu0
      %v645 = vadd.f32 %v530, %v599
      %v646 = vadd.f32 %v531, %v601
      %v647 = vadd.f32 %v532, %v640
      %v648 = vld [vmem:[%s1 + $0x8] sm:$0x3]
      %649 = vrot.lane.b32.xlu0 %v207, 109
      %v650 = vpop.permute.xlu0 %649
      %651 = vrot.lane.b32.xlu0 %v208, 109
      %v652 = vpop.permute.xlu0 %651
      %653 = vrot.lane.b32.xlu0 %v209, 109
      %v654 = vpop.permute.xlu0 %653
      %655 = vrot.lane.b32.xlu0 %v210, 109
      %v656 = vpop.permute.xlu0 %655
      %657 = vrot.lane.b32.xlu0 %v211, 109
      %v658 = vpop.permute.xlu0 %657
      %659 = vrot.lane.b32.xlu0 %v212, 109
      %v660 = vpop.permute.xlu0 %659
      %vm661 = vcmask 891904
      %v662 = vsel %vm661, %v650, %v652
      %v663 = vsel %vm661, %v652, %v654
      %v664 = vsel %vm661, %v656, %v658
      %v665 = vsel %vm661, %v658, %v660
      %v673 = vsel %vm219, %v648, 0
      %675 = vmatprep.subr.bf16.mxu0 0
      %676 = vmatpush1.bf16.msra.mxu0 0
      %677 = vmatprep.subr.bf16.mxu0 0
      %678 = vmatpush1.bf16.msra.mxu0 0
      %679 = vmatprep.subr.bf16.mxu0 0
      %680 = vmatpush1.bf16.msra.mxu0 0
      %681 = vmatprep.subr.bf16.mxu0 0
      %682 = vmatpush1.bf16.msra.mxu0 0
      %683 = vmatprep.subr.bf16.mxu0 0
      %684 = vmatpush1.bf16.msra.mxu0 0
      %685 = vmatprep.subr.bf16.mxu0 0
      %686 = vmatpush1.bf16.msra.mxu0 0
      %687 = vmatprep.subr.bf16.mxu0 %v665
      %688 = vmatpush1.bf16.msra.mxu0 %v664
      %689 = vmatprep.subr.bf16.mxu0 %v663
      %690 = vmatpush1.bf16.msra.mxu0 %v662
      %691 = vmatprep.subr.bf16.mxu0 0
      %692 = vmatpush2.bf16.msra.mxu0 0
      %693 = vmatprep.subr.bf16.mxu0 0
      %694 = vmatpush2.bf16.msra.mxu0 0
      %695 = vmatprep.subr.bf16.mxu0 0
      %696 = vmatpush2.bf16.msra.mxu0 0
      %697 = vmatprep.subr.bf16.mxu0 0
      %698 = vmatpush2.bf16.msra.mxu0 0
      %699 = vmatprep.subr.bf16.mxu0 0
      %700 = vmatpush2.bf16.msra.mxu0 0
      %701 = vmatprep.subr.bf16.mxu0 0
      %702 = vmatpush2.bf16.msra.mxu0 0
      %703 = vmatprep.subr.bf16.mxu0 0
      %704 = vmatpush2.bf16.msra.mxu0 0
      %705 = vmatprep.subr.bf16.mxu0 0
      %706 = vmatpush2.bf16.msra.mxu0 0
      %707 = vmatprep.mubr.bf16.mxu0 0
      %708 = vmatmul.mubr.bf16.gmra.mxu0 %v673
      %v709 = vpop.f32.mrf.mxu0
      %v710 = vadd.f32 0.0, %v709
      %v711 = vpop.f32.mrf.mxu0
      %v712 = vadd.f32 0.0, %v711
      %v713 = vpop.f32.mrf.mxu0
      %v714 = vpop.f32.mrf.mxu0
      %715 = vdwg.mxu0
      %716 = vmatprep.subr.bf16.mxu0 0
      %717 = vmatpush1.bf16.msra.mxu0 0
      %718 = vmatprep.subr.bf16.mxu0 0
      %719 = vmatpush1.bf16.msra.mxu0 0
      %720 = vmatprep.subr.bf16.mxu0 0
      %721 = vmatpush1.bf16.msra.mxu0 0
      %722 = vmatprep.subr.bf16.mxu0 0
      %723 = vmatpush1.bf16.msra.mxu0 0
      %724 = vmatprep.subr.bf16.mxu0 0
      %725 = vmatpush1.bf16.msra.mxu0 0
      %726 = vmatprep.subr.bf16.mxu0 0
      %727 = vmatpush1.bf16.msra.mxu0 0
      %728 = vmatprep.subr.bf16.mxu0 0
      %729 = vmatpush1.bf16.msra.mxu0 %v660
      %730 = vmatprep.subr.bf16.mxu0 0
      %731 = vmatpush1.bf16.msra.mxu0 %v654
      %732 = vmatprep.subr.bf16.mxu0 0
      %733 = vmatpush2.bf16.msra.mxu0 0
      %734 = vmatprep.subr.bf16.mxu0 0
      %735 = vmatpush2.bf16.msra.mxu0 0
      %736 = vmatprep.subr.bf16.mxu0 0
      %737 = vmatpush2.bf16.msra.mxu0 0
      %738 = vmatprep.subr.bf16.mxu0 0
      %739 = vmatpush2.bf16.msra.mxu0 0
      %740 = vmatprep.subr.bf16.mxu0 0
      %741 = vmatpush2.bf16.msra.mxu0 0
      %742 = vmatprep.subr.bf16.mxu0 0
      %743 = vmatpush2.bf16.msra.mxu0 0
      %744 = vmatprep.subr.bf16.mxu0 0
      %745 = vmatpush2.bf16.msra.mxu0 0
      %746 = vmatprep.subr.bf16.mxu0 0
      %747 = vmatpush2.bf16.msra.mxu0 0
      %748 = vmatprep.mubr.bf16.mxu0 0
      %749 = vmatmul.mubr.bf16.gmra.mxu0 %v673
      %v750 = vpop.f32.mrf.mxu0
      %v751 = vadd.f32 0.0, %v750
      %v752 = vpop.f32.mrf.mxu0
      %v753 = vpop.f32.mrf.mxu0
      %v754 = vpop.f32.mrf.mxu0
      %755 = vdwg.mxu0
      %v756 = vadd.f32 %v645, %v710
      %v757 = vadd.f32 %v646, %v712
      %v758 = vadd.f32 %v647, %v751
      %v759 = vld [vmem:[%s1 + $0x8] sm:$0xc]
      %v761 = vunpack.c.l.b16 %v759
      %v762 = vpack.c.b16 %v761, %v761
      %v763 = vrot.slane %v762, 2
      %764 = vrot.lane.b32.xlu0 %v207, 108
      %v765 = vpop.permute.xlu0 %764
      %766 = vrot.lane.b32.xlu0 %v208, 108
      %v767 = vpop.permute.xlu0 %766
      %768 = vrot.lane.b32.xlu0 %v209, 108
      %v769 = vpop.permute.xlu0 %768
      %770 = vrot.lane.b32.xlu0 %v210, 108
      %v771 = vpop.permute.xlu0 %770
      %772 = vrot.lane.b32.xlu0 %v211, 108
      %v773 = vpop.permute.xlu0 %772
      %774 = vrot.lane.b32.xlu0 %v212, 108
      %v775 = vpop.permute.xlu0 %774
      %vm776 = vcmask 883712
      %v777 = vsel %vm776, %v765, %v767
      %v778 = vsel %vm776, %v767, %v769
      %v779 = vsel %vm776, %v771, %v773
      %v780 = vsel %vm776, %v773, %v775
      %v788 = vsel %vm219, %v763, 0
      %790 = vmatprep.subr.bf16.mxu0 0
      %791 = vmatpush1.bf16.msra.mxu0 0
      %792 = vmatprep.subr.bf16.mxu0 0
      %793 = vmatpush1.bf16.msra.mxu0 0
      %794 = vmatprep.subr.bf16.mxu0 0
      %795 = vmatpush1.bf16.msra.mxu0 0
      %796 = vmatprep.subr.bf16.mxu0 0
      %797 = vmatpush1.bf16.msra.mxu0 0
      %798 = vmatprep.subr.bf16.mxu0 0
      %799 = vmatpush1.bf16.msra.mxu0 0
      %800 = vmatprep.subr.bf16.mxu0 0
      %801 = vmatpush1.bf16.msra.mxu0 0
      %802 = vmatprep.subr.bf16.mxu0 %v780
      %803 = vmatpush1.bf16.msra.mxu0 %v779
      %804 = vmatprep.subr.bf16.mxu0 %v778
      %805 = vmatpush1.bf16.msra.mxu0 %v777
      %806 = vmatprep.subr.bf16.mxu0 0
      %807 = vmatpush2.bf16.msra.mxu0 0
      %808 = vmatprep.subr.bf16.mxu0 0
      %809 = vmatpush2.bf16.msra.mxu0 0
      %810 = vmatprep.subr.bf16.mxu0 0
      %811 = vmatpush2.bf16.msra.mxu0 0
      %812 = vmatprep.subr.bf16.mxu0 0
      %813 = vmatpush2.bf16.msra.mxu0 0
      %814 = vmatprep.subr.bf16.mxu0 0
      %815 = vmatpush2.bf16.msra.mxu0 0
      %816 = vmatprep.subr.bf16.mxu0 0
      %817 = vmatpush2.bf16.msra.mxu0 0
      %818 = vmatprep.subr.bf16.mxu0 0
      %819 = vmatpush2.bf16.msra.mxu0 0
      %820 = vmatprep.subr.bf16.mxu0 0
      %821 = vmatpush2.bf16.msra.mxu0 0
      %822 = vmatprep.mubr.bf16.mxu0 0
      %823 = vmatmul.mubr.bf16.gmra.mxu0 %v788
      %v824 = vpop.f32.mrf.mxu0
      %v825 = vadd.f32 0.0, %v824
      %v826 = vpop.f32.mrf.mxu0
      %v827 = vadd.f32 0.0, %v826
      %v828 = vpop.f32.mrf.mxu0
      %v829 = vpop.f32.mrf.mxu0
      %830 = vdwg.mxu0
      %831 = vmatprep.subr.bf16.mxu0 0
      %832 = vmatpush1.bf16.msra.mxu0 0
      %833 = vmatprep.subr.bf16.mxu0 0
      %834 = vmatpush1.bf16.msra.mxu0 0
      %835 = vmatprep.subr.bf16.mxu0 0
      %836 = vmatpush1.bf16.msra.mxu0 0
      %837 = vmatprep.subr.bf16.mxu0 0
      %838 = vmatpush1.bf16.msra.mxu0 0
      %839 = vmatprep.subr.bf16.mxu0 0
      %840 = vmatpush1.bf16.msra.mxu0 0
      %841 = vmatprep.subr.bf16.mxu0 0
      %842 = vmatpush1.bf16.msra.mxu0 0
      %843 = vmatprep.subr.bf16.mxu0 0
      %844 = vmatpush1.bf16.msra.mxu0 %v775
      %845 = vmatprep.subr.bf16.mxu0 0
      %846 = vmatpush1.bf16.msra.mxu0 %v769
      %847 = vmatprep.subr.bf16.mxu0 0
      %848 = vmatpush2.bf16.msra.mxu0 0
      %849 = vmatprep.subr.bf16.mxu0 0
      %850 = vmatpush2.bf16.msra.mxu0 0
      %851 = vmatprep.subr.bf16.mxu0 0
      %852 = vmatpush2.bf16.msra.mxu0 0
      %853 = vmatprep.subr.bf16.mxu0 0
      %854 = vmatpush2.bf16.msra.mxu0 0
      %855 = vmatprep.subr.bf16.mxu0 0
      %856 = vmatpush2.bf16.msra.mxu0 0
      %857 = vmatprep.subr.bf16.mxu0 0
      %858 = vmatpush2.bf16.msra.mxu0 0
      %859 = vmatprep.subr.bf16.mxu0 0
      %860 = vmatpush2.bf16.msra.mxu0 0
      %861 = vmatprep.subr.bf16.mxu0 0
      %862 = vmatpush2.bf16.msra.mxu0 0
      %863 = vmatprep.mubr.bf16.mxu0 0
      %864 = vmatmul.mubr.bf16.gmra.mxu0 %v788
      %v865 = vpop.f32.mrf.mxu0
      %v866 = vadd.f32 0.0, %v865
      %v867 = vpop.f32.mrf.mxu0
      %v868 = vpop.f32.mrf.mxu0
      %v869 = vpop.f32.mrf.mxu0
      %870 = vdwg.mxu0
      %v871 = vadd.f32 %v756, %v825
      %v872 = vadd.f32 %v757, %v827
      %v873 = vadd.f32 %v758, %v866
      %v874 = vld [vmem:[%s1 + $0xc] sm:$0x3]
      %875 = vrot.lane.b32.xlu0 %v207, 92
      %v876 = vpop.permute.xlu0 %875
      %877 = vrot.lane.b32.xlu0 %v208, 92
      %v878 = vpop.permute.xlu0 %877
      %879 = vrot.lane.b32.xlu0 %v209, 92
      %v880 = vpop.permute.xlu0 %879
      %881 = vrot.lane.b32.xlu0 %v210, 92
      %v882 = vpop.permute.xlu0 %881
      %883 = vrot.lane.b32.xlu0 %v211, 92
      %v884 = vpop.permute.xlu0 %883
      %885 = vrot.lane.b32.xlu0 %v212, 92
      %v886 = vpop.permute.xlu0 %885
      %vm887 = vcmask 752640
      %v888 = vsel %vm887, %v876, %v878
      %v889 = vsel %vm887, %v878, %v880
      %v890 = vsel %vm887, %v882, %v884
      %v891 = vsel %vm887, %v884, %v886
      %v899 = vsel %vm219, %v874, 0
      %901 = vmatprep.subr.bf16.mxu0 0
      %902 = vmatpush1.bf16.msra.mxu0 0
      %903 = vmatprep.subr.bf16.mxu0 0
      %904 = vmatpush1.bf16.msra.mxu0 0
      %905 = vmatprep.subr.bf16.mxu0 0
      %906 = vmatpush1.bf16.msra.mxu0 0
      %907 = vmatprep.subr.bf16.mxu0 0
      %908 = vmatpush1.bf16.msra.mxu0 0
      %909 = vmatprep.subr.bf16.mxu0 0
      %910 = vmatpush1.bf16.msra.mxu0 0
      %911 = vmatprep.subr.bf16.mxu0 0
      %912 = vmatpush1.bf16.msra.mxu0 0
      %913 = vmatprep.subr.bf16.mxu0 %v891
      %914 = vmatpush1.bf16.msra.mxu0 %v890
      %915 = vmatprep.subr.bf16.mxu0 %v889
      %916 = vmatpush1.bf16.msra.mxu0 %v888
      %917 = vmatprep.subr.bf16.mxu0 0
      %918 = vmatpush2.bf16.msra.mxu0 0
      %919 = vmatprep.subr.bf16.mxu0 0
      %920 = vmatpush2.bf16.msra.mxu0 0
      %921 = vmatprep.subr.bf16.mxu0 0
      %922 = vmatpush2.bf16.msra.mxu0 0
      %923 = vmatprep.subr.bf16.mxu0 0
      %924 = vmatpush2.bf16.msra.mxu0 0
      %925 = vmatprep.subr.bf16.mxu0 0
      %926 = vmatpush2.bf16.msra.mxu0 0
      %927 = vmatprep.subr.bf16.mxu0 0
      %928 = vmatpush2.bf16.msra.mxu0 0
      %929 = vmatprep.subr.bf16.mxu0 0
      %930 = vmatpush2.bf16.msra.mxu0 0
      %931 = vmatprep.subr.bf16.mxu0 0
      %932 = vmatpush2.bf16.msra.mxu0 0
      %933 = vmatprep.mubr.bf16.mxu0 0
      %934 = vmatmul.mubr.bf16.gmra.mxu0 %v899
      %v935 = vpop.f32.mrf.mxu0
      %v936 = vadd.f32 0.0, %v935
      %v937 = vpop.f32.mrf.mxu0
      %v938 = vadd.f32 0.0, %v937
      %v939 = vpop.f32.mrf.mxu0
      %v940 = vpop.f32.mrf.mxu0
      %941 = vdwg.mxu0
      %942 = vmatprep.subr.bf16.mxu0 0
      %943 = vmatpush1.bf16.msra.mxu0 0
      %944 = vmatprep.subr.bf16.mxu0 0
      %945 = vmatpush1.bf16.msra.mxu0 0
      %946 = vmatprep.subr.bf16.mxu0 0
      %947 = vmatpush1.bf16.msra.mxu0 0
      %948 = vmatprep.subr.bf16.mxu0 0
      %949 = vmatpush1.bf16.msra.mxu0 0
      %950 = vmatprep.subr.bf16.mxu0 0
      %951 = vmatpush1.bf16.msra.mxu0 0
      %952 = vmatprep.subr.bf16.mxu0 0
      %953 = vmatpush1.bf16.msra.mxu0 0
      %954 = vmatprep.subr.bf16.mxu0 0
      %955 = vmatpush1.bf16.msra.mxu0 %v886
      %956 = vmatprep.subr.bf16.mxu0 0
      %957 = vmatpush1.bf16.msra.mxu0 %v880
      %958 = vmatprep.subr.bf16.mxu0 0
      %959 = vmatpush2.bf16.msra.mxu0 0
      %960 = vmatprep.subr.bf16.mxu0 0
      %961 = vmatpush2.bf16.msra.mxu0 0
      %962 = vmatprep.subr.bf16.mxu0 0
      %963 = vmatpush2.bf16.msra.mxu0 0
      %964 = vmatprep.subr.bf16.mxu0 0
      %965 = vmatpush2.bf16.msra.mxu0 0
      %966 = vmatprep.subr.bf16.mxu0 0
      %967 = vmatpush2.bf16.msra.mxu0 0
      %968 = vmatprep.subr.bf16.mxu0 0
      %969 = vmatpush2.bf16.msra.mxu0 0
      %970 = vmatprep.subr.bf16.mxu0 0
      %971 = vmatpush2.bf16.msra.mxu0 0
      %972 = vmatprep.subr.bf16.mxu0 0
      %973 = vmatpush2.bf16.msra.mxu0 0
      %974 = vmatprep.mubr.bf16.mxu0 0
      %975 = vmatmul.mubr.bf16.gmra.mxu0 %v899
      %v976 = vpop.f32.mrf.mxu0
      %v977 = vadd.f32 0.0, %v976
      %v978 = vpop.f32.mrf.mxu0
      %v979 = vpop.f32.mrf.mxu0
      %v980 = vpop.f32.mrf.mxu0
      %981 = vdwg.mxu0
      %v982 = vadd.f32 %v871, %v936
      %v983 = vadd.f32 %v872, %v938
      %v984 = vadd.f32 %v873, %v977
      %v985 = vld [vmem:[%s1 + $0xc] sm:$0xc]
      %v987 = vunpack.c.l.b16 %v985
      %v988 = vpack.c.b16 %v987, %v987
      %v989 = vrot.slane %v988, 2
      %990 = vrot.lane.b32.xlu0 %v207, 91
      %v991 = vpop.permute.xlu0 %990
      %992 = vrot.lane.b32.xlu0 %v208, 91
      %v993 = vpop.permute.xlu0 %992
      %994 = vrot.lane.b32.xlu0 %v209, 91
      %v995 = vpop.permute.xlu0 %994
      %996 = vrot.lane.b32.xlu0 %v210, 91
      %v997 = vpop.permute.xlu0 %996
      %998 = vrot.lane.b32.xlu0 %v211, 91
      %v999 = vpop.permute.xlu0 %998
      %1000 = vrot.lane.b32.xlu0 %v212, 91
      %v1001 = vpop.permute.xlu0 %1000
      %vm1002 = vcmask 744448
      %v1003 = vsel %vm1002, %v991, %v993
      %v1004 = vsel %vm1002, %v993, %v995
      %v1005 = vsel %vm1002, %v997, %v999
      %v1006 = vsel %vm1002, %v999, %v1001
      %v1014 = vsel %vm219, %v989, 0
      %1016 = vmatprep.subr.bf16.mxu0 0
      %1017 = vmatpush1.bf16.msra.mxu0 0
      %1018 = vmatprep.subr.bf16.mxu0 0
      %1019 = vmatpush1.bf16.msra.mxu0 0
      %1020 = vmatprep.subr.bf16.mxu0 0
      %1021 = vmatpush1.bf16.msra.mxu0 0
      %1022 = vmatprep.subr.bf16.mxu0 0
      %1023 = vmatpush1.bf16.msra.mxu0 0
      %1024 = vmatprep.subr.bf16.mxu0 0
      %1025 = vmatpush1.bf16.msra.mxu0 0
      %1026 = vmatprep.subr.bf16.mxu0 0
      %1027 = vmatpush1.bf16.msra.mxu0 0
      %1028 = vmatprep.subr.bf16.mxu0 %v1006
      %1029 = vmatpush1.bf16.msra.mxu0 %v1005
      %1030 = vmatprep.subr.bf16.mxu0 %v1004
      %1031 = vmatpush1.bf16.msra.mxu0 %v1003
      %1032 = vmatprep.subr.bf16.mxu0 0
      %1033 = vmatpush2.bf16.msra.mxu0 0
      %1034 = vmatprep.subr.bf16.mxu0 0
      %1035 = vmatpush2.bf16.msra.mxu0 0
      %1036 = vmatprep.subr.bf16.mxu0 0
      %1037 = vmatpush2.bf16.msra.mxu0 0
      %1038 = vmatprep.subr.bf16.mxu0 0
      %1039 = vmatpush2.bf16.msra.mxu0 0
      %1040 = vmatprep.subr.bf16.mxu0 0
      %1041 = vmatpush2.bf16.msra.mxu0 0
      %1042 = vmatprep.subr.bf16.mxu0 0
      %1043 = vmatpush2.bf16.msra.mxu0 0
      %1044 = vmatprep.subr.bf16.mxu0 0
      %1045 = vmatpush2.bf16.msra.mxu0 0
      %1046 = vmatprep.subr.bf16.mxu0 0
      %1047 = vmatpush2.bf16.msra.mxu0 0
      %1048 = vmatprep.mubr.bf16.mxu0 0
      %1049 = vmatmul.mubr.bf16.gmra.mxu0 %v1014
      %v1050 = vpop.f32.mrf.mxu0
      %v1051 = vadd.f32 0.0, %v1050
      %v1052 = vpop.f32.mrf.mxu0
      %v1053 = vadd.f32 0.0, %v1052
      %v1054 = vpop.f32.mrf.mxu0
      %v1055 = vpop.f32.mrf.mxu0
      %1056 = vdwg.mxu0
      %1057 = vmatprep.subr.bf16.mxu0 0
      %1058 = vmatpush1.bf16.msra.mxu0 0
      %1059 = vmatprep.subr.bf16.mxu0 0
      %1060 = vmatpush1.bf16.msra.mxu0 0
      %1061 = vmatprep.subr.bf16.mxu0 0
      %1062 = vmatpush1.bf16.msra.mxu0 0
      %1063 = vmatprep.subr.bf16.mxu0 0
      %1064 = vmatpush1.bf16.msra.mxu0 0
      %1065 = vmatprep.subr.bf16.mxu0 0
      %1066 = vmatpush1.bf16.msra.mxu0 0
      %1067 = vmatprep.subr.bf16.mxu0 0
      %1068 = vmatpush1.bf16.msra.mxu0 0
      %1069 = vmatprep.subr.bf16.mxu0 0
      %1070 = vmatpush1.bf16.msra.mxu0 %v1001
      %1071 = vmatprep.subr.bf16.mxu0 0
      %1072 = vmatpush1.bf16.msra.mxu0 %v995
      %1073 = vmatprep.subr.bf16.mxu0 0
      %1074 = vmatpush2.bf16.msra.mxu0 0
      %1075 = vmatprep.subr.bf16.mxu0 0
      %1076 = vmatpush2.bf16.msra.mxu0 0
      %1077 = vmatprep.subr.bf16.mxu0 0
      %1078 = vmatpush2.bf16.msra.mxu0 0
      %1079 = vmatprep.subr.bf16.mxu0 0
      %1080 = vmatpush2.bf16.msra.mxu0 0
      %1081 = vmatprep.subr.bf16.mxu0 0
      %1082 = vmatpush2.bf16.msra.mxu0 0
      %1083 = vmatprep.subr.bf16.mxu0 0
      %1084 = vmatpush2.bf16.msra.mxu0 0
      %1085 = vmatprep.subr.bf16.mxu0 0
      %1086 = vmatpush2.bf16.msra.mxu0 0
      %1087 = vmatprep.subr.bf16.mxu0 0
      %1088 = vmatpush2.bf16.msra.mxu0 0
      %1089 = vmatprep.mubr.bf16.mxu0 0
      %1090 = vmatmul.mubr.bf16.gmra.mxu0 %v1014
      %v1091 = vpop.f32.mrf.mxu0
      %v1092 = vadd.f32 0.0, %v1091
      %v1093 = vpop.f32.mrf.mxu0
      %v1094 = vpop.f32.mrf.mxu0
      %v1095 = vpop.f32.mrf.mxu0
      %1096 = vdwg.mxu0
      %v1097 = vadd.f32 %v982, %v1051
      %v1098 = vadd.f32 %v983, %v1053
      %v1099 = vadd.f32 %v984, %v1092
      %v1100 = vld [vmem:[%s1 + $0x10] sm:$0x3]
      %1101 = vrot.lane.b32.xlu0 %v207, 90
      %v1102 = vpop.permute.xlu0 %1101
      %1103 = vrot.lane.b32.xlu0 %v208, 90
      %v1104 = vpop.permute.xlu0 %1103
      %1105 = vrot.lane.b32.xlu0 %v209, 90
      %v1106 = vpop.permute.xlu0 %1105
      %1107 = vrot.lane.b32.xlu0 %v210, 90
      %v1108 = vpop.permute.xlu0 %1107
      %1109 = vrot.lane.b32.xlu0 %v211, 90
      %v1110 = vpop.permute.xlu0 %1109
      %1111 = vrot.lane.b32.xlu0 %v212, 90
      %v1112 = vpop.permute.xlu0 %1111
      %vm1113 = vcmask 736256
      %v1114 = vsel %vm1113, %v1102, %v1104
      %v1115 = vsel %vm1113, %v1104, %v1106
      %v1116 = vsel %vm1113, %v1108, %v1110
      %v1117 = vsel %vm1113, %v1110, %v1112
      %v1125 = vsel %vm219, %v1100, 0
      %1127 = vmatprep.subr.bf16.mxu0 0
      %1128 = vmatpush1.bf16.msra.mxu0 0
      %1129 = vmatprep.subr.bf16.mxu0 0
      %1130 = vmatpush1.bf16.msra.mxu0 0
      %1131 = vmatprep.subr.bf16.mxu0 0
      %1132 = vmatpush1.bf16.msra.mxu0 0
      %1133 = vmatprep.subr.bf16.mxu0 0
      %1134 = vmatpush1.bf16.msra.mxu0 0
      %1135 = vmatprep.subr.bf16.mxu0 0
      %1136 = vmatpush1.bf16.msra.mxu0 0
      %1137 = vmatprep.subr.bf16.mxu0 0
      %1138 = vmatpush1.bf16.msra.mxu0 0
      %1139 = vmatprep.subr.bf16.mxu0 %v1117
      %1140 = vmatpush1.bf16.msra.mxu0 %v1116
      %1141 = vmatprep.subr.bf16.mxu0 %v1115
      %1142 = vmatpush1.bf16.msra.mxu0 %v1114
      %1143 = vmatprep.subr.bf16.mxu0 0
      %1144 = vmatpush2.bf16.msra.mxu0 0
      %1145 = vmatprep.subr.bf16.mxu0 0
      %1146 = vmatpush2.bf16.msra.mxu0 0
      %1147 = vmatprep.subr.bf16.mxu0 0
      %1148 = vmatpush2.bf16.msra.mxu0 0
      %1149 = vmatprep.subr.bf16.mxu0 0
      %1150 = vmatpush2.bf16.msra.mxu0 0
      %1151 = vmatprep.subr.bf16.mxu0 0
      %1152 = vmatpush2.bf16.msra.mxu0 0
      %1153 = vmatprep.subr.bf16.mxu0 0
      %1154 = vmatpush2.bf16.msra.mxu0 0
      %1155 = vmatprep.subr.bf16.mxu0 0
      %1156 = vmatpush2.bf16.msra.mxu0 0
      %1157 = vmatprep.subr.bf16.mxu0 0
      %1158 = vmatpush2.bf16.msra.mxu0 0
      %1159 = vmatprep.mubr.bf16.mxu0 0
      %1160 = vmatmul.mubr.bf16.gmra.mxu0 %v1125
      %v1161 = vpop.f32.mrf.mxu0
      %v1162 = vadd.f32 0.0, %v1161
      %v1163 = vpop.f32.mrf.mxu0
      %v1164 = vadd.f32 0.0, %v1163
      %v1165 = vpop.f32.mrf.mxu0
      %v1166 = vpop.f32.mrf.mxu0
      %1167 = vdwg.mxu0
      %1168 = vmatprep.subr.bf16.mxu0 0
      %1169 = vmatpush1.bf16.msra.mxu0 0
      %1170 = vmatprep.subr.bf16.mxu0 0
      %1171 = vmatpush1.bf16.msra.mxu0 0
      %1172 = vmatprep.subr.bf16.mxu0 0
      %1173 = vmatpush1.bf16.msra.mxu0 0
      %1174 = vmatprep.subr.bf16.mxu0 0
      %1175 = vmatpush1.bf16.msra.mxu0 0
      %1176 = vmatprep.subr.bf16.mxu0 0
      %1177 = vmatpush1.bf16.msra.mxu0 0
      %1178 = vmatprep.subr.bf16.mxu0 0
      %1179 = vmatpush1.bf16.msra.mxu0 0
      %1180 = vmatprep.subr.bf16.mxu0 0
      %1181 = vmatpush1.bf16.msra.mxu0 %v1112
      %1182 = vmatprep.subr.bf16.mxu0 0
      %1183 = vmatpush1.bf16.msra.mxu0 %v1106
      %1184 = vmatprep.subr.bf16.mxu0 0
      %1185 = vmatpush2.bf16.msra.mxu0 0
      %1186 = vmatprep.subr.bf16.mxu0 0
      %1187 = vmatpush2.bf16.msra.mxu0 0
      %1188 = vmatprep.subr.bf16.mxu0 0
      %1189 = vmatpush2.bf16.msra.mxu0 0
      %1190 = vmatprep.subr.bf16.mxu0 0
      %1191 = vmatpush2.bf16.msra.mxu0 0
      %1192 = vmatprep.subr.bf16.mxu0 0
      %1193 = vmatpush2.bf16.msra.mxu0 0
      %1194 = vmatprep.subr.bf16.mxu0 0
      %1195 = vmatpush2.bf16.msra.mxu0 0
      %1196 = vmatprep.subr.bf16.mxu0 0
      %1197 = vmatpush2.bf16.msra.mxu0 0
      %1198 = vmatprep.subr.bf16.mxu0 0
      %1199 = vmatpush2.bf16.msra.mxu0 0
      %1200 = vmatprep.mubr.bf16.mxu0 0
      %1201 = vmatmul.mubr.bf16.gmra.mxu0 %v1125
      %v1202 = vpop.f32.mrf.mxu0
      %v1203 = vadd.f32 0.0, %v1202
      %v1204 = vpop.f32.mrf.mxu0
      %v1205 = vpop.f32.mrf.mxu0
      %v1206 = vpop.f32.mrf.mxu0
      %1207 = vdwg.mxu0
      %v1208 = vadd.f32 %v1097, %v1162
      %v1209 = vadd.f32 %v1098, %v1164
      %v1210 = vadd.f32 %v1099, %v1203
      %v1213 = vcombine.low %v1208, %v1209
      %1215 = vst [vmem:[%s170] sm:$0xff] %v1213
      %vm1216 = vcmask 257024
      %1217 = vst.msk [vmem:[%s170 + $0x8] sm:$0xf] %vm1216, %v1210
      %p1218 = scmp.lt.s32.totalorder %s14, 1
      %s1219 = scalar_select %p1218, %s14, 1
      %s1220 = smul.addr %s1219, 3
      %s1221 = smul.addr %s1220, 4
      %s1222 = scalar_lea.vmem %s3, %s1221
      // Predicated region
      $region33: #{conv_autoencoder_forward.13} parent=31 // pred_check
        %p1223 = pneg %p100
      $region34: #{conv_autoencoder_forward.13} parent=31 // pred_check_branch
        %1225 = sbr.rel (%p1223) target = $region36
      $region35: #{conv_autoencoder_forward.13} parent=31 // pred_region
        _
      $region36: #{conv_autoencoder_forward.13} parent=31 // pred_fallthru
        _
    $region32: #{conv_autoencoder_forward.13} parent=5 // pred_fallthru
      _
    %p1226 = scmp.le.s32.totalorder 2, %s9
    // Predicated region
    $region37: #{conv_autoencoder_forward.13} parent=5 // pred_check
      %p1227 = pneg %p1226
    $region38: #{conv_autoencoder_forward.13} parent=5 // pred_check_branch
      %1229 = sbr.rel (%p1227) target = $region40
    $region39: #{conv_autoencoder_forward.13} parent=5 // pred_region
      %s1230 = ssub.s32 %s9, 2
      // Predicated region
      $region41: #{conv_autoencoder_forward.13} parent=39 // pred_check
        %p1231 = pneg %p106
      $region42: #{conv_autoencoder_forward.13} parent=39 // pred_check_branch
        %1233 = sbr.rel (%p1231) target = $region44
      $region43: #{conv_autoencoder_forward.13} parent=39 // pred_region
        %p1234 = scmp.lt.s32.totalorder %s15, 1
        %s1235 = scalar_select %p1234, %s15, 1
        %s1236 = smul.addr %s1235, 3
        %s1237 = smul.addr %s1236, 4
        %s1238 = scalar_lea.vmem %s3, %s1237
      $region44: #{conv_autoencoder_forward.13} parent=39 // pred_fallthru
        _
    $region40: #{conv_autoencoder_forward.13} parent=5 // pred_fallthru
      _
  $region6: #{conv_autoencoder_forward.13} parent=0 // loop_footer
    %s13 = sadd.s32 1, %s9
  $region7: #{conv_autoencoder_forward.13} parent=0 // loop_footer_branch
    %8 = sbr.rel target = $region3
  $region8: #{conv_autoencoder_forward.13} parent=0 // loop_exit
    _

</llo_original>
